<compile_context>
chip_gen: v5e
topology: v5e:2x2
jax: 0.10.0
libtpu: 0.0.40
codegen_flags: <defaults>
</compile_context>

<pallas_src>
import functools

import jax
import jax.numpy as jnp
from jax.experimental import pallas as pl
from jax.experimental.pallas import tpu as pltpu

# --- model hyper-parameters (match the PyTorch module defaults) ---------------
IN_CHANNELS = 1
MAX_NUM_SAMPLES = 200
NUM_CHANNELS = 4
NUM_BLOCKS = 8
KERNEL_SIZE = 2                      # module default: 2 causal taps
DILATIONS = (1, 2, 4, 8, 16, 32, 64, 128)
NUM_COMPONENTS = 1

NC = NUM_CHANNELS
CIN1 = IN_CHANNELS + 1
NCOMP1 = NUM_COMPONENTS + 1
NHEAD = NCOMP1 + 2 * NUM_COMPONENTS          # fused rows: pi logits | mu | sigma

# --- flat parameter buffer layout (1-D f32, lives in SMEM inside the kernel) --
OFF_C1W = 0                                            # conv1 weight [NC, CIN1, K]
OFF_C1B = OFF_C1W + NC * CIN1 * KERNEL_SIZE            # conv1 bias   [NC]
OFF_BLK0 = OFF_C1B + NC
BLK_W1 = 0                                             # block conv1 w [2NC, NC, K]
BLK_B1 = BLK_W1 + 2 * NC * NC * KERNEL_SIZE            # block conv1 b [2NC]
BLK_W2 = BLK_B1 + 2 * NC                               # block conv2 w [NC, NC]
BLK_B2 = BLK_W2 + NC * NC                              # block conv2 b [NC]
BLK_SIZE = BLK_B2 + NC                                 # = 92 per block
OFF_C2W = OFF_BLK0 + NUM_BLOCKS * BLK_SIZE             # conv2 w [2NC, NC]
OFF_C2B = OFF_C2W + 2 * NC * NC                        # conv2 b [2NC]
OFF_HW = OFF_C2B + 2 * NC                              # fused head w [NHEAD, 2NC]
OFF_HB = OFF_HW + NHEAD * 2 * NC                       # fused head b [NHEAD]
N_PARAMS = OFF_HB + NHEAD                              # = 832 for defaults


# ------------------------------------------------------------------------------
# Pallas kernel: full Mooncake forward for one batch block.
#   x_ref   : [Cin, bb, Tp]   VMEM (batch on sublanes, time on lanes)
#   p_ref   : [N_PARAMS]      SMEM (flat f32 weights, read as scalars)
#   out_ref : [NHEAD, bb, Tp] VMEM (rows: pi0, pi1, mu, sigma)
# ------------------------------------------------------------------------------
def mooncake_kernel(x_ref, p_ref, out_ref, *, scale):
    f32 = jnp.float32
    cin, bb, Tp = x_ref.shape

    def sigmoid(v):
        # EUP tanh path; exact identity with 1/(1+exp(-v))
        return 0.5 * (jnp.tanh(0.5 * v) + 1.0)

    def shifted(h, d):
        # causal shift along time (lanes): out[:, t] = h[:, t-d], zero fill.
        # zeros||slice concat on the lane axis -> XLU work, no VMEM scratch.
        if d <= 0:
            return h
        if d >= Tp:
            return jnp.zeros_like(h)
        return jnp.concatenate([jnp.zeros((bb, d), f32), h[:, :Tp - d]], axis=1)

    def mix(hs, n_out, w_of, b_of=None, out=None):
        # out[o] (+)= sum_c p[w_of + o*len(hs) + c] * hs[c]   (+ p[b_of + o])
        # vector-scalar FMAs on the VPU; weights come straight from SMEM sregs.
        n_in = len(hs)
        res = []
        for o in range(n_out):
            acc = None if out is None else out[o]
            for c in range(n_in):
                term = p_ref[w_of + o * n_in + c] * hs[c]
                acc = term if acc is None else acc + term
            if b_of is not None:
                acc = acc + p_ref[b_of + o]
            res.append(acc)
        return res

    def causal_conv(hs, d, w_of, b_of, n_out):
        # 2-tap causal conv: tap 0 multiplies x[t-d], tap 1 multiplies x[t]
        n_in = len(hs)
        use_tap0 = d < Tp
        hs_s = [shifted(h, d) for h in hs] if use_tap0 else None
        res = []
        for o in range(n_out):
            acc = None
            for c in range(n_in):
                base = w_of + (o * n_in + c) * KERNEL_SIZE
                term = p_ref[base + 1] * hs[c]
                if use_tap0:
                    term = term + p_ref[base + 0] * hs_s[c]
                acc = term if acc is None else acc + term
            res.append(acc + p_ref[b_of + o])
        return res

    # linspace channel generated in-kernel with the TRUE-T scale (baked in by the
    # wrapper).  The padded time tail only feeds padded outputs (causality) and is
    # sliced off outside.
    t_idx = jax.lax.broadcasted_iota(jnp.int32, (bb, Tp), 1)
    lin = t_idx.astype(f32) * scale

    h_in = [x_ref[c].astype(f32) for c in range(cin)] + [lin]

    # conv1 (causal, dilation 1)
    h = causal_conv(h_in, 1, OFF_C1W, OFF_C1B, NC)
    taps = list(h)

    # residual blocks (unrolled at trace time; dilations are static)
    for i, d in enumerate(DILATIONS):
        base = OFF_BLK0 + i * BLK_SIZE
        a = causal_conv(h, d, base + BLK_W1, base + BLK_B1, 2 * NC)
        gated = [jnp.tanh(a[c]) * sigmoid(a[NC + c]) for c in range(NC)]
        h = mix(gated, NC, base + BLK_W2, base + BLK_B2, out=h)   # conv2(gated)+b+h
        taps = [taps[c] + h[c] for c in range(NC)]

    # aggregate taps (mean over 1 + NUM_BLOCKS taps) + ReLU
    inv = 1.0 / float(NUM_BLOCKS + 1)
    agg = [jnp.maximum(t * inv, 0.0) for t in taps]

    # conv2 (1x1) -> z, then fused heads
    z = mix(agg, 2 * NC, OFF_C2W, OFF_C2B)
    head = mix(z, NHEAD, OFF_HW, OFF_HB)

    pi_logits = head[:NCOMP1]
    if NUM_COMPONENTS == 1:
        # 2-way softmax in closed form: no cross-channel reduce
        p0 = sigmoid(pi_logits[0] - pi_logits[1])
        out_ref[0] = p0
        out_ref[1] = 1.0 - p0
    else:
        m = pi_logits[0]
        for l in pi_logits[1:]:
            m = jnp.maximum(m, l)
        es = [jnp.exp(l - m) for l in pi_logits]
        denom = es[0]
        for e in es[1:]:
            denom = denom + e
        for o, e in enumerate(es):
            out_ref[o] = e / denom

    for j in range(NUM_COMPONENTS):
        out_ref[NCOMP1 + j] = 2.0 * jnp.tanh(0.5 * head[NCOMP1 + j])
    for j in range(NUM_COMPONENTS):
        s = head[NCOMP1 + NUM_COMPONENTS + j]
        out_ref[NCOMP1 + NUM_COMPONENTS + j] = (
            jnp.maximum(s, 0.0) + jnp.log(1.0 + jnp.exp(-jnp.abs(s))))


# ------------------------------------------------------------------------------
# Parameter construction: PyTorch-shaped uniform init packed into ONE flat f32
# buffer of length N_PARAMS (row-major [out, in, tap] per tensor).
# ------------------------------------------------------------------------------
def init_params(key):
    def u(k, shape, fan_in):
        bound = float(fan_in) ** -0.5
        return jax.random.uniform(k, shape, jnp.float32, -bound, bound)

    keys = iter(jax.random.split(key, 64))
    K = KERNEL_SIZE
    parts = []

    # conv1 (causal, in = IN_CHANNELS + linspace)
    w = u(next(keys), (NC, CIN1, K), CIN1 * K)
    b = u(next(keys), (NC,), CIN1 * K)
    parts += [w.reshape(-1), b]

    # residual blocks
    for _ in range(NUM_BLOCKS):
        w1 = u(next(keys), (2 * NC, NC, K), NC * K)
        b1 = u(next(keys), (2 * NC,), NC * K)
        w2 = u(next(keys), (NC, NC), NC)
        b2 = u(next(keys), (NC,), NC)
        parts += [w1.reshape(-1), b1, w2.reshape(-1), b2]

    # conv2 (1x1)
    w = u(next(keys), (2 * NC, NC), NC)
    b = u(next(keys), (2 * NC,), NC)
    parts += [w.reshape(-1), b]

    # heads (1x1 convs from 2NC channels) fused: rows = pi (NCOMP1) | mu | sigma
    piw = u(next(keys), (NCOMP1, 2 * NC), 2 * NC)
    pib = u(next(keys), (NCOMP1,), 2 * NC)
    muw = u(next(keys), (NUM_COMPONENTS, 2 * NC), 2 * NC)
    mub = u(next(keys), (NUM_COMPONENTS,), 2 * NC)
    sgw = u(next(keys), (NUM_COMPONENTS, 2 * NC), 2 * NC)
    sgb = u(next(keys), (NUM_COMPONENTS,), 2 * NC)
    parts += [jnp.concatenate([piw, muw, sgw], axis=0).reshape(-1),
              jnp.concatenate([pib, mub, sgb], axis=0)]

    flat = jnp.concatenate(parts, axis=0)
    assert flat.shape == (N_PARAMS,)
    return flat


# ------------------------------------------------------------------------------
# Wrapper: PyTorch NCW in / NCW out.  Layout plumbing (transposes, batch/time
# padding, output split) stays in XLA; the kernel only sees lane-dense tiles.
# ------------------------------------------------------------------------------
def _round_up(a, m):
    return ((a + m - 1) // m) * m


@jax.jit
def mooncake_forward(x_ncw, flat_params):
    B, cin, T = x_ncw.shape
    Tp = _round_up(max(T, 1), 128)          # lane-dense time axis
    B8 = _round_up(B, 8)                    # batch on sublanes

    # Batch-block policy:
    #  * per-step VMEM footprint ~ 40 live f32 rows of length Tp per batch element
    #    (h/taps/a/gated/shifted intermediates + double-buffered in/out DMA tiles)
    #  * keep it under ~20 MiB so it fits the requested scoped VMEM on every gen
    #    (v7x has only 64 MiB physical VMEM)
    #  * when the batch has to be split, keep the step count even so both v7x
    #    TensorCores get work; single-step for small B avoids per-step overhead
    #    on 1-TC chips (v5e/v6e).
    per_row = 40 * 4 * Tp
    max_rows = max(8, ((20 << 20) // per_row) // 8 * 8)
    steps = -(-B8 // max_rows)
    if steps > 1 and steps % 2 == 1:
        steps += 1
    bb = _round_up(-(-B8 // steps), 8)
    Bp = steps * bb

    # TRUE-T linspace scale (padding T must not change the lin channel)
    scale = (T / MAX_NUM_SAMPLES) / (T - 1) if T > 1 else 0.0

    x = jnp.transpose(x_ncw.astype(jnp.float32), (1, 0, 2))      # [cin, B, T]
    x = jnp.pad(x, ((0, 0), (0, Bp - B), (0, Tp - T)))           # [cin, Bp, Tp]

    out = pl.pallas_call(
        functools.partial(mooncake_kernel, scale=scale),
        grid=(steps,),
        in_specs=[
            pl.BlockSpec((cin, bb, Tp), lambda b: (0, b, 0)),
            # flat parameter buffer -> SMEM; weights read as scalar operands
            pl.BlockSpec(memory_space=pltpu.MemorySpace.SMEM),
        ],
        out_specs=pl.BlockSpec((NHEAD, bb, Tp), lambda b: (0, b, 0)),
        out_shape=jax.ShapeDtypeStruct((NHEAD, Bp, Tp), jnp.float32),
        compiler_params=pltpu.CompilerParams(
            dimension_semantics=("parallel",),
            vmem_limit_bytes=32 << 20),
    )(x, flat_params)

    out = out[:, :B, :T]                                          # drop padding
    pi = jnp.transpose(out[:NCOMP1], (1, 0, 2))
    mu = jnp.transpose(out[NCOMP1:NCOMP1 + NUM_COMPONENTS], (1, 0, 2))
    sigma = jnp.transpose(out[NCOMP1 + NUM_COMPONENTS:], (1, 0, 2))
    return pi, mu, sigma


# ------------------------------------------------------------------------------
# Pure-JAX reference (same math, same flat params) for correctness check
# ------------------------------------------------------------------------------
def ref_forward(x_ncw, p):
    B, cin, T = x_ncw.shape
    x = x_ncw.astype(jnp.float32)
    lin = jnp.linspace(0.0, T / MAX_NUM_SAMPLES, T).astype(jnp.float32)
    h = jnp.concatenate([x, jnp.broadcast_to(lin[None, None, :], (B, 1, T))], 1)

    def shift(a, d):
        return jnp.pad(a, ((0, 0), (0, 0), (d, 0)))[:, :, :T]

    def cconv(hin, w, b, d):
        # w: [O, C, 2]; tap 0 -> x[t-d], tap 1 -> x[t]
        return (jnp.einsum('oc,bct->bot', w[:, :, 1], hin)
                + jnp.einsum('oc,bct->bot', w[:, :, 0], shift(hin, d))
                + b[None, :, None])

    c1w = p[OFF_C1W:OFF_C1B].reshape(NC, CIN1, KERNEL_SIZE)
    c1b = p[OFF_C1B:OFF_BLK0]
    h = cconv(h, c1w, c1b, 1)
    taps = h
    for i, d in enumerate(DILATIONS):
        base = OFF_BLK0 + i * BLK_SIZE
        w1 = p[base + BLK_W1:base + BLK_B1].reshape(2 * NC, NC, KERNEL_SIZE)
        b1 = p[base + BLK_B1:base + BLK_W2]
        w2 = p[base + BLK_W2:base + BLK_B2].reshape(NC, NC)
        b2 = p[base + BLK_B2:base + BLK_SIZE]
        a = cconv(h, w1, b1, d)
        gated = jnp.tanh(a[:, :NC, :]) * jax.nn.sigmoid(a[:, NC:, :])
        h = jnp.einsum('oc,bct->bot', w2, gated) + b2[None, :, None] + h
        taps = taps + h
    agg = jnp.maximum(taps / float(NUM_BLOCKS + 1), 0.0)
    c2w = p[OFF_C2W:OFF_C2B].reshape(2 * NC, NC)
    c2b = p[OFF_C2B:OFF_HW]
    z = jnp.einsum('oc,bct->bot', c2w, agg) + c2b[None, :, None]
    hw = p[OFF_HW:OFF_HB].reshape(NHEAD, 2 * NC)
    hb = p[OFF_HB:N_PARAMS]
    head = jnp.einsum('oc,bct->bot', hw, z) + hb[None, :, None]
    pi = jax.nn.softmax(head[:, :NCOMP1, :], axis=1)
    mu = 2.0 * jnp.tanh(head[:, NCOMP1:NCOMP1 + NUM_COMPONENTS, :] / 2.0)
    s = head[:, NCOMP1 + NUM_COMPONENTS:, :]
    sigma = jnp.maximum(s, 0.0) + jnp.log(1.0 + jnp.exp(-jnp.abs(s)))
    return pi, mu, sigma


if __name__ == "__main__":
    key = jax.random.PRNGKey(0)
    kx, kp = jax.random.split(key)

    B, T = 2, 16
    x = jax.random.normal(kx, (B, IN_CHANNELS, T), jnp.float32)   # PyTorch NCW input
    params = init_params(kp)

    pi, mu, sigma = mooncake_forward(x, params)
    jax.block_until_ready((pi, mu, sigma))

    pi_r, mu_r, sg_r = ref_forward(x, params)
    assert pi.shape == (B, NUM_COMPONENTS + 1, T)
    assert mu.shape == (B, NUM_COMPONENTS, T)
    assert sigma.shape == (B, NUM_COMPONENTS, T)
    assert jnp.allclose(pi, pi_r, atol=1e-4, rtol=1e-4)
    assert jnp.allclose(mu, mu_r, atol=1e-4, rtol=1e-4)
    assert jnp.allclose(sigma, sg_r, atol=1e-4, rtol=1e-4)

    print("KERNEL_OK")
</pallas_src>

<mosaic_0001>
module attributes {stable_mosaic.version = 11 : i64} {
  func.func @mooncake_kernel(%arg0: i32, %arg1: memref<1x8x128xf32, #tpu.memory_space<vmem>>, %arg2: memref<832xf32, #tpu.memory_space<smem>>, %arg3: memref<4x8x128xf32, #tpu.memory_space<vmem>>) attributes {dimension_semantics = [#tpu.dimension_semantics<parallel>], iteration_bounds = array<i64: 1>, scalar_prefetch = 0 : i64, scratch_operands = 0 : i64, tpu.core_type = #tpu.core_type<tc>, window_params = [{transform_indices = @transform_0, window_bounds = array<i64: 1, 8, 128>}, {transform_indices = @transform_1, window_bounds = array<i64: 832>}, {transform_indices = @transform_2, window_bounds = array<i64: 4, 8, 128>}]} {
    %0 = tpu.iota {dimensions = array<i32: 1>} : vector<8x128xi32>
    %1 = arith.sitofp %0 : vector<8x128xi32> to vector<8x128xf32>
    %cst = arith.constant 0.00533333328 : f32
    %2 = vector.broadcast %cst : f32 to vector<8x128xf32>
    %3 = arith.mulf %1, %2 : vector<8x128xf32>
    %c0 = arith.constant 0 : index
    %c0_0 = arith.constant 0 : index
    %c0_1 = arith.constant 0 : index
    %4 = vector.load %arg1[%c0, %c0_0, %c0_1] : memref<1x8x128xf32, #tpu.memory_space<vmem>>, vector<1x8x128xf32>
    %5 = vector.shape_cast %4 : vector<1x8x128xf32> to vector<8x128xf32>
    %cst_2 = arith.constant 0.000000e+00 : f32
    %6 = vector.broadcast %cst_2 : f32 to vector<8x1xf32>
    %7 = vector.extract_strided_slice %5 {offsets = [0, 0], sizes = [8, 127], strides = [1, 1]} : vector<8x128xf32> to vector<8x127xf32>
    %8 = tpu.concatenate %6, %7 in 1 : vector<8x1xf32>, vector<8x127xf32> -> vector<8x128xf32>
    %cst_3 = arith.constant 0.000000e+00 : f32
    %9 = vector.broadcast %cst_3 : f32 to vector<8x1xf32>
    %10 = vector.extract_strided_slice %3 {offsets = [0, 0], sizes = [8, 127], strides = [1, 1]} : vector<8x128xf32> to vector<8x127xf32>
    %11 = tpu.concatenate %9, %10 in 1 : vector<8x1xf32>, vector<8x127xf32> -> vector<8x128xf32>
    %c1 = arith.constant 1 : index
    %12 = memref.load %arg2[%c1] : memref<832xf32, #tpu.memory_space<smem>>
    %13 = vector.broadcast %12 : f32 to vector<8x128xf32>
    %14 = arith.mulf %13, %5 : vector<8x128xf32>
    %c0_4 = arith.constant 0 : index
    %15 = memref.load %arg2[%c0_4] : memref<832xf32, #tpu.memory_space<smem>>
    %16 = vector.broadcast %15 : f32 to vector<8x128xf32>
    %17 = arith.mulf %16, %8 : vector<8x128xf32>
    %18 = arith.addf %14, %17 : vector<8x128xf32>
    %c3 = arith.constant 3 : index
    %19 = memref.load %arg2[%c3] : memref<832xf32, #tpu.memory_space<smem>>
    %20 = vector.broadcast %19 : f32 to vector<8x128xf32>
    %21 = arith.mulf %20, %3 : vector<8x128xf32>
    %c2 = arith.constant 2 : index
    %22 = memref.load %arg2[%c2] : memref<832xf32, #tpu.memory_space<smem>>
    %23 = vector.broadcast %22 : f32 to vector<8x128xf32>
    %24 = arith.mulf %23, %11 : vector<8x128xf32>
    %25 = arith.addf %21, %24 : vector<8x128xf32>
    %26 = arith.addf %18, %25 : vector<8x128xf32>
    %c16 = arith.constant 16 : index
    %27 = memref.load %arg2[%c16] : memref<832xf32, #tpu.memory_space<smem>>
    %28 = vector.broadcast %27 : f32 to vector<8x128xf32>
    %29 = arith.addf %26, %28 : vector<8x128xf32>
    %c5 = arith.constant 5 : index
    %30 = memref.load %arg2[%c5] : memref<832xf32, #tpu.memory_space<smem>>
    %31 = vector.broadcast %30 : f32 to vector<8x128xf32>
    %32 = arith.mulf %31, %5 : vector<8x128xf32>
    %c4 = arith.constant 4 : index
    %33 = memref.load %arg2[%c4] : memref<832xf32, #tpu.memory_space<smem>>
    %34 = vector.broadcast %33 : f32 to vector<8x128xf32>
    %35 = arith.mulf %34, %8 : vector<8x128xf32>
    %36 = arith.addf %32, %35 : vector<8x128xf32>
    %c7 = arith.constant 7 : index
    %37 = memref.load %arg2[%c7] : memref<832xf32, #tpu.memory_space<smem>>
    %38 = vector.broadcast %37 : f32 to vector<8x128xf32>
    %39 = arith.mulf %38, %3 : vector<8x128xf32>
    %c6 = arith.constant 6 : index
    %40 = memref.load %arg2[%c6] : memref<832xf32, #tpu.memory_space<smem>>
    %41 = vector.broadcast %40 : f32 to vector<8x128xf32>
    %42 = arith.mulf %41, %11 : vector<8x128xf32>
    %43 = arith.addf %39, %42 : vector<8x128xf32>
    %44 = arith.addf %36, %43 : vector<8x128xf32>
    %c17 = arith.constant 17 : index
    %45 = memref.load %arg2[%c17] : memref<832xf32, #tpu.memory_space<smem>>
    %46 = vector.broadcast %45 : f32 to vector<8x128xf32>
    %47 = arith.addf %44, %46 : vector<8x128xf32>
    %c9 = arith.constant 9 : index
    %48 = memref.load %arg2[%c9] : memref<832xf32, #tpu.memory_space<smem>>
    %49 = vector.broadcast %48 : f32 to vector<8x128xf32>
    %50 = arith.mulf %49, %5 : vector<8x128xf32>
    %c8 = arith.constant 8 : index
    %51 = memref.load %arg2[%c8] : memref<832xf32, #tpu.memory_space<smem>>
    %52 = vector.broadcast %51 : f32 to vector<8x128xf32>
    %53 = arith.mulf %52, %8 : vector<8x128xf32>
    %54 = arith.addf %50, %53 : vector<8x128xf32>
    %c11 = arith.constant 11 : index
    %55 = memref.load %arg2[%c11] : memref<832xf32, #tpu.memory_space<smem>>
    %56 = vector.broadcast %55 : f32 to vector<8x128xf32>
    %57 = arith.mulf %56, %3 : vector<8x128xf32>
    %c10 = arith.constant 10 : index
    %58 = memref.load %arg2[%c10] : memref<832xf32, #tpu.memory_space<smem>>
    %59 = vector.broadcast %58 : f32 to vector<8x128xf32>
    %60 = arith.mulf %59, %11 : vector<8x128xf32>
    %61 = arith.addf %57, %60 : vector<8x128xf32>
    %62 = arith.addf %54, %61 : vector<8x128xf32>
    %c18 = arith.constant 18 : index
    %63 = memref.load %arg2[%c18] : memref<832xf32, #tpu.memory_space<smem>>
    %64 = vector.broadcast %63 : f32 to vector<8x128xf32>
    %65 = arith.addf %62, %64 : vector<8x128xf32>
    %c13 = arith.constant 13 : index
    %66 = memref.load %arg2[%c13] : memref<832xf32, #tpu.memory_space<smem>>
    %67 = vector.broadcast %66 : f32 to vector<8x128xf32>
    %68 = arith.mulf %67, %5 : vector<8x128xf32>
    %c12 = arith.constant 12 : index
    %69 = memref.load %arg2[%c12] : memref<832xf32, #tpu.memory_space<smem>>
    %70 = vector.broadcast %69 : f32 to vector<8x128xf32>
    %71 = arith.mulf %70, %8 : vector<8x128xf32>
    %72 = arith.addf %68, %71 : vector<8x128xf32>
    %c15 = arith.constant 15 : index
    %73 = memref.load %arg2[%c15] : memref<832xf32, #tpu.memory_space<smem>>
    %74 = vector.broadcast %73 : f32 to vector<8x128xf32>
    %75 = arith.mulf %74, %3 : vector<8x128xf32>
    %c14 = arith.constant 14 : index
    %76 = memref.load %arg2[%c14] : memref<832xf32, #tpu.memory_space<smem>>
    %77 = vector.broadcast %76 : f32 to vector<8x128xf32>
    %78 = arith.mulf %77, %11 : vector<8x128xf32>
    %79 = arith.addf %75, %78 : vector<8x128xf32>
    %80 = arith.addf %72, %79 : vector<8x128xf32>
    %c19 = arith.constant 19 : index
    %81 = memref.load %arg2[%c19] : memref<832xf32, #tpu.memory_space<smem>>
    %82 = vector.broadcast %81 : f32 to vector<8x128xf32>
    %83 = arith.addf %80, %82 : vector<8x128xf32>
    %cst_5 = arith.constant 0.000000e+00 : f32
    %84 = vector.broadcast %cst_5 : f32 to vector<8x1xf32>
    %85 = vector.extract_strided_slice %29 {offsets = [0, 0], sizes = [8, 127], strides = [1, 1]} : vector<8x128xf32> to vector<8x127xf32>
    %86 = tpu.concatenate %84, %85 in 1 : vector<8x1xf32>, vector<8x127xf32> -> vector<8x128xf32>
    %cst_6 = arith.constant 0.000000e+00 : f32
    %87 = vector.broadcast %cst_6 : f32 to vector<8x1xf32>
    %88 = vector.extract_strided_slice %47 {offsets = [0, 0], sizes = [8, 127], strides = [1, 1]} : vector<8x128xf32> to vector<8x127xf32>
    %89 = tpu.concatenate %87, %88 in 1 : vector<8x1xf32>, vector<8x127xf32> -> vector<8x128xf32>
    %cst_7 = arith.constant 0.000000e+00 : f32
    %90 = vector.broadcast %cst_7 : f32 to vector<8x1xf32>
    %91 = vector.extract_strided_slice %65 {offsets = [0, 0], sizes = [8, 127], strides = [1, 1]} : vector<8x128xf32> to vector<8x127xf32>
    %92 = tpu.concatenate %90, %91 in 1 : vector<8x1xf32>, vector<8x127xf32> -> vector<8x128xf32>
    %cst_8 = arith.constant 0.000000e+00 : f32
    %93 = vector.broadcast %cst_8 : f32 to vector<8x1xf32>
    %94 = vector.extract_strided_slice %83 {offsets = [0, 0], sizes = [8, 127], strides = [1, 1]} : vector<8x128xf32> to vector<8x127xf32>
    %95 = tpu.concatenate %93, %94 in 1 : vector<8x1xf32>, vector<8x127xf32> -> vector<8x128xf32>
    %c21 = arith.constant 21 : index
    %96 = memref.load %arg2[%c21] : memref<832xf32, #tpu.memory_space<smem>>
    %97 = vector.broadcast %96 : f32 to vector<8x128xf32>
    %98 = arith.mulf %97, %29 : vector<8x128xf32>
    %c20 = arith.constant 20 : index
    %99 = memref.load %arg2[%c20] : memref<832xf32, #tpu.memory_space<smem>>
    %100 = vector.broadcast %99 : f32 to vector<8x128xf32>
    %101 = arith.mulf %100, %86 : vector<8x128xf32>
    %102 = arith.addf %98, %101 : vector<8x128xf32>
    %c23 = arith.constant 23 : index
    %103 = memref.load %arg2[%c23] : memref<832xf32, #tpu.memory_space<smem>>
    %104 = vector.broadcast %103 : f32 to vector<8x128xf32>
    %105 = arith.mulf %104, %47 : vector<8x128xf32>
    %c22 = arith.constant 22 : index
    %106 = memref.load %arg2[%c22] : memref<832xf32, #tpu.memory_space<smem>>
    %107 = vector.broadcast %106 : f32 to vector<8x128xf32>
    %108 = arith.mulf %107, %89 : vector<8x128xf32>
    %109 = arith.addf %105, %108 : vector<8x128xf32>
    %110 = arith.addf %102, %109 : vector<8x128xf32>
    %c25 = arith.constant 25 : index
    %111 = memref.load %arg2[%c25] : memref<832xf32, #tpu.memory_space<smem>>
    %112 = vector.broadcast %111 : f32 to vector<8x128xf32>
    %113 = arith.mulf %112, %65 : vector<8x128xf32>
    %c24 = arith.constant 24 : index
    %114 = memref.load %arg2[%c24] : memref<832xf32, #tpu.memory_space<smem>>
    %115 = vector.broadcast %114 : f32 to vector<8x128xf32>
    %116 = arith.mulf %115, %92 : vector<8x128xf32>
    %117 = arith.addf %113, %116 : vector<8x128xf32>
    %118 = arith.addf %110, %117 : vector<8x128xf32>
    %c27 = arith.constant 27 : index
    %119 = memref.load %arg2[%c27] : memref<832xf32, #tpu.memory_space<smem>>
    %120 = vector.broadcast %119 : f32 to vector<8x128xf32>
    %121 = arith.mulf %120, %83 : vector<8x128xf32>
    %c26 = arith.constant 26 : index
    %122 = memref.load %arg2[%c26] : memref<832xf32, #tpu.memory_space<smem>>
    %123 = vector.broadcast %122 : f32 to vector<8x128xf32>
    %124 = arith.mulf %123, %95 : vector<8x128xf32>
    %125 = arith.addf %121, %124 : vector<8x128xf32>
    %126 = arith.addf %118, %125 : vector<8x128xf32>
    %c84 = arith.constant 84 : index
    %127 = memref.load %arg2[%c84] : memref<832xf32, #tpu.memory_space<smem>>
    %128 = vector.broadcast %127 : f32 to vector<8x128xf32>
    %129 = arith.addf %126, %128 : vector<8x128xf32>
    %c29 = arith.constant 29 : index
    %130 = memref.load %arg2[%c29] : memref<832xf32, #tpu.memory_space<smem>>
    %131 = vector.broadcast %130 : f32 to vector<8x128xf32>
    %132 = arith.mulf %131, %29 : vector<8x128xf32>
    %c28 = arith.constant 28 : index
    %133 = memref.load %arg2[%c28] : memref<832xf32, #tpu.memory_space<smem>>
    %134 = vector.broadcast %133 : f32 to vector<8x128xf32>
    %135 = arith.mulf %134, %86 : vector<8x128xf32>
    %136 = arith.addf %132, %135 : vector<8x128xf32>
    %c31 = arith.constant 31 : index
    %137 = memref.load %arg2[%c31] : memref<832xf32, #tpu.memory_space<smem>>
    %138 = vector.broadcast %137 : f32 to vector<8x128xf32>
    %139 = arith.mulf %138, %47 : vector<8x128xf32>
    %c30 = arith.constant 30 : index
    %140 = memref.load %arg2[%c30] : memref<832xf32, #tpu.memory_space<smem>>
    %141 = vector.broadcast %140 : f32 to vector<8x128xf32>
    %142 = arith.mulf %141, %89 : vector<8x128xf32>
    %143 = arith.addf %139, %142 : vector<8x128xf32>
    %144 = arith.addf %136, %143 : vector<8x128xf32>
    %c33 = arith.constant 33 : index
    %145 = memref.load %arg2[%c33] : memref<832xf32, #tpu.memory_space<smem>>
    %146 = vector.broadcast %145 : f32 to vector<8x128xf32>
    %147 = arith.mulf %146, %65 : vector<8x128xf32>
    %c32 = arith.constant 32 : index
    %148 = memref.load %arg2[%c32] : memref<832xf32, #tpu.memory_space<smem>>
    %149 = vector.broadcast %148 : f32 to vector<8x128xf32>
    %150 = arith.mulf %149, %92 : vector<8x128xf32>
    %151 = arith.addf %147, %150 : vector<8x128xf32>
    %152 = arith.addf %144, %151 : vector<8x128xf32>
    %c35 = arith.constant 35 : index
    %153 = memref.load %arg2[%c35] : memref<832xf32, #tpu.memory_space<smem>>
    %154 = vector.broadcast %153 : f32 to vector<8x128xf32>
    %155 = arith.mulf %154, %83 : vector<8x128xf32>
    %c34 = arith.constant 34 : index
    %156 = memref.load %arg2[%c34] : memref<832xf32, #tpu.memory_space<smem>>
    %157 = vector.broadcast %156 : f32 to vector<8x128xf32>
    %158 = arith.mulf %157, %95 : vector<8x128xf32>
    %159 = arith.addf %155, %158 : vector<8x128xf32>
    %160 = arith.addf %152, %159 : vector<8x128xf32>
    %c85 = arith.constant 85 : index
    %161 = memref.load %arg2[%c85] : memref<832xf32, #tpu.memory_space<smem>>
    %162 = vector.broadcast %161 : f32 to vector<8x128xf32>
    %163 = arith.addf %160, %162 : vector<8x128xf32>
    %c37 = arith.constant 37 : index
    %164 = memref.load %arg2[%c37] : memref<832xf32, #tpu.memory_space<smem>>
    %165 = vector.broadcast %164 : f32 to vector<8x128xf32>
    %166 = arith.mulf %165, %29 : vector<8x128xf32>
    %c36 = arith.constant 36 : index
    %167 = memref.load %arg2[%c36] : memref<832xf32, #tpu.memory_space<smem>>
    %168 = vector.broadcast %167 : f32 to vector<8x128xf32>
    %169 = arith.mulf %168, %86 : vector<8x128xf32>
    %170 = arith.addf %166, %169 : vector<8x128xf32>
    %c39 = arith.constant 39 : index
    %171 = memref.load %arg2[%c39] : memref<832xf32, #tpu.memory_space<smem>>
    %172 = vector.broadcast %171 : f32 to vector<8x128xf32>
    %173 = arith.mulf %172, %47 : vector<8x128xf32>
    %c38 = arith.constant 38 : index
    %174 = memref.load %arg2[%c38] : memref<832xf32, #tpu.memory_space<smem>>
    %175 = vector.broadcast %174 : f32 to vector<8x128xf32>
    %176 = arith.mulf %175, %89 : vector<8x128xf32>
    %177 = arith.addf %173, %176 : vector<8x128xf32>
    %178 = arith.addf %170, %177 : vector<8x128xf32>
    %c41 = arith.constant 41 : index
    %179 = memref.load %arg2[%c41] : memref<832xf32, #tpu.memory_space<smem>>
    %180 = vector.broadcast %179 : f32 to vector<8x128xf32>
    %181 = arith.mulf %180, %65 : vector<8x128xf32>
    %c40 = arith.constant 40 : index
    %182 = memref.load %arg2[%c40] : memref<832xf32, #tpu.memory_space<smem>>
    %183 = vector.broadcast %182 : f32 to vector<8x128xf32>
    %184 = arith.mulf %183, %92 : vector<8x128xf32>
    %185 = arith.addf %181, %184 : vector<8x128xf32>
    %186 = arith.addf %178, %185 : vector<8x128xf32>
    %c43 = arith.constant 43 : index
    %187 = memref.load %arg2[%c43] : memref<832xf32, #tpu.memory_space<smem>>
    %188 = vector.broadcast %187 : f32 to vector<8x128xf32>
    %189 = arith.mulf %188, %83 : vector<8x128xf32>
    %c42 = arith.constant 42 : index
    %190 = memref.load %arg2[%c42] : memref<832xf32, #tpu.memory_space<smem>>
    %191 = vector.broadcast %190 : f32 to vector<8x128xf32>
    %192 = arith.mulf %191, %95 : vector<8x128xf32>
    %193 = arith.addf %189, %192 : vector<8x128xf32>
    %194 = arith.addf %186, %193 : vector<8x128xf32>
    %c86 = arith.constant 86 : index
    %195 = memref.load %arg2[%c86] : memref<832xf32, #tpu.memory_space<smem>>
    %196 = vector.broadcast %195 : f32 to vector<8x128xf32>
    %197 = arith.addf %194, %196 : vector<8x128xf32>
    %c45 = arith.constant 45 : index
    %198 = memref.load %arg2[%c45] : memref<832xf32, #tpu.memory_space<smem>>
    %199 = vector.broadcast %198 : f32 to vector<8x128xf32>
    %200 = arith.mulf %199, %29 : vector<8x128xf32>
    %c44 = arith.constant 44 : index
    %201 = memref.load %arg2[%c44] : memref<832xf32, #tpu.memory_space<smem>>
    %202 = vector.broadcast %201 : f32 to vector<8x128xf32>
    %203 = arith.mulf %202, %86 : vector<8x128xf32>
    %204 = arith.addf %200, %203 : vector<8x128xf32>
    %c47 = arith.constant 47 : index
    %205 = memref.load %arg2[%c47] : memref<832xf32, #tpu.memory_space<smem>>
    %206 = vector.broadcast %205 : f32 to vector<8x128xf32>
    %207 = arith.mulf %206, %47 : vector<8x128xf32>
    %c46 = arith.constant 46 : index
    %208 = memref.load %arg2[%c46] : memref<832xf32, #tpu.memory_space<smem>>
    %209 = vector.broadcast %208 : f32 to vector<8x128xf32>
    %210 = arith.mulf %209, %89 : vector<8x128xf32>
    %211 = arith.addf %207, %210 : vector<8x128xf32>
    %212 = arith.addf %204, %211 : vector<8x128xf32>
    %c49 = arith.constant 49 : index
    %213 = memref.load %arg2[%c49] : memref<832xf32, #tpu.memory_space<smem>>
    %214 = vector.broadcast %213 : f32 to vector<8x128xf32>
    %215 = arith.mulf %214, %65 : vector<8x128xf32>
    %c48 = arith.constant 48 : index
    %216 = memref.load %arg2[%c48] : memref<832xf32, #tpu.memory_space<smem>>
    %217 = vector.broadcast %216 : f32 to vector<8x128xf32>
    %218 = arith.mulf %217, %92 : vector<8x128xf32>
    %219 = arith.addf %215, %218 : vector<8x128xf32>
    %220 = arith.addf %212, %219 : vector<8x128xf32>
    %c51 = arith.constant 51 : index
    %221 = memref.load %arg2[%c51] : memref<832xf32, #tpu.memory_space<smem>>
    %222 = vector.broadcast %221 : f32 to vector<8x128xf32>
    %223 = arith.mulf %222, %83 : vector<8x128xf32>
    %c50 = arith.constant 50 : index
    %224 = memref.load %arg2[%c50] : memref<832xf32, #tpu.memory_space<smem>>
    %225 = vector.broadcast %224 : f32 to vector<8x128xf32>
    %226 = arith.mulf %225, %95 : vector<8x128xf32>
    %227 = arith.addf %223, %226 : vector<8x128xf32>
    %228 = arith.addf %220, %227 : vector<8x128xf32>
    %c87 = arith.constant 87 : index
    %229 = memref.load %arg2[%c87] : memref<832xf32, #tpu.memory_space<smem>>
    %230 = vector.broadcast %229 : f32 to vector<8x128xf32>
    %231 = arith.addf %228, %230 : vector<8x128xf32>
    %c53 = arith.constant 53 : index
    %232 = memref.load %arg2[%c53] : memref<832xf32, #tpu.memory_space<smem>>
    %233 = vector.broadcast %232 : f32 to vector<8x128xf32>
    %234 = arith.mulf %233, %29 : vector<8x128xf32>
    %c52 = arith.constant 52 : index
    %235 = memref.load %arg2[%c52] : memref<832xf32, #tpu.memory_space<smem>>
    %236 = vector.broadcast %235 : f32 to vector<8x128xf32>
    %237 = arith.mulf %236, %86 : vector<8x128xf32>
    %238 = arith.addf %234, %237 : vector<8x128xf32>
    %c55 = arith.constant 55 : index
    %239 = memref.load %arg2[%c55] : memref<832xf32, #tpu.memory_space<smem>>
    %240 = vector.broadcast %239 : f32 to vector<8x128xf32>
    %241 = arith.mulf %240, %47 : vector<8x128xf32>
    %c54 = arith.constant 54 : index
    %242 = memref.load %arg2[%c54] : memref<832xf32, #tpu.memory_space<smem>>
    %243 = vector.broadcast %242 : f32 to vector<8x128xf32>
    %244 = arith.mulf %243, %89 : vector<8x128xf32>
    %245 = arith.addf %241, %244 : vector<8x128xf32>
    %246 = arith.addf %238, %245 : vector<8x128xf32>
    %c57 = arith.constant 57 : index
    %247 = memref.load %arg2[%c57] : memref<832xf32, #tpu.memory_space<smem>>
    %248 = vector.broadcast %247 : f32 to vector<8x128xf32>
    %249 = arith.mulf %248, %65 : vector<8x128xf32>
    %c56 = arith.constant 56 : index
    %250 = memref.load %arg2[%c56] : memref<832xf32, #tpu.memory_space<smem>>
    %251 = vector.broadcast %250 : f32 to vector<8x128xf32>
    %252 = arith.mulf %251, %92 : vector<8x128xf32>
    %253 = arith.addf %249, %252 : vector<8x128xf32>
    %254 = arith.addf %246, %253 : vector<8x128xf32>
    %c59 = arith.constant 59 : index
    %255 = memref.load %arg2[%c59] : memref<832xf32, #tpu.memory_space<smem>>
    %256 = vector.broadcast %255 : f32 to vector<8x128xf32>
    %257 = arith.mulf %256, %83 : vector<8x128xf32>
    %c58 = arith.constant 58 : index
    %258 = memref.load %arg2[%c58] : memref<832xf32, #tpu.memory_space<smem>>
    %259 = vector.broadcast %258 : f32 to vector<8x128xf32>
    %260 = arith.mulf %259, %95 : vector<8x128xf32>
    %261 = arith.addf %257, %260 : vector<8x128xf32>
    %262 = arith.addf %254, %261 : vector<8x128xf32>
    %c88 = arith.constant 88 : index
    %263 = memref.load %arg2[%c88] : memref<832xf32, #tpu.memory_space<smem>>
    %264 = vector.broadcast %263 : f32 to vector<8x128xf32>
    %265 = arith.addf %262, %264 : vector<8x128xf32>
    %c61 = arith.constant 61 : index
    %266 = memref.load %arg2[%c61] : memref<832xf32, #tpu.memory_space<smem>>
    %267 = vector.broadcast %266 : f32 to vector<8x128xf32>
    %268 = arith.mulf %267, %29 : vector<8x128xf32>
    %c60 = arith.constant 60 : index
    %269 = memref.load %arg2[%c60] : memref<832xf32, #tpu.memory_space<smem>>
    %270 = vector.broadcast %269 : f32 to vector<8x128xf32>
    %271 = arith.mulf %270, %86 : vector<8x128xf32>
    %272 = arith.addf %268, %271 : vector<8x128xf32>
    %c63 = arith.constant 63 : index
    %273 = memref.load %arg2[%c63] : memref<832xf32, #tpu.memory_space<smem>>
    %274 = vector.broadcast %273 : f32 to vector<8x128xf32>
    %275 = arith.mulf %274, %47 : vector<8x128xf32>
    %c62 = arith.constant 62 : index
    %276 = memref.load %arg2[%c62] : memref<832xf32, #tpu.memory_space<smem>>
    %277 = vector.broadcast %276 : f32 to vector<8x128xf32>
    %278 = arith.mulf %277, %89 : vector<8x128xf32>
    %279 = arith.addf %275, %278 : vector<8x128xf32>
    %280 = arith.addf %272, %279 : vector<8x128xf32>
    %c65 = arith.constant 65 : index
    %281 = memref.load %arg2[%c65] : memref<832xf32, #tpu.memory_space<smem>>
    %282 = vector.broadcast %281 : f32 to vector<8x128xf32>
    %283 = arith.mulf %282, %65 : vector<8x128xf32>
    %c64 = arith.constant 64 : index
    %284 = memref.load %arg2[%c64] : memref<832xf32, #tpu.memory_space<smem>>
    %285 = vector.broadcast %284 : f32 to vector<8x128xf32>
    %286 = arith.mulf %285, %92 : vector<8x128xf32>
    %287 = arith.addf %283, %286 : vector<8x128xf32>
    %288 = arith.addf %280, %287 : vector<8x128xf32>
    %c67 = arith.constant 67 : index
    %289 = memref.load %arg2[%c67] : memref<832xf32, #tpu.memory_space<smem>>
    %290 = vector.broadcast %289 : f32 to vector<8x128xf32>
    %291 = arith.mulf %290, %83 : vector<8x128xf32>
    %c66 = arith.constant 66 : index
    %292 = memref.load %arg2[%c66] : memref<832xf32, #tpu.memory_space<smem>>
    %293 = vector.broadcast %292 : f32 to vector<8x128xf32>
    %294 = arith.mulf %293, %95 : vector<8x128xf32>
    %295 = arith.addf %291, %294 : vector<8x128xf32>
    %296 = arith.addf %288, %295 : vector<8x128xf32>
    %c89 = arith.constant 89 : index
    %297 = memref.load %arg2[%c89] : memref<832xf32, #tpu.memory_space<smem>>
    %298 = vector.broadcast %297 : f32 to vector<8x128xf32>
    %299 = arith.addf %296, %298 : vector<8x128xf32>
    %c69 = arith.constant 69 : index
    %300 = memref.load %arg2[%c69] : memref<832xf32, #tpu.memory_space<smem>>
    %301 = vector.broadcast %300 : f32 to vector<8x128xf32>
    %302 = arith.mulf %301, %29 : vector<8x128xf32>
    %c68 = arith.constant 68 : index
    %303 = memref.load %arg2[%c68] : memref<832xf32, #tpu.memory_space<smem>>
    %304 = vector.broadcast %303 : f32 to vector<8x128xf32>
    %305 = arith.mulf %304, %86 : vector<8x128xf32>
    %306 = arith.addf %302, %305 : vector<8x128xf32>
    %c71 = arith.constant 71 : index
    %307 = memref.load %arg2[%c71] : memref<832xf32, #tpu.memory_space<smem>>
    %308 = vector.broadcast %307 : f32 to vector<8x128xf32>
    %309 = arith.mulf %308, %47 : vector<8x128xf32>
    %c70 = arith.constant 70 : index
    %310 = memref.load %arg2[%c70] : memref<832xf32, #tpu.memory_space<smem>>
    %311 = vector.broadcast %310 : f32 to vector<8x128xf32>
    %312 = arith.mulf %311, %89 : vector<8x128xf32>
    %313 = arith.addf %309, %312 : vector<8x128xf32>
    %314 = arith.addf %306, %313 : vector<8x128xf32>
    %c73 = arith.constant 73 : index
    %315 = memref.load %arg2[%c73] : memref<832xf32, #tpu.memory_space<smem>>
    %316 = vector.broadcast %315 : f32 to vector<8x128xf32>
    %317 = arith.mulf %316, %65 : vector<8x128xf32>
    %c72 = arith.constant 72 : index
    %318 = memref.load %arg2[%c72] : memref<832xf32, #tpu.memory_space<smem>>
    %319 = vector.broadcast %318 : f32 to vector<8x128xf32>
    %320 = arith.mulf %319, %92 : vector<8x128xf32>
    %321 = arith.addf %317, %320 : vector<8x128xf32>
    %322 = arith.addf %314, %321 : vector<8x128xf32>
    %c75 = arith.constant 75 : index
    %323 = memref.load %arg2[%c75] : memref<832xf32, #tpu.memory_space<smem>>
    %324 = vector.broadcast %323 : f32 to vector<8x128xf32>
    %325 = arith.mulf %324, %83 : vector<8x128xf32>
    %c74 = arith.constant 74 : index
    %326 = memref.load %arg2[%c74] : memref<832xf32, #tpu.memory_space<smem>>
    %327 = vector.broadcast %326 : f32 to vector<8x128xf32>
    %328 = arith.mulf %327, %95 : vector<8x128xf32>
    %329 = arith.addf %325, %328 : vector<8x128xf32>
    %330 = arith.addf %322, %329 : vector<8x128xf32>
    %c90 = arith.constant 90 : index
    %331 = memref.load %arg2[%c90] : memref<832xf32, #tpu.memory_space<smem>>
    %332 = vector.broadcast %331 : f32 to vector<8x128xf32>
    %333 = arith.addf %330, %332 : vector<8x128xf32>
    %c77 = arith.constant 77 : index
    %334 = memref.load %arg2[%c77] : memref<832xf32, #tpu.memory_space<smem>>
    %335 = vector.broadcast %334 : f32 to vector<8x128xf32>
    %336 = arith.mulf %335, %29 : vector<8x128xf32>
    %c76 = arith.constant 76 : index
    %337 = memref.load %arg2[%c76] : memref<832xf32, #tpu.memory_space<smem>>
    %338 = vector.broadcast %337 : f32 to vector<8x128xf32>
    %339 = arith.mulf %338, %86 : vector<8x128xf32>
    %340 = arith.addf %336, %339 : vector<8x128xf32>
    %c79 = arith.constant 79 : index
    %341 = memref.load %arg2[%c79] : memref<832xf32, #tpu.memory_space<smem>>
    %342 = vector.broadcast %341 : f32 to vector<8x128xf32>
    %343 = arith.mulf %342, %47 : vector<8x128xf32>
    %c78 = arith.constant 78 : index
    %344 = memref.load %arg2[%c78] : memref<832xf32, #tpu.memory_space<smem>>
    %345 = vector.broadcast %344 : f32 to vector<8x128xf32>
    %346 = arith.mulf %345, %89 : vector<8x128xf32>
    %347 = arith.addf %343, %346 : vector<8x128xf32>
    %348 = arith.addf %340, %347 : vector<8x128xf32>
    %c81 = arith.constant 81 : index
    %349 = memref.load %arg2[%c81] : memref<832xf32, #tpu.memory_space<smem>>
    %350 = vector.broadcast %349 : f32 to vector<8x128xf32>
    %351 = arith.mulf %350, %65 : vector<8x128xf32>
    %c80 = arith.constant 80 : index
    %352 = memref.load %arg2[%c80] : memref<832xf32, #tpu.memory_space<smem>>
    %353 = vector.broadcast %352 : f32 to vector<8x128xf32>
    %354 = arith.mulf %353, %92 : vector<8x128xf32>
    %355 = arith.addf %351, %354 : vector<8x128xf32>
    %356 = arith.addf %348, %355 : vector<8x128xf32>
    %c83 = arith.constant 83 : index
    %357 = memref.load %arg2[%c83] : memref<832xf32, #tpu.memory_space<smem>>
    %358 = vector.broadcast %357 : f32 to vector<8x128xf32>
    %359 = arith.mulf %358, %83 : vector<8x128xf32>
    %c82 = arith.constant 82 : index
    %360 = memref.load %arg2[%c82] : memref<832xf32, #tpu.memory_space<smem>>
    %361 = vector.broadcast %360 : f32 to vector<8x128xf32>
    %362 = arith.mulf %361, %95 : vector<8x128xf32>
    %363 = arith.addf %359, %362 : vector<8x128xf32>
    %364 = arith.addf %356, %363 : vector<8x128xf32>
    %c91 = arith.constant 91 : index
    %365 = memref.load %arg2[%c91] : memref<832xf32, #tpu.memory_space<smem>>
    %366 = vector.broadcast %365 : f32 to vector<8x128xf32>
    %367 = arith.addf %364, %366 : vector<8x128xf32>
    %368 = math.tanh %129 : vector<8x128xf32>
    %cst_9 = arith.constant 5.000000e-01 : f32
    %369 = vector.broadcast %cst_9 : f32 to vector<8x128xf32>
    %370 = arith.mulf %369, %265 : vector<8x128xf32>
    %371 = math.tanh %370 : vector<8x128xf32>
    %cst_10 = arith.constant 1.000000e+00 : f32
    %372 = vector.broadcast %cst_10 : f32 to vector<8x128xf32>
    %373 = arith.addf %371, %372 : vector<8x128xf32>
    %cst_11 = arith.constant 5.000000e-01 : f32
    %374 = vector.broadcast %cst_11 : f32 to vector<8x128xf32>
    %375 = arith.mulf %374, %373 : vector<8x128xf32>
    %376 = arith.mulf %368, %375 : vector<8x128xf32>
    %377 = math.tanh %163 : vector<8x128xf32>
    %cst_12 = arith.constant 5.000000e-01 : f32
    %378 = vector.broadcast %cst_12 : f32 to vector<8x128xf32>
    %379 = arith.mulf %378, %299 : vector<8x128xf32>
    %380 = math.tanh %379 : vector<8x128xf32>
    %cst_13 = arith.constant 1.000000e+00 : f32
    %381 = vector.broadcast %cst_13 : f32 to vector<8x128xf32>
    %382 = arith.addf %380, %381 : vector<8x128xf32>
    %cst_14 = arith.constant 5.000000e-01 : f32
    %383 = vector.broadcast %cst_14 : f32 to vector<8x128xf32>
    %384 = arith.mulf %383, %382 : vector<8x128xf32>
    %385 = arith.mulf %377, %384 : vector<8x128xf32>
    %386 = math.tanh %197 : vector<8x128xf32>
    %cst_15 = arith.constant 5.000000e-01 : f32
    %387 = vector.broadcast %cst_15 : f32 to vector<8x128xf32>
    %388 = arith.mulf %387, %333 : vector<8x128xf32>
    %389 = math.tanh %388 : vector<8x128xf32>
    %cst_16 = arith.constant 1.000000e+00 : f32
    %390 = vector.broadcast %cst_16 : f32 to vector<8x128xf32>
    %391 = arith.addf %389, %390 : vector<8x128xf32>
    %cst_17 = arith.constant 5.000000e-01 : f32
    %392 = vector.broadcast %cst_17 : f32 to vector<8x128xf32>
    %393 = arith.mulf %392, %391 : vector<8x128xf32>
    %394 = arith.mulf %386, %393 : vector<8x128xf32>
    %395 = math.tanh %231 : vector<8x128xf32>
    %cst_18 = arith.constant 5.000000e-01 : f32
    %396 = vector.broadcast %cst_18 : f32 to vector<8x128xf32>
    %397 = arith.mulf %396, %367 : vector<8x128xf32>
    %398 = math.tanh %397 : vector<8x128xf32>
    %cst_19 = arith.constant 1.000000e+00 : f32
    %399 = vector.broadcast %cst_19 : f32 to vector<8x128xf32>
    %400 = arith.addf %398, %399 : vector<8x128xf32>
    %cst_20 = arith.constant 5.000000e-01 : f32
    %401 = vector.broadcast %cst_20 : f32 to vector<8x128xf32>
    %402 = arith.mulf %401, %400 : vector<8x128xf32>
    %403 = arith.mulf %395, %402 : vector<8x128xf32>
    %c92 = arith.constant 92 : index
    %404 = memref.load %arg2[%c92] : memref<832xf32, #tpu.memory_space<smem>>
    %405 = vector.broadcast %404 : f32 to vector<8x128xf32>
    %406 = arith.mulf %405, %376 : vector<8x128xf32>
    %407 = arith.addf %29, %406 : vector<8x128xf32>
    %c93 = arith.constant 93 : index
    %408 = memref.load %arg2[%c93] : memref<832xf32, #tpu.memory_space<smem>>
    %409 = vector.broadcast %408 : f32 to vector<8x128xf32>
    %410 = arith.mulf %409, %385 : vector<8x128xf32>
    %411 = arith.addf %407, %410 : vector<8x128xf32>
    %c94 = arith.constant 94 : index
    %412 = memref.load %arg2[%c94] : memref<832xf32, #tpu.memory_space<smem>>
    %413 = vector.broadcast %412 : f32 to vector<8x128xf32>
    %414 = arith.mulf %413, %394 : vector<8x128xf32>
    %415 = arith.addf %411, %414 : vector<8x128xf32>
    %c95 = arith.constant 95 : index
    %416 = memref.load %arg2[%c95] : memref<832xf32, #tpu.memory_space<smem>>
    %417 = vector.broadcast %416 : f32 to vector<8x128xf32>
    %418 = arith.mulf %417, %403 : vector<8x128xf32>
    %419 = arith.addf %415, %418 : vector<8x128xf32>
    %c108 = arith.constant 108 : index
    %420 = memref.load %arg2[%c108] : memref<832xf32, #tpu.memory_space<smem>>
    %421 = vector.broadcast %420 : f32 to vector<8x128xf32>
    %422 = arith.addf %419, %421 : vector<8x128xf32>
    %c96 = arith.constant 96 : index
    %423 = memref.load %arg2[%c96] : memref<832xf32, #tpu.memory_space<smem>>
    %424 = vector.broadcast %423 : f32 to vector<8x128xf32>
    %425 = arith.mulf %424, %376 : vector<8x128xf32>
    %426 = arith.addf %47, %425 : vector<8x128xf32>
    %c97 = arith.constant 97 : index
    %427 = memref.load %arg2[%c97] : memref<832xf32, #tpu.memory_space<smem>>
    %428 = vector.broadcast %427 : f32 to vector<8x128xf32>
    %429 = arith.mulf %428, %385 : vector<8x128xf32>
    %430 = arith.addf %426, %429 : vector<8x128xf32>
    %c98 = arith.constant 98 : index
    %431 = memref.load %arg2[%c98] : memref<832xf32, #tpu.memory_space<smem>>
    %432 = vector.broadcast %431 : f32 to vector<8x128xf32>
    %433 = arith.mulf %432, %394 : vector<8x128xf32>
    %434 = arith.addf %430, %433 : vector<8x128xf32>
    %c99 = arith.constant 99 : index
    %435 = memref.load %arg2[%c99] : memref<832xf32, #tpu.memory_space<smem>>
    %436 = vector.broadcast %435 : f32 to vector<8x128xf32>
    %437 = arith.mulf %436, %403 : vector<8x128xf32>
    %438 = arith.addf %434, %437 : vector<8x128xf32>
    %c109 = arith.constant 109 : index
    %439 = memref.load %arg2[%c109] : memref<832xf32, #tpu.memory_space<smem>>
    %440 = vector.broadcast %439 : f32 to vector<8x128xf32>
    %441 = arith.addf %438, %440 : vector<8x128xf32>
    %c100 = arith.constant 100 : index
    %442 = memref.load %arg2[%c100] : memref<832xf32, #tpu.memory_space<smem>>
    %443 = vector.broadcast %442 : f32 to vector<8x128xf32>
    %444 = arith.mulf %443, %376 : vector<8x128xf32>
    %445 = arith.addf %65, %444 : vector<8x128xf32>
    %c101 = arith.constant 101 : index
    %446 = memref.load %arg2[%c101] : memref<832xf32, #tpu.memory_space<smem>>
    %447 = vector.broadcast %446 : f32 to vector<8x128xf32>
    %448 = arith.mulf %447, %385 : vector<8x128xf32>
    %449 = arith.addf %445, %448 : vector<8x128xf32>
    %c102 = arith.constant 102 : index
    %450 = memref.load %arg2[%c102] : memref<832xf32, #tpu.memory_space<smem>>
    %451 = vector.broadcast %450 : f32 to vector<8x128xf32>
    %452 = arith.mulf %451, %394 : vector<8x128xf32>
    %453 = arith.addf %449, %452 : vector<8x128xf32>
    %c103 = arith.constant 103 : index
    %454 = memref.load %arg2[%c103] : memref<832xf32, #tpu.memory_space<smem>>
    %455 = vector.broadcast %454 : f32 to vector<8x128xf32>
    %456 = arith.mulf %455, %403 : vector<8x128xf32>
    %457 = arith.addf %453, %456 : vector<8x128xf32>
    %c110 = arith.constant 110 : index
    %458 = memref.load %arg2[%c110] : memref<832xf32, #tpu.memory_space<smem>>
    %459 = vector.broadcast %458 : f32 to vector<8x128xf32>
    %460 = arith.addf %457, %459 : vector<8x128xf32>
    %c104 = arith.constant 104 : index
    %461 = memref.load %arg2[%c104] : memref<832xf32, #tpu.memory_space<smem>>
    %462 = vector.broadcast %461 : f32 to vector<8x128xf32>
    %463 = arith.mulf %462, %376 : vector<8x128xf32>
    %464 = arith.addf %83, %463 : vector<8x128xf32>
    %c105 = arith.constant 105 : index
    %465 = memref.load %arg2[%c105] : memref<832xf32, #tpu.memory_space<smem>>
    %466 = vector.broadcast %465 : f32 to vector<8x128xf32>
    %467 = arith.mulf %466, %385 : vector<8x128xf32>
    %468 = arith.addf %464, %467 : vector<8x128xf32>
    %c106 = arith.constant 106 : index
    %469 = memref.load %arg2[%c106] : memref<832xf32, #tpu.memory_space<smem>>
    %470 = vector.broadcast %469 : f32 to vector<8x128xf32>
    %471 = arith.mulf %470, %394 : vector<8x128xf32>
    %472 = arith.addf %468, %471 : vector<8x128xf32>
    %c107 = arith.constant 107 : index
    %473 = memref.load %arg2[%c107] : memref<832xf32, #tpu.memory_space<smem>>
    %474 = vector.broadcast %473 : f32 to vector<8x128xf32>
    %475 = arith.mulf %474, %403 : vector<8x128xf32>
    %476 = arith.addf %472, %475 : vector<8x128xf32>
    %c111 = arith.constant 111 : index
    %477 = memref.load %arg2[%c111] : memref<832xf32, #tpu.memory_space<smem>>
    %478 = vector.broadcast %477 : f32 to vector<8x128xf32>
    %479 = arith.addf %476, %478 : vector<8x128xf32>
    %480 = arith.addf %29, %422 : vector<8x128xf32>
    %481 = arith.addf %47, %441 : vector<8x128xf32>
    %482 = arith.addf %65, %460 : vector<8x128xf32>
    %483 = arith.addf %83, %479 : vector<8x128xf32>
    %cst_21 = arith.constant 0.000000e+00 : f32
    %484 = vector.broadcast %cst_21 : f32 to vector<8x2xf32>
    %485 = vector.extract_strided_slice %422 {offsets = [0, 0], sizes = [8, 126], strides = [1, 1]} : vector<8x128xf32> to vector<8x126xf32>
    %486 = tpu.concatenate %484, %485 in 1 : vector<8x2xf32>, vector<8x126xf32> -> vector<8x128xf32>
    %cst_22 = arith.constant 0.000000e+00 : f32
    %487 = vector.broadcast %cst_22 : f32 to vector<8x2xf32>
    %488 = vector.extract_strided_slice %441 {offsets = [0, 0], sizes = [8, 126], strides = [1, 1]} : vector<8x128xf32> to vector<8x126xf32>
    %489 = tpu.concatenate %487, %488 in 1 : vector<8x2xf32>, vector<8x126xf32> -> vector<8x128xf32>
    %cst_23 = arith.constant 0.000000e+00 : f32
    %490 = vector.broadcast %cst_23 : f32 to vector<8x2xf32>
    %491 = vector.extract_strided_slice %460 {offsets = [0, 0], sizes = [8, 126], strides = [1, 1]} : vector<8x128xf32> to vector<8x126xf32>
    %492 = tpu.concatenate %490, %491 in 1 : vector<8x2xf32>, vector<8x126xf32> -> vector<8x128xf32>
    %cst_24 = arith.constant 0.000000e+00 : f32
    %493 = vector.broadcast %cst_24 : f32 to vector<8x2xf32>
    %494 = vector.extract_strided_slice %479 {offsets = [0, 0], sizes = [8, 126], strides = [1, 1]} : vector<8x128xf32> to vector<8x126xf32>
    %495 = tpu.concatenate %493, %494 in 1 : vector<8x2xf32>, vector<8x126xf32> -> vector<8x128xf32>
    %c113 = arith.constant 113 : index
    %496 = memref.load %arg2[%c113] : memref<832xf32, #tpu.memory_space<smem>>
    %497 = vector.broadcast %496 : f32 to vector<8x128xf32>
    %498 = arith.mulf %497, %422 : vector<8x128xf32>
    %c112 = arith.constant 112 : index
    %499 = memref.load %arg2[%c112] : memref<832xf32, #tpu.memory_space<smem>>
    %500 = vector.broadcast %499 : f32 to vector<8x128xf32>
    %501 = arith.mulf %500, %486 : vector<8x128xf32>
    %502 = arith.addf %498, %501 : vector<8x128xf32>
    %c115 = arith.constant 115 : index
    %503 = memref.load %arg2[%c115] : memref<832xf32, #tpu.memory_space<smem>>
    %504 = vector.broadcast %503 : f32 to vector<8x128xf32>
    %505 = arith.mulf %504, %441 : vector<8x128xf32>
    %c114 = arith.constant 114 : index
    %506 = memref.load %arg2[%c114] : memref<832xf32, #tpu.memory_space<smem>>
    %507 = vector.broadcast %506 : f32 to vector<8x128xf32>
    %508 = arith.mulf %507, %489 : vector<8x128xf32>
    %509 = arith.addf %505, %508 : vector<8x128xf32>
    %510 = arith.addf %502, %509 : vector<8x128xf32>
    %c117 = arith.constant 117 : index
    %511 = memref.load %arg2[%c117] : memref<832xf32, #tpu.memory_space<smem>>
    %512 = vector.broadcast %511 : f32 to vector<8x128xf32>
    %513 = arith.mulf %512, %460 : vector<8x128xf32>
    %c116 = arith.constant 116 : index
    %514 = memref.load %arg2[%c116] : memref<832xf32, #tpu.memory_space<smem>>
    %515 = vector.broadcast %514 : f32 to vector<8x128xf32>
    %516 = arith.mulf %515, %492 : vector<8x128xf32>
    %517 = arith.addf %513, %516 : vector<8x128xf32>
    %518 = arith.addf %510, %517 : vector<8x128xf32>
    %c119 = arith.constant 119 : index
    %519 = memref.load %arg2[%c119] : memref<832xf32, #tpu.memory_space<smem>>
    %520 = vector.broadcast %519 : f32 to vector<8x128xf32>
    %521 = arith.mulf %520, %479 : vector<8x128xf32>
    %c118 = arith.constant 118 : index
    %522 = memref.load %arg2[%c118] : memref<832xf32, #tpu.memory_space<smem>>
    %523 = vector.broadcast %522 : f32 to vector<8x128xf32>
    %524 = arith.mulf %523, %495 : vector<8x128xf32>
    %525 = arith.addf %521, %524 : vector<8x128xf32>
    %526 = arith.addf %518, %525 : vector<8x128xf32>
    %c176 = arith.constant 176 : index
    %527 = memref.load %arg2[%c176] : memref<832xf32, #tpu.memory_space<smem>>
    %528 = vector.broadcast %527 : f32 to vector<8x128xf32>
    %529 = arith.addf %526, %528 : vector<8x128xf32>
    %c121 = arith.constant 121 : index
    %530 = memref.load %arg2[%c121] : memref<832xf32, #tpu.memory_space<smem>>
    %531 = vector.broadcast %530 : f32 to vector<8x128xf32>
    %532 = arith.mulf %531, %422 : vector<8x128xf32>
    %c120 = arith.constant 120 : index
    %533 = memref.load %arg2[%c120] : memref<832xf32, #tpu.memory_space<smem>>
    %534 = vector.broadcast %533 : f32 to vector<8x128xf32>
    %535 = arith.mulf %534, %486 : vector<8x128xf32>
    %536 = arith.addf %532, %535 : vector<8x128xf32>
    %c123 = arith.constant 123 : index
    %537 = memref.load %arg2[%c123] : memref<832xf32, #tpu.memory_space<smem>>
    %538 = vector.broadcast %537 : f32 to vector<8x128xf32>
    %539 = arith.mulf %538, %441 : vector<8x128xf32>
    %c122 = arith.constant 122 : index
    %540 = memref.load %arg2[%c122] : memref<832xf32, #tpu.memory_space<smem>>
    %541 = vector.broadcast %540 : f32 to vector<8x128xf32>
    %542 = arith.mulf %541, %489 : vector<8x128xf32>
    %543 = arith.addf %539, %542 : vector<8x128xf32>
    %544 = arith.addf %536, %543 : vector<8x128xf32>
    %c125 = arith.constant 125 : index
    %545 = memref.load %arg2[%c125] : memref<832xf32, #tpu.memory_space<smem>>
    %546 = vector.broadcast %545 : f32 to vector<8x128xf32>
    %547 = arith.mulf %546, %460 : vector<8x128xf32>
    %c124 = arith.constant 124 : index
    %548 = memref.load %arg2[%c124] : memref<832xf32, #tpu.memory_space<smem>>
    %549 = vector.broadcast %548 : f32 to vector<8x128xf32>
    %550 = arith.mulf %549, %492 : vector<8x128xf32>
    %551 = arith.addf %547, %550 : vector<8x128xf32>
    %552 = arith.addf %544, %551 : vector<8x128xf32>
    %c127 = arith.constant 127 : index
    %553 = memref.load %arg2[%c127] : memref<832xf32, #tpu.memory_space<smem>>
    %554 = vector.broadcast %553 : f32 to vector<8x128xf32>
    %555 = arith.mulf %554, %479 : vector<8x128xf32>
    %c126 = arith.constant 126 : index
    %556 = memref.load %arg2[%c126] : memref<832xf32, #tpu.memory_space<smem>>
    %557 = vector.broadcast %556 : f32 to vector<8x128xf32>
    %558 = arith.mulf %557, %495 : vector<8x128xf32>
    %559 = arith.addf %555, %558 : vector<8x128xf32>
    %560 = arith.addf %552, %559 : vector<8x128xf32>
    %c177 = arith.constant 177 : index
    %561 = memref.load %arg2[%c177] : memref<832xf32, #tpu.memory_space<smem>>
    %562 = vector.broadcast %561 : f32 to vector<8x128xf32>
    %563 = arith.addf %560, %562 : vector<8x128xf32>
    %c129 = arith.constant 129 : index
    %564 = memref.load %arg2[%c129] : memref<832xf32, #tpu.memory_space<smem>>
    %565 = vector.broadcast %564 : f32 to vector<8x128xf32>
    %566 = arith.mulf %565, %422 : vector<8x128xf32>
    %c128 = arith.constant 128 : index
    %567 = memref.load %arg2[%c128] : memref<832xf32, #tpu.memory_space<smem>>
    %568 = vector.broadcast %567 : f32 to vector<8x128xf32>
    %569 = arith.mulf %568, %486 : vector<8x128xf32>
    %570 = arith.addf %566, %569 : vector<8x128xf32>
    %c131 = arith.constant 131 : index
    %571 = memref.load %arg2[%c131] : memref<832xf32, #tpu.memory_space<smem>>
    %572 = vector.broadcast %571 : f32 to vector<8x128xf32>
    %573 = arith.mulf %572, %441 : vector<8x128xf32>
    %c130 = arith.constant 130 : index
    %574 = memref.load %arg2[%c130] : memref<832xf32, #tpu.memory_space<smem>>
    %575 = vector.broadcast %574 : f32 to vector<8x128xf32>
    %576 = arith.mulf %575, %489 : vector<8x128xf32>
    %577 = arith.addf %573, %576 : vector<8x128xf32>
    %578 = arith.addf %570, %577 : vector<8x128xf32>
    %c133 = arith.constant 133 : index
    %579 = memref.load %arg2[%c133] : memref<832xf32, #tpu.memory_space<smem>>
    %580 = vector.broadcast %579 : f32 to vector<8x128xf32>
    %581 = arith.mulf %580, %460 : vector<8x128xf32>
    %c132 = arith.constant 132 : index
    %582 = memref.load %arg2[%c132] : memref<832xf32, #tpu.memory_space<smem>>
    %583 = vector.broadcast %582 : f32 to vector<8x128xf32>
    %584 = arith.mulf %583, %492 : vector<8x128xf32>
    %585 = arith.addf %581, %584 : vector<8x128xf32>
    %586 = arith.addf %578, %585 : vector<8x128xf32>
    %c135 = arith.constant 135 : index
    %587 = memref.load %arg2[%c135] : memref<832xf32, #tpu.memory_space<smem>>
    %588 = vector.broadcast %587 : f32 to vector<8x128xf32>
    %589 = arith.mulf %588, %479 : vector<8x128xf32>
    %c134 = arith.constant 134 : index
    %590 = memref.load %arg2[%c134] : memref<832xf32, #tpu.memory_space<smem>>
    %591 = vector.broadcast %590 : f32 to vector<8x128xf32>
    %592 = arith.mulf %591, %495 : vector<8x128xf32>
    %593 = arith.addf %589, %592 : vector<8x128xf32>
    %594 = arith.addf %586, %593 : vector<8x128xf32>
    %c178 = arith.constant 178 : index
    %595 = memref.load %arg2[%c178] : memref<832xf32, #tpu.memory_space<smem>>
    %596 = vector.broadcast %595 : f32 to vector<8x128xf32>
    %597 = arith.addf %594, %596 : vector<8x128xf32>
    %c137 = arith.constant 137 : index
    %598 = memref.load %arg2[%c137] : memref<832xf32, #tpu.memory_space<smem>>
    %599 = vector.broadcast %598 : f32 to vector<8x128xf32>
    %600 = arith.mulf %599, %422 : vector<8x128xf32>
    %c136 = arith.constant 136 : index
    %601 = memref.load %arg2[%c136] : memref<832xf32, #tpu.memory_space<smem>>
    %602 = vector.broadcast %601 : f32 to vector<8x128xf32>
    %603 = arith.mulf %602, %486 : vector<8x128xf32>
    %604 = arith.addf %600, %603 : vector<8x128xf32>
    %c139 = arith.constant 139 : index
    %605 = memref.load %arg2[%c139] : memref<832xf32, #tpu.memory_space<smem>>
    %606 = vector.broadcast %605 : f32 to vector<8x128xf32>
    %607 = arith.mulf %606, %441 : vector<8x128xf32>
    %c138 = arith.constant 138 : index
    %608 = memref.load %arg2[%c138] : memref<832xf32, #tpu.memory_space<smem>>
    %609 = vector.broadcast %608 : f32 to vector<8x128xf32>
    %610 = arith.mulf %609, %489 : vector<8x128xf32>
    %611 = arith.addf %607, %610 : vector<8x128xf32>
    %612 = arith.addf %604, %611 : vector<8x128xf32>
    %c141 = arith.constant 141 : index
    %613 = memref.load %arg2[%c141] : memref<832xf32, #tpu.memory_space<smem>>
    %614 = vector.broadcast %613 : f32 to vector<8x128xf32>
    %615 = arith.mulf %614, %460 : vector<8x128xf32>
    %c140 = arith.constant 140 : index
    %616 = memref.load %arg2[%c140] : memref<832xf32, #tpu.memory_space<smem>>
    %617 = vector.broadcast %616 : f32 to vector<8x128xf32>
    %618 = arith.mulf %617, %492 : vector<8x128xf32>
    %619 = arith.addf %615, %618 : vector<8x128xf32>
    %620 = arith.addf %612, %619 : vector<8x128xf32>
    %c143 = arith.constant 143 : index
    %621 = memref.load %arg2[%c143] : memref<832xf32, #tpu.memory_space<smem>>
    %622 = vector.broadcast %621 : f32 to vector<8x128xf32>
    %623 = arith.mulf %622, %479 : vector<8x128xf32>
    %c142 = arith.constant 142 : index
    %624 = memref.load %arg2[%c142] : memref<832xf32, #tpu.memory_space<smem>>
    %625 = vector.broadcast %624 : f32 to vector<8x128xf32>
    %626 = arith.mulf %625, %495 : vector<8x128xf32>
    %627 = arith.addf %623, %626 : vector<8x128xf32>
    %628 = arith.addf %620, %627 : vector<8x128xf32>
    %c179 = arith.constant 179 : index
    %629 = memref.load %arg2[%c179] : memref<832xf32, #tpu.memory_space<smem>>
    %630 = vector.broadcast %629 : f32 to vector<8x128xf32>
    %631 = arith.addf %628, %630 : vector<8x128xf32>
    %c145 = arith.constant 145 : index
    %632 = memref.load %arg2[%c145] : memref<832xf32, #tpu.memory_space<smem>>
    %633 = vector.broadcast %632 : f32 to vector<8x128xf32>
    %634 = arith.mulf %633, %422 : vector<8x128xf32>
    %c144 = arith.constant 144 : index
    %635 = memref.load %arg2[%c144] : memref<832xf32, #tpu.memory_space<smem>>
    %636 = vector.broadcast %635 : f32 to vector<8x128xf32>
    %637 = arith.mulf %636, %486 : vector<8x128xf32>
    %638 = arith.addf %634, %637 : vector<8x128xf32>
    %c147 = arith.constant 147 : index
    %639 = memref.load %arg2[%c147] : memref<832xf32, #tpu.memory_space<smem>>
    %640 = vector.broadcast %639 : f32 to vector<8x128xf32>
    %641 = arith.mulf %640, %441 : vector<8x128xf32>
    %c146 = arith.constant 146 : index
    %642 = memref.load %arg2[%c146] : memref<832xf32, #tpu.memory_space<smem>>
    %643 = vector.broadcast %642 : f32 to vector<8x128xf32>
    %644 = arith.mulf %643, %489 : vector<8x128xf32>
    %645 = arith.addf %641, %644 : vector<8x128xf32>
    %646 = arith.addf %638, %645 : vector<8x128xf32>
    %c149 = arith.constant 149 : index
    %647 = memref.load %arg2[%c149] : memref<832xf32, #tpu.memory_space<smem>>
    %648 = vector.broadcast %647 : f32 to vector<8x128xf32>
    %649 = arith.mulf %648, %460 : vector<8x128xf32>
    %c148 = arith.constant 148 : index
    %650 = memref.load %arg2[%c148] : memref<832xf32, #tpu.memory_space<smem>>
    %651 = vector.broadcast %650 : f32 to vector<8x128xf32>
    %652 = arith.mulf %651, %492 : vector<8x128xf32>
    %653 = arith.addf %649, %652 : vector<8x128xf32>
    %654 = arith.addf %646, %653 : vector<8x128xf32>
    %c151 = arith.constant 151 : index
    %655 = memref.load %arg2[%c151] : memref<832xf32, #tpu.memory_space<smem>>
    %656 = vector.broadcast %655 : f32 to vector<8x128xf32>
    %657 = arith.mulf %656, %479 : vector<8x128xf32>
    %c150 = arith.constant 150 : index
    %658 = memref.load %arg2[%c150] : memref<832xf32, #tpu.memory_space<smem>>
    %659 = vector.broadcast %658 : f32 to vector<8x128xf32>
    %660 = arith.mulf %659, %495 : vector<8x128xf32>
    %661 = arith.addf %657, %660 : vector<8x128xf32>
    %662 = arith.addf %654, %661 : vector<8x128xf32>
    %c180 = arith.constant 180 : index
    %663 = memref.load %arg2[%c180] : memref<832xf32, #tpu.memory_space<smem>>
    %664 = vector.broadcast %663 : f32 to vector<8x128xf32>
    %665 = arith.addf %662, %664 : vector<8x128xf32>
    %c153 = arith.constant 153 : index
    %666 = memref.load %arg2[%c153] : memref<832xf32, #tpu.memory_space<smem>>
    %667 = vector.broadcast %666 : f32 to vector<8x128xf32>
    %668 = arith.mulf %667, %422 : vector<8x128xf32>
    %c152 = arith.constant 152 : index
    %669 = memref.load %arg2[%c152] : memref<832xf32, #tpu.memory_space<smem>>
    %670 = vector.broadcast %669 : f32 to vector<8x128xf32>
    %671 = arith.mulf %670, %486 : vector<8x128xf32>
    %672 = arith.addf %668, %671 : vector<8x128xf32>
    %c155 = arith.constant 155 : index
    %673 = memref.load %arg2[%c155] : memref<832xf32, #tpu.memory_space<smem>>
    %674 = vector.broadcast %673 : f32 to vector<8x128xf32>
    %675 = arith.mulf %674, %441 : vector<8x128xf32>
    %c154 = arith.constant 154 : index
    %676 = memref.load %arg2[%c154] : memref<832xf32, #tpu.memory_space<smem>>
    %677 = vector.broadcast %676 : f32 to vector<8x128xf32>
    %678 = arith.mulf %677, %489 : vector<8x128xf32>
    %679 = arith.addf %675, %678 : vector<8x128xf32>
    %680 = arith.addf %672, %679 : vector<8x128xf32>
    %c157 = arith.constant 157 : index
    %681 = memref.load %arg2[%c157] : memref<832xf32, #tpu.memory_space<smem>>
    %682 = vector.broadcast %681 : f32 to vector<8x128xf32>
    %683 = arith.mulf %682, %460 : vector<8x128xf32>
    %c156 = arith.constant 156 : index
    %684 = memref.load %arg2[%c156] : memref<832xf32, #tpu.memory_space<smem>>
    %685 = vector.broadcast %684 : f32 to vector<8x128xf32>
    %686 = arith.mulf %685, %492 : vector<8x128xf32>
    %687 = arith.addf %683, %686 : vector<8x128xf32>
    %688 = arith.addf %680, %687 : vector<8x128xf32>
    %c159 = arith.constant 159 : index
    %689 = memref.load %arg2[%c159] : memref<832xf32, #tpu.memory_space<smem>>
    %690 = vector.broadcast %689 : f32 to vector<8x128xf32>
    %691 = arith.mulf %690, %479 : vector<8x128xf32>
    %c158 = arith.constant 158 : index
    %692 = memref.load %arg2[%c158] : memref<832xf32, #tpu.memory_space<smem>>
    %693 = vector.broadcast %692 : f32 to vector<8x128xf32>
    %694 = arith.mulf %693, %495 : vector<8x128xf32>
    %695 = arith.addf %691, %694 : vector<8x128xf32>
    %696 = arith.addf %688, %695 : vector<8x128xf32>
    %c181 = arith.constant 181 : index
    %697 = memref.load %arg2[%c181] : memref<832xf32, #tpu.memory_space<smem>>
    %698 = vector.broadcast %697 : f32 to vector<8x128xf32>
    %699 = arith.addf %696, %698 : vector<8x128xf32>
    %c161 = arith.constant 161 : index
    %700 = memref.load %arg2[%c161] : memref<832xf32, #tpu.memory_space<smem>>
    %701 = vector.broadcast %700 : f32 to vector<8x128xf32>
    %702 = arith.mulf %701, %422 : vector<8x128xf32>
    %c160 = arith.constant 160 : index
    %703 = memref.load %arg2[%c160] : memref<832xf32, #tpu.memory_space<smem>>
    %704 = vector.broadcast %703 : f32 to vector<8x128xf32>
    %705 = arith.mulf %704, %486 : vector<8x128xf32>
    %706 = arith.addf %702, %705 : vector<8x128xf32>
    %c163 = arith.constant 163 : index
    %707 = memref.load %arg2[%c163] : memref<832xf32, #tpu.memory_space<smem>>
    %708 = vector.broadcast %707 : f32 to vector<8x128xf32>
    %709 = arith.mulf %708, %441 : vector<8x128xf32>
    %c162 = arith.constant 162 : index
    %710 = memref.load %arg2[%c162] : memref<832xf32, #tpu.memory_space<smem>>
    %711 = vector.broadcast %710 : f32 to vector<8x128xf32>
    %712 = arith.mulf %711, %489 : vector<8x128xf32>
    %713 = arith.addf %709, %712 : vector<8x128xf32>
    %714 = arith.addf %706, %713 : vector<8x128xf32>
    %c165 = arith.constant 165 : index
    %715 = memref.load %arg2[%c165] : memref<832xf32, #tpu.memory_space<smem>>
    %716 = vector.broadcast %715 : f32 to vector<8x128xf32>
    %717 = arith.mulf %716, %460 : vector<8x128xf32>
    %c164 = arith.constant 164 : index
    %718 = memref.load %arg2[%c164] : memref<832xf32, #tpu.memory_space<smem>>
    %719 = vector.broadcast %718 : f32 to vector<8x128xf32>
    %720 = arith.mulf %719, %492 : vector<8x128xf32>
    %721 = arith.addf %717, %720 : vector<8x128xf32>
    %722 = arith.addf %714, %721 : vector<8x128xf32>
    %c167 = arith.constant 167 : index
    %723 = memref.load %arg2[%c167] : memref<832xf32, #tpu.memory_space<smem>>
    %724 = vector.broadcast %723 : f32 to vector<8x128xf32>
    %725 = arith.mulf %724, %479 : vector<8x128xf32>
    %c166 = arith.constant 166 : index
    %726 = memref.load %arg2[%c166] : memref<832xf32, #tpu.memory_space<smem>>
    %727 = vector.broadcast %726 : f32 to vector<8x128xf32>
    %728 = arith.mulf %727, %495 : vector<8x128xf32>
    %729 = arith.addf %725, %728 : vector<8x128xf32>
    %730 = arith.addf %722, %729 : vector<8x128xf32>
    %c182 = arith.constant 182 : index
    %731 = memref.load %arg2[%c182] : memref<832xf32, #tpu.memory_space<smem>>
    %732 = vector.broadcast %731 : f32 to vector<8x128xf32>
    %733 = arith.addf %730, %732 : vector<8x128xf32>
    %c169 = arith.constant 169 : index
    %734 = memref.load %arg2[%c169] : memref<832xf32, #tpu.memory_space<smem>>
    %735 = vector.broadcast %734 : f32 to vector<8x128xf32>
    %736 = arith.mulf %735, %422 : vector<8x128xf32>
    %c168 = arith.constant 168 : index
    %737 = memref.load %arg2[%c168] : memref<832xf32, #tpu.memory_space<smem>>
    %738 = vector.broadcast %737 : f32 to vector<8x128xf32>
    %739 = arith.mulf %738, %486 : vector<8x128xf32>
    %740 = arith.addf %736, %739 : vector<8x128xf32>
    %c171 = arith.constant 171 : index
    %741 = memref.load %arg2[%c171] : memref<832xf32, #tpu.memory_space<smem>>
    %742 = vector.broadcast %741 : f32 to vector<8x128xf32>
    %743 = arith.mulf %742, %441 : vector<8x128xf32>
    %c170 = arith.constant 170 : index
    %744 = memref.load %arg2[%c170] : memref<832xf32, #tpu.memory_space<smem>>
    %745 = vector.broadcast %744 : f32 to vector<8x128xf32>
    %746 = arith.mulf %745, %489 : vector<8x128xf32>
    %747 = arith.addf %743, %746 : vector<8x128xf32>
    %748 = arith.addf %740, %747 : vector<8x128xf32>
    %c173 = arith.constant 173 : index
    %749 = memref.load %arg2[%c173] : memref<832xf32, #tpu.memory_space<smem>>
    %750 = vector.broadcast %749 : f32 to vector<8x128xf32>
    %751 = arith.mulf %750, %460 : vector<8x128xf32>
    %c172 = arith.constant 172 : index
    %752 = memref.load %arg2[%c172] : memref<832xf32, #tpu.memory_space<smem>>
    %753 = vector.broadcast %752 : f32 to vector<8x128xf32>
    %754 = arith.mulf %753, %492 : vector<8x128xf32>
    %755 = arith.addf %751, %754 : vector<8x128xf32>
    %756 = arith.addf %748, %755 : vector<8x128xf32>
    %c175 = arith.constant 175 : index
    %757 = memref.load %arg2[%c175] : memref<832xf32, #tpu.memory_space<smem>>
    %758 = vector.broadcast %757 : f32 to vector<8x128xf32>
    %759 = arith.mulf %758, %479 : vector<8x128xf32>
    %c174 = arith.constant 174 : index
    %760 = memref.load %arg2[%c174] : memref<832xf32, #tpu.memory_space<smem>>
    %761 = vector.broadcast %760 : f32 to vector<8x128xf32>
    %762 = arith.mulf %761, %495 : vector<8x128xf32>
    %763 = arith.addf %759, %762 : vector<8x128xf32>
    %764 = arith.addf %756, %763 : vector<8x128xf32>
    %c183 = arith.constant 183 : index
    %765 = memref.load %arg2[%c183] : memref<832xf32, #tpu.memory_space<smem>>
    %766 = vector.broadcast %765 : f32 to vector<8x128xf32>
    %767 = arith.addf %764, %766 : vector<8x128xf32>
    %768 = math.tanh %529 : vector<8x128xf32>
    %cst_25 = arith.constant 5.000000e-01 : f32
    %769 = vector.broadcast %cst_25 : f32 to vector<8x128xf32>
    %770 = arith.mulf %769, %665 : vector<8x128xf32>
    %771 = math.tanh %770 : vector<8x128xf32>
    %cst_26 = arith.constant 1.000000e+00 : f32
    %772 = vector.broadcast %cst_26 : f32 to vector<8x128xf32>
    %773 = arith.addf %771, %772 : vector<8x128xf32>
    %cst_27 = arith.constant 5.000000e-01 : f32
    %774 = vector.broadcast %cst_27 : f32 to vector<8x128xf32>
    %775 = arith.mulf %774, %773 : vector<8x128xf32>
    %776 = arith.mulf %768, %775 : vector<8x128xf32>
    %777 = math.tanh %563 : vector<8x128xf32>
    %cst_28 = arith.constant 5.000000e-01 : f32
    %778 = vector.broadcast %cst_28 : f32 to vector<8x128xf32>
    %779 = arith.mulf %778, %699 : vector<8x128xf32>
    %780 = math.tanh %779 : vector<8x128xf32>
    %cst_29 = arith.constant 1.000000e+00 : f32
    %781 = vector.broadcast %cst_29 : f32 to vector<8x128xf32>
    %782 = arith.addf %780, %781 : vector<8x128xf32>
    %cst_30 = arith.constant 5.000000e-01 : f32
    %783 = vector.broadcast %cst_30 : f32 to vector<8x128xf32>
    %784 = arith.mulf %783, %782 : vector<8x128xf32>
    %785 = arith.mulf %777, %784 : vector<8x128xf32>
    %786 = math.tanh %597 : vector<8x128xf32>
    %cst_31 = arith.constant 5.000000e-01 : f32
    %787 = vector.broadcast %cst_31 : f32 to vector<8x128xf32>
    %788 = arith.mulf %787, %733 : vector<8x128xf32>
    %789 = math.tanh %788 : vector<8x128xf32>
    %cst_32 = arith.constant 1.000000e+00 : f32
    %790 = vector.broadcast %cst_32 : f32 to vector<8x128xf32>
    %791 = arith.addf %789, %790 : vector<8x128xf32>
    %cst_33 = arith.constant 5.000000e-01 : f32
    %792 = vector.broadcast %cst_33 : f32 to vector<8x128xf32>
    %793 = arith.mulf %792, %791 : vector<8x128xf32>
    %794 = arith.mulf %786, %793 : vector<8x128xf32>
    %795 = math.tanh %631 : vector<8x128xf32>
    %cst_34 = arith.constant 5.000000e-01 : f32
    %796 = vector.broadcast %cst_34 : f32 to vector<8x128xf32>
    %797 = arith.mulf %796, %767 : vector<8x128xf32>
    %798 = math.tanh %797 : vector<8x128xf32>
    %cst_35 = arith.constant 1.000000e+00 : f32
    %799 = vector.broadcast %cst_35 : f32 to vector<8x128xf32>
    %800 = arith.addf %798, %799 : vector<8x128xf32>
    %cst_36 = arith.constant 5.000000e-01 : f32
    %801 = vector.broadcast %cst_36 : f32 to vector<8x128xf32>
    %802 = arith.mulf %801, %800 : vector<8x128xf32>
    %803 = arith.mulf %795, %802 : vector<8x128xf32>
    %c184 = arith.constant 184 : index
    %804 = memref.load %arg2[%c184] : memref<832xf32, #tpu.memory_space<smem>>
    %805 = vector.broadcast %804 : f32 to vector<8x128xf32>
    %806 = arith.mulf %805, %776 : vector<8x128xf32>
    %807 = arith.addf %422, %806 : vector<8x128xf32>
    %c185 = arith.constant 185 : index
    %808 = memref.load %arg2[%c185] : memref<832xf32, #tpu.memory_space<smem>>
    %809 = vector.broadcast %808 : f32 to vector<8x128xf32>
    %810 = arith.mulf %809, %785 : vector<8x128xf32>
    %811 = arith.addf %807, %810 : vector<8x128xf32>
    %c186 = arith.constant 186 : index
    %812 = memref.load %arg2[%c186] : memref<832xf32, #tpu.memory_space<smem>>
    %813 = vector.broadcast %812 : f32 to vector<8x128xf32>
    %814 = arith.mulf %813, %794 : vector<8x128xf32>
    %815 = arith.addf %811, %814 : vector<8x128xf32>
    %c187 = arith.constant 187 : index
    %816 = memref.load %arg2[%c187] : memref<832xf32, #tpu.memory_space<smem>>
    %817 = vector.broadcast %816 : f32 to vector<8x128xf32>
    %818 = arith.mulf %817, %803 : vector<8x128xf32>
    %819 = arith.addf %815, %818 : vector<8x128xf32>
    %c200 = arith.constant 200 : index
    %820 = memref.load %arg2[%c200] : memref<832xf32, #tpu.memory_space<smem>>
    %821 = vector.broadcast %820 : f32 to vector<8x128xf32>
    %822 = arith.addf %819, %821 : vector<8x128xf32>
    %c188 = arith.constant 188 : index
    %823 = memref.load %arg2[%c188] : memref<832xf32, #tpu.memory_space<smem>>
    %824 = vector.broadcast %823 : f32 to vector<8x128xf32>
    %825 = arith.mulf %824, %776 : vector<8x128xf32>
    %826 = arith.addf %441, %825 : vector<8x128xf32>
    %c189 = arith.constant 189 : index
    %827 = memref.load %arg2[%c189] : memref<832xf32, #tpu.memory_space<smem>>
    %828 = vector.broadcast %827 : f32 to vector<8x128xf32>
    %829 = arith.mulf %828, %785 : vector<8x128xf32>
    %830 = arith.addf %826, %829 : vector<8x128xf32>
    %c190 = arith.constant 190 : index
    %831 = memref.load %arg2[%c190] : memref<832xf32, #tpu.memory_space<smem>>
    %832 = vector.broadcast %831 : f32 to vector<8x128xf32>
    %833 = arith.mulf %832, %794 : vector<8x128xf32>
    %834 = arith.addf %830, %833 : vector<8x128xf32>
    %c191 = arith.constant 191 : index
    %835 = memref.load %arg2[%c191] : memref<832xf32, #tpu.memory_space<smem>>
    %836 = vector.broadcast %835 : f32 to vector<8x128xf32>
    %837 = arith.mulf %836, %803 : vector<8x128xf32>
    %838 = arith.addf %834, %837 : vector<8x128xf32>
    %c201 = arith.constant 201 : index
    %839 = memref.load %arg2[%c201] : memref<832xf32, #tpu.memory_space<smem>>
    %840 = vector.broadcast %839 : f32 to vector<8x128xf32>
    %841 = arith.addf %838, %840 : vector<8x128xf32>
    %c192 = arith.constant 192 : index
    %842 = memref.load %arg2[%c192] : memref<832xf32, #tpu.memory_space<smem>>
    %843 = vector.broadcast %842 : f32 to vector<8x128xf32>
    %844 = arith.mulf %843, %776 : vector<8x128xf32>
    %845 = arith.addf %460, %844 : vector<8x128xf32>
    %c193 = arith.constant 193 : index
    %846 = memref.load %arg2[%c193] : memref<832xf32, #tpu.memory_space<smem>>
    %847 = vector.broadcast %846 : f32 to vector<8x128xf32>
    %848 = arith.mulf %847, %785 : vector<8x128xf32>
    %849 = arith.addf %845, %848 : vector<8x128xf32>
    %c194 = arith.constant 194 : index
    %850 = memref.load %arg2[%c194] : memref<832xf32, #tpu.memory_space<smem>>
    %851 = vector.broadcast %850 : f32 to vector<8x128xf32>
    %852 = arith.mulf %851, %794 : vector<8x128xf32>
    %853 = arith.addf %849, %852 : vector<8x128xf32>
    %c195 = arith.constant 195 : index
    %854 = memref.load %arg2[%c195] : memref<832xf32, #tpu.memory_space<smem>>
    %855 = vector.broadcast %854 : f32 to vector<8x128xf32>
    %856 = arith.mulf %855, %803 : vector<8x128xf32>
    %857 = arith.addf %853, %856 : vector<8x128xf32>
    %c202 = arith.constant 202 : index
    %858 = memref.load %arg2[%c202] : memref<832xf32, #tpu.memory_space<smem>>
    %859 = vector.broadcast %858 : f32 to vector<8x128xf32>
    %860 = arith.addf %857, %859 : vector<8x128xf32>
    %c196 = arith.constant 196 : index
    %861 = memref.load %arg2[%c196] : memref<832xf32, #tpu.memory_space<smem>>
    %862 = vector.broadcast %861 : f32 to vector<8x128xf32>
    %863 = arith.mulf %862, %776 : vector<8x128xf32>
    %864 = arith.addf %479, %863 : vector<8x128xf32>
    %c197 = arith.constant 197 : index
    %865 = memref.load %arg2[%c197] : memref<832xf32, #tpu.memory_space<smem>>
    %866 = vector.broadcast %865 : f32 to vector<8x128xf32>
    %867 = arith.mulf %866, %785 : vector<8x128xf32>
    %868 = arith.addf %864, %867 : vector<8x128xf32>
    %c198 = arith.constant 198 : index
    %869 = memref.load %arg2[%c198] : memref<832xf32, #tpu.memory_space<smem>>
    %870 = vector.broadcast %869 : f32 to vector<8x128xf32>
    %871 = arith.mulf %870, %794 : vector<8x128xf32>
    %872 = arith.addf %868, %871 : vector<8x128xf32>
    %c199 = arith.constant 199 : index
    %873 = memref.load %arg2[%c199] : memref<832xf32, #tpu.memory_space<smem>>
    %874 = vector.broadcast %873 : f32 to vector<8x128xf32>
    %875 = arith.mulf %874, %803 : vector<8x128xf32>
    %876 = arith.addf %872, %875 : vector<8x128xf32>
    %c203 = arith.constant 203 : index
    %877 = memref.load %arg2[%c203] : memref<832xf32, #tpu.memory_space<smem>>
    %878 = vector.broadcast %877 : f32 to vector<8x128xf32>
    %879 = arith.addf %876, %878 : vector<8x128xf32>
    %880 = arith.addf %480, %822 : vector<8x128xf32>
    %881 = arith.addf %481, %841 : vector<8x128xf32>
    %882 = arith.addf %482, %860 : vector<8x128xf32>
    %883 = arith.addf %483, %879 : vector<8x128xf32>
    %cst_37 = arith.constant 0.000000e+00 : f32
    %884 = vector.broadcast %cst_37 : f32 to vector<8x4xf32>
    %885 = vector.extract_strided_slice %822 {offsets = [0, 0], sizes = [8, 124], strides = [1, 1]} : vector<8x128xf32> to vector<8x124xf32>
    %886 = tpu.concatenate %884, %885 in 1 : vector<8x4xf32>, vector<8x124xf32> -> vector<8x128xf32>
    %cst_38 = arith.constant 0.000000e+00 : f32
    %887 = vector.broadcast %cst_38 : f32 to vector<8x4xf32>
    %888 = vector.extract_strided_slice %841 {offsets = [0, 0], sizes = [8, 124], strides = [1, 1]} : vector<8x128xf32> to vector<8x124xf32>
    %889 = tpu.concatenate %887, %888 in 1 : vector<8x4xf32>, vector<8x124xf32> -> vector<8x128xf32>
    %cst_39 = arith.constant 0.000000e+00 : f32
    %890 = vector.broadcast %cst_39 : f32 to vector<8x4xf32>
    %891 = vector.extract_strided_slice %860 {offsets = [0, 0], sizes = [8, 124], strides = [1, 1]} : vector<8x128xf32> to vector<8x124xf32>
    %892 = tpu.concatenate %890, %891 in 1 : vector<8x4xf32>, vector<8x124xf32> -> vector<8x128xf32>
    %cst_40 = arith.constant 0.000000e+00 : f32
    %893 = vector.broadcast %cst_40 : f32 to vector<8x4xf32>
    %894 = vector.extract_strided_slice %879 {offsets = [0, 0], sizes = [8, 124], strides = [1, 1]} : vector<8x128xf32> to vector<8x124xf32>
    %895 = tpu.concatenate %893, %894 in 1 : vector<8x4xf32>, vector<8x124xf32> -> vector<8x128xf32>
    %c205 = arith.constant 205 : index
    %896 = memref.load %arg2[%c205] : memref<832xf32, #tpu.memory_space<smem>>
    %897 = vector.broadcast %896 : f32 to vector<8x128xf32>
    %898 = arith.mulf %897, %822 : vector<8x128xf32>
    %c204 = arith.constant 204 : index
    %899 = memref.load %arg2[%c204] : memref<832xf32, #tpu.memory_space<smem>>
    %900 = vector.broadcast %899 : f32 to vector<8x128xf32>
    %901 = arith.mulf %900, %886 : vector<8x128xf32>
    %902 = arith.addf %898, %901 : vector<8x128xf32>
    %c207 = arith.constant 207 : index
    %903 = memref.load %arg2[%c207] : memref<832xf32, #tpu.memory_space<smem>>
    %904 = vector.broadcast %903 : f32 to vector<8x128xf32>
    %905 = arith.mulf %904, %841 : vector<8x128xf32>
    %c206 = arith.constant 206 : index
    %906 = memref.load %arg2[%c206] : memref<832xf32, #tpu.memory_space<smem>>
    %907 = vector.broadcast %906 : f32 to vector<8x128xf32>
    %908 = arith.mulf %907, %889 : vector<8x128xf32>
    %909 = arith.addf %905, %908 : vector<8x128xf32>
    %910 = arith.addf %902, %909 : vector<8x128xf32>
    %c209 = arith.constant 209 : index
    %911 = memref.load %arg2[%c209] : memref<832xf32, #tpu.memory_space<smem>>
    %912 = vector.broadcast %911 : f32 to vector<8x128xf32>
    %913 = arith.mulf %912, %860 : vector<8x128xf32>
    %c208 = arith.constant 208 : index
    %914 = memref.load %arg2[%c208] : memref<832xf32, #tpu.memory_space<smem>>
    %915 = vector.broadcast %914 : f32 to vector<8x128xf32>
    %916 = arith.mulf %915, %892 : vector<8x128xf32>
    %917 = arith.addf %913, %916 : vector<8x128xf32>
    %918 = arith.addf %910, %917 : vector<8x128xf32>
    %c211 = arith.constant 211 : index
    %919 = memref.load %arg2[%c211] : memref<832xf32, #tpu.memory_space<smem>>
    %920 = vector.broadcast %919 : f32 to vector<8x128xf32>
    %921 = arith.mulf %920, %879 : vector<8x128xf32>
    %c210 = arith.constant 210 : index
    %922 = memref.load %arg2[%c210] : memref<832xf32, #tpu.memory_space<smem>>
    %923 = vector.broadcast %922 : f32 to vector<8x128xf32>
    %924 = arith.mulf %923, %895 : vector<8x128xf32>
    %925 = arith.addf %921, %924 : vector<8x128xf32>
    %926 = arith.addf %918, %925 : vector<8x128xf32>
    %c268 = arith.constant 268 : index
    %927 = memref.load %arg2[%c268] : memref<832xf32, #tpu.memory_space<smem>>
    %928 = vector.broadcast %927 : f32 to vector<8x128xf32>
    %929 = arith.addf %926, %928 : vector<8x128xf32>
    %c213 = arith.constant 213 : index
    %930 = memref.load %arg2[%c213] : memref<832xf32, #tpu.memory_space<smem>>
    %931 = vector.broadcast %930 : f32 to vector<8x128xf32>
    %932 = arith.mulf %931, %822 : vector<8x128xf32>
    %c212 = arith.constant 212 : index
    %933 = memref.load %arg2[%c212] : memref<832xf32, #tpu.memory_space<smem>>
    %934 = vector.broadcast %933 : f32 to vector<8x128xf32>
    %935 = arith.mulf %934, %886 : vector<8x128xf32>
    %936 = arith.addf %932, %935 : vector<8x128xf32>
    %c215 = arith.constant 215 : index
    %937 = memref.load %arg2[%c215] : memref<832xf32, #tpu.memory_space<smem>>
    %938 = vector.broadcast %937 : f32 to vector<8x128xf32>
    %939 = arith.mulf %938, %841 : vector<8x128xf32>
    %c214 = arith.constant 214 : index
    %940 = memref.load %arg2[%c214] : memref<832xf32, #tpu.memory_space<smem>>
    %941 = vector.broadcast %940 : f32 to vector<8x128xf32>
    %942 = arith.mulf %941, %889 : vector<8x128xf32>
    %943 = arith.addf %939, %942 : vector<8x128xf32>
    %944 = arith.addf %936, %943 : vector<8x128xf32>
    %c217 = arith.constant 217 : index
    %945 = memref.load %arg2[%c217] : memref<832xf32, #tpu.memory_space<smem>>
    %946 = vector.broadcast %945 : f32 to vector<8x128xf32>
    %947 = arith.mulf %946, %860 : vector<8x128xf32>
    %c216 = arith.constant 216 : index
    %948 = memref.load %arg2[%c216] : memref<832xf32, #tpu.memory_space<smem>>
    %949 = vector.broadcast %948 : f32 to vector<8x128xf32>
    %950 = arith.mulf %949, %892 : vector<8x128xf32>
    %951 = arith.addf %947, %950 : vector<8x128xf32>
    %952 = arith.addf %944, %951 : vector<8x128xf32>
    %c219 = arith.constant 219 : index
    %953 = memref.load %arg2[%c219] : memref<832xf32, #tpu.memory_space<smem>>
    %954 = vector.broadcast %953 : f32 to vector<8x128xf32>
    %955 = arith.mulf %954, %879 : vector<8x128xf32>
    %c218 = arith.constant 218 : index
    %956 = memref.load %arg2[%c218] : memref<832xf32, #tpu.memory_space<smem>>
    %957 = vector.broadcast %956 : f32 to vector<8x128xf32>
    %958 = arith.mulf %957, %895 : vector<8x128xf32>
    %959 = arith.addf %955, %958 : vector<8x128xf32>
    %960 = arith.addf %952, %959 : vector<8x128xf32>
    %c269 = arith.constant 269 : index
    %961 = memref.load %arg2[%c269] : memref<832xf32, #tpu.memory_space<smem>>
    %962 = vector.broadcast %961 : f32 to vector<8x128xf32>
    %963 = arith.addf %960, %962 : vector<8x128xf32>
    %c221 = arith.constant 221 : index
    %964 = memref.load %arg2[%c221] : memref<832xf32, #tpu.memory_space<smem>>
    %965 = vector.broadcast %964 : f32 to vector<8x128xf32>
    %966 = arith.mulf %965, %822 : vector<8x128xf32>
    %c220 = arith.constant 220 : index
    %967 = memref.load %arg2[%c220] : memref<832xf32, #tpu.memory_space<smem>>
    %968 = vector.broadcast %967 : f32 to vector<8x128xf32>
    %969 = arith.mulf %968, %886 : vector<8x128xf32>
    %970 = arith.addf %966, %969 : vector<8x128xf32>
    %c223 = arith.constant 223 : index
    %971 = memref.load %arg2[%c223] : memref<832xf32, #tpu.memory_space<smem>>
    %972 = vector.broadcast %971 : f32 to vector<8x128xf32>
    %973 = arith.mulf %972, %841 : vector<8x128xf32>
    %c222 = arith.constant 222 : index
    %974 = memref.load %arg2[%c222] : memref<832xf32, #tpu.memory_space<smem>>
    %975 = vector.broadcast %974 : f32 to vector<8x128xf32>
    %976 = arith.mulf %975, %889 : vector<8x128xf32>
    %977 = arith.addf %973, %976 : vector<8x128xf32>
    %978 = arith.addf %970, %977 : vector<8x128xf32>
    %c225 = arith.constant 225 : index
    %979 = memref.load %arg2[%c225] : memref<832xf32, #tpu.memory_space<smem>>
    %980 = vector.broadcast %979 : f32 to vector<8x128xf32>
    %981 = arith.mulf %980, %860 : vector<8x128xf32>
    %c224 = arith.constant 224 : index
    %982 = memref.load %arg2[%c224] : memref<832xf32, #tpu.memory_space<smem>>
    %983 = vector.broadcast %982 : f32 to vector<8x128xf32>
    %984 = arith.mulf %983, %892 : vector<8x128xf32>
    %985 = arith.addf %981, %984 : vector<8x128xf32>
    %986 = arith.addf %978, %985 : vector<8x128xf32>
    %c227 = arith.constant 227 : index
    %987 = memref.load %arg2[%c227] : memref<832xf32, #tpu.memory_space<smem>>
    %988 = vector.broadcast %987 : f32 to vector<8x128xf32>
    %989 = arith.mulf %988, %879 : vector<8x128xf32>
    %c226 = arith.constant 226 : index
    %990 = memref.load %arg2[%c226] : memref<832xf32, #tpu.memory_space<smem>>
    %991 = vector.broadcast %990 : f32 to vector<8x128xf32>
    %992 = arith.mulf %991, %895 : vector<8x128xf32>
    %993 = arith.addf %989, %992 : vector<8x128xf32>
    %994 = arith.addf %986, %993 : vector<8x128xf32>
    %c270 = arith.constant 270 : index
    %995 = memref.load %arg2[%c270] : memref<832xf32, #tpu.memory_space<smem>>
    %996 = vector.broadcast %995 : f32 to vector<8x128xf32>
    %997 = arith.addf %994, %996 : vector<8x128xf32>
    %c229 = arith.constant 229 : index
    %998 = memref.load %arg2[%c229] : memref<832xf32, #tpu.memory_space<smem>>
    %999 = vector.broadcast %998 : f32 to vector<8x128xf32>
    %1000 = arith.mulf %999, %822 : vector<8x128xf32>
    %c228 = arith.constant 228 : index
    %1001 = memref.load %arg2[%c228] : memref<832xf32, #tpu.memory_space<smem>>
    %1002 = vector.broadcast %1001 : f32 to vector<8x128xf32>
    %1003 = arith.mulf %1002, %886 : vector<8x128xf32>
    %1004 = arith.addf %1000, %1003 : vector<8x128xf32>
    %c231 = arith.constant 231 : index
    %1005 = memref.load %arg2[%c231] : memref<832xf32, #tpu.memory_space<smem>>
    %1006 = vector.broadcast %1005 : f32 to vector<8x128xf32>
    %1007 = arith.mulf %1006, %841 : vector<8x128xf32>
    %c230 = arith.constant 230 : index
    %1008 = memref.load %arg2[%c230] : memref<832xf32, #tpu.memory_space<smem>>
    %1009 = vector.broadcast %1008 : f32 to vector<8x128xf32>
    %1010 = arith.mulf %1009, %889 : vector<8x128xf32>
    %1011 = arith.addf %1007, %1010 : vector<8x128xf32>
    %1012 = arith.addf %1004, %1011 : vector<8x128xf32>
    %c233 = arith.constant 233 : index
    %1013 = memref.load %arg2[%c233] : memref<832xf32, #tpu.memory_space<smem>>
    %1014 = vector.broadcast %1013 : f32 to vector<8x128xf32>
    %1015 = arith.mulf %1014, %860 : vector<8x128xf32>
    %c232 = arith.constant 232 : index
    %1016 = memref.load %arg2[%c232] : memref<832xf32, #tpu.memory_space<smem>>
    %1017 = vector.broadcast %1016 : f32 to vector<8x128xf32>
    %1018 = arith.mulf %1017, %892 : vector<8x128xf32>
    %1019 = arith.addf %1015, %1018 : vector<8x128xf32>
    %1020 = arith.addf %1012, %1019 : vector<8x128xf32>
    %c235 = arith.constant 235 : index
    %1021 = memref.load %arg2[%c235] : memref<832xf32, #tpu.memory_space<smem>>
    %1022 = vector.broadcast %1021 : f32 to vector<8x128xf32>
    %1023 = arith.mulf %1022, %879 : vector<8x128xf32>
    %c234 = arith.constant 234 : index
    %1024 = memref.load %arg2[%c234] : memref<832xf32, #tpu.memory_space<smem>>
    %1025 = vector.broadcast %1024 : f32 to vector<8x128xf32>
    %1026 = arith.mulf %1025, %895 : vector<8x128xf32>
    %1027 = arith.addf %1023, %1026 : vector<8x128xf32>
    %1028 = arith.addf %1020, %1027 : vector<8x128xf32>
    %c271 = arith.constant 271 : index
    %1029 = memref.load %arg2[%c271] : memref<832xf32, #tpu.memory_space<smem>>
    %1030 = vector.broadcast %1029 : f32 to vector<8x128xf32>
    %1031 = arith.addf %1028, %1030 : vector<8x128xf32>
    %c237 = arith.constant 237 : index
    %1032 = memref.load %arg2[%c237] : memref<832xf32, #tpu.memory_space<smem>>
    %1033 = vector.broadcast %1032 : f32 to vector<8x128xf32>
    %1034 = arith.mulf %1033, %822 : vector<8x128xf32>
    %c236 = arith.constant 236 : index
    %1035 = memref.load %arg2[%c236] : memref<832xf32, #tpu.memory_space<smem>>
    %1036 = vector.broadcast %1035 : f32 to vector<8x128xf32>
    %1037 = arith.mulf %1036, %886 : vector<8x128xf32>
    %1038 = arith.addf %1034, %1037 : vector<8x128xf32>
    %c239 = arith.constant 239 : index
    %1039 = memref.load %arg2[%c239] : memref<832xf32, #tpu.memory_space<smem>>
    %1040 = vector.broadcast %1039 : f32 to vector<8x128xf32>
    %1041 = arith.mulf %1040, %841 : vector<8x128xf32>
    %c238 = arith.constant 238 : index
    %1042 = memref.load %arg2[%c238] : memref<832xf32, #tpu.memory_space<smem>>
    %1043 = vector.broadcast %1042 : f32 to vector<8x128xf32>
    %1044 = arith.mulf %1043, %889 : vector<8x128xf32>
    %1045 = arith.addf %1041, %1044 : vector<8x128xf32>
    %1046 = arith.addf %1038, %1045 : vector<8x128xf32>
    %c241 = arith.constant 241 : index
    %1047 = memref.load %arg2[%c241] : memref<832xf32, #tpu.memory_space<smem>>
    %1048 = vector.broadcast %1047 : f32 to vector<8x128xf32>
    %1049 = arith.mulf %1048, %860 : vector<8x128xf32>
    %c240 = arith.constant 240 : index
    %1050 = memref.load %arg2[%c240] : memref<832xf32, #tpu.memory_space<smem>>
    %1051 = vector.broadcast %1050 : f32 to vector<8x128xf32>
    %1052 = arith.mulf %1051, %892 : vector<8x128xf32>
    %1053 = arith.addf %1049, %1052 : vector<8x128xf32>
    %1054 = arith.addf %1046, %1053 : vector<8x128xf32>
    %c243 = arith.constant 243 : index
    %1055 = memref.load %arg2[%c243] : memref<832xf32, #tpu.memory_space<smem>>
    %1056 = vector.broadcast %1055 : f32 to vector<8x128xf32>
    %1057 = arith.mulf %1056, %879 : vector<8x128xf32>
    %c242 = arith.constant 242 : index
    %1058 = memref.load %arg2[%c242] : memref<832xf32, #tpu.memory_space<smem>>
    %1059 = vector.broadcast %1058 : f32 to vector<8x128xf32>
    %1060 = arith.mulf %1059, %895 : vector<8x128xf32>
    %1061 = arith.addf %1057, %1060 : vector<8x128xf32>
    %1062 = arith.addf %1054, %1061 : vector<8x128xf32>
    %c272 = arith.constant 272 : index
    %1063 = memref.load %arg2[%c272] : memref<832xf32, #tpu.memory_space<smem>>
    %1064 = vector.broadcast %1063 : f32 to vector<8x128xf32>
    %1065 = arith.addf %1062, %1064 : vector<8x128xf32>
    %c245 = arith.constant 245 : index
    %1066 = memref.load %arg2[%c245] : memref<832xf32, #tpu.memory_space<smem>>
    %1067 = vector.broadcast %1066 : f32 to vector<8x128xf32>
    %1068 = arith.mulf %1067, %822 : vector<8x128xf32>
    %c244 = arith.constant 244 : index
    %1069 = memref.load %arg2[%c244] : memref<832xf32, #tpu.memory_space<smem>>
    %1070 = vector.broadcast %1069 : f32 to vector<8x128xf32>
    %1071 = arith.mulf %1070, %886 : vector<8x128xf32>
    %1072 = arith.addf %1068, %1071 : vector<8x128xf32>
    %c247 = arith.constant 247 : index
    %1073 = memref.load %arg2[%c247] : memref<832xf32, #tpu.memory_space<smem>>
    %1074 = vector.broadcast %1073 : f32 to vector<8x128xf32>
    %1075 = arith.mulf %1074, %841 : vector<8x128xf32>
    %c246 = arith.constant 246 : index
    %1076 = memref.load %arg2[%c246] : memref<832xf32, #tpu.memory_space<smem>>
    %1077 = vector.broadcast %1076 : f32 to vector<8x128xf32>
    %1078 = arith.mulf %1077, %889 : vector<8x128xf32>
    %1079 = arith.addf %1075, %1078 : vector<8x128xf32>
    %1080 = arith.addf %1072, %1079 : vector<8x128xf32>
    %c249 = arith.constant 249 : index
    %1081 = memref.load %arg2[%c249] : memref<832xf32, #tpu.memory_space<smem>>
    %1082 = vector.broadcast %1081 : f32 to vector<8x128xf32>
    %1083 = arith.mulf %1082, %860 : vector<8x128xf32>
    %c248 = arith.constant 248 : index
    %1084 = memref.load %arg2[%c248] : memref<832xf32, #tpu.memory_space<smem>>
    %1085 = vector.broadcast %1084 : f32 to vector<8x128xf32>
    %1086 = arith.mulf %1085, %892 : vector<8x128xf32>
    %1087 = arith.addf %1083, %1086 : vector<8x128xf32>
    %1088 = arith.addf %1080, %1087 : vector<8x128xf32>
    %c251 = arith.constant 251 : index
    %1089 = memref.load %arg2[%c251] : memref<832xf32, #tpu.memory_space<smem>>
    %1090 = vector.broadcast %1089 : f32 to vector<8x128xf32>
    %1091 = arith.mulf %1090, %879 : vector<8x128xf32>
    %c250 = arith.constant 250 : index
    %1092 = memref.load %arg2[%c250] : memref<832xf32, #tpu.memory_space<smem>>
    %1093 = vector.broadcast %1092 : f32 to vector<8x128xf32>
    %1094 = arith.mulf %1093, %895 : vector<8x128xf32>
    %1095 = arith.addf %1091, %1094 : vector<8x128xf32>
    %1096 = arith.addf %1088, %1095 : vector<8x128xf32>
    %c273 = arith.constant 273 : index
    %1097 = memref.load %arg2[%c273] : memref<832xf32, #tpu.memory_space<smem>>
    %1098 = vector.broadcast %1097 : f32 to vector<8x128xf32>
    %1099 = arith.addf %1096, %1098 : vector<8x128xf32>
    %c253 = arith.constant 253 : index
    %1100 = memref.load %arg2[%c253] : memref<832xf32, #tpu.memory_space<smem>>
    %1101 = vector.broadcast %1100 : f32 to vector<8x128xf32>
    %1102 = arith.mulf %1101, %822 : vector<8x128xf32>
    %c252 = arith.constant 252 : index
    %1103 = memref.load %arg2[%c252] : memref<832xf32, #tpu.memory_space<smem>>
    %1104 = vector.broadcast %1103 : f32 to vector<8x128xf32>
    %1105 = arith.mulf %1104, %886 : vector<8x128xf32>
    %1106 = arith.addf %1102, %1105 : vector<8x128xf32>
    %c255 = arith.constant 255 : index
    %1107 = memref.load %arg2[%c255] : memref<832xf32, #tpu.memory_space<smem>>
    %1108 = vector.broadcast %1107 : f32 to vector<8x128xf32>
    %1109 = arith.mulf %1108, %841 : vector<8x128xf32>
    %c254 = arith.constant 254 : index
    %1110 = memref.load %arg2[%c254] : memref<832xf32, #tpu.memory_space<smem>>
    %1111 = vector.broadcast %1110 : f32 to vector<8x128xf32>
    %1112 = arith.mulf %1111, %889 : vector<8x128xf32>
    %1113 = arith.addf %1109, %1112 : vector<8x128xf32>
    %1114 = arith.addf %1106, %1113 : vector<8x128xf32>
    %c257 = arith.constant 257 : index
    %1115 = memref.load %arg2[%c257] : memref<832xf32, #tpu.memory_space<smem>>
    %1116 = vector.broadcast %1115 : f32 to vector<8x128xf32>
    %1117 = arith.mulf %1116, %860 : vector<8x128xf32>
    %c256 = arith.constant 256 : index
    %1118 = memref.load %arg2[%c256] : memref<832xf32, #tpu.memory_space<smem>>
    %1119 = vector.broadcast %1118 : f32 to vector<8x128xf32>
    %1120 = arith.mulf %1119, %892 : vector<8x128xf32>
    %1121 = arith.addf %1117, %1120 : vector<8x128xf32>
    %1122 = arith.addf %1114, %1121 : vector<8x128xf32>
    %c259 = arith.constant 259 : index
    %1123 = memref.load %arg2[%c259] : memref<832xf32, #tpu.memory_space<smem>>
    %1124 = vector.broadcast %1123 : f32 to vector<8x128xf32>
    %1125 = arith.mulf %1124, %879 : vector<8x128xf32>
    %c258 = arith.constant 258 : index
    %1126 = memref.load %arg2[%c258] : memref<832xf32, #tpu.memory_space<smem>>
    %1127 = vector.broadcast %1126 : f32 to vector<8x128xf32>
    %1128 = arith.mulf %1127, %895 : vector<8x128xf32>
    %1129 = arith.addf %1125, %1128 : vector<8x128xf32>
    %1130 = arith.addf %1122, %1129 : vector<8x128xf32>
    %c274 = arith.constant 274 : index
    %1131 = memref.load %arg2[%c274] : memref<832xf32, #tpu.memory_space<smem>>
    %1132 = vector.broadcast %1131 : f32 to vector<8x128xf32>
    %1133 = arith.addf %1130, %1132 : vector<8x128xf32>
    %c261 = arith.constant 261 : index
    %1134 = memref.load %arg2[%c261] : memref<832xf32, #tpu.memory_space<smem>>
    %1135 = vector.broadcast %1134 : f32 to vector<8x128xf32>
    %1136 = arith.mulf %1135, %822 : vector<8x128xf32>
    %c260 = arith.constant 260 : index
    %1137 = memref.load %arg2[%c260] : memref<832xf32, #tpu.memory_space<smem>>
    %1138 = vector.broadcast %1137 : f32 to vector<8x128xf32>
    %1139 = arith.mulf %1138, %886 : vector<8x128xf32>
    %1140 = arith.addf %1136, %1139 : vector<8x128xf32>
    %c263 = arith.constant 263 : index
    %1141 = memref.load %arg2[%c263] : memref<832xf32, #tpu.memory_space<smem>>
    %1142 = vector.broadcast %1141 : f32 to vector<8x128xf32>
    %1143 = arith.mulf %1142, %841 : vector<8x128xf32>
    %c262 = arith.constant 262 : index
    %1144 = memref.load %arg2[%c262] : memref<832xf32, #tpu.memory_space<smem>>
    %1145 = vector.broadcast %1144 : f32 to vector<8x128xf32>
    %1146 = arith.mulf %1145, %889 : vector<8x128xf32>
    %1147 = arith.addf %1143, %1146 : vector<8x128xf32>
    %1148 = arith.addf %1140, %1147 : vector<8x128xf32>
    %c265 = arith.constant 265 : index
    %1149 = memref.load %arg2[%c265] : memref<832xf32, #tpu.memory_space<smem>>
    %1150 = vector.broadcast %1149 : f32 to vector<8x128xf32>
    %1151 = arith.mulf %1150, %860 : vector<8x128xf32>
    %c264 = arith.constant 264 : index
    %1152 = memref.load %arg2[%c264] : memref<832xf32, #tpu.memory_space<smem>>
    %1153 = vector.broadcast %1152 : f32 to vector<8x128xf32>
    %1154 = arith.mulf %1153, %892 : vector<8x128xf32>
    %1155 = arith.addf %1151, %1154 : vector<8x128xf32>
    %1156 = arith.addf %1148, %1155 : vector<8x128xf32>
    %c267 = arith.constant 267 : index
    %1157 = memref.load %arg2[%c267] : memref<832xf32, #tpu.memory_space<smem>>
    %1158 = vector.broadcast %1157 : f32 to vector<8x128xf32>
    %1159 = arith.mulf %1158, %879 : vector<8x128xf32>
    %c266 = arith.constant 266 : index
    %1160 = memref.load %arg2[%c266] : memref<832xf32, #tpu.memory_space<smem>>
    %1161 = vector.broadcast %1160 : f32 to vector<8x128xf32>
    %1162 = arith.mulf %1161, %895 : vector<8x128xf32>
    %1163 = arith.addf %1159, %1162 : vector<8x128xf32>
    %1164 = arith.addf %1156, %1163 : vector<8x128xf32>
    %c275 = arith.constant 275 : index
    %1165 = memref.load %arg2[%c275] : memref<832xf32, #tpu.memory_space<smem>>
    %1166 = vector.broadcast %1165 : f32 to vector<8x128xf32>
    %1167 = arith.addf %1164, %1166 : vector<8x128xf32>
    %1168 = math.tanh %929 : vector<8x128xf32>
    %cst_41 = arith.constant 5.000000e-01 : f32
    %1169 = vector.broadcast %cst_41 : f32 to vector<8x128xf32>
    %1170 = arith.mulf %1169, %1065 : vector<8x128xf32>
    %1171 = math.tanh %1170 : vector<8x128xf32>
    %cst_42 = arith.constant 1.000000e+00 : f32
    %1172 = vector.broadcast %cst_42 : f32 to vector<8x128xf32>
    %1173 = arith.addf %1171, %1172 : vector<8x128xf32>
    %cst_43 = arith.constant 5.000000e-01 : f32
    %1174 = vector.broadcast %cst_43 : f32 to vector<8x128xf32>
    %1175 = arith.mulf %1174, %1173 : vector<8x128xf32>
    %1176 = arith.mulf %1168, %1175 : vector<8x128xf32>
    %1177 = math.tanh %963 : vector<8x128xf32>
    %cst_44 = arith.constant 5.000000e-01 : f32
    %1178 = vector.broadcast %cst_44 : f32 to vector<8x128xf32>
    %1179 = arith.mulf %1178, %1099 : vector<8x128xf32>
    %1180 = math.tanh %1179 : vector<8x128xf32>
    %cst_45 = arith.constant 1.000000e+00 : f32
    %1181 = vector.broadcast %cst_45 : f32 to vector<8x128xf32>
    %1182 = arith.addf %1180, %1181 : vector<8x128xf32>
    %cst_46 = arith.constant 5.000000e-01 : f32
    %1183 = vector.broadcast %cst_46 : f32 to vector<8x128xf32>
    %1184 = arith.mulf %1183, %1182 : vector<8x128xf32>
    %1185 = arith.mulf %1177, %1184 : vector<8x128xf32>
    %1186 = math.tanh %997 : vector<8x128xf32>
    %cst_47 = arith.constant 5.000000e-01 : f32
    %1187 = vector.broadcast %cst_47 : f32 to vector<8x128xf32>
    %1188 = arith.mulf %1187, %1133 : vector<8x128xf32>
    %1189 = math.tanh %1188 : vector<8x128xf32>
    %cst_48 = arith.constant 1.000000e+00 : f32
    %1190 = vector.broadcast %cst_48 : f32 to vector<8x128xf32>
    %1191 = arith.addf %1189, %1190 : vector<8x128xf32>
    %cst_49 = arith.constant 5.000000e-01 : f32
    %1192 = vector.broadcast %cst_49 : f32 to vector<8x128xf32>
    %1193 = arith.mulf %1192, %1191 : vector<8x128xf32>
    %1194 = arith.mulf %1186, %1193 : vector<8x128xf32>
    %1195 = math.tanh %1031 : vector<8x128xf32>
    %cst_50 = arith.constant 5.000000e-01 : f32
    %1196 = vector.broadcast %cst_50 : f32 to vector<8x128xf32>
    %1197 = arith.mulf %1196, %1167 : vector<8x128xf32>
    %1198 = math.tanh %1197 : vector<8x128xf32>
    %cst_51 = arith.constant 1.000000e+00 : f32
    %1199 = vector.broadcast %cst_51 : f32 to vector<8x128xf32>
    %1200 = arith.addf %1198, %1199 : vector<8x128xf32>
    %cst_52 = arith.constant 5.000000e-01 : f32
    %1201 = vector.broadcast %cst_52 : f32 to vector<8x128xf32>
    %1202 = arith.mulf %1201, %1200 : vector<8x128xf32>
    %1203 = arith.mulf %1195, %1202 : vector<8x128xf32>
    %c276 = arith.constant 276 : index
    %1204 = memref.load %arg2[%c276] : memref<832xf32, #tpu.memory_space<smem>>
    %1205 = vector.broadcast %1204 : f32 to vector<8x128xf32>
    %1206 = arith.mulf %1205, %1176 : vector<8x128xf32>
    %1207 = arith.addf %822, %1206 : vector<8x128xf32>
    %c277 = arith.constant 277 : index
    %1208 = memref.load %arg2[%c277] : memref<832xf32, #tpu.memory_space<smem>>
    %1209 = vector.broadcast %1208 : f32 to vector<8x128xf32>
    %1210 = arith.mulf %1209, %1185 : vector<8x128xf32>
    %1211 = arith.addf %1207, %1210 : vector<8x128xf32>
    %c278 = arith.constant 278 : index
    %1212 = memref.load %arg2[%c278] : memref<832xf32, #tpu.memory_space<smem>>
    %1213 = vector.broadcast %1212 : f32 to vector<8x128xf32>
    %1214 = arith.mulf %1213, %1194 : vector<8x128xf32>
    %1215 = arith.addf %1211, %1214 : vector<8x128xf32>
    %c279 = arith.constant 279 : index
    %1216 = memref.load %arg2[%c279] : memref<832xf32, #tpu.memory_space<smem>>
    %1217 = vector.broadcast %1216 : f32 to vector<8x128xf32>
    %1218 = arith.mulf %1217, %1203 : vector<8x128xf32>
    %1219 = arith.addf %1215, %1218 : vector<8x128xf32>
    %c292 = arith.constant 292 : index
    %1220 = memref.load %arg2[%c292] : memref<832xf32, #tpu.memory_space<smem>>
    %1221 = vector.broadcast %1220 : f32 to vector<8x128xf32>
    %1222 = arith.addf %1219, %1221 : vector<8x128xf32>
    %c280 = arith.constant 280 : index
    %1223 = memref.load %arg2[%c280] : memref<832xf32, #tpu.memory_space<smem>>
    %1224 = vector.broadcast %1223 : f32 to vector<8x128xf32>
    %1225 = arith.mulf %1224, %1176 : vector<8x128xf32>
    %1226 = arith.addf %841, %1225 : vector<8x128xf32>
    %c281 = arith.constant 281 : index
    %1227 = memref.load %arg2[%c281] : memref<832xf32, #tpu.memory_space<smem>>
    %1228 = vector.broadcast %1227 : f32 to vector<8x128xf32>
    %1229 = arith.mulf %1228, %1185 : vector<8x128xf32>
    %1230 = arith.addf %1226, %1229 : vector<8x128xf32>
    %c282 = arith.constant 282 : index
    %1231 = memref.load %arg2[%c282] : memref<832xf32, #tpu.memory_space<smem>>
    %1232 = vector.broadcast %1231 : f32 to vector<8x128xf32>
    %1233 = arith.mulf %1232, %1194 : vector<8x128xf32>
    %1234 = arith.addf %1230, %1233 : vector<8x128xf32>
    %c283 = arith.constant 283 : index
    %1235 = memref.load %arg2[%c283] : memref<832xf32, #tpu.memory_space<smem>>
    %1236 = vector.broadcast %1235 : f32 to vector<8x128xf32>
    %1237 = arith.mulf %1236, %1203 : vector<8x128xf32>
    %1238 = arith.addf %1234, %1237 : vector<8x128xf32>
    %c293 = arith.constant 293 : index
    %1239 = memref.load %arg2[%c293] : memref<832xf32, #tpu.memory_space<smem>>
    %1240 = vector.broadcast %1239 : f32 to vector<8x128xf32>
    %1241 = arith.addf %1238, %1240 : vector<8x128xf32>
    %c284 = arith.constant 284 : index
    %1242 = memref.load %arg2[%c284] : memref<832xf32, #tpu.memory_space<smem>>
    %1243 = vector.broadcast %1242 : f32 to vector<8x128xf32>
    %1244 = arith.mulf %1243, %1176 : vector<8x128xf32>
    %1245 = arith.addf %860, %1244 : vector<8x128xf32>
    %c285 = arith.constant 285 : index
    %1246 = memref.load %arg2[%c285] : memref<832xf32, #tpu.memory_space<smem>>
    %1247 = vector.broadcast %1246 : f32 to vector<8x128xf32>
    %1248 = arith.mulf %1247, %1185 : vector<8x128xf32>
    %1249 = arith.addf %1245, %1248 : vector<8x128xf32>
    %c286 = arith.constant 286 : index
    %1250 = memref.load %arg2[%c286] : memref<832xf32, #tpu.memory_space<smem>>
    %1251 = vector.broadcast %1250 : f32 to vector<8x128xf32>
    %1252 = arith.mulf %1251, %1194 : vector<8x128xf32>
    %1253 = arith.addf %1249, %1252 : vector<8x128xf32>
    %c287 = arith.constant 287 : index
    %1254 = memref.load %arg2[%c287] : memref<832xf32, #tpu.memory_space<smem>>
    %1255 = vector.broadcast %1254 : f32 to vector<8x128xf32>
    %1256 = arith.mulf %1255, %1203 : vector<8x128xf32>
    %1257 = arith.addf %1253, %1256 : vector<8x128xf32>
    %c294 = arith.constant 294 : index
    %1258 = memref.load %arg2[%c294] : memref<832xf32, #tpu.memory_space<smem>>
    %1259 = vector.broadcast %1258 : f32 to vector<8x128xf32>
    %1260 = arith.addf %1257, %1259 : vector<8x128xf32>
    %c288 = arith.constant 288 : index
    %1261 = memref.load %arg2[%c288] : memref<832xf32, #tpu.memory_space<smem>>
    %1262 = vector.broadcast %1261 : f32 to vector<8x128xf32>
    %1263 = arith.mulf %1262, %1176 : vector<8x128xf32>
    %1264 = arith.addf %879, %1263 : vector<8x128xf32>
    %c289 = arith.constant 289 : index
    %1265 = memref.load %arg2[%c289] : memref<832xf32, #tpu.memory_space<smem>>
    %1266 = vector.broadcast %1265 : f32 to vector<8x128xf32>
    %1267 = arith.mulf %1266, %1185 : vector<8x128xf32>
    %1268 = arith.addf %1264, %1267 : vector<8x128xf32>
    %c290 = arith.constant 290 : index
    %1269 = memref.load %arg2[%c290] : memref<832xf32, #tpu.memory_space<smem>>
    %1270 = vector.broadcast %1269 : f32 to vector<8x128xf32>
    %1271 = arith.mulf %1270, %1194 : vector<8x128xf32>
    %1272 = arith.addf %1268, %1271 : vector<8x128xf32>
    %c291 = arith.constant 291 : index
    %1273 = memref.load %arg2[%c291] : memref<832xf32, #tpu.memory_space<smem>>
    %1274 = vector.broadcast %1273 : f32 to vector<8x128xf32>
    %1275 = arith.mulf %1274, %1203 : vector<8x128xf32>
    %1276 = arith.addf %1272, %1275 : vector<8x128xf32>
    %c295 = arith.constant 295 : index
    %1277 = memref.load %arg2[%c295] : memref<832xf32, #tpu.memory_space<smem>>
    %1278 = vector.broadcast %1277 : f32 to vector<8x128xf32>
    %1279 = arith.addf %1276, %1278 : vector<8x128xf32>
    %1280 = arith.addf %880, %1222 : vector<8x128xf32>
    %1281 = arith.addf %881, %1241 : vector<8x128xf32>
    %1282 = arith.addf %882, %1260 : vector<8x128xf32>
    %1283 = arith.addf %883, %1279 : vector<8x128xf32>
    %cst_53 = arith.constant 0.000000e+00 : f32
    %1284 = vector.broadcast %cst_53 : f32 to vector<8x8xf32>
    %1285 = vector.extract_strided_slice %1222 {offsets = [0, 0], sizes = [8, 120], strides = [1, 1]} : vector<8x128xf32> to vector<8x120xf32>
    %1286 = tpu.concatenate %1284, %1285 in 1 : vector<8x8xf32>, vector<8x120xf32> -> vector<8x128xf32>
    %cst_54 = arith.constant 0.000000e+00 : f32
    %1287 = vector.broadcast %cst_54 : f32 to vector<8x8xf32>
    %1288 = vector.extract_strided_slice %1241 {offsets = [0, 0], sizes = [8, 120], strides = [1, 1]} : vector<8x128xf32> to vector<8x120xf32>
    %1289 = tpu.concatenate %1287, %1288 in 1 : vector<8x8xf32>, vector<8x120xf32> -> vector<8x128xf32>
    %cst_55 = arith.constant 0.000000e+00 : f32
    %1290 = vector.broadcast %cst_55 : f32 to vector<8x8xf32>
    %1291 = vector.extract_strided_slice %1260 {offsets = [0, 0], sizes = [8, 120], strides = [1, 1]} : vector<8x128xf32> to vector<8x120xf32>
    %1292 = tpu.concatenate %1290, %1291 in 1 : vector<8x8xf32>, vector<8x120xf32> -> vector<8x128xf32>
    %cst_56 = arith.constant 0.000000e+00 : f32
    %1293 = vector.broadcast %cst_56 : f32 to vector<8x8xf32>
    %1294 = vector.extract_strided_slice %1279 {offsets = [0, 0], sizes = [8, 120], strides = [1, 1]} : vector<8x128xf32> to vector<8x120xf32>
    %1295 = tpu.concatenate %1293, %1294 in 1 : vector<8x8xf32>, vector<8x120xf32> -> vector<8x128xf32>
    %c297 = arith.constant 297 : index
    %1296 = memref.load %arg2[%c297] : memref<832xf32, #tpu.memory_space<smem>>
    %1297 = vector.broadcast %1296 : f32 to vector<8x128xf32>
    %1298 = arith.mulf %1297, %1222 : vector<8x128xf32>
    %c296 = arith.constant 296 : index
    %1299 = memref.load %arg2[%c296] : memref<832xf32, #tpu.memory_space<smem>>
    %1300 = vector.broadcast %1299 : f32 to vector<8x128xf32>
    %1301 = arith.mulf %1300, %1286 : vector<8x128xf32>
    %1302 = arith.addf %1298, %1301 : vector<8x128xf32>
    %c299 = arith.constant 299 : index
    %1303 = memref.load %arg2[%c299] : memref<832xf32, #tpu.memory_space<smem>>
    %1304 = vector.broadcast %1303 : f32 to vector<8x128xf32>
    %1305 = arith.mulf %1304, %1241 : vector<8x128xf32>
    %c298 = arith.constant 298 : index
    %1306 = memref.load %arg2[%c298] : memref<832xf32, #tpu.memory_space<smem>>
    %1307 = vector.broadcast %1306 : f32 to vector<8x128xf32>
    %1308 = arith.mulf %1307, %1289 : vector<8x128xf32>
    %1309 = arith.addf %1305, %1308 : vector<8x128xf32>
    %1310 = arith.addf %1302, %1309 : vector<8x128xf32>
    %c301 = arith.constant 301 : index
    %1311 = memref.load %arg2[%c301] : memref<832xf32, #tpu.memory_space<smem>>
    %1312 = vector.broadcast %1311 : f32 to vector<8x128xf32>
    %1313 = arith.mulf %1312, %1260 : vector<8x128xf32>
    %c300 = arith.constant 300 : index
    %1314 = memref.load %arg2[%c300] : memref<832xf32, #tpu.memory_space<smem>>
    %1315 = vector.broadcast %1314 : f32 to vector<8x128xf32>
    %1316 = arith.mulf %1315, %1292 : vector<8x128xf32>
    %1317 = arith.addf %1313, %1316 : vector<8x128xf32>
    %1318 = arith.addf %1310, %1317 : vector<8x128xf32>
    %c303 = arith.constant 303 : index
    %1319 = memref.load %arg2[%c303] : memref<832xf32, #tpu.memory_space<smem>>
    %1320 = vector.broadcast %1319 : f32 to vector<8x128xf32>
    %1321 = arith.mulf %1320, %1279 : vector<8x128xf32>
    %c302 = arith.constant 302 : index
    %1322 = memref.load %arg2[%c302] : memref<832xf32, #tpu.memory_space<smem>>
    %1323 = vector.broadcast %1322 : f32 to vector<8x128xf32>
    %1324 = arith.mulf %1323, %1295 : vector<8x128xf32>
    %1325 = arith.addf %1321, %1324 : vector<8x128xf32>
    %1326 = arith.addf %1318, %1325 : vector<8x128xf32>
    %c360 = arith.constant 360 : index
    %1327 = memref.load %arg2[%c360] : memref<832xf32, #tpu.memory_space<smem>>
    %1328 = vector.broadcast %1327 : f32 to vector<8x128xf32>
    %1329 = arith.addf %1326, %1328 : vector<8x128xf32>
    %c305 = arith.constant 305 : index
    %1330 = memref.load %arg2[%c305] : memref<832xf32, #tpu.memory_space<smem>>
    %1331 = vector.broadcast %1330 : f32 to vector<8x128xf32>
    %1332 = arith.mulf %1331, %1222 : vector<8x128xf32>
    %c304 = arith.constant 304 : index
    %1333 = memref.load %arg2[%c304] : memref<832xf32, #tpu.memory_space<smem>>
    %1334 = vector.broadcast %1333 : f32 to vector<8x128xf32>
    %1335 = arith.mulf %1334, %1286 : vector<8x128xf32>
    %1336 = arith.addf %1332, %1335 : vector<8x128xf32>
    %c307 = arith.constant 307 : index
    %1337 = memref.load %arg2[%c307] : memref<832xf32, #tpu.memory_space<smem>>
    %1338 = vector.broadcast %1337 : f32 to vector<8x128xf32>
    %1339 = arith.mulf %1338, %1241 : vector<8x128xf32>
    %c306 = arith.constant 306 : index
    %1340 = memref.load %arg2[%c306] : memref<832xf32, #tpu.memory_space<smem>>
    %1341 = vector.broadcast %1340 : f32 to vector<8x128xf32>
    %1342 = arith.mulf %1341, %1289 : vector<8x128xf32>
    %1343 = arith.addf %1339, %1342 : vector<8x128xf32>
    %1344 = arith.addf %1336, %1343 : vector<8x128xf32>
    %c309 = arith.constant 309 : index
    %1345 = memref.load %arg2[%c309] : memref<832xf32, #tpu.memory_space<smem>>
    %1346 = vector.broadcast %1345 : f32 to vector<8x128xf32>
    %1347 = arith.mulf %1346, %1260 : vector<8x128xf32>
    %c308 = arith.constant 308 : index
    %1348 = memref.load %arg2[%c308] : memref<832xf32, #tpu.memory_space<smem>>
    %1349 = vector.broadcast %1348 : f32 to vector<8x128xf32>
    %1350 = arith.mulf %1349, %1292 : vector<8x128xf32>
    %1351 = arith.addf %1347, %1350 : vector<8x128xf32>
    %1352 = arith.addf %1344, %1351 : vector<8x128xf32>
    %c311 = arith.constant 311 : index
    %1353 = memref.load %arg2[%c311] : memref<832xf32, #tpu.memory_space<smem>>
    %1354 = vector.broadcast %1353 : f32 to vector<8x128xf32>
    %1355 = arith.mulf %1354, %1279 : vector<8x128xf32>
    %c310 = arith.constant 310 : index
    %1356 = memref.load %arg2[%c310] : memref<832xf32, #tpu.memory_space<smem>>
    %1357 = vector.broadcast %1356 : f32 to vector<8x128xf32>
    %1358 = arith.mulf %1357, %1295 : vector<8x128xf32>
    %1359 = arith.addf %1355, %1358 : vector<8x128xf32>
    %1360 = arith.addf %1352, %1359 : vector<8x128xf32>
    %c361 = arith.constant 361 : index
    %1361 = memref.load %arg2[%c361] : memref<832xf32, #tpu.memory_space<smem>>
    %1362 = vector.broadcast %1361 : f32 to vector<8x128xf32>
    %1363 = arith.addf %1360, %1362 : vector<8x128xf32>
    %c313 = arith.constant 313 : index
    %1364 = memref.load %arg2[%c313] : memref<832xf32, #tpu.memory_space<smem>>
    %1365 = vector.broadcast %1364 : f32 to vector<8x128xf32>
    %1366 = arith.mulf %1365, %1222 : vector<8x128xf32>
    %c312 = arith.constant 312 : index
    %1367 = memref.load %arg2[%c312] : memref<832xf32, #tpu.memory_space<smem>>
    %1368 = vector.broadcast %1367 : f32 to vector<8x128xf32>
    %1369 = arith.mulf %1368, %1286 : vector<8x128xf32>
    %1370 = arith.addf %1366, %1369 : vector<8x128xf32>
    %c315 = arith.constant 315 : index
    %1371 = memref.load %arg2[%c315] : memref<832xf32, #tpu.memory_space<smem>>
    %1372 = vector.broadcast %1371 : f32 to vector<8x128xf32>
    %1373 = arith.mulf %1372, %1241 : vector<8x128xf32>
    %c314 = arith.constant 314 : index
    %1374 = memref.load %arg2[%c314] : memref<832xf32, #tpu.memory_space<smem>>
    %1375 = vector.broadcast %1374 : f32 to vector<8x128xf32>
    %1376 = arith.mulf %1375, %1289 : vector<8x128xf32>
    %1377 = arith.addf %1373, %1376 : vector<8x128xf32>
    %1378 = arith.addf %1370, %1377 : vector<8x128xf32>
    %c317 = arith.constant 317 : index
    %1379 = memref.load %arg2[%c317] : memref<832xf32, #tpu.memory_space<smem>>
    %1380 = vector.broadcast %1379 : f32 to vector<8x128xf32>
    %1381 = arith.mulf %1380, %1260 : vector<8x128xf32>
    %c316 = arith.constant 316 : index
    %1382 = memref.load %arg2[%c316] : memref<832xf32, #tpu.memory_space<smem>>
    %1383 = vector.broadcast %1382 : f32 to vector<8x128xf32>
    %1384 = arith.mulf %1383, %1292 : vector<8x128xf32>
    %1385 = arith.addf %1381, %1384 : vector<8x128xf32>
    %1386 = arith.addf %1378, %1385 : vector<8x128xf32>
    %c319 = arith.constant 319 : index
    %1387 = memref.load %arg2[%c319] : memref<832xf32, #tpu.memory_space<smem>>
    %1388 = vector.broadcast %1387 : f32 to vector<8x128xf32>
    %1389 = arith.mulf %1388, %1279 : vector<8x128xf32>
    %c318 = arith.constant 318 : index
    %1390 = memref.load %arg2[%c318] : memref<832xf32, #tpu.memory_space<smem>>
    %1391 = vector.broadcast %1390 : f32 to vector<8x128xf32>
    %1392 = arith.mulf %1391, %1295 : vector<8x128xf32>
    %1393 = arith.addf %1389, %1392 : vector<8x128xf32>
    %1394 = arith.addf %1386, %1393 : vector<8x128xf32>
    %c362 = arith.constant 362 : index
    %1395 = memref.load %arg2[%c362] : memref<832xf32, #tpu.memory_space<smem>>
    %1396 = vector.broadcast %1395 : f32 to vector<8x128xf32>
    %1397 = arith.addf %1394, %1396 : vector<8x128xf32>
    %c321 = arith.constant 321 : index
    %1398 = memref.load %arg2[%c321] : memref<832xf32, #tpu.memory_space<smem>>
    %1399 = vector.broadcast %1398 : f32 to vector<8x128xf32>
    %1400 = arith.mulf %1399, %1222 : vector<8x128xf32>
    %c320 = arith.constant 320 : index
    %1401 = memref.load %arg2[%c320] : memref<832xf32, #tpu.memory_space<smem>>
    %1402 = vector.broadcast %1401 : f32 to vector<8x128xf32>
    %1403 = arith.mulf %1402, %1286 : vector<8x128xf32>
    %1404 = arith.addf %1400, %1403 : vector<8x128xf32>
    %c323 = arith.constant 323 : index
    %1405 = memref.load %arg2[%c323] : memref<832xf32, #tpu.memory_space<smem>>
    %1406 = vector.broadcast %1405 : f32 to vector<8x128xf32>
    %1407 = arith.mulf %1406, %1241 : vector<8x128xf32>
    %c322 = arith.constant 322 : index
    %1408 = memref.load %arg2[%c322] : memref<832xf32, #tpu.memory_space<smem>>
    %1409 = vector.broadcast %1408 : f32 to vector<8x128xf32>
    %1410 = arith.mulf %1409, %1289 : vector<8x128xf32>
    %1411 = arith.addf %1407, %1410 : vector<8x128xf32>
    %1412 = arith.addf %1404, %1411 : vector<8x128xf32>
    %c325 = arith.constant 325 : index
    %1413 = memref.load %arg2[%c325] : memref<832xf32, #tpu.memory_space<smem>>
    %1414 = vector.broadcast %1413 : f32 to vector<8x128xf32>
    %1415 = arith.mulf %1414, %1260 : vector<8x128xf32>
    %c324 = arith.constant 324 : index
    %1416 = memref.load %arg2[%c324] : memref<832xf32, #tpu.memory_space<smem>>
    %1417 = vector.broadcast %1416 : f32 to vector<8x128xf32>
    %1418 = arith.mulf %1417, %1292 : vector<8x128xf32>
    %1419 = arith.addf %1415, %1418 : vector<8x128xf32>
    %1420 = arith.addf %1412, %1419 : vector<8x128xf32>
    %c327 = arith.constant 327 : index
    %1421 = memref.load %arg2[%c327] : memref<832xf32, #tpu.memory_space<smem>>
    %1422 = vector.broadcast %1421 : f32 to vector<8x128xf32>
    %1423 = arith.mulf %1422, %1279 : vector<8x128xf32>
    %c326 = arith.constant 326 : index
    %1424 = memref.load %arg2[%c326] : memref<832xf32, #tpu.memory_space<smem>>
    %1425 = vector.broadcast %1424 : f32 to vector<8x128xf32>
    %1426 = arith.mulf %1425, %1295 : vector<8x128xf32>
    %1427 = arith.addf %1423, %1426 : vector<8x128xf32>
    %1428 = arith.addf %1420, %1427 : vector<8x128xf32>
    %c363 = arith.constant 363 : index
    %1429 = memref.load %arg2[%c363] : memref<832xf32, #tpu.memory_space<smem>>
    %1430 = vector.broadcast %1429 : f32 to vector<8x128xf32>
    %1431 = arith.addf %1428, %1430 : vector<8x128xf32>
    %c329 = arith.constant 329 : index
    %1432 = memref.load %arg2[%c329] : memref<832xf32, #tpu.memory_space<smem>>
    %1433 = vector.broadcast %1432 : f32 to vector<8x128xf32>
    %1434 = arith.mulf %1433, %1222 : vector<8x128xf32>
    %c328 = arith.constant 328 : index
    %1435 = memref.load %arg2[%c328] : memref<832xf32, #tpu.memory_space<smem>>
    %1436 = vector.broadcast %1435 : f32 to vector<8x128xf32>
    %1437 = arith.mulf %1436, %1286 : vector<8x128xf32>
    %1438 = arith.addf %1434, %1437 : vector<8x128xf32>
    %c331 = arith.constant 331 : index
    %1439 = memref.load %arg2[%c331] : memref<832xf32, #tpu.memory_space<smem>>
    %1440 = vector.broadcast %1439 : f32 to vector<8x128xf32>
    %1441 = arith.mulf %1440, %1241 : vector<8x128xf32>
    %c330 = arith.constant 330 : index
    %1442 = memref.load %arg2[%c330] : memref<832xf32, #tpu.memory_space<smem>>
    %1443 = vector.broadcast %1442 : f32 to vector<8x128xf32>
    %1444 = arith.mulf %1443, %1289 : vector<8x128xf32>
    %1445 = arith.addf %1441, %1444 : vector<8x128xf32>
    %1446 = arith.addf %1438, %1445 : vector<8x128xf32>
    %c333 = arith.constant 333 : index
    %1447 = memref.load %arg2[%c333] : memref<832xf32, #tpu.memory_space<smem>>
    %1448 = vector.broadcast %1447 : f32 to vector<8x128xf32>
    %1449 = arith.mulf %1448, %1260 : vector<8x128xf32>
    %c332 = arith.constant 332 : index
    %1450 = memref.load %arg2[%c332] : memref<832xf32, #tpu.memory_space<smem>>
    %1451 = vector.broadcast %1450 : f32 to vector<8x128xf32>
    %1452 = arith.mulf %1451, %1292 : vector<8x128xf32>
    %1453 = arith.addf %1449, %1452 : vector<8x128xf32>
    %1454 = arith.addf %1446, %1453 : vector<8x128xf32>
    %c335 = arith.constant 335 : index
    %1455 = memref.load %arg2[%c335] : memref<832xf32, #tpu.memory_space<smem>>
    %1456 = vector.broadcast %1455 : f32 to vector<8x128xf32>
    %1457 = arith.mulf %1456, %1279 : vector<8x128xf32>
    %c334 = arith.constant 334 : index
    %1458 = memref.load %arg2[%c334] : memref<832xf32, #tpu.memory_space<smem>>
    %1459 = vector.broadcast %1458 : f32 to vector<8x128xf32>
    %1460 = arith.mulf %1459, %1295 : vector<8x128xf32>
    %1461 = arith.addf %1457, %1460 : vector<8x128xf32>
    %1462 = arith.addf %1454, %1461 : vector<8x128xf32>
    %c364 = arith.constant 364 : index
    %1463 = memref.load %arg2[%c364] : memref<832xf32, #tpu.memory_space<smem>>
    %1464 = vector.broadcast %1463 : f32 to vector<8x128xf32>
    %1465 = arith.addf %1462, %1464 : vector<8x128xf32>
    %c337 = arith.constant 337 : index
    %1466 = memref.load %arg2[%c337] : memref<832xf32, #tpu.memory_space<smem>>
    %1467 = vector.broadcast %1466 : f32 to vector<8x128xf32>
    %1468 = arith.mulf %1467, %1222 : vector<8x128xf32>
    %c336 = arith.constant 336 : index
    %1469 = memref.load %arg2[%c336] : memref<832xf32, #tpu.memory_space<smem>>
    %1470 = vector.broadcast %1469 : f32 to vector<8x128xf32>
    %1471 = arith.mulf %1470, %1286 : vector<8x128xf32>
    %1472 = arith.addf %1468, %1471 : vector<8x128xf32>
    %c339 = arith.constant 339 : index
    %1473 = memref.load %arg2[%c339] : memref<832xf32, #tpu.memory_space<smem>>
    %1474 = vector.broadcast %1473 : f32 to vector<8x128xf32>
    %1475 = arith.mulf %1474, %1241 : vector<8x128xf32>
    %c338 = arith.constant 338 : index
    %1476 = memref.load %arg2[%c338] : memref<832xf32, #tpu.memory_space<smem>>
    %1477 = vector.broadcast %1476 : f32 to vector<8x128xf32>
    %1478 = arith.mulf %1477, %1289 : vector<8x128xf32>
    %1479 = arith.addf %1475, %1478 : vector<8x128xf32>
    %1480 = arith.addf %1472, %1479 : vector<8x128xf32>
    %c341 = arith.constant 341 : index
    %1481 = memref.load %arg2[%c341] : memref<832xf32, #tpu.memory_space<smem>>
    %1482 = vector.broadcast %1481 : f32 to vector<8x128xf32>
    %1483 = arith.mulf %1482, %1260 : vector<8x128xf32>
    %c340 = arith.constant 340 : index
    %1484 = memref.load %arg2[%c340] : memref<832xf32, #tpu.memory_space<smem>>
    %1485 = vector.broadcast %1484 : f32 to vector<8x128xf32>
    %1486 = arith.mulf %1485, %1292 : vector<8x128xf32>
    %1487 = arith.addf %1483, %1486 : vector<8x128xf32>
    %1488 = arith.addf %1480, %1487 : vector<8x128xf32>
    %c343 = arith.constant 343 : index
    %1489 = memref.load %arg2[%c343] : memref<832xf32, #tpu.memory_space<smem>>
    %1490 = vector.broadcast %1489 : f32 to vector<8x128xf32>
    %1491 = arith.mulf %1490, %1279 : vector<8x128xf32>
    %c342 = arith.constant 342 : index
    %1492 = memref.load %arg2[%c342] : memref<832xf32, #tpu.memory_space<smem>>
    %1493 = vector.broadcast %1492 : f32 to vector<8x128xf32>
    %1494 = arith.mulf %1493, %1295 : vector<8x128xf32>
    %1495 = arith.addf %1491, %1494 : vector<8x128xf32>
    %1496 = arith.addf %1488, %1495 : vector<8x128xf32>
    %c365 = arith.constant 365 : index
    %1497 = memref.load %arg2[%c365] : memref<832xf32, #tpu.memory_space<smem>>
    %1498 = vector.broadcast %1497 : f32 to vector<8x128xf32>
    %1499 = arith.addf %1496, %1498 : vector<8x128xf32>
    %c345 = arith.constant 345 : index
    %1500 = memref.load %arg2[%c345] : memref<832xf32, #tpu.memory_space<smem>>
    %1501 = vector.broadcast %1500 : f32 to vector<8x128xf32>
    %1502 = arith.mulf %1501, %1222 : vector<8x128xf32>
    %c344 = arith.constant 344 : index
    %1503 = memref.load %arg2[%c344] : memref<832xf32, #tpu.memory_space<smem>>
    %1504 = vector.broadcast %1503 : f32 to vector<8x128xf32>
    %1505 = arith.mulf %1504, %1286 : vector<8x128xf32>
    %1506 = arith.addf %1502, %1505 : vector<8x128xf32>
    %c347 = arith.constant 347 : index
    %1507 = memref.load %arg2[%c347] : memref<832xf32, #tpu.memory_space<smem>>
    %1508 = vector.broadcast %1507 : f32 to vector<8x128xf32>
    %1509 = arith.mulf %1508, %1241 : vector<8x128xf32>
    %c346 = arith.constant 346 : index
    %1510 = memref.load %arg2[%c346] : memref<832xf32, #tpu.memory_space<smem>>
    %1511 = vector.broadcast %1510 : f32 to vector<8x128xf32>
    %1512 = arith.mulf %1511, %1289 : vector<8x128xf32>
    %1513 = arith.addf %1509, %1512 : vector<8x128xf32>
    %1514 = arith.addf %1506, %1513 : vector<8x128xf32>
    %c349 = arith.constant 349 : index
    %1515 = memref.load %arg2[%c349] : memref<832xf32, #tpu.memory_space<smem>>
    %1516 = vector.broadcast %1515 : f32 to vector<8x128xf32>
    %1517 = arith.mulf %1516, %1260 : vector<8x128xf32>
    %c348 = arith.constant 348 : index
    %1518 = memref.load %arg2[%c348] : memref<832xf32, #tpu.memory_space<smem>>
    %1519 = vector.broadcast %1518 : f32 to vector<8x128xf32>
    %1520 = arith.mulf %1519, %1292 : vector<8x128xf32>
    %1521 = arith.addf %1517, %1520 : vector<8x128xf32>
    %1522 = arith.addf %1514, %1521 : vector<8x128xf32>
    %c351 = arith.constant 351 : index
    %1523 = memref.load %arg2[%c351] : memref<832xf32, #tpu.memory_space<smem>>
    %1524 = vector.broadcast %1523 : f32 to vector<8x128xf32>
    %1525 = arith.mulf %1524, %1279 : vector<8x128xf32>
    %c350 = arith.constant 350 : index
    %1526 = memref.load %arg2[%c350] : memref<832xf32, #tpu.memory_space<smem>>
    %1527 = vector.broadcast %1526 : f32 to vector<8x128xf32>
    %1528 = arith.mulf %1527, %1295 : vector<8x128xf32>
    %1529 = arith.addf %1525, %1528 : vector<8x128xf32>
    %1530 = arith.addf %1522, %1529 : vector<8x128xf32>
    %c366 = arith.constant 366 : index
    %1531 = memref.load %arg2[%c366] : memref<832xf32, #tpu.memory_space<smem>>
    %1532 = vector.broadcast %1531 : f32 to vector<8x128xf32>
    %1533 = arith.addf %1530, %1532 : vector<8x128xf32>
    %c353 = arith.constant 353 : index
    %1534 = memref.load %arg2[%c353] : memref<832xf32, #tpu.memory_space<smem>>
    %1535 = vector.broadcast %1534 : f32 to vector<8x128xf32>
    %1536 = arith.mulf %1535, %1222 : vector<8x128xf32>
    %c352 = arith.constant 352 : index
    %1537 = memref.load %arg2[%c352] : memref<832xf32, #tpu.memory_space<smem>>
    %1538 = vector.broadcast %1537 : f32 to vector<8x128xf32>
    %1539 = arith.mulf %1538, %1286 : vector<8x128xf32>
    %1540 = arith.addf %1536, %1539 : vector<8x128xf32>
    %c355 = arith.constant 355 : index
    %1541 = memref.load %arg2[%c355] : memref<832xf32, #tpu.memory_space<smem>>
    %1542 = vector.broadcast %1541 : f32 to vector<8x128xf32>
    %1543 = arith.mulf %1542, %1241 : vector<8x128xf32>
    %c354 = arith.constant 354 : index
    %1544 = memref.load %arg2[%c354] : memref<832xf32, #tpu.memory_space<smem>>
    %1545 = vector.broadcast %1544 : f32 to vector<8x128xf32>
    %1546 = arith.mulf %1545, %1289 : vector<8x128xf32>
    %1547 = arith.addf %1543, %1546 : vector<8x128xf32>
    %1548 = arith.addf %1540, %1547 : vector<8x128xf32>
    %c357 = arith.constant 357 : index
    %1549 = memref.load %arg2[%c357] : memref<832xf32, #tpu.memory_space<smem>>
    %1550 = vector.broadcast %1549 : f32 to vector<8x128xf32>
    %1551 = arith.mulf %1550, %1260 : vector<8x128xf32>
    %c356 = arith.constant 356 : index
    %1552 = memref.load %arg2[%c356] : memref<832xf32, #tpu.memory_space<smem>>
    %1553 = vector.broadcast %1552 : f32 to vector<8x128xf32>
    %1554 = arith.mulf %1553, %1292 : vector<8x128xf32>
    %1555 = arith.addf %1551, %1554 : vector<8x128xf32>
    %1556 = arith.addf %1548, %1555 : vector<8x128xf32>
    %c359 = arith.constant 359 : index
    %1557 = memref.load %arg2[%c359] : memref<832xf32, #tpu.memory_space<smem>>
    %1558 = vector.broadcast %1557 : f32 to vector<8x128xf32>
    %1559 = arith.mulf %1558, %1279 : vector<8x128xf32>
    %c358 = arith.constant 358 : index
    %1560 = memref.load %arg2[%c358] : memref<832xf32, #tpu.memory_space<smem>>
    %1561 = vector.broadcast %1560 : f32 to vector<8x128xf32>
    %1562 = arith.mulf %1561, %1295 : vector<8x128xf32>
    %1563 = arith.addf %1559, %1562 : vector<8x128xf32>
    %1564 = arith.addf %1556, %1563 : vector<8x128xf32>
    %c367 = arith.constant 367 : index
    %1565 = memref.load %arg2[%c367] : memref<832xf32, #tpu.memory_space<smem>>
    %1566 = vector.broadcast %1565 : f32 to vector<8x128xf32>
    %1567 = arith.addf %1564, %1566 : vector<8x128xf32>
    %1568 = math.tanh %1329 : vector<8x128xf32>
    %cst_57 = arith.constant 5.000000e-01 : f32
    %1569 = vector.broadcast %cst_57 : f32 to vector<8x128xf32>
    %1570 = arith.mulf %1569, %1465 : vector<8x128xf32>
    %1571 = math.tanh %1570 : vector<8x128xf32>
    %cst_58 = arith.constant 1.000000e+00 : f32
    %1572 = vector.broadcast %cst_58 : f32 to vector<8x128xf32>
    %1573 = arith.addf %1571, %1572 : vector<8x128xf32>
    %cst_59 = arith.constant 5.000000e-01 : f32
    %1574 = vector.broadcast %cst_59 : f32 to vector<8x128xf32>
    %1575 = arith.mulf %1574, %1573 : vector<8x128xf32>
    %1576 = arith.mulf %1568, %1575 : vector<8x128xf32>
    %1577 = math.tanh %1363 : vector<8x128xf32>
    %cst_60 = arith.constant 5.000000e-01 : f32
    %1578 = vector.broadcast %cst_60 : f32 to vector<8x128xf32>
    %1579 = arith.mulf %1578, %1499 : vector<8x128xf32>
    %1580 = math.tanh %1579 : vector<8x128xf32>
    %cst_61 = arith.constant 1.000000e+00 : f32
    %1581 = vector.broadcast %cst_61 : f32 to vector<8x128xf32>
    %1582 = arith.addf %1580, %1581 : vector<8x128xf32>
    %cst_62 = arith.constant 5.000000e-01 : f32
    %1583 = vector.broadcast %cst_62 : f32 to vector<8x128xf32>
    %1584 = arith.mulf %1583, %1582 : vector<8x128xf32>
    %1585 = arith.mulf %1577, %1584 : vector<8x128xf32>
    %1586 = math.tanh %1397 : vector<8x128xf32>
    %cst_63 = arith.constant 5.000000e-01 : f32
    %1587 = vector.broadcast %cst_63 : f32 to vector<8x128xf32>
    %1588 = arith.mulf %1587, %1533 : vector<8x128xf32>
    %1589 = math.tanh %1588 : vector<8x128xf32>
    %cst_64 = arith.constant 1.000000e+00 : f32
    %1590 = vector.broadcast %cst_64 : f32 to vector<8x128xf32>
    %1591 = arith.addf %1589, %1590 : vector<8x128xf32>
    %cst_65 = arith.constant 5.000000e-01 : f32
    %1592 = vector.broadcast %cst_65 : f32 to vector<8x128xf32>
    %1593 = arith.mulf %1592, %1591 : vector<8x128xf32>
    %1594 = arith.mulf %1586, %1593 : vector<8x128xf32>
    %1595 = math.tanh %1431 : vector<8x128xf32>
    %cst_66 = arith.constant 5.000000e-01 : f32
    %1596 = vector.broadcast %cst_66 : f32 to vector<8x128xf32>
    %1597 = arith.mulf %1596, %1567 : vector<8x128xf32>
    %1598 = math.tanh %1597 : vector<8x128xf32>
    %cst_67 = arith.constant 1.000000e+00 : f32
    %1599 = vector.broadcast %cst_67 : f32 to vector<8x128xf32>
    %1600 = arith.addf %1598, %1599 : vector<8x128xf32>
    %cst_68 = arith.constant 5.000000e-01 : f32
    %1601 = vector.broadcast %cst_68 : f32 to vector<8x128xf32>
    %1602 = arith.mulf %1601, %1600 : vector<8x128xf32>
    %1603 = arith.mulf %1595, %1602 : vector<8x128xf32>
    %c368 = arith.constant 368 : index
    %1604 = memref.load %arg2[%c368] : memref<832xf32, #tpu.memory_space<smem>>
    %1605 = vector.broadcast %1604 : f32 to vector<8x128xf32>
    %1606 = arith.mulf %1605, %1576 : vector<8x128xf32>
    %1607 = arith.addf %1222, %1606 : vector<8x128xf32>
    %c369 = arith.constant 369 : index
    %1608 = memref.load %arg2[%c369] : memref<832xf32, #tpu.memory_space<smem>>
    %1609 = vector.broadcast %1608 : f32 to vector<8x128xf32>
    %1610 = arith.mulf %1609, %1585 : vector<8x128xf32>
    %1611 = arith.addf %1607, %1610 : vector<8x128xf32>
    %c370 = arith.constant 370 : index
    %1612 = memref.load %arg2[%c370] : memref<832xf32, #tpu.memory_space<smem>>
    %1613 = vector.broadcast %1612 : f32 to vector<8x128xf32>
    %1614 = arith.mulf %1613, %1594 : vector<8x128xf32>
    %1615 = arith.addf %1611, %1614 : vector<8x128xf32>
    %c371 = arith.constant 371 : index
    %1616 = memref.load %arg2[%c371] : memref<832xf32, #tpu.memory_space<smem>>
    %1617 = vector.broadcast %1616 : f32 to vector<8x128xf32>
    %1618 = arith.mulf %1617, %1603 : vector<8x128xf32>
    %1619 = arith.addf %1615, %1618 : vector<8x128xf32>
    %c384 = arith.constant 384 : index
    %1620 = memref.load %arg2[%c384] : memref<832xf32, #tpu.memory_space<smem>>
    %1621 = vector.broadcast %1620 : f32 to vector<8x128xf32>
    %1622 = arith.addf %1619, %1621 : vector<8x128xf32>
    %c372 = arith.constant 372 : index
    %1623 = memref.load %arg2[%c372] : memref<832xf32, #tpu.memory_space<smem>>
    %1624 = vector.broadcast %1623 : f32 to vector<8x128xf32>
    %1625 = arith.mulf %1624, %1576 : vector<8x128xf32>
    %1626 = arith.addf %1241, %1625 : vector<8x128xf32>
    %c373 = arith.constant 373 : index
    %1627 = memref.load %arg2[%c373] : memref<832xf32, #tpu.memory_space<smem>>
    %1628 = vector.broadcast %1627 : f32 to vector<8x128xf32>
    %1629 = arith.mulf %1628, %1585 : vector<8x128xf32>
    %1630 = arith.addf %1626, %1629 : vector<8x128xf32>
    %c374 = arith.constant 374 : index
    %1631 = memref.load %arg2[%c374] : memref<832xf32, #tpu.memory_space<smem>>
    %1632 = vector.broadcast %1631 : f32 to vector<8x128xf32>
    %1633 = arith.mulf %1632, %1594 : vector<8x128xf32>
    %1634 = arith.addf %1630, %1633 : vector<8x128xf32>
    %c375 = arith.constant 375 : index
    %1635 = memref.load %arg2[%c375] : memref<832xf32, #tpu.memory_space<smem>>
    %1636 = vector.broadcast %1635 : f32 to vector<8x128xf32>
    %1637 = arith.mulf %1636, %1603 : vector<8x128xf32>
    %1638 = arith.addf %1634, %1637 : vector<8x128xf32>
    %c385 = arith.constant 385 : index
    %1639 = memref.load %arg2[%c385] : memref<832xf32, #tpu.memory_space<smem>>
    %1640 = vector.broadcast %1639 : f32 to vector<8x128xf32>
    %1641 = arith.addf %1638, %1640 : vector<8x128xf32>
    %c376 = arith.constant 376 : index
    %1642 = memref.load %arg2[%c376] : memref<832xf32, #tpu.memory_space<smem>>
    %1643 = vector.broadcast %1642 : f32 to vector<8x128xf32>
    %1644 = arith.mulf %1643, %1576 : vector<8x128xf32>
    %1645 = arith.addf %1260, %1644 : vector<8x128xf32>
    %c377 = arith.constant 377 : index
    %1646 = memref.load %arg2[%c377] : memref<832xf32, #tpu.memory_space<smem>>
    %1647 = vector.broadcast %1646 : f32 to vector<8x128xf32>
    %1648 = arith.mulf %1647, %1585 : vector<8x128xf32>
    %1649 = arith.addf %1645, %1648 : vector<8x128xf32>
    %c378 = arith.constant 378 : index
    %1650 = memref.load %arg2[%c378] : memref<832xf32, #tpu.memory_space<smem>>
    %1651 = vector.broadcast %1650 : f32 to vector<8x128xf32>
    %1652 = arith.mulf %1651, %1594 : vector<8x128xf32>
    %1653 = arith.addf %1649, %1652 : vector<8x128xf32>
    %c379 = arith.constant 379 : index
    %1654 = memref.load %arg2[%c379] : memref<832xf32, #tpu.memory_space<smem>>
    %1655 = vector.broadcast %1654 : f32 to vector<8x128xf32>
    %1656 = arith.mulf %1655, %1603 : vector<8x128xf32>
    %1657 = arith.addf %1653, %1656 : vector<8x128xf32>
    %c386 = arith.constant 386 : index
    %1658 = memref.load %arg2[%c386] : memref<832xf32, #tpu.memory_space<smem>>
    %1659 = vector.broadcast %1658 : f32 to vector<8x128xf32>
    %1660 = arith.addf %1657, %1659 : vector<8x128xf32>
    %c380 = arith.constant 380 : index
    %1661 = memref.load %arg2[%c380] : memref<832xf32, #tpu.memory_space<smem>>
    %1662 = vector.broadcast %1661 : f32 to vector<8x128xf32>
    %1663 = arith.mulf %1662, %1576 : vector<8x128xf32>
    %1664 = arith.addf %1279, %1663 : vector<8x128xf32>
    %c381 = arith.constant 381 : index
    %1665 = memref.load %arg2[%c381] : memref<832xf32, #tpu.memory_space<smem>>
    %1666 = vector.broadcast %1665 : f32 to vector<8x128xf32>
    %1667 = arith.mulf %1666, %1585 : vector<8x128xf32>
    %1668 = arith.addf %1664, %1667 : vector<8x128xf32>
    %c382 = arith.constant 382 : index
    %1669 = memref.load %arg2[%c382] : memref<832xf32, #tpu.memory_space<smem>>
    %1670 = vector.broadcast %1669 : f32 to vector<8x128xf32>
    %1671 = arith.mulf %1670, %1594 : vector<8x128xf32>
    %1672 = arith.addf %1668, %1671 : vector<8x128xf32>
    %c383 = arith.constant 383 : index
    %1673 = memref.load %arg2[%c383] : memref<832xf32, #tpu.memory_space<smem>>
    %1674 = vector.broadcast %1673 : f32 to vector<8x128xf32>
    %1675 = arith.mulf %1674, %1603 : vector<8x128xf32>
    %1676 = arith.addf %1672, %1675 : vector<8x128xf32>
    %c387 = arith.constant 387 : index
    %1677 = memref.load %arg2[%c387] : memref<832xf32, #tpu.memory_space<smem>>
    %1678 = vector.broadcast %1677 : f32 to vector<8x128xf32>
    %1679 = arith.addf %1676, %1678 : vector<8x128xf32>
    %1680 = arith.addf %1280, %1622 : vector<8x128xf32>
    %1681 = arith.addf %1281, %1641 : vector<8x128xf32>
    %1682 = arith.addf %1282, %1660 : vector<8x128xf32>
    %1683 = arith.addf %1283, %1679 : vector<8x128xf32>
    %cst_69 = arith.constant 0.000000e+00 : f32
    %1684 = vector.broadcast %cst_69 : f32 to vector<8x16xf32>
    %1685 = vector.extract_strided_slice %1622 {offsets = [0, 0], sizes = [8, 112], strides = [1, 1]} : vector<8x128xf32> to vector<8x112xf32>
    %1686 = tpu.concatenate %1684, %1685 in 1 : vector<8x16xf32>, vector<8x112xf32> -> vector<8x128xf32>
    %cst_70 = arith.constant 0.000000e+00 : f32
    %1687 = vector.broadcast %cst_70 : f32 to vector<8x16xf32>
    %1688 = vector.extract_strided_slice %1641 {offsets = [0, 0], sizes = [8, 112], strides = [1, 1]} : vector<8x128xf32> to vector<8x112xf32>
    %1689 = tpu.concatenate %1687, %1688 in 1 : vector<8x16xf32>, vector<8x112xf32> -> vector<8x128xf32>
    %cst_71 = arith.constant 0.000000e+00 : f32
    %1690 = vector.broadcast %cst_71 : f32 to vector<8x16xf32>
    %1691 = vector.extract_strided_slice %1660 {offsets = [0, 0], sizes = [8, 112], strides = [1, 1]} : vector<8x128xf32> to vector<8x112xf32>
    %1692 = tpu.concatenate %1690, %1691 in 1 : vector<8x16xf32>, vector<8x112xf32> -> vector<8x128xf32>
    %cst_72 = arith.constant 0.000000e+00 : f32
    %1693 = vector.broadcast %cst_72 : f32 to vector<8x16xf32>
    %1694 = vector.extract_strided_slice %1679 {offsets = [0, 0], sizes = [8, 112], strides = [1, 1]} : vector<8x128xf32> to vector<8x112xf32>
    %1695 = tpu.concatenate %1693, %1694 in 1 : vector<8x16xf32>, vector<8x112xf32> -> vector<8x128xf32>
    %c389 = arith.constant 389 : index
    %1696 = memref.load %arg2[%c389] : memref<832xf32, #tpu.memory_space<smem>>
    %1697 = vector.broadcast %1696 : f32 to vector<8x128xf32>
    %1698 = arith.mulf %1697, %1622 : vector<8x128xf32>
    %c388 = arith.constant 388 : index
    %1699 = memref.load %arg2[%c388] : memref<832xf32, #tpu.memory_space<smem>>
    %1700 = vector.broadcast %1699 : f32 to vector<8x128xf32>
    %1701 = arith.mulf %1700, %1686 : vector<8x128xf32>
    %1702 = arith.addf %1698, %1701 : vector<8x128xf32>
    %c391 = arith.constant 391 : index
    %1703 = memref.load %arg2[%c391] : memref<832xf32, #tpu.memory_space<smem>>
    %1704 = vector.broadcast %1703 : f32 to vector<8x128xf32>
    %1705 = arith.mulf %1704, %1641 : vector<8x128xf32>
    %c390 = arith.constant 390 : index
    %1706 = memref.load %arg2[%c390] : memref<832xf32, #tpu.memory_space<smem>>
    %1707 = vector.broadcast %1706 : f32 to vector<8x128xf32>
    %1708 = arith.mulf %1707, %1689 : vector<8x128xf32>
    %1709 = arith.addf %1705, %1708 : vector<8x128xf32>
    %1710 = arith.addf %1702, %1709 : vector<8x128xf32>
    %c393 = arith.constant 393 : index
    %1711 = memref.load %arg2[%c393] : memref<832xf32, #tpu.memory_space<smem>>
    %1712 = vector.broadcast %1711 : f32 to vector<8x128xf32>
    %1713 = arith.mulf %1712, %1660 : vector<8x128xf32>
    %c392 = arith.constant 392 : index
    %1714 = memref.load %arg2[%c392] : memref<832xf32, #tpu.memory_space<smem>>
    %1715 = vector.broadcast %1714 : f32 to vector<8x128xf32>
    %1716 = arith.mulf %1715, %1692 : vector<8x128xf32>
    %1717 = arith.addf %1713, %1716 : vector<8x128xf32>
    %1718 = arith.addf %1710, %1717 : vector<8x128xf32>
    %c395 = arith.constant 395 : index
    %1719 = memref.load %arg2[%c395] : memref<832xf32, #tpu.memory_space<smem>>
    %1720 = vector.broadcast %1719 : f32 to vector<8x128xf32>
    %1721 = arith.mulf %1720, %1679 : vector<8x128xf32>
    %c394 = arith.constant 394 : index
    %1722 = memref.load %arg2[%c394] : memref<832xf32, #tpu.memory_space<smem>>
    %1723 = vector.broadcast %1722 : f32 to vector<8x128xf32>
    %1724 = arith.mulf %1723, %1695 : vector<8x128xf32>
    %1725 = arith.addf %1721, %1724 : vector<8x128xf32>
    %1726 = arith.addf %1718, %1725 : vector<8x128xf32>
    %c452 = arith.constant 452 : index
    %1727 = memref.load %arg2[%c452] : memref<832xf32, #tpu.memory_space<smem>>
    %1728 = vector.broadcast %1727 : f32 to vector<8x128xf32>
    %1729 = arith.addf %1726, %1728 : vector<8x128xf32>
    %c397 = arith.constant 397 : index
    %1730 = memref.load %arg2[%c397] : memref<832xf32, #tpu.memory_space<smem>>
    %1731 = vector.broadcast %1730 : f32 to vector<8x128xf32>
    %1732 = arith.mulf %1731, %1622 : vector<8x128xf32>
    %c396 = arith.constant 396 : index
    %1733 = memref.load %arg2[%c396] : memref<832xf32, #tpu.memory_space<smem>>
    %1734 = vector.broadcast %1733 : f32 to vector<8x128xf32>
    %1735 = arith.mulf %1734, %1686 : vector<8x128xf32>
    %1736 = arith.addf %1732, %1735 : vector<8x128xf32>
    %c399 = arith.constant 399 : index
    %1737 = memref.load %arg2[%c399] : memref<832xf32, #tpu.memory_space<smem>>
    %1738 = vector.broadcast %1737 : f32 to vector<8x128xf32>
    %1739 = arith.mulf %1738, %1641 : vector<8x128xf32>
    %c398 = arith.constant 398 : index
    %1740 = memref.load %arg2[%c398] : memref<832xf32, #tpu.memory_space<smem>>
    %1741 = vector.broadcast %1740 : f32 to vector<8x128xf32>
    %1742 = arith.mulf %1741, %1689 : vector<8x128xf32>
    %1743 = arith.addf %1739, %1742 : vector<8x128xf32>
    %1744 = arith.addf %1736, %1743 : vector<8x128xf32>
    %c401 = arith.constant 401 : index
    %1745 = memref.load %arg2[%c401] : memref<832xf32, #tpu.memory_space<smem>>
    %1746 = vector.broadcast %1745 : f32 to vector<8x128xf32>
    %1747 = arith.mulf %1746, %1660 : vector<8x128xf32>
    %c400 = arith.constant 400 : index
    %1748 = memref.load %arg2[%c400] : memref<832xf32, #tpu.memory_space<smem>>
    %1749 = vector.broadcast %1748 : f32 to vector<8x128xf32>
    %1750 = arith.mulf %1749, %1692 : vector<8x128xf32>
    %1751 = arith.addf %1747, %1750 : vector<8x128xf32>
    %1752 = arith.addf %1744, %1751 : vector<8x128xf32>
    %c403 = arith.constant 403 : index
    %1753 = memref.load %arg2[%c403] : memref<832xf32, #tpu.memory_space<smem>>
    %1754 = vector.broadcast %1753 : f32 to vector<8x128xf32>
    %1755 = arith.mulf %1754, %1679 : vector<8x128xf32>
    %c402 = arith.constant 402 : index
    %1756 = memref.load %arg2[%c402] : memref<832xf32, #tpu.memory_space<smem>>
    %1757 = vector.broadcast %1756 : f32 to vector<8x128xf32>
    %1758 = arith.mulf %1757, %1695 : vector<8x128xf32>
    %1759 = arith.addf %1755, %1758 : vector<8x128xf32>
    %1760 = arith.addf %1752, %1759 : vector<8x128xf32>
    %c453 = arith.constant 453 : index
    %1761 = memref.load %arg2[%c453] : memref<832xf32, #tpu.memory_space<smem>>
    %1762 = vector.broadcast %1761 : f32 to vector<8x128xf32>
    %1763 = arith.addf %1760, %1762 : vector<8x128xf32>
    %c405 = arith.constant 405 : index
    %1764 = memref.load %arg2[%c405] : memref<832xf32, #tpu.memory_space<smem>>
    %1765 = vector.broadcast %1764 : f32 to vector<8x128xf32>
    %1766 = arith.mulf %1765, %1622 : vector<8x128xf32>
    %c404 = arith.constant 404 : index
    %1767 = memref.load %arg2[%c404] : memref<832xf32, #tpu.memory_space<smem>>
    %1768 = vector.broadcast %1767 : f32 to vector<8x128xf32>
    %1769 = arith.mulf %1768, %1686 : vector<8x128xf32>
    %1770 = arith.addf %1766, %1769 : vector<8x128xf32>
    %c407 = arith.constant 407 : index
    %1771 = memref.load %arg2[%c407] : memref<832xf32, #tpu.memory_space<smem>>
    %1772 = vector.broadcast %1771 : f32 to vector<8x128xf32>
    %1773 = arith.mulf %1772, %1641 : vector<8x128xf32>
    %c406 = arith.constant 406 : index
    %1774 = memref.load %arg2[%c406] : memref<832xf32, #tpu.memory_space<smem>>
    %1775 = vector.broadcast %1774 : f32 to vector<8x128xf32>
    %1776 = arith.mulf %1775, %1689 : vector<8x128xf32>
    %1777 = arith.addf %1773, %1776 : vector<8x128xf32>
    %1778 = arith.addf %1770, %1777 : vector<8x128xf32>
    %c409 = arith.constant 409 : index
    %1779 = memref.load %arg2[%c409] : memref<832xf32, #tpu.memory_space<smem>>
    %1780 = vector.broadcast %1779 : f32 to vector<8x128xf32>
    %1781 = arith.mulf %1780, %1660 : vector<8x128xf32>
    %c408 = arith.constant 408 : index
    %1782 = memref.load %arg2[%c408] : memref<832xf32, #tpu.memory_space<smem>>
    %1783 = vector.broadcast %1782 : f32 to vector<8x128xf32>
    %1784 = arith.mulf %1783, %1692 : vector<8x128xf32>
    %1785 = arith.addf %1781, %1784 : vector<8x128xf32>
    %1786 = arith.addf %1778, %1785 : vector<8x128xf32>
    %c411 = arith.constant 411 : index
    %1787 = memref.load %arg2[%c411] : memref<832xf32, #tpu.memory_space<smem>>
    %1788 = vector.broadcast %1787 : f32 to vector<8x128xf32>
    %1789 = arith.mulf %1788, %1679 : vector<8x128xf32>
    %c410 = arith.constant 410 : index
    %1790 = memref.load %arg2[%c410] : memref<832xf32, #tpu.memory_space<smem>>
    %1791 = vector.broadcast %1790 : f32 to vector<8x128xf32>
    %1792 = arith.mulf %1791, %1695 : vector<8x128xf32>
    %1793 = arith.addf %1789, %1792 : vector<8x128xf32>
    %1794 = arith.addf %1786, %1793 : vector<8x128xf32>
    %c454 = arith.constant 454 : index
    %1795 = memref.load %arg2[%c454] : memref<832xf32, #tpu.memory_space<smem>>
    %1796 = vector.broadcast %1795 : f32 to vector<8x128xf32>
    %1797 = arith.addf %1794, %1796 : vector<8x128xf32>
    %c413 = arith.constant 413 : index
    %1798 = memref.load %arg2[%c413] : memref<832xf32, #tpu.memory_space<smem>>
    %1799 = vector.broadcast %1798 : f32 to vector<8x128xf32>
    %1800 = arith.mulf %1799, %1622 : vector<8x128xf32>
    %c412 = arith.constant 412 : index
    %1801 = memref.load %arg2[%c412] : memref<832xf32, #tpu.memory_space<smem>>
    %1802 = vector.broadcast %1801 : f32 to vector<8x128xf32>
    %1803 = arith.mulf %1802, %1686 : vector<8x128xf32>
    %1804 = arith.addf %1800, %1803 : vector<8x128xf32>
    %c415 = arith.constant 415 : index
    %1805 = memref.load %arg2[%c415] : memref<832xf32, #tpu.memory_space<smem>>
    %1806 = vector.broadcast %1805 : f32 to vector<8x128xf32>
    %1807 = arith.mulf %1806, %1641 : vector<8x128xf32>
    %c414 = arith.constant 414 : index
    %1808 = memref.load %arg2[%c414] : memref<832xf32, #tpu.memory_space<smem>>
    %1809 = vector.broadcast %1808 : f32 to vector<8x128xf32>
    %1810 = arith.mulf %1809, %1689 : vector<8x128xf32>
    %1811 = arith.addf %1807, %1810 : vector<8x128xf32>
    %1812 = arith.addf %1804, %1811 : vector<8x128xf32>
    %c417 = arith.constant 417 : index
    %1813 = memref.load %arg2[%c417] : memref<832xf32, #tpu.memory_space<smem>>
    %1814 = vector.broadcast %1813 : f32 to vector<8x128xf32>
    %1815 = arith.mulf %1814, %1660 : vector<8x128xf32>
    %c416 = arith.constant 416 : index
    %1816 = memref.load %arg2[%c416] : memref<832xf32, #tpu.memory_space<smem>>
    %1817 = vector.broadcast %1816 : f32 to vector<8x128xf32>
    %1818 = arith.mulf %1817, %1692 : vector<8x128xf32>
    %1819 = arith.addf %1815, %1818 : vector<8x128xf32>
    %1820 = arith.addf %1812, %1819 : vector<8x128xf32>
    %c419 = arith.constant 419 : index
    %1821 = memref.load %arg2[%c419] : memref<832xf32, #tpu.memory_space<smem>>
    %1822 = vector.broadcast %1821 : f32 to vector<8x128xf32>
    %1823 = arith.mulf %1822, %1679 : vector<8x128xf32>
    %c418 = arith.constant 418 : index
    %1824 = memref.load %arg2[%c418] : memref<832xf32, #tpu.memory_space<smem>>
    %1825 = vector.broadcast %1824 : f32 to vector<8x128xf32>
    %1826 = arith.mulf %1825, %1695 : vector<8x128xf32>
    %1827 = arith.addf %1823, %1826 : vector<8x128xf32>
    %1828 = arith.addf %1820, %1827 : vector<8x128xf32>
    %c455 = arith.constant 455 : index
    %1829 = memref.load %arg2[%c455] : memref<832xf32, #tpu.memory_space<smem>>
    %1830 = vector.broadcast %1829 : f32 to vector<8x128xf32>
    %1831 = arith.addf %1828, %1830 : vector<8x128xf32>
    %c421 = arith.constant 421 : index
    %1832 = memref.load %arg2[%c421] : memref<832xf32, #tpu.memory_space<smem>>
    %1833 = vector.broadcast %1832 : f32 to vector<8x128xf32>
    %1834 = arith.mulf %1833, %1622 : vector<8x128xf32>
    %c420 = arith.constant 420 : index
    %1835 = memref.load %arg2[%c420] : memref<832xf32, #tpu.memory_space<smem>>
    %1836 = vector.broadcast %1835 : f32 to vector<8x128xf32>
    %1837 = arith.mulf %1836, %1686 : vector<8x128xf32>
    %1838 = arith.addf %1834, %1837 : vector<8x128xf32>
    %c423 = arith.constant 423 : index
    %1839 = memref.load %arg2[%c423] : memref<832xf32, #tpu.memory_space<smem>>
    %1840 = vector.broadcast %1839 : f32 to vector<8x128xf32>
    %1841 = arith.mulf %1840, %1641 : vector<8x128xf32>
    %c422 = arith.constant 422 : index
    %1842 = memref.load %arg2[%c422] : memref<832xf32, #tpu.memory_space<smem>>
    %1843 = vector.broadcast %1842 : f32 to vector<8x128xf32>
    %1844 = arith.mulf %1843, %1689 : vector<8x128xf32>
    %1845 = arith.addf %1841, %1844 : vector<8x128xf32>
    %1846 = arith.addf %1838, %1845 : vector<8x128xf32>
    %c425 = arith.constant 425 : index
    %1847 = memref.load %arg2[%c425] : memref<832xf32, #tpu.memory_space<smem>>
    %1848 = vector.broadcast %1847 : f32 to vector<8x128xf32>
    %1849 = arith.mulf %1848, %1660 : vector<8x128xf32>
    %c424 = arith.constant 424 : index
    %1850 = memref.load %arg2[%c424] : memref<832xf32, #tpu.memory_space<smem>>
    %1851 = vector.broadcast %1850 : f32 to vector<8x128xf32>
    %1852 = arith.mulf %1851, %1692 : vector<8x128xf32>
    %1853 = arith.addf %1849, %1852 : vector<8x128xf32>
    %1854 = arith.addf %1846, %1853 : vector<8x128xf32>
    %c427 = arith.constant 427 : index
    %1855 = memref.load %arg2[%c427] : memref<832xf32, #tpu.memory_space<smem>>
    %1856 = vector.broadcast %1855 : f32 to vector<8x128xf32>
    %1857 = arith.mulf %1856, %1679 : vector<8x128xf32>
    %c426 = arith.constant 426 : index
    %1858 = memref.load %arg2[%c426] : memref<832xf32, #tpu.memory_space<smem>>
    %1859 = vector.broadcast %1858 : f32 to vector<8x128xf32>
    %1860 = arith.mulf %1859, %1695 : vector<8x128xf32>
    %1861 = arith.addf %1857, %1860 : vector<8x128xf32>
    %1862 = arith.addf %1854, %1861 : vector<8x128xf32>
    %c456 = arith.constant 456 : index
    %1863 = memref.load %arg2[%c456] : memref<832xf32, #tpu.memory_space<smem>>
    %1864 = vector.broadcast %1863 : f32 to vector<8x128xf32>
    %1865 = arith.addf %1862, %1864 : vector<8x128xf32>
    %c429 = arith.constant 429 : index
    %1866 = memref.load %arg2[%c429] : memref<832xf32, #tpu.memory_space<smem>>
    %1867 = vector.broadcast %1866 : f32 to vector<8x128xf32>
    %1868 = arith.mulf %1867, %1622 : vector<8x128xf32>
    %c428 = arith.constant 428 : index
    %1869 = memref.load %arg2[%c428] : memref<832xf32, #tpu.memory_space<smem>>
    %1870 = vector.broadcast %1869 : f32 to vector<8x128xf32>
    %1871 = arith.mulf %1870, %1686 : vector<8x128xf32>
    %1872 = arith.addf %1868, %1871 : vector<8x128xf32>
    %c431 = arith.constant 431 : index
    %1873 = memref.load %arg2[%c431] : memref<832xf32, #tpu.memory_space<smem>>
    %1874 = vector.broadcast %1873 : f32 to vector<8x128xf32>
    %1875 = arith.mulf %1874, %1641 : vector<8x128xf32>
    %c430 = arith.constant 430 : index
    %1876 = memref.load %arg2[%c430] : memref<832xf32, #tpu.memory_space<smem>>
    %1877 = vector.broadcast %1876 : f32 to vector<8x128xf32>
    %1878 = arith.mulf %1877, %1689 : vector<8x128xf32>
    %1879 = arith.addf %1875, %1878 : vector<8x128xf32>
    %1880 = arith.addf %1872, %1879 : vector<8x128xf32>
    %c433 = arith.constant 433 : index
    %1881 = memref.load %arg2[%c433] : memref<832xf32, #tpu.memory_space<smem>>
    %1882 = vector.broadcast %1881 : f32 to vector<8x128xf32>
    %1883 = arith.mulf %1882, %1660 : vector<8x128xf32>
    %c432 = arith.constant 432 : index
    %1884 = memref.load %arg2[%c432] : memref<832xf32, #tpu.memory_space<smem>>
    %1885 = vector.broadcast %1884 : f32 to vector<8x128xf32>
    %1886 = arith.mulf %1885, %1692 : vector<8x128xf32>
    %1887 = arith.addf %1883, %1886 : vector<8x128xf32>
    %1888 = arith.addf %1880, %1887 : vector<8x128xf32>
    %c435 = arith.constant 435 : index
    %1889 = memref.load %arg2[%c435] : memref<832xf32, #tpu.memory_space<smem>>
    %1890 = vector.broadcast %1889 : f32 to vector<8x128xf32>
    %1891 = arith.mulf %1890, %1679 : vector<8x128xf32>
    %c434 = arith.constant 434 : index
    %1892 = memref.load %arg2[%c434] : memref<832xf32, #tpu.memory_space<smem>>
    %1893 = vector.broadcast %1892 : f32 to vector<8x128xf32>
    %1894 = arith.mulf %1893, %1695 : vector<8x128xf32>
    %1895 = arith.addf %1891, %1894 : vector<8x128xf32>
    %1896 = arith.addf %1888, %1895 : vector<8x128xf32>
    %c457 = arith.constant 457 : index
    %1897 = memref.load %arg2[%c457] : memref<832xf32, #tpu.memory_space<smem>>
    %1898 = vector.broadcast %1897 : f32 to vector<8x128xf32>
    %1899 = arith.addf %1896, %1898 : vector<8x128xf32>
    %c437 = arith.constant 437 : index
    %1900 = memref.load %arg2[%c437] : memref<832xf32, #tpu.memory_space<smem>>
    %1901 = vector.broadcast %1900 : f32 to vector<8x128xf32>
    %1902 = arith.mulf %1901, %1622 : vector<8x128xf32>
    %c436 = arith.constant 436 : index
    %1903 = memref.load %arg2[%c436] : memref<832xf32, #tpu.memory_space<smem>>
    %1904 = vector.broadcast %1903 : f32 to vector<8x128xf32>
    %1905 = arith.mulf %1904, %1686 : vector<8x128xf32>
    %1906 = arith.addf %1902, %1905 : vector<8x128xf32>
    %c439 = arith.constant 439 : index
    %1907 = memref.load %arg2[%c439] : memref<832xf32, #tpu.memory_space<smem>>
    %1908 = vector.broadcast %1907 : f32 to vector<8x128xf32>
    %1909 = arith.mulf %1908, %1641 : vector<8x128xf32>
    %c438 = arith.constant 438 : index
    %1910 = memref.load %arg2[%c438] : memref<832xf32, #tpu.memory_space<smem>>
    %1911 = vector.broadcast %1910 : f32 to vector<8x128xf32>
    %1912 = arith.mulf %1911, %1689 : vector<8x128xf32>
    %1913 = arith.addf %1909, %1912 : vector<8x128xf32>
    %1914 = arith.addf %1906, %1913 : vector<8x128xf32>
    %c441 = arith.constant 441 : index
    %1915 = memref.load %arg2[%c441] : memref<832xf32, #tpu.memory_space<smem>>
    %1916 = vector.broadcast %1915 : f32 to vector<8x128xf32>
    %1917 = arith.mulf %1916, %1660 : vector<8x128xf32>
    %c440 = arith.constant 440 : index
    %1918 = memref.load %arg2[%c440] : memref<832xf32, #tpu.memory_space<smem>>
    %1919 = vector.broadcast %1918 : f32 to vector<8x128xf32>
    %1920 = arith.mulf %1919, %1692 : vector<8x128xf32>
    %1921 = arith.addf %1917, %1920 : vector<8x128xf32>
    %1922 = arith.addf %1914, %1921 : vector<8x128xf32>
    %c443 = arith.constant 443 : index
    %1923 = memref.load %arg2[%c443] : memref<832xf32, #tpu.memory_space<smem>>
    %1924 = vector.broadcast %1923 : f32 to vector<8x128xf32>
    %1925 = arith.mulf %1924, %1679 : vector<8x128xf32>
    %c442 = arith.constant 442 : index
    %1926 = memref.load %arg2[%c442] : memref<832xf32, #tpu.memory_space<smem>>
    %1927 = vector.broadcast %1926 : f32 to vector<8x128xf32>
    %1928 = arith.mulf %1927, %1695 : vector<8x128xf32>
    %1929 = arith.addf %1925, %1928 : vector<8x128xf32>
    %1930 = arith.addf %1922, %1929 : vector<8x128xf32>
    %c458 = arith.constant 458 : index
    %1931 = memref.load %arg2[%c458] : memref<832xf32, #tpu.memory_space<smem>>
    %1932 = vector.broadcast %1931 : f32 to vector<8x128xf32>
    %1933 = arith.addf %1930, %1932 : vector<8x128xf32>
    %c445 = arith.constant 445 : index
    %1934 = memref.load %arg2[%c445] : memref<832xf32, #tpu.memory_space<smem>>
    %1935 = vector.broadcast %1934 : f32 to vector<8x128xf32>
    %1936 = arith.mulf %1935, %1622 : vector<8x128xf32>
    %c444 = arith.constant 444 : index
    %1937 = memref.load %arg2[%c444] : memref<832xf32, #tpu.memory_space<smem>>
    %1938 = vector.broadcast %1937 : f32 to vector<8x128xf32>
    %1939 = arith.mulf %1938, %1686 : vector<8x128xf32>
    %1940 = arith.addf %1936, %1939 : vector<8x128xf32>
    %c447 = arith.constant 447 : index
    %1941 = memref.load %arg2[%c447] : memref<832xf32, #tpu.memory_space<smem>>
    %1942 = vector.broadcast %1941 : f32 to vector<8x128xf32>
    %1943 = arith.mulf %1942, %1641 : vector<8x128xf32>
    %c446 = arith.constant 446 : index
    %1944 = memref.load %arg2[%c446] : memref<832xf32, #tpu.memory_space<smem>>
    %1945 = vector.broadcast %1944 : f32 to vector<8x128xf32>
    %1946 = arith.mulf %1945, %1689 : vector<8x128xf32>
    %1947 = arith.addf %1943, %1946 : vector<8x128xf32>
    %1948 = arith.addf %1940, %1947 : vector<8x128xf32>
    %c449 = arith.constant 449 : index
    %1949 = memref.load %arg2[%c449] : memref<832xf32, #tpu.memory_space<smem>>
    %1950 = vector.broadcast %1949 : f32 to vector<8x128xf32>
    %1951 = arith.mulf %1950, %1660 : vector<8x128xf32>
    %c448 = arith.constant 448 : index
    %1952 = memref.load %arg2[%c448] : memref<832xf32, #tpu.memory_space<smem>>
    %1953 = vector.broadcast %1952 : f32 to vector<8x128xf32>
    %1954 = arith.mulf %1953, %1692 : vector<8x128xf32>
    %1955 = arith.addf %1951, %1954 : vector<8x128xf32>
    %1956 = arith.addf %1948, %1955 : vector<8x128xf32>
    %c451 = arith.constant 451 : index
    %1957 = memref.load %arg2[%c451] : memref<832xf32, #tpu.memory_space<smem>>
    %1958 = vector.broadcast %1957 : f32 to vector<8x128xf32>
    %1959 = arith.mulf %1958, %1679 : vector<8x128xf32>
    %c450 = arith.constant 450 : index
    %1960 = memref.load %arg2[%c450] : memref<832xf32, #tpu.memory_space<smem>>
    %1961 = vector.broadcast %1960 : f32 to vector<8x128xf32>
    %1962 = arith.mulf %1961, %1695 : vector<8x128xf32>
    %1963 = arith.addf %1959, %1962 : vector<8x128xf32>
    %1964 = arith.addf %1956, %1963 : vector<8x128xf32>
    %c459 = arith.constant 459 : index
    %1965 = memref.load %arg2[%c459] : memref<832xf32, #tpu.memory_space<smem>>
    %1966 = vector.broadcast %1965 : f32 to vector<8x128xf32>
    %1967 = arith.addf %1964, %1966 : vector<8x128xf32>
    %1968 = math.tanh %1729 : vector<8x128xf32>
    %cst_73 = arith.constant 5.000000e-01 : f32
    %1969 = vector.broadcast %cst_73 : f32 to vector<8x128xf32>
    %1970 = arith.mulf %1969, %1865 : vector<8x128xf32>
    %1971 = math.tanh %1970 : vector<8x128xf32>
    %cst_74 = arith.constant 1.000000e+00 : f32
    %1972 = vector.broadcast %cst_74 : f32 to vector<8x128xf32>
    %1973 = arith.addf %1971, %1972 : vector<8x128xf32>
    %cst_75 = arith.constant 5.000000e-01 : f32
    %1974 = vector.broadcast %cst_75 : f32 to vector<8x128xf32>
    %1975 = arith.mulf %1974, %1973 : vector<8x128xf32>
    %1976 = arith.mulf %1968, %1975 : vector<8x128xf32>
    %1977 = math.tanh %1763 : vector<8x128xf32>
    %cst_76 = arith.constant 5.000000e-01 : f32
    %1978 = vector.broadcast %cst_76 : f32 to vector<8x128xf32>
    %1979 = arith.mulf %1978, %1899 : vector<8x128xf32>
    %1980 = math.tanh %1979 : vector<8x128xf32>
    %cst_77 = arith.constant 1.000000e+00 : f32
    %1981 = vector.broadcast %cst_77 : f32 to vector<8x128xf32>
    %1982 = arith.addf %1980, %1981 : vector<8x128xf32>
    %cst_78 = arith.constant 5.000000e-01 : f32
    %1983 = vector.broadcast %cst_78 : f32 to vector<8x128xf32>
    %1984 = arith.mulf %1983, %1982 : vector<8x128xf32>
    %1985 = arith.mulf %1977, %1984 : vector<8x128xf32>
    %1986 = math.tanh %1797 : vector<8x128xf32>
    %cst_79 = arith.constant 5.000000e-01 : f32
    %1987 = vector.broadcast %cst_79 : f32 to vector<8x128xf32>
    %1988 = arith.mulf %1987, %1933 : vector<8x128xf32>
    %1989 = math.tanh %1988 : vector<8x128xf32>
    %cst_80 = arith.constant 1.000000e+00 : f32
    %1990 = vector.broadcast %cst_80 : f32 to vector<8x128xf32>
    %1991 = arith.addf %1989, %1990 : vector<8x128xf32>
    %cst_81 = arith.constant 5.000000e-01 : f32
    %1992 = vector.broadcast %cst_81 : f32 to vector<8x128xf32>
    %1993 = arith.mulf %1992, %1991 : vector<8x128xf32>
    %1994 = arith.mulf %1986, %1993 : vector<8x128xf32>
    %1995 = math.tanh %1831 : vector<8x128xf32>
    %cst_82 = arith.constant 5.000000e-01 : f32
    %1996 = vector.broadcast %cst_82 : f32 to vector<8x128xf32>
    %1997 = arith.mulf %1996, %1967 : vector<8x128xf32>
    %1998 = math.tanh %1997 : vector<8x128xf32>
    %cst_83 = arith.constant 1.000000e+00 : f32
    %1999 = vector.broadcast %cst_83 : f32 to vector<8x128xf32>
    %2000 = arith.addf %1998, %1999 : vector<8x128xf32>
    %cst_84 = arith.constant 5.000000e-01 : f32
    %2001 = vector.broadcast %cst_84 : f32 to vector<8x128xf32>
    %2002 = arith.mulf %2001, %2000 : vector<8x128xf32>
    %2003 = arith.mulf %1995, %2002 : vector<8x128xf32>
    %c460 = arith.constant 460 : index
    %2004 = memref.load %arg2[%c460] : memref<832xf32, #tpu.memory_space<smem>>
    %2005 = vector.broadcast %2004 : f32 to vector<8x128xf32>
    %2006 = arith.mulf %2005, %1976 : vector<8x128xf32>
    %2007 = arith.addf %1622, %2006 : vector<8x128xf32>
    %c461 = arith.constant 461 : index
    %2008 = memref.load %arg2[%c461] : memref<832xf32, #tpu.memory_space<smem>>
    %2009 = vector.broadcast %2008 : f32 to vector<8x128xf32>
    %2010 = arith.mulf %2009, %1985 : vector<8x128xf32>
    %2011 = arith.addf %2007, %2010 : vector<8x128xf32>
    %c462 = arith.constant 462 : index
    %2012 = memref.load %arg2[%c462] : memref<832xf32, #tpu.memory_space<smem>>
    %2013 = vector.broadcast %2012 : f32 to vector<8x128xf32>
    %2014 = arith.mulf %2013, %1994 : vector<8x128xf32>
    %2015 = arith.addf %2011, %2014 : vector<8x128xf32>
    %c463 = arith.constant 463 : index
    %2016 = memref.load %arg2[%c463] : memref<832xf32, #tpu.memory_space<smem>>
    %2017 = vector.broadcast %2016 : f32 to vector<8x128xf32>
    %2018 = arith.mulf %2017, %2003 : vector<8x128xf32>
    %2019 = arith.addf %2015, %2018 : vector<8x128xf32>
    %c476 = arith.constant 476 : index
    %2020 = memref.load %arg2[%c476] : memref<832xf32, #tpu.memory_space<smem>>
    %2021 = vector.broadcast %2020 : f32 to vector<8x128xf32>
    %2022 = arith.addf %2019, %2021 : vector<8x128xf32>
    %c464 = arith.constant 464 : index
    %2023 = memref.load %arg2[%c464] : memref<832xf32, #tpu.memory_space<smem>>
    %2024 = vector.broadcast %2023 : f32 to vector<8x128xf32>
    %2025 = arith.mulf %2024, %1976 : vector<8x128xf32>
    %2026 = arith.addf %1641, %2025 : vector<8x128xf32>
    %c465 = arith.constant 465 : index
    %2027 = memref.load %arg2[%c465] : memref<832xf32, #tpu.memory_space<smem>>
    %2028 = vector.broadcast %2027 : f32 to vector<8x128xf32>
    %2029 = arith.mulf %2028, %1985 : vector<8x128xf32>
    %2030 = arith.addf %2026, %2029 : vector<8x128xf32>
    %c466 = arith.constant 466 : index
    %2031 = memref.load %arg2[%c466] : memref<832xf32, #tpu.memory_space<smem>>
    %2032 = vector.broadcast %2031 : f32 to vector<8x128xf32>
    %2033 = arith.mulf %2032, %1994 : vector<8x128xf32>
    %2034 = arith.addf %2030, %2033 : vector<8x128xf32>
    %c467 = arith.constant 467 : index
    %2035 = memref.load %arg2[%c467] : memref<832xf32, #tpu.memory_space<smem>>
    %2036 = vector.broadcast %2035 : f32 to vector<8x128xf32>
    %2037 = arith.mulf %2036, %2003 : vector<8x128xf32>
    %2038 = arith.addf %2034, %2037 : vector<8x128xf32>
    %c477 = arith.constant 477 : index
    %2039 = memref.load %arg2[%c477] : memref<832xf32, #tpu.memory_space<smem>>
    %2040 = vector.broadcast %2039 : f32 to vector<8x128xf32>
    %2041 = arith.addf %2038, %2040 : vector<8x128xf32>
    %c468 = arith.constant 468 : index
    %2042 = memref.load %arg2[%c468] : memref<832xf32, #tpu.memory_space<smem>>
    %2043 = vector.broadcast %2042 : f32 to vector<8x128xf32>
    %2044 = arith.mulf %2043, %1976 : vector<8x128xf32>
    %2045 = arith.addf %1660, %2044 : vector<8x128xf32>
    %c469 = arith.constant 469 : index
    %2046 = memref.load %arg2[%c469] : memref<832xf32, #tpu.memory_space<smem>>
    %2047 = vector.broadcast %2046 : f32 to vector<8x128xf32>
    %2048 = arith.mulf %2047, %1985 : vector<8x128xf32>
    %2049 = arith.addf %2045, %2048 : vector<8x128xf32>
    %c470 = arith.constant 470 : index
    %2050 = memref.load %arg2[%c470] : memref<832xf32, #tpu.memory_space<smem>>
    %2051 = vector.broadcast %2050 : f32 to vector<8x128xf32>
    %2052 = arith.mulf %2051, %1994 : vector<8x128xf32>
    %2053 = arith.addf %2049, %2052 : vector<8x128xf32>
    %c471 = arith.constant 471 : index
    %2054 = memref.load %arg2[%c471] : memref<832xf32, #tpu.memory_space<smem>>
    %2055 = vector.broadcast %2054 : f32 to vector<8x128xf32>
    %2056 = arith.mulf %2055, %2003 : vector<8x128xf32>
    %2057 = arith.addf %2053, %2056 : vector<8x128xf32>
    %c478 = arith.constant 478 : index
    %2058 = memref.load %arg2[%c478] : memref<832xf32, #tpu.memory_space<smem>>
    %2059 = vector.broadcast %2058 : f32 to vector<8x128xf32>
    %2060 = arith.addf %2057, %2059 : vector<8x128xf32>
    %c472 = arith.constant 472 : index
    %2061 = memref.load %arg2[%c472] : memref<832xf32, #tpu.memory_space<smem>>
    %2062 = vector.broadcast %2061 : f32 to vector<8x128xf32>
    %2063 = arith.mulf %2062, %1976 : vector<8x128xf32>
    %2064 = arith.addf %1679, %2063 : vector<8x128xf32>
    %c473 = arith.constant 473 : index
    %2065 = memref.load %arg2[%c473] : memref<832xf32, #tpu.memory_space<smem>>
    %2066 = vector.broadcast %2065 : f32 to vector<8x128xf32>
    %2067 = arith.mulf %2066, %1985 : vector<8x128xf32>
    %2068 = arith.addf %2064, %2067 : vector<8x128xf32>
    %c474 = arith.constant 474 : index
    %2069 = memref.load %arg2[%c474] : memref<832xf32, #tpu.memory_space<smem>>
    %2070 = vector.broadcast %2069 : f32 to vector<8x128xf32>
    %2071 = arith.mulf %2070, %1994 : vector<8x128xf32>
    %2072 = arith.addf %2068, %2071 : vector<8x128xf32>
    %c475 = arith.constant 475 : index
    %2073 = memref.load %arg2[%c475] : memref<832xf32, #tpu.memory_space<smem>>
    %2074 = vector.broadcast %2073 : f32 to vector<8x128xf32>
    %2075 = arith.mulf %2074, %2003 : vector<8x128xf32>
    %2076 = arith.addf %2072, %2075 : vector<8x128xf32>
    %c479 = arith.constant 479 : index
    %2077 = memref.load %arg2[%c479] : memref<832xf32, #tpu.memory_space<smem>>
    %2078 = vector.broadcast %2077 : f32 to vector<8x128xf32>
    %2079 = arith.addf %2076, %2078 : vector<8x128xf32>
    %2080 = arith.addf %1680, %2022 : vector<8x128xf32>
    %2081 = arith.addf %1681, %2041 : vector<8x128xf32>
    %2082 = arith.addf %1682, %2060 : vector<8x128xf32>
    %2083 = arith.addf %1683, %2079 : vector<8x128xf32>
    %cst_85 = arith.constant 0.000000e+00 : f32
    %2084 = vector.broadcast %cst_85 : f32 to vector<8x32xf32>
    %2085 = vector.extract_strided_slice %2022 {offsets = [0, 0], sizes = [8, 96], strides = [1, 1]} : vector<8x128xf32> to vector<8x96xf32>
    %2086 = tpu.concatenate %2084, %2085 in 1 : vector<8x32xf32>, vector<8x96xf32> -> vector<8x128xf32>
    %cst_86 = arith.constant 0.000000e+00 : f32
    %2087 = vector.broadcast %cst_86 : f32 to vector<8x32xf32>
    %2088 = vector.extract_strided_slice %2041 {offsets = [0, 0], sizes = [8, 96], strides = [1, 1]} : vector<8x128xf32> to vector<8x96xf32>
    %2089 = tpu.concatenate %2087, %2088 in 1 : vector<8x32xf32>, vector<8x96xf32> -> vector<8x128xf32>
    %cst_87 = arith.constant 0.000000e+00 : f32
    %2090 = vector.broadcast %cst_87 : f32 to vector<8x32xf32>
    %2091 = vector.extract_strided_slice %2060 {offsets = [0, 0], sizes = [8, 96], strides = [1, 1]} : vector<8x128xf32> to vector<8x96xf32>
    %2092 = tpu.concatenate %2090, %2091 in 1 : vector<8x32xf32>, vector<8x96xf32> -> vector<8x128xf32>
    %cst_88 = arith.constant 0.000000e+00 : f32
    %2093 = vector.broadcast %cst_88 : f32 to vector<8x32xf32>
    %2094 = vector.extract_strided_slice %2079 {offsets = [0, 0], sizes = [8, 96], strides = [1, 1]} : vector<8x128xf32> to vector<8x96xf32>
    %2095 = tpu.concatenate %2093, %2094 in 1 : vector<8x32xf32>, vector<8x96xf32> -> vector<8x128xf32>
    %c481 = arith.constant 481 : index
    %2096 = memref.load %arg2[%c481] : memref<832xf32, #tpu.memory_space<smem>>
    %2097 = vector.broadcast %2096 : f32 to vector<8x128xf32>
    %2098 = arith.mulf %2097, %2022 : vector<8x128xf32>
    %c480 = arith.constant 480 : index
    %2099 = memref.load %arg2[%c480] : memref<832xf32, #tpu.memory_space<smem>>
    %2100 = vector.broadcast %2099 : f32 to vector<8x128xf32>
    %2101 = arith.mulf %2100, %2086 : vector<8x128xf32>
    %2102 = arith.addf %2098, %2101 : vector<8x128xf32>
    %c483 = arith.constant 483 : index
    %2103 = memref.load %arg2[%c483] : memref<832xf32, #tpu.memory_space<smem>>
    %2104 = vector.broadcast %2103 : f32 to vector<8x128xf32>
    %2105 = arith.mulf %2104, %2041 : vector<8x128xf32>
    %c482 = arith.constant 482 : index
    %2106 = memref.load %arg2[%c482] : memref<832xf32, #tpu.memory_space<smem>>
    %2107 = vector.broadcast %2106 : f32 to vector<8x128xf32>
    %2108 = arith.mulf %2107, %2089 : vector<8x128xf32>
    %2109 = arith.addf %2105, %2108 : vector<8x128xf32>
    %2110 = arith.addf %2102, %2109 : vector<8x128xf32>
    %c485 = arith.constant 485 : index
    %2111 = memref.load %arg2[%c485] : memref<832xf32, #tpu.memory_space<smem>>
    %2112 = vector.broadcast %2111 : f32 to vector<8x128xf32>
    %2113 = arith.mulf %2112, %2060 : vector<8x128xf32>
    %c484 = arith.constant 484 : index
    %2114 = memref.load %arg2[%c484] : memref<832xf32, #tpu.memory_space<smem>>
    %2115 = vector.broadcast %2114 : f32 to vector<8x128xf32>
    %2116 = arith.mulf %2115, %2092 : vector<8x128xf32>
    %2117 = arith.addf %2113, %2116 : vector<8x128xf32>
    %2118 = arith.addf %2110, %2117 : vector<8x128xf32>
    %c487 = arith.constant 487 : index
    %2119 = memref.load %arg2[%c487] : memref<832xf32, #tpu.memory_space<smem>>
    %2120 = vector.broadcast %2119 : f32 to vector<8x128xf32>
    %2121 = arith.mulf %2120, %2079 : vector<8x128xf32>
    %c486 = arith.constant 486 : index
    %2122 = memref.load %arg2[%c486] : memref<832xf32, #tpu.memory_space<smem>>
    %2123 = vector.broadcast %2122 : f32 to vector<8x128xf32>
    %2124 = arith.mulf %2123, %2095 : vector<8x128xf32>
    %2125 = arith.addf %2121, %2124 : vector<8x128xf32>
    %2126 = arith.addf %2118, %2125 : vector<8x128xf32>
    %c544 = arith.constant 544 : index
    %2127 = memref.load %arg2[%c544] : memref<832xf32, #tpu.memory_space<smem>>
    %2128 = vector.broadcast %2127 : f32 to vector<8x128xf32>
    %2129 = arith.addf %2126, %2128 : vector<8x128xf32>
    %c489 = arith.constant 489 : index
    %2130 = memref.load %arg2[%c489] : memref<832xf32, #tpu.memory_space<smem>>
    %2131 = vector.broadcast %2130 : f32 to vector<8x128xf32>
    %2132 = arith.mulf %2131, %2022 : vector<8x128xf32>
    %c488 = arith.constant 488 : index
    %2133 = memref.load %arg2[%c488] : memref<832xf32, #tpu.memory_space<smem>>
    %2134 = vector.broadcast %2133 : f32 to vector<8x128xf32>
    %2135 = arith.mulf %2134, %2086 : vector<8x128xf32>
    %2136 = arith.addf %2132, %2135 : vector<8x128xf32>
    %c491 = arith.constant 491 : index
    %2137 = memref.load %arg2[%c491] : memref<832xf32, #tpu.memory_space<smem>>
    %2138 = vector.broadcast %2137 : f32 to vector<8x128xf32>
    %2139 = arith.mulf %2138, %2041 : vector<8x128xf32>
    %c490 = arith.constant 490 : index
    %2140 = memref.load %arg2[%c490] : memref<832xf32, #tpu.memory_space<smem>>
    %2141 = vector.broadcast %2140 : f32 to vector<8x128xf32>
    %2142 = arith.mulf %2141, %2089 : vector<8x128xf32>
    %2143 = arith.addf %2139, %2142 : vector<8x128xf32>
    %2144 = arith.addf %2136, %2143 : vector<8x128xf32>
    %c493 = arith.constant 493 : index
    %2145 = memref.load %arg2[%c493] : memref<832xf32, #tpu.memory_space<smem>>
    %2146 = vector.broadcast %2145 : f32 to vector<8x128xf32>
    %2147 = arith.mulf %2146, %2060 : vector<8x128xf32>
    %c492 = arith.constant 492 : index
    %2148 = memref.load %arg2[%c492] : memref<832xf32, #tpu.memory_space<smem>>
    %2149 = vector.broadcast %2148 : f32 to vector<8x128xf32>
    %2150 = arith.mulf %2149, %2092 : vector<8x128xf32>
    %2151 = arith.addf %2147, %2150 : vector<8x128xf32>
    %2152 = arith.addf %2144, %2151 : vector<8x128xf32>
    %c495 = arith.constant 495 : index
    %2153 = memref.load %arg2[%c495] : memref<832xf32, #tpu.memory_space<smem>>
    %2154 = vector.broadcast %2153 : f32 to vector<8x128xf32>
    %2155 = arith.mulf %2154, %2079 : vector<8x128xf32>
    %c494 = arith.constant 494 : index
    %2156 = memref.load %arg2[%c494] : memref<832xf32, #tpu.memory_space<smem>>
    %2157 = vector.broadcast %2156 : f32 to vector<8x128xf32>
    %2158 = arith.mulf %2157, %2095 : vector<8x128xf32>
    %2159 = arith.addf %2155, %2158 : vector<8x128xf32>
    %2160 = arith.addf %2152, %2159 : vector<8x128xf32>
    %c545 = arith.constant 545 : index
    %2161 = memref.load %arg2[%c545] : memref<832xf32, #tpu.memory_space<smem>>
    %2162 = vector.broadcast %2161 : f32 to vector<8x128xf32>
    %2163 = arith.addf %2160, %2162 : vector<8x128xf32>
    %c497 = arith.constant 497 : index
    %2164 = memref.load %arg2[%c497] : memref<832xf32, #tpu.memory_space<smem>>
    %2165 = vector.broadcast %2164 : f32 to vector<8x128xf32>
    %2166 = arith.mulf %2165, %2022 : vector<8x128xf32>
    %c496 = arith.constant 496 : index
    %2167 = memref.load %arg2[%c496] : memref<832xf32, #tpu.memory_space<smem>>
    %2168 = vector.broadcast %2167 : f32 to vector<8x128xf32>
    %2169 = arith.mulf %2168, %2086 : vector<8x128xf32>
    %2170 = arith.addf %2166, %2169 : vector<8x128xf32>
    %c499 = arith.constant 499 : index
    %2171 = memref.load %arg2[%c499] : memref<832xf32, #tpu.memory_space<smem>>
    %2172 = vector.broadcast %2171 : f32 to vector<8x128xf32>
    %2173 = arith.mulf %2172, %2041 : vector<8x128xf32>
    %c498 = arith.constant 498 : index
    %2174 = memref.load %arg2[%c498] : memref<832xf32, #tpu.memory_space<smem>>
    %2175 = vector.broadcast %2174 : f32 to vector<8x128xf32>
    %2176 = arith.mulf %2175, %2089 : vector<8x128xf32>
    %2177 = arith.addf %2173, %2176 : vector<8x128xf32>
    %2178 = arith.addf %2170, %2177 : vector<8x128xf32>
    %c501 = arith.constant 501 : index
    %2179 = memref.load %arg2[%c501] : memref<832xf32, #tpu.memory_space<smem>>
    %2180 = vector.broadcast %2179 : f32 to vector<8x128xf32>
    %2181 = arith.mulf %2180, %2060 : vector<8x128xf32>
    %c500 = arith.constant 500 : index
    %2182 = memref.load %arg2[%c500] : memref<832xf32, #tpu.memory_space<smem>>
    %2183 = vector.broadcast %2182 : f32 to vector<8x128xf32>
    %2184 = arith.mulf %2183, %2092 : vector<8x128xf32>
    %2185 = arith.addf %2181, %2184 : vector<8x128xf32>
    %2186 = arith.addf %2178, %2185 : vector<8x128xf32>
    %c503 = arith.constant 503 : index
    %2187 = memref.load %arg2[%c503] : memref<832xf32, #tpu.memory_space<smem>>
    %2188 = vector.broadcast %2187 : f32 to vector<8x128xf32>
    %2189 = arith.mulf %2188, %2079 : vector<8x128xf32>
    %c502 = arith.constant 502 : index
    %2190 = memref.load %arg2[%c502] : memref<832xf32, #tpu.memory_space<smem>>
    %2191 = vector.broadcast %2190 : f32 to vector<8x128xf32>
    %2192 = arith.mulf %2191, %2095 : vector<8x128xf32>
    %2193 = arith.addf %2189, %2192 : vector<8x128xf32>
    %2194 = arith.addf %2186, %2193 : vector<8x128xf32>
    %c546 = arith.constant 546 : index
    %2195 = memref.load %arg2[%c546] : memref<832xf32, #tpu.memory_space<smem>>
    %2196 = vector.broadcast %2195 : f32 to vector<8x128xf32>
    %2197 = arith.addf %2194, %2196 : vector<8x128xf32>
    %c505 = arith.constant 505 : index
    %2198 = memref.load %arg2[%c505] : memref<832xf32, #tpu.memory_space<smem>>
    %2199 = vector.broadcast %2198 : f32 to vector<8x128xf32>
    %2200 = arith.mulf %2199, %2022 : vector<8x128xf32>
    %c504 = arith.constant 504 : index
    %2201 = memref.load %arg2[%c504] : memref<832xf32, #tpu.memory_space<smem>>
    %2202 = vector.broadcast %2201 : f32 to vector<8x128xf32>
    %2203 = arith.mulf %2202, %2086 : vector<8x128xf32>
    %2204 = arith.addf %2200, %2203 : vector<8x128xf32>
    %c507 = arith.constant 507 : index
    %2205 = memref.load %arg2[%c507] : memref<832xf32, #tpu.memory_space<smem>>
    %2206 = vector.broadcast %2205 : f32 to vector<8x128xf32>
    %2207 = arith.mulf %2206, %2041 : vector<8x128xf32>
    %c506 = arith.constant 506 : index
    %2208 = memref.load %arg2[%c506] : memref<832xf32, #tpu.memory_space<smem>>
    %2209 = vector.broadcast %2208 : f32 to vector<8x128xf32>
    %2210 = arith.mulf %2209, %2089 : vector<8x128xf32>
    %2211 = arith.addf %2207, %2210 : vector<8x128xf32>
    %2212 = arith.addf %2204, %2211 : vector<8x128xf32>
    %c509 = arith.constant 509 : index
    %2213 = memref.load %arg2[%c509] : memref<832xf32, #tpu.memory_space<smem>>
    %2214 = vector.broadcast %2213 : f32 to vector<8x128xf32>
    %2215 = arith.mulf %2214, %2060 : vector<8x128xf32>
    %c508 = arith.constant 508 : index
    %2216 = memref.load %arg2[%c508] : memref<832xf32, #tpu.memory_space<smem>>
    %2217 = vector.broadcast %2216 : f32 to vector<8x128xf32>
    %2218 = arith.mulf %2217, %2092 : vector<8x128xf32>
    %2219 = arith.addf %2215, %2218 : vector<8x128xf32>
    %2220 = arith.addf %2212, %2219 : vector<8x128xf32>
    %c511 = arith.constant 511 : index
    %2221 = memref.load %arg2[%c511] : memref<832xf32, #tpu.memory_space<smem>>
    %2222 = vector.broadcast %2221 : f32 to vector<8x128xf32>
    %2223 = arith.mulf %2222, %2079 : vector<8x128xf32>
    %c510 = arith.constant 510 : index
    %2224 = memref.load %arg2[%c510] : memref<832xf32, #tpu.memory_space<smem>>
    %2225 = vector.broadcast %2224 : f32 to vector<8x128xf32>
    %2226 = arith.mulf %2225, %2095 : vector<8x128xf32>
    %2227 = arith.addf %2223, %2226 : vector<8x128xf32>
    %2228 = arith.addf %2220, %2227 : vector<8x128xf32>
    %c547 = arith.constant 547 : index
    %2229 = memref.load %arg2[%c547] : memref<832xf32, #tpu.memory_space<smem>>
    %2230 = vector.broadcast %2229 : f32 to vector<8x128xf32>
    %2231 = arith.addf %2228, %2230 : vector<8x128xf32>
    %c513 = arith.constant 513 : index
    %2232 = memref.load %arg2[%c513] : memref<832xf32, #tpu.memory_space<smem>>
    %2233 = vector.broadcast %2232 : f32 to vector<8x128xf32>
    %2234 = arith.mulf %2233, %2022 : vector<8x128xf32>
    %c512 = arith.constant 512 : index
    %2235 = memref.load %arg2[%c512] : memref<832xf32, #tpu.memory_space<smem>>
    %2236 = vector.broadcast %2235 : f32 to vector<8x128xf32>
    %2237 = arith.mulf %2236, %2086 : vector<8x128xf32>
    %2238 = arith.addf %2234, %2237 : vector<8x128xf32>
    %c515 = arith.constant 515 : index
    %2239 = memref.load %arg2[%c515] : memref<832xf32, #tpu.memory_space<smem>>
    %2240 = vector.broadcast %2239 : f32 to vector<8x128xf32>
    %2241 = arith.mulf %2240, %2041 : vector<8x128xf32>
    %c514 = arith.constant 514 : index
    %2242 = memref.load %arg2[%c514] : memref<832xf32, #tpu.memory_space<smem>>
    %2243 = vector.broadcast %2242 : f32 to vector<8x128xf32>
    %2244 = arith.mulf %2243, %2089 : vector<8x128xf32>
    %2245 = arith.addf %2241, %2244 : vector<8x128xf32>
    %2246 = arith.addf %2238, %2245 : vector<8x128xf32>
    %c517 = arith.constant 517 : index
    %2247 = memref.load %arg2[%c517] : memref<832xf32, #tpu.memory_space<smem>>
    %2248 = vector.broadcast %2247 : f32 to vector<8x128xf32>
    %2249 = arith.mulf %2248, %2060 : vector<8x128xf32>
    %c516 = arith.constant 516 : index
    %2250 = memref.load %arg2[%c516] : memref<832xf32, #tpu.memory_space<smem>>
    %2251 = vector.broadcast %2250 : f32 to vector<8x128xf32>
    %2252 = arith.mulf %2251, %2092 : vector<8x128xf32>
    %2253 = arith.addf %2249, %2252 : vector<8x128xf32>
    %2254 = arith.addf %2246, %2253 : vector<8x128xf32>
    %c519 = arith.constant 519 : index
    %2255 = memref.load %arg2[%c519] : memref<832xf32, #tpu.memory_space<smem>>
    %2256 = vector.broadcast %2255 : f32 to vector<8x128xf32>
    %2257 = arith.mulf %2256, %2079 : vector<8x128xf32>
    %c518 = arith.constant 518 : index
    %2258 = memref.load %arg2[%c518] : memref<832xf32, #tpu.memory_space<smem>>
    %2259 = vector.broadcast %2258 : f32 to vector<8x128xf32>
    %2260 = arith.mulf %2259, %2095 : vector<8x128xf32>
    %2261 = arith.addf %2257, %2260 : vector<8x128xf32>
    %2262 = arith.addf %2254, %2261 : vector<8x128xf32>
    %c548 = arith.constant 548 : index
    %2263 = memref.load %arg2[%c548] : memref<832xf32, #tpu.memory_space<smem>>
    %2264 = vector.broadcast %2263 : f32 to vector<8x128xf32>
    %2265 = arith.addf %2262, %2264 : vector<8x128xf32>
    %c521 = arith.constant 521 : index
    %2266 = memref.load %arg2[%c521] : memref<832xf32, #tpu.memory_space<smem>>
    %2267 = vector.broadcast %2266 : f32 to vector<8x128xf32>
    %2268 = arith.mulf %2267, %2022 : vector<8x128xf32>
    %c520 = arith.constant 520 : index
    %2269 = memref.load %arg2[%c520] : memref<832xf32, #tpu.memory_space<smem>>
    %2270 = vector.broadcast %2269 : f32 to vector<8x128xf32>
    %2271 = arith.mulf %2270, %2086 : vector<8x128xf32>
    %2272 = arith.addf %2268, %2271 : vector<8x128xf32>
    %c523 = arith.constant 523 : index
    %2273 = memref.load %arg2[%c523] : memref<832xf32, #tpu.memory_space<smem>>
    %2274 = vector.broadcast %2273 : f32 to vector<8x128xf32>
    %2275 = arith.mulf %2274, %2041 : vector<8x128xf32>
    %c522 = arith.constant 522 : index
    %2276 = memref.load %arg2[%c522] : memref<832xf32, #tpu.memory_space<smem>>
    %2277 = vector.broadcast %2276 : f32 to vector<8x128xf32>
    %2278 = arith.mulf %2277, %2089 : vector<8x128xf32>
    %2279 = arith.addf %2275, %2278 : vector<8x128xf32>
    %2280 = arith.addf %2272, %2279 : vector<8x128xf32>
    %c525 = arith.constant 525 : index
    %2281 = memref.load %arg2[%c525] : memref<832xf32, #tpu.memory_space<smem>>
    %2282 = vector.broadcast %2281 : f32 to vector<8x128xf32>
    %2283 = arith.mulf %2282, %2060 : vector<8x128xf32>
    %c524 = arith.constant 524 : index
    %2284 = memref.load %arg2[%c524] : memref<832xf32, #tpu.memory_space<smem>>
    %2285 = vector.broadcast %2284 : f32 to vector<8x128xf32>
    %2286 = arith.mulf %2285, %2092 : vector<8x128xf32>
    %2287 = arith.addf %2283, %2286 : vector<8x128xf32>
    %2288 = arith.addf %2280, %2287 : vector<8x128xf32>
    %c527 = arith.constant 527 : index
    %2289 = memref.load %arg2[%c527] : memref<832xf32, #tpu.memory_space<smem>>
    %2290 = vector.broadcast %2289 : f32 to vector<8x128xf32>
    %2291 = arith.mulf %2290, %2079 : vector<8x128xf32>
    %c526 = arith.constant 526 : index
    %2292 = memref.load %arg2[%c526] : memref<832xf32, #tpu.memory_space<smem>>
    %2293 = vector.broadcast %2292 : f32 to vector<8x128xf32>
    %2294 = arith.mulf %2293, %2095 : vector<8x128xf32>
    %2295 = arith.addf %2291, %2294 : vector<8x128xf32>
    %2296 = arith.addf %2288, %2295 : vector<8x128xf32>
    %c549 = arith.constant 549 : index
    %2297 = memref.load %arg2[%c549] : memref<832xf32, #tpu.memory_space<smem>>
    %2298 = vector.broadcast %2297 : f32 to vector<8x128xf32>
    %2299 = arith.addf %2296, %2298 : vector<8x128xf32>
    %c529 = arith.constant 529 : index
    %2300 = memref.load %arg2[%c529] : memref<832xf32, #tpu.memory_space<smem>>
    %2301 = vector.broadcast %2300 : f32 to vector<8x128xf32>
    %2302 = arith.mulf %2301, %2022 : vector<8x128xf32>
    %c528 = arith.constant 528 : index
    %2303 = memref.load %arg2[%c528] : memref<832xf32, #tpu.memory_space<smem>>
    %2304 = vector.broadcast %2303 : f32 to vector<8x128xf32>
    %2305 = arith.mulf %2304, %2086 : vector<8x128xf32>
    %2306 = arith.addf %2302, %2305 : vector<8x128xf32>
    %c531 = arith.constant 531 : index
    %2307 = memref.load %arg2[%c531] : memref<832xf32, #tpu.memory_space<smem>>
    %2308 = vector.broadcast %2307 : f32 to vector<8x128xf32>
    %2309 = arith.mulf %2308, %2041 : vector<8x128xf32>
    %c530 = arith.constant 530 : index
    %2310 = memref.load %arg2[%c530] : memref<832xf32, #tpu.memory_space<smem>>
    %2311 = vector.broadcast %2310 : f32 to vector<8x128xf32>
    %2312 = arith.mulf %2311, %2089 : vector<8x128xf32>
    %2313 = arith.addf %2309, %2312 : vector<8x128xf32>
    %2314 = arith.addf %2306, %2313 : vector<8x128xf32>
    %c533 = arith.constant 533 : index
    %2315 = memref.load %arg2[%c533] : memref<832xf32, #tpu.memory_space<smem>>
    %2316 = vector.broadcast %2315 : f32 to vector<8x128xf32>
    %2317 = arith.mulf %2316, %2060 : vector<8x128xf32>
    %c532 = arith.constant 532 : index
    %2318 = memref.load %arg2[%c532] : memref<832xf32, #tpu.memory_space<smem>>
    %2319 = vector.broadcast %2318 : f32 to vector<8x128xf32>
    %2320 = arith.mulf %2319, %2092 : vector<8x128xf32>
    %2321 = arith.addf %2317, %2320 : vector<8x128xf32>
    %2322 = arith.addf %2314, %2321 : vector<8x128xf32>
    %c535 = arith.constant 535 : index
    %2323 = memref.load %arg2[%c535] : memref<832xf32, #tpu.memory_space<smem>>
    %2324 = vector.broadcast %2323 : f32 to vector<8x128xf32>
    %2325 = arith.mulf %2324, %2079 : vector<8x128xf32>
    %c534 = arith.constant 534 : index
    %2326 = memref.load %arg2[%c534] : memref<832xf32, #tpu.memory_space<smem>>
    %2327 = vector.broadcast %2326 : f32 to vector<8x128xf32>
    %2328 = arith.mulf %2327, %2095 : vector<8x128xf32>
    %2329 = arith.addf %2325, %2328 : vector<8x128xf32>
    %2330 = arith.addf %2322, %2329 : vector<8x128xf32>
    %c550 = arith.constant 550 : index
    %2331 = memref.load %arg2[%c550] : memref<832xf32, #tpu.memory_space<smem>>
    %2332 = vector.broadcast %2331 : f32 to vector<8x128xf32>
    %2333 = arith.addf %2330, %2332 : vector<8x128xf32>
    %c537 = arith.constant 537 : index
    %2334 = memref.load %arg2[%c537] : memref<832xf32, #tpu.memory_space<smem>>
    %2335 = vector.broadcast %2334 : f32 to vector<8x128xf32>
    %2336 = arith.mulf %2335, %2022 : vector<8x128xf32>
    %c536 = arith.constant 536 : index
    %2337 = memref.load %arg2[%c536] : memref<832xf32, #tpu.memory_space<smem>>
    %2338 = vector.broadcast %2337 : f32 to vector<8x128xf32>
    %2339 = arith.mulf %2338, %2086 : vector<8x128xf32>
    %2340 = arith.addf %2336, %2339 : vector<8x128xf32>
    %c539 = arith.constant 539 : index
    %2341 = memref.load %arg2[%c539] : memref<832xf32, #tpu.memory_space<smem>>
    %2342 = vector.broadcast %2341 : f32 to vector<8x128xf32>
    %2343 = arith.mulf %2342, %2041 : vector<8x128xf32>
    %c538 = arith.constant 538 : index
    %2344 = memref.load %arg2[%c538] : memref<832xf32, #tpu.memory_space<smem>>
    %2345 = vector.broadcast %2344 : f32 to vector<8x128xf32>
    %2346 = arith.mulf %2345, %2089 : vector<8x128xf32>
    %2347 = arith.addf %2343, %2346 : vector<8x128xf32>
    %2348 = arith.addf %2340, %2347 : vector<8x128xf32>
    %c541 = arith.constant 541 : index
    %2349 = memref.load %arg2[%c541] : memref<832xf32, #tpu.memory_space<smem>>
    %2350 = vector.broadcast %2349 : f32 to vector<8x128xf32>
    %2351 = arith.mulf %2350, %2060 : vector<8x128xf32>
    %c540 = arith.constant 540 : index
    %2352 = memref.load %arg2[%c540] : memref<832xf32, #tpu.memory_space<smem>>
    %2353 = vector.broadcast %2352 : f32 to vector<8x128xf32>
    %2354 = arith.mulf %2353, %2092 : vector<8x128xf32>
    %2355 = arith.addf %2351, %2354 : vector<8x128xf32>
    %2356 = arith.addf %2348, %2355 : vector<8x128xf32>
    %c543 = arith.constant 543 : index
    %2357 = memref.load %arg2[%c543] : memref<832xf32, #tpu.memory_space<smem>>
    %2358 = vector.broadcast %2357 : f32 to vector<8x128xf32>
    %2359 = arith.mulf %2358, %2079 : vector<8x128xf32>
    %c542 = arith.constant 542 : index
    %2360 = memref.load %arg2[%c542] : memref<832xf32, #tpu.memory_space<smem>>
    %2361 = vector.broadcast %2360 : f32 to vector<8x128xf32>
    %2362 = arith.mulf %2361, %2095 : vector<8x128xf32>
    %2363 = arith.addf %2359, %2362 : vector<8x128xf32>
    %2364 = arith.addf %2356, %2363 : vector<8x128xf32>
    %c551 = arith.constant 551 : index
    %2365 = memref.load %arg2[%c551] : memref<832xf32, #tpu.memory_space<smem>>
    %2366 = vector.broadcast %2365 : f32 to vector<8x128xf32>
    %2367 = arith.addf %2364, %2366 : vector<8x128xf32>
    %2368 = math.tanh %2129 : vector<8x128xf32>
    %cst_89 = arith.constant 5.000000e-01 : f32
    %2369 = vector.broadcast %cst_89 : f32 to vector<8x128xf32>
    %2370 = arith.mulf %2369, %2265 : vector<8x128xf32>
    %2371 = math.tanh %2370 : vector<8x128xf32>
    %cst_90 = arith.constant 1.000000e+00 : f32
    %2372 = vector.broadcast %cst_90 : f32 to vector<8x128xf32>
    %2373 = arith.addf %2371, %2372 : vector<8x128xf32>
    %cst_91 = arith.constant 5.000000e-01 : f32
    %2374 = vector.broadcast %cst_91 : f32 to vector<8x128xf32>
    %2375 = arith.mulf %2374, %2373 : vector<8x128xf32>
    %2376 = arith.mulf %2368, %2375 : vector<8x128xf32>
    %2377 = math.tanh %2163 : vector<8x128xf32>
    %cst_92 = arith.constant 5.000000e-01 : f32
    %2378 = vector.broadcast %cst_92 : f32 to vector<8x128xf32>
    %2379 = arith.mulf %2378, %2299 : vector<8x128xf32>
    %2380 = math.tanh %2379 : vector<8x128xf32>
    %cst_93 = arith.constant 1.000000e+00 : f32
    %2381 = vector.broadcast %cst_93 : f32 to vector<8x128xf32>
    %2382 = arith.addf %2380, %2381 : vector<8x128xf32>
    %cst_94 = arith.constant 5.000000e-01 : f32
    %2383 = vector.broadcast %cst_94 : f32 to vector<8x128xf32>
    %2384 = arith.mulf %2383, %2382 : vector<8x128xf32>
    %2385 = arith.mulf %2377, %2384 : vector<8x128xf32>
    %2386 = math.tanh %2197 : vector<8x128xf32>
    %cst_95 = arith.constant 5.000000e-01 : f32
    %2387 = vector.broadcast %cst_95 : f32 to vector<8x128xf32>
    %2388 = arith.mulf %2387, %2333 : vector<8x128xf32>
    %2389 = math.tanh %2388 : vector<8x128xf32>
    %cst_96 = arith.constant 1.000000e+00 : f32
    %2390 = vector.broadcast %cst_96 : f32 to vector<8x128xf32>
    %2391 = arith.addf %2389, %2390 : vector<8x128xf32>
    %cst_97 = arith.constant 5.000000e-01 : f32
    %2392 = vector.broadcast %cst_97 : f32 to vector<8x128xf32>
    %2393 = arith.mulf %2392, %2391 : vector<8x128xf32>
    %2394 = arith.mulf %2386, %2393 : vector<8x128xf32>
    %2395 = math.tanh %2231 : vector<8x128xf32>
    %cst_98 = arith.constant 5.000000e-01 : f32
    %2396 = vector.broadcast %cst_98 : f32 to vector<8x128xf32>
    %2397 = arith.mulf %2396, %2367 : vector<8x128xf32>
    %2398 = math.tanh %2397 : vector<8x128xf32>
    %cst_99 = arith.constant 1.000000e+00 : f32
    %2399 = vector.broadcast %cst_99 : f32 to vector<8x128xf32>
    %2400 = arith.addf %2398, %2399 : vector<8x128xf32>
    %cst_100 = arith.constant 5.000000e-01 : f32
    %2401 = vector.broadcast %cst_100 : f32 to vector<8x128xf32>
    %2402 = arith.mulf %2401, %2400 : vector<8x128xf32>
    %2403 = arith.mulf %2395, %2402 : vector<8x128xf32>
    %c552 = arith.constant 552 : index
    %2404 = memref.load %arg2[%c552] : memref<832xf32, #tpu.memory_space<smem>>
    %2405 = vector.broadcast %2404 : f32 to vector<8x128xf32>
    %2406 = arith.mulf %2405, %2376 : vector<8x128xf32>
    %2407 = arith.addf %2022, %2406 : vector<8x128xf32>
    %c553 = arith.constant 553 : index
    %2408 = memref.load %arg2[%c553] : memref<832xf32, #tpu.memory_space<smem>>
    %2409 = vector.broadcast %2408 : f32 to vector<8x128xf32>
    %2410 = arith.mulf %2409, %2385 : vector<8x128xf32>
    %2411 = arith.addf %2407, %2410 : vector<8x128xf32>
    %c554 = arith.constant 554 : index
    %2412 = memref.load %arg2[%c554] : memref<832xf32, #tpu.memory_space<smem>>
    %2413 = vector.broadcast %2412 : f32 to vector<8x128xf32>
    %2414 = arith.mulf %2413, %2394 : vector<8x128xf32>
    %2415 = arith.addf %2411, %2414 : vector<8x128xf32>
    %c555 = arith.constant 555 : index
    %2416 = memref.load %arg2[%c555] : memref<832xf32, #tpu.memory_space<smem>>
    %2417 = vector.broadcast %2416 : f32 to vector<8x128xf32>
    %2418 = arith.mulf %2417, %2403 : vector<8x128xf32>
    %2419 = arith.addf %2415, %2418 : vector<8x128xf32>
    %c568 = arith.constant 568 : index
    %2420 = memref.load %arg2[%c568] : memref<832xf32, #tpu.memory_space<smem>>
    %2421 = vector.broadcast %2420 : f32 to vector<8x128xf32>
    %2422 = arith.addf %2419, %2421 : vector<8x128xf32>
    %c556 = arith.constant 556 : index
    %2423 = memref.load %arg2[%c556] : memref<832xf32, #tpu.memory_space<smem>>
    %2424 = vector.broadcast %2423 : f32 to vector<8x128xf32>
    %2425 = arith.mulf %2424, %2376 : vector<8x128xf32>
    %2426 = arith.addf %2041, %2425 : vector<8x128xf32>
    %c557 = arith.constant 557 : index
    %2427 = memref.load %arg2[%c557] : memref<832xf32, #tpu.memory_space<smem>>
    %2428 = vector.broadcast %2427 : f32 to vector<8x128xf32>
    %2429 = arith.mulf %2428, %2385 : vector<8x128xf32>
    %2430 = arith.addf %2426, %2429 : vector<8x128xf32>
    %c558 = arith.constant 558 : index
    %2431 = memref.load %arg2[%c558] : memref<832xf32, #tpu.memory_space<smem>>
    %2432 = vector.broadcast %2431 : f32 to vector<8x128xf32>
    %2433 = arith.mulf %2432, %2394 : vector<8x128xf32>
    %2434 = arith.addf %2430, %2433 : vector<8x128xf32>
    %c559 = arith.constant 559 : index
    %2435 = memref.load %arg2[%c559] : memref<832xf32, #tpu.memory_space<smem>>
    %2436 = vector.broadcast %2435 : f32 to vector<8x128xf32>
    %2437 = arith.mulf %2436, %2403 : vector<8x128xf32>
    %2438 = arith.addf %2434, %2437 : vector<8x128xf32>
    %c569 = arith.constant 569 : index
    %2439 = memref.load %arg2[%c569] : memref<832xf32, #tpu.memory_space<smem>>
    %2440 = vector.broadcast %2439 : f32 to vector<8x128xf32>
    %2441 = arith.addf %2438, %2440 : vector<8x128xf32>
    %c560 = arith.constant 560 : index
    %2442 = memref.load %arg2[%c560] : memref<832xf32, #tpu.memory_space<smem>>
    %2443 = vector.broadcast %2442 : f32 to vector<8x128xf32>
    %2444 = arith.mulf %2443, %2376 : vector<8x128xf32>
    %2445 = arith.addf %2060, %2444 : vector<8x128xf32>
    %c561 = arith.constant 561 : index
    %2446 = memref.load %arg2[%c561] : memref<832xf32, #tpu.memory_space<smem>>
    %2447 = vector.broadcast %2446 : f32 to vector<8x128xf32>
    %2448 = arith.mulf %2447, %2385 : vector<8x128xf32>
    %2449 = arith.addf %2445, %2448 : vector<8x128xf32>
    %c562 = arith.constant 562 : index
    %2450 = memref.load %arg2[%c562] : memref<832xf32, #tpu.memory_space<smem>>
    %2451 = vector.broadcast %2450 : f32 to vector<8x128xf32>
    %2452 = arith.mulf %2451, %2394 : vector<8x128xf32>
    %2453 = arith.addf %2449, %2452 : vector<8x128xf32>
    %c563 = arith.constant 563 : index
    %2454 = memref.load %arg2[%c563] : memref<832xf32, #tpu.memory_space<smem>>
    %2455 = vector.broadcast %2454 : f32 to vector<8x128xf32>
    %2456 = arith.mulf %2455, %2403 : vector<8x128xf32>
    %2457 = arith.addf %2453, %2456 : vector<8x128xf32>
    %c570 = arith.constant 570 : index
    %2458 = memref.load %arg2[%c570] : memref<832xf32, #tpu.memory_space<smem>>
    %2459 = vector.broadcast %2458 : f32 to vector<8x128xf32>
    %2460 = arith.addf %2457, %2459 : vector<8x128xf32>
    %c564 = arith.constant 564 : index
    %2461 = memref.load %arg2[%c564] : memref<832xf32, #tpu.memory_space<smem>>
    %2462 = vector.broadcast %2461 : f32 to vector<8x128xf32>
    %2463 = arith.mulf %2462, %2376 : vector<8x128xf32>
    %2464 = arith.addf %2079, %2463 : vector<8x128xf32>
    %c565 = arith.constant 565 : index
    %2465 = memref.load %arg2[%c565] : memref<832xf32, #tpu.memory_space<smem>>
    %2466 = vector.broadcast %2465 : f32 to vector<8x128xf32>
    %2467 = arith.mulf %2466, %2385 : vector<8x128xf32>
    %2468 = arith.addf %2464, %2467 : vector<8x128xf32>
    %c566 = arith.constant 566 : index
    %2469 = memref.load %arg2[%c566] : memref<832xf32, #tpu.memory_space<smem>>
    %2470 = vector.broadcast %2469 : f32 to vector<8x128xf32>
    %2471 = arith.mulf %2470, %2394 : vector<8x128xf32>
    %2472 = arith.addf %2468, %2471 : vector<8x128xf32>
    %c567 = arith.constant 567 : index
    %2473 = memref.load %arg2[%c567] : memref<832xf32, #tpu.memory_space<smem>>
    %2474 = vector.broadcast %2473 : f32 to vector<8x128xf32>
    %2475 = arith.mulf %2474, %2403 : vector<8x128xf32>
    %2476 = arith.addf %2472, %2475 : vector<8x128xf32>
    %c571 = arith.constant 571 : index
    %2477 = memref.load %arg2[%c571] : memref<832xf32, #tpu.memory_space<smem>>
    %2478 = vector.broadcast %2477 : f32 to vector<8x128xf32>
    %2479 = arith.addf %2476, %2478 : vector<8x128xf32>
    %2480 = arith.addf %2080, %2422 : vector<8x128xf32>
    %2481 = arith.addf %2081, %2441 : vector<8x128xf32>
    %2482 = arith.addf %2082, %2460 : vector<8x128xf32>
    %2483 = arith.addf %2083, %2479 : vector<8x128xf32>
    %cst_101 = arith.constant 0.000000e+00 : f32
    %2484 = vector.broadcast %cst_101 : f32 to vector<8x64xf32>
    %2485 = vector.extract_strided_slice %2422 {offsets = [0, 0], sizes = [8, 64], strides = [1, 1]} : vector<8x128xf32> to vector<8x64xf32>
    %2486 = tpu.concatenate %2484, %2485 in 1 : vector<8x64xf32>, vector<8x64xf32> -> vector<8x128xf32>
    %cst_102 = arith.constant 0.000000e+00 : f32
    %2487 = vector.broadcast %cst_102 : f32 to vector<8x64xf32>
    %2488 = vector.extract_strided_slice %2441 {offsets = [0, 0], sizes = [8, 64], strides = [1, 1]} : vector<8x128xf32> to vector<8x64xf32>
    %2489 = tpu.concatenate %2487, %2488 in 1 : vector<8x64xf32>, vector<8x64xf32> -> vector<8x128xf32>
    %cst_103 = arith.constant 0.000000e+00 : f32
    %2490 = vector.broadcast %cst_103 : f32 to vector<8x64xf32>
    %2491 = vector.extract_strided_slice %2460 {offsets = [0, 0], sizes = [8, 64], strides = [1, 1]} : vector<8x128xf32> to vector<8x64xf32>
    %2492 = tpu.concatenate %2490, %2491 in 1 : vector<8x64xf32>, vector<8x64xf32> -> vector<8x128xf32>
    %cst_104 = arith.constant 0.000000e+00 : f32
    %2493 = vector.broadcast %cst_104 : f32 to vector<8x64xf32>
    %2494 = vector.extract_strided_slice %2479 {offsets = [0, 0], sizes = [8, 64], strides = [1, 1]} : vector<8x128xf32> to vector<8x64xf32>
    %2495 = tpu.concatenate %2493, %2494 in 1 : vector<8x64xf32>, vector<8x64xf32> -> vector<8x128xf32>
    %c573 = arith.constant 573 : index
    %2496 = memref.load %arg2[%c573] : memref<832xf32, #tpu.memory_space<smem>>
    %2497 = vector.broadcast %2496 : f32 to vector<8x128xf32>
    %2498 = arith.mulf %2497, %2422 : vector<8x128xf32>
    %c572 = arith.constant 572 : index
    %2499 = memref.load %arg2[%c572] : memref<832xf32, #tpu.memory_space<smem>>
    %2500 = vector.broadcast %2499 : f32 to vector<8x128xf32>
    %2501 = arith.mulf %2500, %2486 : vector<8x128xf32>
    %2502 = arith.addf %2498, %2501 : vector<8x128xf32>
    %c575 = arith.constant 575 : index
    %2503 = memref.load %arg2[%c575] : memref<832xf32, #tpu.memory_space<smem>>
    %2504 = vector.broadcast %2503 : f32 to vector<8x128xf32>
    %2505 = arith.mulf %2504, %2441 : vector<8x128xf32>
    %c574 = arith.constant 574 : index
    %2506 = memref.load %arg2[%c574] : memref<832xf32, #tpu.memory_space<smem>>
    %2507 = vector.broadcast %2506 : f32 to vector<8x128xf32>
    %2508 = arith.mulf %2507, %2489 : vector<8x128xf32>
    %2509 = arith.addf %2505, %2508 : vector<8x128xf32>
    %2510 = arith.addf %2502, %2509 : vector<8x128xf32>
    %c577 = arith.constant 577 : index
    %2511 = memref.load %arg2[%c577] : memref<832xf32, #tpu.memory_space<smem>>
    %2512 = vector.broadcast %2511 : f32 to vector<8x128xf32>
    %2513 = arith.mulf %2512, %2460 : vector<8x128xf32>
    %c576 = arith.constant 576 : index
    %2514 = memref.load %arg2[%c576] : memref<832xf32, #tpu.memory_space<smem>>
    %2515 = vector.broadcast %2514 : f32 to vector<8x128xf32>
    %2516 = arith.mulf %2515, %2492 : vector<8x128xf32>
    %2517 = arith.addf %2513, %2516 : vector<8x128xf32>
    %2518 = arith.addf %2510, %2517 : vector<8x128xf32>
    %c579 = arith.constant 579 : index
    %2519 = memref.load %arg2[%c579] : memref<832xf32, #tpu.memory_space<smem>>
    %2520 = vector.broadcast %2519 : f32 to vector<8x128xf32>
    %2521 = arith.mulf %2520, %2479 : vector<8x128xf32>
    %c578 = arith.constant 578 : index
    %2522 = memref.load %arg2[%c578] : memref<832xf32, #tpu.memory_space<smem>>
    %2523 = vector.broadcast %2522 : f32 to vector<8x128xf32>
    %2524 = arith.mulf %2523, %2495 : vector<8x128xf32>
    %2525 = arith.addf %2521, %2524 : vector<8x128xf32>
    %2526 = arith.addf %2518, %2525 : vector<8x128xf32>
    %c636 = arith.constant 636 : index
    %2527 = memref.load %arg2[%c636] : memref<832xf32, #tpu.memory_space<smem>>
    %2528 = vector.broadcast %2527 : f32 to vector<8x128xf32>
    %2529 = arith.addf %2526, %2528 : vector<8x128xf32>
    %c581 = arith.constant 581 : index
    %2530 = memref.load %arg2[%c581] : memref<832xf32, #tpu.memory_space<smem>>
    %2531 = vector.broadcast %2530 : f32 to vector<8x128xf32>
    %2532 = arith.mulf %2531, %2422 : vector<8x128xf32>
    %c580 = arith.constant 580 : index
    %2533 = memref.load %arg2[%c580] : memref<832xf32, #tpu.memory_space<smem>>
    %2534 = vector.broadcast %2533 : f32 to vector<8x128xf32>
    %2535 = arith.mulf %2534, %2486 : vector<8x128xf32>
    %2536 = arith.addf %2532, %2535 : vector<8x128xf32>
    %c583 = arith.constant 583 : index
    %2537 = memref.load %arg2[%c583] : memref<832xf32, #tpu.memory_space<smem>>
    %2538 = vector.broadcast %2537 : f32 to vector<8x128xf32>
    %2539 = arith.mulf %2538, %2441 : vector<8x128xf32>
    %c582 = arith.constant 582 : index
    %2540 = memref.load %arg2[%c582] : memref<832xf32, #tpu.memory_space<smem>>
    %2541 = vector.broadcast %2540 : f32 to vector<8x128xf32>
    %2542 = arith.mulf %2541, %2489 : vector<8x128xf32>
    %2543 = arith.addf %2539, %2542 : vector<8x128xf32>
    %2544 = arith.addf %2536, %2543 : vector<8x128xf32>
    %c585 = arith.constant 585 : index
    %2545 = memref.load %arg2[%c585] : memref<832xf32, #tpu.memory_space<smem>>
    %2546 = vector.broadcast %2545 : f32 to vector<8x128xf32>
    %2547 = arith.mulf %2546, %2460 : vector<8x128xf32>
    %c584 = arith.constant 584 : index
    %2548 = memref.load %arg2[%c584] : memref<832xf32, #tpu.memory_space<smem>>
    %2549 = vector.broadcast %2548 : f32 to vector<8x128xf32>
    %2550 = arith.mulf %2549, %2492 : vector<8x128xf32>
    %2551 = arith.addf %2547, %2550 : vector<8x128xf32>
    %2552 = arith.addf %2544, %2551 : vector<8x128xf32>
    %c587 = arith.constant 587 : index
    %2553 = memref.load %arg2[%c587] : memref<832xf32, #tpu.memory_space<smem>>
    %2554 = vector.broadcast %2553 : f32 to vector<8x128xf32>
    %2555 = arith.mulf %2554, %2479 : vector<8x128xf32>
    %c586 = arith.constant 586 : index
    %2556 = memref.load %arg2[%c586] : memref<832xf32, #tpu.memory_space<smem>>
    %2557 = vector.broadcast %2556 : f32 to vector<8x128xf32>
    %2558 = arith.mulf %2557, %2495 : vector<8x128xf32>
    %2559 = arith.addf %2555, %2558 : vector<8x128xf32>
    %2560 = arith.addf %2552, %2559 : vector<8x128xf32>
    %c637 = arith.constant 637 : index
    %2561 = memref.load %arg2[%c637] : memref<832xf32, #tpu.memory_space<smem>>
    %2562 = vector.broadcast %2561 : f32 to vector<8x128xf32>
    %2563 = arith.addf %2560, %2562 : vector<8x128xf32>
    %c589 = arith.constant 589 : index
    %2564 = memref.load %arg2[%c589] : memref<832xf32, #tpu.memory_space<smem>>
    %2565 = vector.broadcast %2564 : f32 to vector<8x128xf32>
    %2566 = arith.mulf %2565, %2422 : vector<8x128xf32>
    %c588 = arith.constant 588 : index
    %2567 = memref.load %arg2[%c588] : memref<832xf32, #tpu.memory_space<smem>>
    %2568 = vector.broadcast %2567 : f32 to vector<8x128xf32>
    %2569 = arith.mulf %2568, %2486 : vector<8x128xf32>
    %2570 = arith.addf %2566, %2569 : vector<8x128xf32>
    %c591 = arith.constant 591 : index
    %2571 = memref.load %arg2[%c591] : memref<832xf32, #tpu.memory_space<smem>>
    %2572 = vector.broadcast %2571 : f32 to vector<8x128xf32>
    %2573 = arith.mulf %2572, %2441 : vector<8x128xf32>
    %c590 = arith.constant 590 : index
    %2574 = memref.load %arg2[%c590] : memref<832xf32, #tpu.memory_space<smem>>
    %2575 = vector.broadcast %2574 : f32 to vector<8x128xf32>
    %2576 = arith.mulf %2575, %2489 : vector<8x128xf32>
    %2577 = arith.addf %2573, %2576 : vector<8x128xf32>
    %2578 = arith.addf %2570, %2577 : vector<8x128xf32>
    %c593 = arith.constant 593 : index
    %2579 = memref.load %arg2[%c593] : memref<832xf32, #tpu.memory_space<smem>>
    %2580 = vector.broadcast %2579 : f32 to vector<8x128xf32>
    %2581 = arith.mulf %2580, %2460 : vector<8x128xf32>
    %c592 = arith.constant 592 : index
    %2582 = memref.load %arg2[%c592] : memref<832xf32, #tpu.memory_space<smem>>
    %2583 = vector.broadcast %2582 : f32 to vector<8x128xf32>
    %2584 = arith.mulf %2583, %2492 : vector<8x128xf32>
    %2585 = arith.addf %2581, %2584 : vector<8x128xf32>
    %2586 = arith.addf %2578, %2585 : vector<8x128xf32>
    %c595 = arith.constant 595 : index
    %2587 = memref.load %arg2[%c595] : memref<832xf32, #tpu.memory_space<smem>>
    %2588 = vector.broadcast %2587 : f32 to vector<8x128xf32>
    %2589 = arith.mulf %2588, %2479 : vector<8x128xf32>
    %c594 = arith.constant 594 : index
    %2590 = memref.load %arg2[%c594] : memref<832xf32, #tpu.memory_space<smem>>
    %2591 = vector.broadcast %2590 : f32 to vector<8x128xf32>
    %2592 = arith.mulf %2591, %2495 : vector<8x128xf32>
    %2593 = arith.addf %2589, %2592 : vector<8x128xf32>
    %2594 = arith.addf %2586, %2593 : vector<8x128xf32>
    %c638 = arith.constant 638 : index
    %2595 = memref.load %arg2[%c638] : memref<832xf32, #tpu.memory_space<smem>>
    %2596 = vector.broadcast %2595 : f32 to vector<8x128xf32>
    %2597 = arith.addf %2594, %2596 : vector<8x128xf32>
    %c597 = arith.constant 597 : index
    %2598 = memref.load %arg2[%c597] : memref<832xf32, #tpu.memory_space<smem>>
    %2599 = vector.broadcast %2598 : f32 to vector<8x128xf32>
    %2600 = arith.mulf %2599, %2422 : vector<8x128xf32>
    %c596 = arith.constant 596 : index
    %2601 = memref.load %arg2[%c596] : memref<832xf32, #tpu.memory_space<smem>>
    %2602 = vector.broadcast %2601 : f32 to vector<8x128xf32>
    %2603 = arith.mulf %2602, %2486 : vector<8x128xf32>
    %2604 = arith.addf %2600, %2603 : vector<8x128xf32>
    %c599 = arith.constant 599 : index
    %2605 = memref.load %arg2[%c599] : memref<832xf32, #tpu.memory_space<smem>>
    %2606 = vector.broadcast %2605 : f32 to vector<8x128xf32>
    %2607 = arith.mulf %2606, %2441 : vector<8x128xf32>
    %c598 = arith.constant 598 : index
    %2608 = memref.load %arg2[%c598] : memref<832xf32, #tpu.memory_space<smem>>
    %2609 = vector.broadcast %2608 : f32 to vector<8x128xf32>
    %2610 = arith.mulf %2609, %2489 : vector<8x128xf32>
    %2611 = arith.addf %2607, %2610 : vector<8x128xf32>
    %2612 = arith.addf %2604, %2611 : vector<8x128xf32>
    %c601 = arith.constant 601 : index
    %2613 = memref.load %arg2[%c601] : memref<832xf32, #tpu.memory_space<smem>>
    %2614 = vector.broadcast %2613 : f32 to vector<8x128xf32>
    %2615 = arith.mulf %2614, %2460 : vector<8x128xf32>
    %c600 = arith.constant 600 : index
    %2616 = memref.load %arg2[%c600] : memref<832xf32, #tpu.memory_space<smem>>
    %2617 = vector.broadcast %2616 : f32 to vector<8x128xf32>
    %2618 = arith.mulf %2617, %2492 : vector<8x128xf32>
    %2619 = arith.addf %2615, %2618 : vector<8x128xf32>
    %2620 = arith.addf %2612, %2619 : vector<8x128xf32>
    %c603 = arith.constant 603 : index
    %2621 = memref.load %arg2[%c603] : memref<832xf32, #tpu.memory_space<smem>>
    %2622 = vector.broadcast %2621 : f32 to vector<8x128xf32>
    %2623 = arith.mulf %2622, %2479 : vector<8x128xf32>
    %c602 = arith.constant 602 : index
    %2624 = memref.load %arg2[%c602] : memref<832xf32, #tpu.memory_space<smem>>
    %2625 = vector.broadcast %2624 : f32 to vector<8x128xf32>
    %2626 = arith.mulf %2625, %2495 : vector<8x128xf32>
    %2627 = arith.addf %2623, %2626 : vector<8x128xf32>
    %2628 = arith.addf %2620, %2627 : vector<8x128xf32>
    %c639 = arith.constant 639 : index
    %2629 = memref.load %arg2[%c639] : memref<832xf32, #tpu.memory_space<smem>>
    %2630 = vector.broadcast %2629 : f32 to vector<8x128xf32>
    %2631 = arith.addf %2628, %2630 : vector<8x128xf32>
    %c605 = arith.constant 605 : index
    %2632 = memref.load %arg2[%c605] : memref<832xf32, #tpu.memory_space<smem>>
    %2633 = vector.broadcast %2632 : f32 to vector<8x128xf32>
    %2634 = arith.mulf %2633, %2422 : vector<8x128xf32>
    %c604 = arith.constant 604 : index
    %2635 = memref.load %arg2[%c604] : memref<832xf32, #tpu.memory_space<smem>>
    %2636 = vector.broadcast %2635 : f32 to vector<8x128xf32>
    %2637 = arith.mulf %2636, %2486 : vector<8x128xf32>
    %2638 = arith.addf %2634, %2637 : vector<8x128xf32>
    %c607 = arith.constant 607 : index
    %2639 = memref.load %arg2[%c607] : memref<832xf32, #tpu.memory_space<smem>>
    %2640 = vector.broadcast %2639 : f32 to vector<8x128xf32>
    %2641 = arith.mulf %2640, %2441 : vector<8x128xf32>
    %c606 = arith.constant 606 : index
    %2642 = memref.load %arg2[%c606] : memref<832xf32, #tpu.memory_space<smem>>
    %2643 = vector.broadcast %2642 : f32 to vector<8x128xf32>
    %2644 = arith.mulf %2643, %2489 : vector<8x128xf32>
    %2645 = arith.addf %2641, %2644 : vector<8x128xf32>
    %2646 = arith.addf %2638, %2645 : vector<8x128xf32>
    %c609 = arith.constant 609 : index
    %2647 = memref.load %arg2[%c609] : memref<832xf32, #tpu.memory_space<smem>>
    %2648 = vector.broadcast %2647 : f32 to vector<8x128xf32>
    %2649 = arith.mulf %2648, %2460 : vector<8x128xf32>
    %c608 = arith.constant 608 : index
    %2650 = memref.load %arg2[%c608] : memref<832xf32, #tpu.memory_space<smem>>
    %2651 = vector.broadcast %2650 : f32 to vector<8x128xf32>
    %2652 = arith.mulf %2651, %2492 : vector<8x128xf32>
    %2653 = arith.addf %2649, %2652 : vector<8x128xf32>
    %2654 = arith.addf %2646, %2653 : vector<8x128xf32>
    %c611 = arith.constant 611 : index
    %2655 = memref.load %arg2[%c611] : memref<832xf32, #tpu.memory_space<smem>>
    %2656 = vector.broadcast %2655 : f32 to vector<8x128xf32>
    %2657 = arith.mulf %2656, %2479 : vector<8x128xf32>
    %c610 = arith.constant 610 : index
    %2658 = memref.load %arg2[%c610] : memref<832xf32, #tpu.memory_space<smem>>
    %2659 = vector.broadcast %2658 : f32 to vector<8x128xf32>
    %2660 = arith.mulf %2659, %2495 : vector<8x128xf32>
    %2661 = arith.addf %2657, %2660 : vector<8x128xf32>
    %2662 = arith.addf %2654, %2661 : vector<8x128xf32>
    %c640 = arith.constant 640 : index
    %2663 = memref.load %arg2[%c640] : memref<832xf32, #tpu.memory_space<smem>>
    %2664 = vector.broadcast %2663 : f32 to vector<8x128xf32>
    %2665 = arith.addf %2662, %2664 : vector<8x128xf32>
    %c613 = arith.constant 613 : index
    %2666 = memref.load %arg2[%c613] : memref<832xf32, #tpu.memory_space<smem>>
    %2667 = vector.broadcast %2666 : f32 to vector<8x128xf32>
    %2668 = arith.mulf %2667, %2422 : vector<8x128xf32>
    %c612 = arith.constant 612 : index
    %2669 = memref.load %arg2[%c612] : memref<832xf32, #tpu.memory_space<smem>>
    %2670 = vector.broadcast %2669 : f32 to vector<8x128xf32>
    %2671 = arith.mulf %2670, %2486 : vector<8x128xf32>
    %2672 = arith.addf %2668, %2671 : vector<8x128xf32>
    %c615 = arith.constant 615 : index
    %2673 = memref.load %arg2[%c615] : memref<832xf32, #tpu.memory_space<smem>>
    %2674 = vector.broadcast %2673 : f32 to vector<8x128xf32>
    %2675 = arith.mulf %2674, %2441 : vector<8x128xf32>
    %c614 = arith.constant 614 : index
    %2676 = memref.load %arg2[%c614] : memref<832xf32, #tpu.memory_space<smem>>
    %2677 = vector.broadcast %2676 : f32 to vector<8x128xf32>
    %2678 = arith.mulf %2677, %2489 : vector<8x128xf32>
    %2679 = arith.addf %2675, %2678 : vector<8x128xf32>
    %2680 = arith.addf %2672, %2679 : vector<8x128xf32>
    %c617 = arith.constant 617 : index
    %2681 = memref.load %arg2[%c617] : memref<832xf32, #tpu.memory_space<smem>>
    %2682 = vector.broadcast %2681 : f32 to vector<8x128xf32>
    %2683 = arith.mulf %2682, %2460 : vector<8x128xf32>
    %c616 = arith.constant 616 : index
    %2684 = memref.load %arg2[%c616] : memref<832xf32, #tpu.memory_space<smem>>
    %2685 = vector.broadcast %2684 : f32 to vector<8x128xf32>
    %2686 = arith.mulf %2685, %2492 : vector<8x128xf32>
    %2687 = arith.addf %2683, %2686 : vector<8x128xf32>
    %2688 = arith.addf %2680, %2687 : vector<8x128xf32>
    %c619 = arith.constant 619 : index
    %2689 = memref.load %arg2[%c619] : memref<832xf32, #tpu.memory_space<smem>>
    %2690 = vector.broadcast %2689 : f32 to vector<8x128xf32>
    %2691 = arith.mulf %2690, %2479 : vector<8x128xf32>
    %c618 = arith.constant 618 : index
    %2692 = memref.load %arg2[%c618] : memref<832xf32, #tpu.memory_space<smem>>
    %2693 = vector.broadcast %2692 : f32 to vector<8x128xf32>
    %2694 = arith.mulf %2693, %2495 : vector<8x128xf32>
    %2695 = arith.addf %2691, %2694 : vector<8x128xf32>
    %2696 = arith.addf %2688, %2695 : vector<8x128xf32>
    %c641 = arith.constant 641 : index
    %2697 = memref.load %arg2[%c641] : memref<832xf32, #tpu.memory_space<smem>>
    %2698 = vector.broadcast %2697 : f32 to vector<8x128xf32>
    %2699 = arith.addf %2696, %2698 : vector<8x128xf32>
    %c621 = arith.constant 621 : index
    %2700 = memref.load %arg2[%c621] : memref<832xf32, #tpu.memory_space<smem>>
    %2701 = vector.broadcast %2700 : f32 to vector<8x128xf32>
    %2702 = arith.mulf %2701, %2422 : vector<8x128xf32>
    %c620 = arith.constant 620 : index
    %2703 = memref.load %arg2[%c620] : memref<832xf32, #tpu.memory_space<smem>>
    %2704 = vector.broadcast %2703 : f32 to vector<8x128xf32>
    %2705 = arith.mulf %2704, %2486 : vector<8x128xf32>
    %2706 = arith.addf %2702, %2705 : vector<8x128xf32>
    %c623 = arith.constant 623 : index
    %2707 = memref.load %arg2[%c623] : memref<832xf32, #tpu.memory_space<smem>>
    %2708 = vector.broadcast %2707 : f32 to vector<8x128xf32>
    %2709 = arith.mulf %2708, %2441 : vector<8x128xf32>
    %c622 = arith.constant 622 : index
    %2710 = memref.load %arg2[%c622] : memref<832xf32, #tpu.memory_space<smem>>
    %2711 = vector.broadcast %2710 : f32 to vector<8x128xf32>
    %2712 = arith.mulf %2711, %2489 : vector<8x128xf32>
    %2713 = arith.addf %2709, %2712 : vector<8x128xf32>
    %2714 = arith.addf %2706, %2713 : vector<8x128xf32>
    %c625 = arith.constant 625 : index
    %2715 = memref.load %arg2[%c625] : memref<832xf32, #tpu.memory_space<smem>>
    %2716 = vector.broadcast %2715 : f32 to vector<8x128xf32>
    %2717 = arith.mulf %2716, %2460 : vector<8x128xf32>
    %c624 = arith.constant 624 : index
    %2718 = memref.load %arg2[%c624] : memref<832xf32, #tpu.memory_space<smem>>
    %2719 = vector.broadcast %2718 : f32 to vector<8x128xf32>
    %2720 = arith.mulf %2719, %2492 : vector<8x128xf32>
    %2721 = arith.addf %2717, %2720 : vector<8x128xf32>
    %2722 = arith.addf %2714, %2721 : vector<8x128xf32>
    %c627 = arith.constant 627 : index
    %2723 = memref.load %arg2[%c627] : memref<832xf32, #tpu.memory_space<smem>>
    %2724 = vector.broadcast %2723 : f32 to vector<8x128xf32>
    %2725 = arith.mulf %2724, %2479 : vector<8x128xf32>
    %c626 = arith.constant 626 : index
    %2726 = memref.load %arg2[%c626] : memref<832xf32, #tpu.memory_space<smem>>
    %2727 = vector.broadcast %2726 : f32 to vector<8x128xf32>
    %2728 = arith.mulf %2727, %2495 : vector<8x128xf32>
    %2729 = arith.addf %2725, %2728 : vector<8x128xf32>
    %2730 = arith.addf %2722, %2729 : vector<8x128xf32>
    %c642 = arith.constant 642 : index
    %2731 = memref.load %arg2[%c642] : memref<832xf32, #tpu.memory_space<smem>>
    %2732 = vector.broadcast %2731 : f32 to vector<8x128xf32>
    %2733 = arith.addf %2730, %2732 : vector<8x128xf32>
    %c629 = arith.constant 629 : index
    %2734 = memref.load %arg2[%c629] : memref<832xf32, #tpu.memory_space<smem>>
    %2735 = vector.broadcast %2734 : f32 to vector<8x128xf32>
    %2736 = arith.mulf %2735, %2422 : vector<8x128xf32>
    %c628 = arith.constant 628 : index
    %2737 = memref.load %arg2[%c628] : memref<832xf32, #tpu.memory_space<smem>>
    %2738 = vector.broadcast %2737 : f32 to vector<8x128xf32>
    %2739 = arith.mulf %2738, %2486 : vector<8x128xf32>
    %2740 = arith.addf %2736, %2739 : vector<8x128xf32>
    %c631 = arith.constant 631 : index
    %2741 = memref.load %arg2[%c631] : memref<832xf32, #tpu.memory_space<smem>>
    %2742 = vector.broadcast %2741 : f32 to vector<8x128xf32>
    %2743 = arith.mulf %2742, %2441 : vector<8x128xf32>
    %c630 = arith.constant 630 : index
    %2744 = memref.load %arg2[%c630] : memref<832xf32, #tpu.memory_space<smem>>
    %2745 = vector.broadcast %2744 : f32 to vector<8x128xf32>
    %2746 = arith.mulf %2745, %2489 : vector<8x128xf32>
    %2747 = arith.addf %2743, %2746 : vector<8x128xf32>
    %2748 = arith.addf %2740, %2747 : vector<8x128xf32>
    %c633 = arith.constant 633 : index
    %2749 = memref.load %arg2[%c633] : memref<832xf32, #tpu.memory_space<smem>>
    %2750 = vector.broadcast %2749 : f32 to vector<8x128xf32>
    %2751 = arith.mulf %2750, %2460 : vector<8x128xf32>
    %c632 = arith.constant 632 : index
    %2752 = memref.load %arg2[%c632] : memref<832xf32, #tpu.memory_space<smem>>
    %2753 = vector.broadcast %2752 : f32 to vector<8x128xf32>
    %2754 = arith.mulf %2753, %2492 : vector<8x128xf32>
    %2755 = arith.addf %2751, %2754 : vector<8x128xf32>
    %2756 = arith.addf %2748, %2755 : vector<8x128xf32>
    %c635 = arith.constant 635 : index
    %2757 = memref.load %arg2[%c635] : memref<832xf32, #tpu.memory_space<smem>>
    %2758 = vector.broadcast %2757 : f32 to vector<8x128xf32>
    %2759 = arith.mulf %2758, %2479 : vector<8x128xf32>
    %c634 = arith.constant 634 : index
    %2760 = memref.load %arg2[%c634] : memref<832xf32, #tpu.memory_space<smem>>
    %2761 = vector.broadcast %2760 : f32 to vector<8x128xf32>
    %2762 = arith.mulf %2761, %2495 : vector<8x128xf32>
    %2763 = arith.addf %2759, %2762 : vector<8x128xf32>
    %2764 = arith.addf %2756, %2763 : vector<8x128xf32>
    %c643 = arith.constant 643 : index
    %2765 = memref.load %arg2[%c643] : memref<832xf32, #tpu.memory_space<smem>>
    %2766 = vector.broadcast %2765 : f32 to vector<8x128xf32>
    %2767 = arith.addf %2764, %2766 : vector<8x128xf32>
    %2768 = math.tanh %2529 : vector<8x128xf32>
    %cst_105 = arith.constant 5.000000e-01 : f32
    %2769 = vector.broadcast %cst_105 : f32 to vector<8x128xf32>
    %2770 = arith.mulf %2769, %2665 : vector<8x128xf32>
    %2771 = math.tanh %2770 : vector<8x128xf32>
    %cst_106 = arith.constant 1.000000e+00 : f32
    %2772 = vector.broadcast %cst_106 : f32 to vector<8x128xf32>
    %2773 = arith.addf %2771, %2772 : vector<8x128xf32>
    %cst_107 = arith.constant 5.000000e-01 : f32
    %2774 = vector.broadcast %cst_107 : f32 to vector<8x128xf32>
    %2775 = arith.mulf %2774, %2773 : vector<8x128xf32>
    %2776 = arith.mulf %2768, %2775 : vector<8x128xf32>
    %2777 = math.tanh %2563 : vector<8x128xf32>
    %cst_108 = arith.constant 5.000000e-01 : f32
    %2778 = vector.broadcast %cst_108 : f32 to vector<8x128xf32>
    %2779 = arith.mulf %2778, %2699 : vector<8x128xf32>
    %2780 = math.tanh %2779 : vector<8x128xf32>
    %cst_109 = arith.constant 1.000000e+00 : f32
    %2781 = vector.broadcast %cst_109 : f32 to vector<8x128xf32>
    %2782 = arith.addf %2780, %2781 : vector<8x128xf32>
    %cst_110 = arith.constant 5.000000e-01 : f32
    %2783 = vector.broadcast %cst_110 : f32 to vector<8x128xf32>
    %2784 = arith.mulf %2783, %2782 : vector<8x128xf32>
    %2785 = arith.mulf %2777, %2784 : vector<8x128xf32>
    %2786 = math.tanh %2597 : vector<8x128xf32>
    %cst_111 = arith.constant 5.000000e-01 : f32
    %2787 = vector.broadcast %cst_111 : f32 to vector<8x128xf32>
    %2788 = arith.mulf %2787, %2733 : vector<8x128xf32>
    %2789 = math.tanh %2788 : vector<8x128xf32>
    %cst_112 = arith.constant 1.000000e+00 : f32
    %2790 = vector.broadcast %cst_112 : f32 to vector<8x128xf32>
    %2791 = arith.addf %2789, %2790 : vector<8x128xf32>
    %cst_113 = arith.constant 5.000000e-01 : f32
    %2792 = vector.broadcast %cst_113 : f32 to vector<8x128xf32>
    %2793 = arith.mulf %2792, %2791 : vector<8x128xf32>
    %2794 = arith.mulf %2786, %2793 : vector<8x128xf32>
    %2795 = math.tanh %2631 : vector<8x128xf32>
    %cst_114 = arith.constant 5.000000e-01 : f32
    %2796 = vector.broadcast %cst_114 : f32 to vector<8x128xf32>
    %2797 = arith.mulf %2796, %2767 : vector<8x128xf32>
    %2798 = math.tanh %2797 : vector<8x128xf32>
    %cst_115 = arith.constant 1.000000e+00 : f32
    %2799 = vector.broadcast %cst_115 : f32 to vector<8x128xf32>
    %2800 = arith.addf %2798, %2799 : vector<8x128xf32>
    %cst_116 = arith.constant 5.000000e-01 : f32
    %2801 = vector.broadcast %cst_116 : f32 to vector<8x128xf32>
    %2802 = arith.mulf %2801, %2800 : vector<8x128xf32>
    %2803 = arith.mulf %2795, %2802 : vector<8x128xf32>
    %c644 = arith.constant 644 : index
    %2804 = memref.load %arg2[%c644] : memref<832xf32, #tpu.memory_space<smem>>
    %2805 = vector.broadcast %2804 : f32 to vector<8x128xf32>
    %2806 = arith.mulf %2805, %2776 : vector<8x128xf32>
    %2807 = arith.addf %2422, %2806 : vector<8x128xf32>
    %c645 = arith.constant 645 : index
    %2808 = memref.load %arg2[%c645] : memref<832xf32, #tpu.memory_space<smem>>
    %2809 = vector.broadcast %2808 : f32 to vector<8x128xf32>
    %2810 = arith.mulf %2809, %2785 : vector<8x128xf32>
    %2811 = arith.addf %2807, %2810 : vector<8x128xf32>
    %c646 = arith.constant 646 : index
    %2812 = memref.load %arg2[%c646] : memref<832xf32, #tpu.memory_space<smem>>
    %2813 = vector.broadcast %2812 : f32 to vector<8x128xf32>
    %2814 = arith.mulf %2813, %2794 : vector<8x128xf32>
    %2815 = arith.addf %2811, %2814 : vector<8x128xf32>
    %c647 = arith.constant 647 : index
    %2816 = memref.load %arg2[%c647] : memref<832xf32, #tpu.memory_space<smem>>
    %2817 = vector.broadcast %2816 : f32 to vector<8x128xf32>
    %2818 = arith.mulf %2817, %2803 : vector<8x128xf32>
    %2819 = arith.addf %2815, %2818 : vector<8x128xf32>
    %c660 = arith.constant 660 : index
    %2820 = memref.load %arg2[%c660] : memref<832xf32, #tpu.memory_space<smem>>
    %2821 = vector.broadcast %2820 : f32 to vector<8x128xf32>
    %2822 = arith.addf %2819, %2821 : vector<8x128xf32>
    %c648 = arith.constant 648 : index
    %2823 = memref.load %arg2[%c648] : memref<832xf32, #tpu.memory_space<smem>>
    %2824 = vector.broadcast %2823 : f32 to vector<8x128xf32>
    %2825 = arith.mulf %2824, %2776 : vector<8x128xf32>
    %2826 = arith.addf %2441, %2825 : vector<8x128xf32>
    %c649 = arith.constant 649 : index
    %2827 = memref.load %arg2[%c649] : memref<832xf32, #tpu.memory_space<smem>>
    %2828 = vector.broadcast %2827 : f32 to vector<8x128xf32>
    %2829 = arith.mulf %2828, %2785 : vector<8x128xf32>
    %2830 = arith.addf %2826, %2829 : vector<8x128xf32>
    %c650 = arith.constant 650 : index
    %2831 = memref.load %arg2[%c650] : memref<832xf32, #tpu.memory_space<smem>>
    %2832 = vector.broadcast %2831 : f32 to vector<8x128xf32>
    %2833 = arith.mulf %2832, %2794 : vector<8x128xf32>
    %2834 = arith.addf %2830, %2833 : vector<8x128xf32>
    %c651 = arith.constant 651 : index
    %2835 = memref.load %arg2[%c651] : memref<832xf32, #tpu.memory_space<smem>>
    %2836 = vector.broadcast %2835 : f32 to vector<8x128xf32>
    %2837 = arith.mulf %2836, %2803 : vector<8x128xf32>
    %2838 = arith.addf %2834, %2837 : vector<8x128xf32>
    %c661 = arith.constant 661 : index
    %2839 = memref.load %arg2[%c661] : memref<832xf32, #tpu.memory_space<smem>>
    %2840 = vector.broadcast %2839 : f32 to vector<8x128xf32>
    %2841 = arith.addf %2838, %2840 : vector<8x128xf32>
    %c652 = arith.constant 652 : index
    %2842 = memref.load %arg2[%c652] : memref<832xf32, #tpu.memory_space<smem>>
    %2843 = vector.broadcast %2842 : f32 to vector<8x128xf32>
    %2844 = arith.mulf %2843, %2776 : vector<8x128xf32>
    %2845 = arith.addf %2460, %2844 : vector<8x128xf32>
    %c653 = arith.constant 653 : index
    %2846 = memref.load %arg2[%c653] : memref<832xf32, #tpu.memory_space<smem>>
    %2847 = vector.broadcast %2846 : f32 to vector<8x128xf32>
    %2848 = arith.mulf %2847, %2785 : vector<8x128xf32>
    %2849 = arith.addf %2845, %2848 : vector<8x128xf32>
    %c654 = arith.constant 654 : index
    %2850 = memref.load %arg2[%c654] : memref<832xf32, #tpu.memory_space<smem>>
    %2851 = vector.broadcast %2850 : f32 to vector<8x128xf32>
    %2852 = arith.mulf %2851, %2794 : vector<8x128xf32>
    %2853 = arith.addf %2849, %2852 : vector<8x128xf32>
    %c655 = arith.constant 655 : index
    %2854 = memref.load %arg2[%c655] : memref<832xf32, #tpu.memory_space<smem>>
    %2855 = vector.broadcast %2854 : f32 to vector<8x128xf32>
    %2856 = arith.mulf %2855, %2803 : vector<8x128xf32>
    %2857 = arith.addf %2853, %2856 : vector<8x128xf32>
    %c662 = arith.constant 662 : index
    %2858 = memref.load %arg2[%c662] : memref<832xf32, #tpu.memory_space<smem>>
    %2859 = vector.broadcast %2858 : f32 to vector<8x128xf32>
    %2860 = arith.addf %2857, %2859 : vector<8x128xf32>
    %c656 = arith.constant 656 : index
    %2861 = memref.load %arg2[%c656] : memref<832xf32, #tpu.memory_space<smem>>
    %2862 = vector.broadcast %2861 : f32 to vector<8x128xf32>
    %2863 = arith.mulf %2862, %2776 : vector<8x128xf32>
    %2864 = arith.addf %2479, %2863 : vector<8x128xf32>
    %c657 = arith.constant 657 : index
    %2865 = memref.load %arg2[%c657] : memref<832xf32, #tpu.memory_space<smem>>
    %2866 = vector.broadcast %2865 : f32 to vector<8x128xf32>
    %2867 = arith.mulf %2866, %2785 : vector<8x128xf32>
    %2868 = arith.addf %2864, %2867 : vector<8x128xf32>
    %c658 = arith.constant 658 : index
    %2869 = memref.load %arg2[%c658] : memref<832xf32, #tpu.memory_space<smem>>
    %2870 = vector.broadcast %2869 : f32 to vector<8x128xf32>
    %2871 = arith.mulf %2870, %2794 : vector<8x128xf32>
    %2872 = arith.addf %2868, %2871 : vector<8x128xf32>
    %c659 = arith.constant 659 : index
    %2873 = memref.load %arg2[%c659] : memref<832xf32, #tpu.memory_space<smem>>
    %2874 = vector.broadcast %2873 : f32 to vector<8x128xf32>
    %2875 = arith.mulf %2874, %2803 : vector<8x128xf32>
    %2876 = arith.addf %2872, %2875 : vector<8x128xf32>
    %c663 = arith.constant 663 : index
    %2877 = memref.load %arg2[%c663] : memref<832xf32, #tpu.memory_space<smem>>
    %2878 = vector.broadcast %2877 : f32 to vector<8x128xf32>
    %2879 = arith.addf %2876, %2878 : vector<8x128xf32>
    %2880 = arith.addf %2480, %2822 : vector<8x128xf32>
    %2881 = arith.addf %2481, %2841 : vector<8x128xf32>
    %2882 = arith.addf %2482, %2860 : vector<8x128xf32>
    %2883 = arith.addf %2483, %2879 : vector<8x128xf32>
    %c665 = arith.constant 665 : index
    %2884 = memref.load %arg2[%c665] : memref<832xf32, #tpu.memory_space<smem>>
    %2885 = vector.broadcast %2884 : f32 to vector<8x128xf32>
    %2886 = arith.mulf %2885, %2822 : vector<8x128xf32>
    %c667 = arith.constant 667 : index
    %2887 = memref.load %arg2[%c667] : memref<832xf32, #tpu.memory_space<smem>>
    %2888 = vector.broadcast %2887 : f32 to vector<8x128xf32>
    %2889 = arith.mulf %2888, %2841 : vector<8x128xf32>
    %2890 = arith.addf %2886, %2889 : vector<8x128xf32>
    %c669 = arith.constant 669 : index
    %2891 = memref.load %arg2[%c669] : memref<832xf32, #tpu.memory_space<smem>>
    %2892 = vector.broadcast %2891 : f32 to vector<8x128xf32>
    %2893 = arith.mulf %2892, %2860 : vector<8x128xf32>
    %2894 = arith.addf %2890, %2893 : vector<8x128xf32>
    %c671 = arith.constant 671 : index
    %2895 = memref.load %arg2[%c671] : memref<832xf32, #tpu.memory_space<smem>>
    %2896 = vector.broadcast %2895 : f32 to vector<8x128xf32>
    %2897 = arith.mulf %2896, %2879 : vector<8x128xf32>
    %2898 = arith.addf %2894, %2897 : vector<8x128xf32>
    %c728 = arith.constant 728 : index
    %2899 = memref.load %arg2[%c728] : memref<832xf32, #tpu.memory_space<smem>>
    %2900 = vector.broadcast %2899 : f32 to vector<8x128xf32>
    %2901 = arith.addf %2898, %2900 : vector<8x128xf32>
    %c673 = arith.constant 673 : index
    %2902 = memref.load %arg2[%c673] : memref<832xf32, #tpu.memory_space<smem>>
    %2903 = vector.broadcast %2902 : f32 to vector<8x128xf32>
    %2904 = arith.mulf %2903, %2822 : vector<8x128xf32>
    %c675 = arith.constant 675 : index
    %2905 = memref.load %arg2[%c675] : memref<832xf32, #tpu.memory_space<smem>>
    %2906 = vector.broadcast %2905 : f32 to vector<8x128xf32>
    %2907 = arith.mulf %2906, %2841 : vector<8x128xf32>
    %2908 = arith.addf %2904, %2907 : vector<8x128xf32>
    %c677 = arith.constant 677 : index
    %2909 = memref.load %arg2[%c677] : memref<832xf32, #tpu.memory_space<smem>>
    %2910 = vector.broadcast %2909 : f32 to vector<8x128xf32>
    %2911 = arith.mulf %2910, %2860 : vector<8x128xf32>
    %2912 = arith.addf %2908, %2911 : vector<8x128xf32>
    %c679 = arith.constant 679 : index
    %2913 = memref.load %arg2[%c679] : memref<832xf32, #tpu.memory_space<smem>>
    %2914 = vector.broadcast %2913 : f32 to vector<8x128xf32>
    %2915 = arith.mulf %2914, %2879 : vector<8x128xf32>
    %2916 = arith.addf %2912, %2915 : vector<8x128xf32>
    %c729 = arith.constant 729 : index
    %2917 = memref.load %arg2[%c729] : memref<832xf32, #tpu.memory_space<smem>>
    %2918 = vector.broadcast %2917 : f32 to vector<8x128xf32>
    %2919 = arith.addf %2916, %2918 : vector<8x128xf32>
    %c681 = arith.constant 681 : index
    %2920 = memref.load %arg2[%c681] : memref<832xf32, #tpu.memory_space<smem>>
    %2921 = vector.broadcast %2920 : f32 to vector<8x128xf32>
    %2922 = arith.mulf %2921, %2822 : vector<8x128xf32>
    %c683 = arith.constant 683 : index
    %2923 = memref.load %arg2[%c683] : memref<832xf32, #tpu.memory_space<smem>>
    %2924 = vector.broadcast %2923 : f32 to vector<8x128xf32>
    %2925 = arith.mulf %2924, %2841 : vector<8x128xf32>
    %2926 = arith.addf %2922, %2925 : vector<8x128xf32>
    %c685 = arith.constant 685 : index
    %2927 = memref.load %arg2[%c685] : memref<832xf32, #tpu.memory_space<smem>>
    %2928 = vector.broadcast %2927 : f32 to vector<8x128xf32>
    %2929 = arith.mulf %2928, %2860 : vector<8x128xf32>
    %2930 = arith.addf %2926, %2929 : vector<8x128xf32>
    %c687 = arith.constant 687 : index
    %2931 = memref.load %arg2[%c687] : memref<832xf32, #tpu.memory_space<smem>>
    %2932 = vector.broadcast %2931 : f32 to vector<8x128xf32>
    %2933 = arith.mulf %2932, %2879 : vector<8x128xf32>
    %2934 = arith.addf %2930, %2933 : vector<8x128xf32>
    %c730 = arith.constant 730 : index
    %2935 = memref.load %arg2[%c730] : memref<832xf32, #tpu.memory_space<smem>>
    %2936 = vector.broadcast %2935 : f32 to vector<8x128xf32>
    %2937 = arith.addf %2934, %2936 : vector<8x128xf32>
    %c689 = arith.constant 689 : index
    %2938 = memref.load %arg2[%c689] : memref<832xf32, #tpu.memory_space<smem>>
    %2939 = vector.broadcast %2938 : f32 to vector<8x128xf32>
    %2940 = arith.mulf %2939, %2822 : vector<8x128xf32>
    %c691 = arith.constant 691 : index
    %2941 = memref.load %arg2[%c691] : memref<832xf32, #tpu.memory_space<smem>>
    %2942 = vector.broadcast %2941 : f32 to vector<8x128xf32>
    %2943 = arith.mulf %2942, %2841 : vector<8x128xf32>
    %2944 = arith.addf %2940, %2943 : vector<8x128xf32>
    %c693 = arith.constant 693 : index
    %2945 = memref.load %arg2[%c693] : memref<832xf32, #tpu.memory_space<smem>>
    %2946 = vector.broadcast %2945 : f32 to vector<8x128xf32>
    %2947 = arith.mulf %2946, %2860 : vector<8x128xf32>
    %2948 = arith.addf %2944, %2947 : vector<8x128xf32>
    %c695 = arith.constant 695 : index
    %2949 = memref.load %arg2[%c695] : memref<832xf32, #tpu.memory_space<smem>>
    %2950 = vector.broadcast %2949 : f32 to vector<8x128xf32>
    %2951 = arith.mulf %2950, %2879 : vector<8x128xf32>
    %2952 = arith.addf %2948, %2951 : vector<8x128xf32>
    %c731 = arith.constant 731 : index
    %2953 = memref.load %arg2[%c731] : memref<832xf32, #tpu.memory_space<smem>>
    %2954 = vector.broadcast %2953 : f32 to vector<8x128xf32>
    %2955 = arith.addf %2952, %2954 : vector<8x128xf32>
    %c697 = arith.constant 697 : index
    %2956 = memref.load %arg2[%c697] : memref<832xf32, #tpu.memory_space<smem>>
    %2957 = vector.broadcast %2956 : f32 to vector<8x128xf32>
    %2958 = arith.mulf %2957, %2822 : vector<8x128xf32>
    %c699 = arith.constant 699 : index
    %2959 = memref.load %arg2[%c699] : memref<832xf32, #tpu.memory_space<smem>>
    %2960 = vector.broadcast %2959 : f32 to vector<8x128xf32>
    %2961 = arith.mulf %2960, %2841 : vector<8x128xf32>
    %2962 = arith.addf %2958, %2961 : vector<8x128xf32>
    %c701 = arith.constant 701 : index
    %2963 = memref.load %arg2[%c701] : memref<832xf32, #tpu.memory_space<smem>>
    %2964 = vector.broadcast %2963 : f32 to vector<8x128xf32>
    %2965 = arith.mulf %2964, %2860 : vector<8x128xf32>
    %2966 = arith.addf %2962, %2965 : vector<8x128xf32>
    %c703 = arith.constant 703 : index
    %2967 = memref.load %arg2[%c703] : memref<832xf32, #tpu.memory_space<smem>>
    %2968 = vector.broadcast %2967 : f32 to vector<8x128xf32>
    %2969 = arith.mulf %2968, %2879 : vector<8x128xf32>
    %2970 = arith.addf %2966, %2969 : vector<8x128xf32>
    %c732 = arith.constant 732 : index
    %2971 = memref.load %arg2[%c732] : memref<832xf32, #tpu.memory_space<smem>>
    %2972 = vector.broadcast %2971 : f32 to vector<8x128xf32>
    %2973 = arith.addf %2970, %2972 : vector<8x128xf32>
    %c705 = arith.constant 705 : index
    %2974 = memref.load %arg2[%c705] : memref<832xf32, #tpu.memory_space<smem>>
    %2975 = vector.broadcast %2974 : f32 to vector<8x128xf32>
    %2976 = arith.mulf %2975, %2822 : vector<8x128xf32>
    %c707 = arith.constant 707 : index
    %2977 = memref.load %arg2[%c707] : memref<832xf32, #tpu.memory_space<smem>>
    %2978 = vector.broadcast %2977 : f32 to vector<8x128xf32>
    %2979 = arith.mulf %2978, %2841 : vector<8x128xf32>
    %2980 = arith.addf %2976, %2979 : vector<8x128xf32>
    %c709 = arith.constant 709 : index
    %2981 = memref.load %arg2[%c709] : memref<832xf32, #tpu.memory_space<smem>>
    %2982 = vector.broadcast %2981 : f32 to vector<8x128xf32>
    %2983 = arith.mulf %2982, %2860 : vector<8x128xf32>
    %2984 = arith.addf %2980, %2983 : vector<8x128xf32>
    %c711 = arith.constant 711 : index
    %2985 = memref.load %arg2[%c711] : memref<832xf32, #tpu.memory_space<smem>>
    %2986 = vector.broadcast %2985 : f32 to vector<8x128xf32>
    %2987 = arith.mulf %2986, %2879 : vector<8x128xf32>
    %2988 = arith.addf %2984, %2987 : vector<8x128xf32>
    %c733 = arith.constant 733 : index
    %2989 = memref.load %arg2[%c733] : memref<832xf32, #tpu.memory_space<smem>>
    %2990 = vector.broadcast %2989 : f32 to vector<8x128xf32>
    %2991 = arith.addf %2988, %2990 : vector<8x128xf32>
    %c713 = arith.constant 713 : index
    %2992 = memref.load %arg2[%c713] : memref<832xf32, #tpu.memory_space<smem>>
    %2993 = vector.broadcast %2992 : f32 to vector<8x128xf32>
    %2994 = arith.mulf %2993, %2822 : vector<8x128xf32>
    %c715 = arith.constant 715 : index
    %2995 = memref.load %arg2[%c715] : memref<832xf32, #tpu.memory_space<smem>>
    %2996 = vector.broadcast %2995 : f32 to vector<8x128xf32>
    %2997 = arith.mulf %2996, %2841 : vector<8x128xf32>
    %2998 = arith.addf %2994, %2997 : vector<8x128xf32>
    %c717 = arith.constant 717 : index
    %2999 = memref.load %arg2[%c717] : memref<832xf32, #tpu.memory_space<smem>>
    %3000 = vector.broadcast %2999 : f32 to vector<8x128xf32>
    %3001 = arith.mulf %3000, %2860 : vector<8x128xf32>
    %3002 = arith.addf %2998, %3001 : vector<8x128xf32>
    %c719 = arith.constant 719 : index
    %3003 = memref.load %arg2[%c719] : memref<832xf32, #tpu.memory_space<smem>>
    %3004 = vector.broadcast %3003 : f32 to vector<8x128xf32>
    %3005 = arith.mulf %3004, %2879 : vector<8x128xf32>
    %3006 = arith.addf %3002, %3005 : vector<8x128xf32>
    %c734 = arith.constant 734 : index
    %3007 = memref.load %arg2[%c734] : memref<832xf32, #tpu.memory_space<smem>>
    %3008 = vector.broadcast %3007 : f32 to vector<8x128xf32>
    %3009 = arith.addf %3006, %3008 : vector<8x128xf32>
    %c721 = arith.constant 721 : index
    %3010 = memref.load %arg2[%c721] : memref<832xf32, #tpu.memory_space<smem>>
    %3011 = vector.broadcast %3010 : f32 to vector<8x128xf32>
    %3012 = arith.mulf %3011, %2822 : vector<8x128xf32>
    %c723 = arith.constant 723 : index
    %3013 = memref.load %arg2[%c723] : memref<832xf32, #tpu.memory_space<smem>>
    %3014 = vector.broadcast %3013 : f32 to vector<8x128xf32>
    %3015 = arith.mulf %3014, %2841 : vector<8x128xf32>
    %3016 = arith.addf %3012, %3015 : vector<8x128xf32>
    %c725 = arith.constant 725 : index
    %3017 = memref.load %arg2[%c725] : memref<832xf32, #tpu.memory_space<smem>>
    %3018 = vector.broadcast %3017 : f32 to vector<8x128xf32>
    %3019 = arith.mulf %3018, %2860 : vector<8x128xf32>
    %3020 = arith.addf %3016, %3019 : vector<8x128xf32>
    %c727 = arith.constant 727 : index
    %3021 = memref.load %arg2[%c727] : memref<832xf32, #tpu.memory_space<smem>>
    %3022 = vector.broadcast %3021 : f32 to vector<8x128xf32>
    %3023 = arith.mulf %3022, %2879 : vector<8x128xf32>
    %3024 = arith.addf %3020, %3023 : vector<8x128xf32>
    %c735 = arith.constant 735 : index
    %3025 = memref.load %arg2[%c735] : memref<832xf32, #tpu.memory_space<smem>>
    %3026 = vector.broadcast %3025 : f32 to vector<8x128xf32>
    %3027 = arith.addf %3024, %3026 : vector<8x128xf32>
    %3028 = math.tanh %2901 : vector<8x128xf32>
    %cst_117 = arith.constant 5.000000e-01 : f32
    %3029 = vector.broadcast %cst_117 : f32 to vector<8x128xf32>
    %3030 = arith.mulf %3029, %2973 : vector<8x128xf32>
    %3031 = math.tanh %3030 : vector<8x128xf32>
    %cst_118 = arith.constant 1.000000e+00 : f32
    %3032 = vector.broadcast %cst_118 : f32 to vector<8x128xf32>
    %3033 = arith.addf %3031, %3032 : vector<8x128xf32>
    %cst_119 = arith.constant 5.000000e-01 : f32
    %3034 = vector.broadcast %cst_119 : f32 to vector<8x128xf32>
    %3035 = arith.mulf %3034, %3033 : vector<8x128xf32>
    %3036 = arith.mulf %3028, %3035 : vector<8x128xf32>
    %3037 = math.tanh %2919 : vector<8x128xf32>
    %cst_120 = arith.constant 5.000000e-01 : f32
    %3038 = vector.broadcast %cst_120 : f32 to vector<8x128xf32>
    %3039 = arith.mulf %3038, %2991 : vector<8x128xf32>
    %3040 = math.tanh %3039 : vector<8x128xf32>
    %cst_121 = arith.constant 1.000000e+00 : f32
    %3041 = vector.broadcast %cst_121 : f32 to vector<8x128xf32>
    %3042 = arith.addf %3040, %3041 : vector<8x128xf32>
    %cst_122 = arith.constant 5.000000e-01 : f32
    %3043 = vector.broadcast %cst_122 : f32 to vector<8x128xf32>
    %3044 = arith.mulf %3043, %3042 : vector<8x128xf32>
    %3045 = arith.mulf %3037, %3044 : vector<8x128xf32>
    %3046 = math.tanh %2937 : vector<8x128xf32>
    %cst_123 = arith.constant 5.000000e-01 : f32
    %3047 = vector.broadcast %cst_123 : f32 to vector<8x128xf32>
    %3048 = arith.mulf %3047, %3009 : vector<8x128xf32>
    %3049 = math.tanh %3048 : vector<8x128xf32>
    %cst_124 = arith.constant 1.000000e+00 : f32
    %3050 = vector.broadcast %cst_124 : f32 to vector<8x128xf32>
    %3051 = arith.addf %3049, %3050 : vector<8x128xf32>
    %cst_125 = arith.constant 5.000000e-01 : f32
    %3052 = vector.broadcast %cst_125 : f32 to vector<8x128xf32>
    %3053 = arith.mulf %3052, %3051 : vector<8x128xf32>
    %3054 = arith.mulf %3046, %3053 : vector<8x128xf32>
    %3055 = math.tanh %2955 : vector<8x128xf32>
    %cst_126 = arith.constant 5.000000e-01 : f32
    %3056 = vector.broadcast %cst_126 : f32 to vector<8x128xf32>
    %3057 = arith.mulf %3056, %3027 : vector<8x128xf32>
    %3058 = math.tanh %3057 : vector<8x128xf32>
    %cst_127 = arith.constant 1.000000e+00 : f32
    %3059 = vector.broadcast %cst_127 : f32 to vector<8x128xf32>
    %3060 = arith.addf %3058, %3059 : vector<8x128xf32>
    %cst_128 = arith.constant 5.000000e-01 : f32
    %3061 = vector.broadcast %cst_128 : f32 to vector<8x128xf32>
    %3062 = arith.mulf %3061, %3060 : vector<8x128xf32>
    %3063 = arith.mulf %3055, %3062 : vector<8x128xf32>
    %c736 = arith.constant 736 : index
    %3064 = memref.load %arg2[%c736] : memref<832xf32, #tpu.memory_space<smem>>
    %3065 = vector.broadcast %3064 : f32 to vector<8x128xf32>
    %3066 = arith.mulf %3065, %3036 : vector<8x128xf32>
    %3067 = arith.addf %2822, %3066 : vector<8x128xf32>
    %c737 = arith.constant 737 : index
    %3068 = memref.load %arg2[%c737] : memref<832xf32, #tpu.memory_space<smem>>
    %3069 = vector.broadcast %3068 : f32 to vector<8x128xf32>
    %3070 = arith.mulf %3069, %3045 : vector<8x128xf32>
    %3071 = arith.addf %3067, %3070 : vector<8x128xf32>
    %c738 = arith.constant 738 : index
    %3072 = memref.load %arg2[%c738] : memref<832xf32, #tpu.memory_space<smem>>
    %3073 = vector.broadcast %3072 : f32 to vector<8x128xf32>
    %3074 = arith.mulf %3073, %3054 : vector<8x128xf32>
    %3075 = arith.addf %3071, %3074 : vector<8x128xf32>
    %c739 = arith.constant 739 : index
    %3076 = memref.load %arg2[%c739] : memref<832xf32, #tpu.memory_space<smem>>
    %3077 = vector.broadcast %3076 : f32 to vector<8x128xf32>
    %3078 = arith.mulf %3077, %3063 : vector<8x128xf32>
    %3079 = arith.addf %3075, %3078 : vector<8x128xf32>
    %c752 = arith.constant 752 : index
    %3080 = memref.load %arg2[%c752] : memref<832xf32, #tpu.memory_space<smem>>
    %3081 = vector.broadcast %3080 : f32 to vector<8x128xf32>
    %3082 = arith.addf %3079, %3081 : vector<8x128xf32>
    %c740 = arith.constant 740 : index
    %3083 = memref.load %arg2[%c740] : memref<832xf32, #tpu.memory_space<smem>>
    %3084 = vector.broadcast %3083 : f32 to vector<8x128xf32>
    %3085 = arith.mulf %3084, %3036 : vector<8x128xf32>
    %3086 = arith.addf %2841, %3085 : vector<8x128xf32>
    %c741 = arith.constant 741 : index
    %3087 = memref.load %arg2[%c741] : memref<832xf32, #tpu.memory_space<smem>>
    %3088 = vector.broadcast %3087 : f32 to vector<8x128xf32>
    %3089 = arith.mulf %3088, %3045 : vector<8x128xf32>
    %3090 = arith.addf %3086, %3089 : vector<8x128xf32>
    %c742 = arith.constant 742 : index
    %3091 = memref.load %arg2[%c742] : memref<832xf32, #tpu.memory_space<smem>>
    %3092 = vector.broadcast %3091 : f32 to vector<8x128xf32>
    %3093 = arith.mulf %3092, %3054 : vector<8x128xf32>
    %3094 = arith.addf %3090, %3093 : vector<8x128xf32>
    %c743 = arith.constant 743 : index
    %3095 = memref.load %arg2[%c743] : memref<832xf32, #tpu.memory_space<smem>>
    %3096 = vector.broadcast %3095 : f32 to vector<8x128xf32>
    %3097 = arith.mulf %3096, %3063 : vector<8x128xf32>
    %3098 = arith.addf %3094, %3097 : vector<8x128xf32>
    %c753 = arith.constant 753 : index
    %3099 = memref.load %arg2[%c753] : memref<832xf32, #tpu.memory_space<smem>>
    %3100 = vector.broadcast %3099 : f32 to vector<8x128xf32>
    %3101 = arith.addf %3098, %3100 : vector<8x128xf32>
    %c744 = arith.constant 744 : index
    %3102 = memref.load %arg2[%c744] : memref<832xf32, #tpu.memory_space<smem>>
    %3103 = vector.broadcast %3102 : f32 to vector<8x128xf32>
    %3104 = arith.mulf %3103, %3036 : vector<8x128xf32>
    %3105 = arith.addf %2860, %3104 : vector<8x128xf32>
    %c745 = arith.constant 745 : index
    %3106 = memref.load %arg2[%c745] : memref<832xf32, #tpu.memory_space<smem>>
    %3107 = vector.broadcast %3106 : f32 to vector<8x128xf32>
    %3108 = arith.mulf %3107, %3045 : vector<8x128xf32>
    %3109 = arith.addf %3105, %3108 : vector<8x128xf32>
    %c746 = arith.constant 746 : index
    %3110 = memref.load %arg2[%c746] : memref<832xf32, #tpu.memory_space<smem>>
    %3111 = vector.broadcast %3110 : f32 to vector<8x128xf32>
    %3112 = arith.mulf %3111, %3054 : vector<8x128xf32>
    %3113 = arith.addf %3109, %3112 : vector<8x128xf32>
    %c747 = arith.constant 747 : index
    %3114 = memref.load %arg2[%c747] : memref<832xf32, #tpu.memory_space<smem>>
    %3115 = vector.broadcast %3114 : f32 to vector<8x128xf32>
    %3116 = arith.mulf %3115, %3063 : vector<8x128xf32>
    %3117 = arith.addf %3113, %3116 : vector<8x128xf32>
    %c754 = arith.constant 754 : index
    %3118 = memref.load %arg2[%c754] : memref<832xf32, #tpu.memory_space<smem>>
    %3119 = vector.broadcast %3118 : f32 to vector<8x128xf32>
    %3120 = arith.addf %3117, %3119 : vector<8x128xf32>
    %c748 = arith.constant 748 : index
    %3121 = memref.load %arg2[%c748] : memref<832xf32, #tpu.memory_space<smem>>
    %3122 = vector.broadcast %3121 : f32 to vector<8x128xf32>
    %3123 = arith.mulf %3122, %3036 : vector<8x128xf32>
    %3124 = arith.addf %2879, %3123 : vector<8x128xf32>
    %c749 = arith.constant 749 : index
    %3125 = memref.load %arg2[%c749] : memref<832xf32, #tpu.memory_space<smem>>
    %3126 = vector.broadcast %3125 : f32 to vector<8x128xf32>
    %3127 = arith.mulf %3126, %3045 : vector<8x128xf32>
    %3128 = arith.addf %3124, %3127 : vector<8x128xf32>
    %c750 = arith.constant 750 : index
    %3129 = memref.load %arg2[%c750] : memref<832xf32, #tpu.memory_space<smem>>
    %3130 = vector.broadcast %3129 : f32 to vector<8x128xf32>
    %3131 = arith.mulf %3130, %3054 : vector<8x128xf32>
    %3132 = arith.addf %3128, %3131 : vector<8x128xf32>
    %c751 = arith.constant 751 : index
    %3133 = memref.load %arg2[%c751] : memref<832xf32, #tpu.memory_space<smem>>
    %3134 = vector.broadcast %3133 : f32 to vector<8x128xf32>
    %3135 = arith.mulf %3134, %3063 : vector<8x128xf32>
    %3136 = arith.addf %3132, %3135 : vector<8x128xf32>
    %c755 = arith.constant 755 : index
    %3137 = memref.load %arg2[%c755] : memref<832xf32, #tpu.memory_space<smem>>
    %3138 = vector.broadcast %3137 : f32 to vector<8x128xf32>
    %3139 = arith.addf %3136, %3138 : vector<8x128xf32>
    %3140 = arith.addf %2880, %3082 : vector<8x128xf32>
    %3141 = arith.addf %2881, %3101 : vector<8x128xf32>
    %3142 = arith.addf %2882, %3120 : vector<8x128xf32>
    %3143 = arith.addf %2883, %3139 : vector<8x128xf32>
    %cst_129 = arith.constant 0.111111112 : f32
    %3144 = vector.broadcast %cst_129 : f32 to vector<8x128xf32>
    %3145 = arith.mulf %3140, %3144 : vector<8x128xf32>
    %cst_130 = arith.constant 0.000000e+00 : f32
    %3146 = vector.broadcast %cst_130 : f32 to vector<8x128xf32>
    %3147 = arith.maximumf %3145, %3146 : vector<8x128xf32>
    %cst_131 = arith.constant 0.111111112 : f32
    %3148 = vector.broadcast %cst_131 : f32 to vector<8x128xf32>
    %3149 = arith.mulf %3141, %3148 : vector<8x128xf32>
    %cst_132 = arith.constant 0.000000e+00 : f32
    %3150 = vector.broadcast %cst_132 : f32 to vector<8x128xf32>
    %3151 = arith.maximumf %3149, %3150 : vector<8x128xf32>
    %cst_133 = arith.constant 0.111111112 : f32
    %3152 = vector.broadcast %cst_133 : f32 to vector<8x128xf32>
    %3153 = arith.mulf %3142, %3152 : vector<8x128xf32>
    %cst_134 = arith.constant 0.000000e+00 : f32
    %3154 = vector.broadcast %cst_134 : f32 to vector<8x128xf32>
    %3155 = arith.maximumf %3153, %3154 : vector<8x128xf32>
    %cst_135 = arith.constant 0.111111112 : f32
    %3156 = vector.broadcast %cst_135 : f32 to vector<8x128xf32>
    %3157 = arith.mulf %3143, %3156 : vector<8x128xf32>
    %cst_136 = arith.constant 0.000000e+00 : f32
    %3158 = vector.broadcast %cst_136 : f32 to vector<8x128xf32>
    %3159 = arith.maximumf %3157, %3158 : vector<8x128xf32>
    %c756 = arith.constant 756 : index
    %3160 = memref.load %arg2[%c756] : memref<832xf32, #tpu.memory_space<smem>>
    %3161 = vector.broadcast %3160 : f32 to vector<8x128xf32>
    %3162 = arith.mulf %3161, %3147 : vector<8x128xf32>
    %c757 = arith.constant 757 : index
    %3163 = memref.load %arg2[%c757] : memref<832xf32, #tpu.memory_space<smem>>
    %3164 = vector.broadcast %3163 : f32 to vector<8x128xf32>
    %3165 = arith.mulf %3164, %3151 : vector<8x128xf32>
    %3166 = arith.addf %3162, %3165 : vector<8x128xf32>
    %c758 = arith.constant 758 : index
    %3167 = memref.load %arg2[%c758] : memref<832xf32, #tpu.memory_space<smem>>
    %3168 = vector.broadcast %3167 : f32 to vector<8x128xf32>
    %3169 = arith.mulf %3168, %3155 : vector<8x128xf32>
    %3170 = arith.addf %3166, %3169 : vector<8x128xf32>
    %c759 = arith.constant 759 : index
    %3171 = memref.load %arg2[%c759] : memref<832xf32, #tpu.memory_space<smem>>
    %3172 = vector.broadcast %3171 : f32 to vector<8x128xf32>
    %3173 = arith.mulf %3172, %3159 : vector<8x128xf32>
    %3174 = arith.addf %3170, %3173 : vector<8x128xf32>
    %c788 = arith.constant 788 : index
    %3175 = memref.load %arg2[%c788] : memref<832xf32, #tpu.memory_space<smem>>
    %3176 = vector.broadcast %3175 : f32 to vector<8x128xf32>
    %3177 = arith.addf %3174, %3176 : vector<8x128xf32>
    %c760 = arith.constant 760 : index
    %3178 = memref.load %arg2[%c760] : memref<832xf32, #tpu.memory_space<smem>>
    %3179 = vector.broadcast %3178 : f32 to vector<8x128xf32>
    %3180 = arith.mulf %3179, %3147 : vector<8x128xf32>
    %c761 = arith.constant 761 : index
    %3181 = memref.load %arg2[%c761] : memref<832xf32, #tpu.memory_space<smem>>
    %3182 = vector.broadcast %3181 : f32 to vector<8x128xf32>
    %3183 = arith.mulf %3182, %3151 : vector<8x128xf32>
    %3184 = arith.addf %3180, %3183 : vector<8x128xf32>
    %c762 = arith.constant 762 : index
    %3185 = memref.load %arg2[%c762] : memref<832xf32, #tpu.memory_space<smem>>
    %3186 = vector.broadcast %3185 : f32 to vector<8x128xf32>
    %3187 = arith.mulf %3186, %3155 : vector<8x128xf32>
    %3188 = arith.addf %3184, %3187 : vector<8x128xf32>
    %c763 = arith.constant 763 : index
    %3189 = memref.load %arg2[%c763] : memref<832xf32, #tpu.memory_space<smem>>
    %3190 = vector.broadcast %3189 : f32 to vector<8x128xf32>
    %3191 = arith.mulf %3190, %3159 : vector<8x128xf32>
    %3192 = arith.addf %3188, %3191 : vector<8x128xf32>
    %c789 = arith.constant 789 : index
    %3193 = memref.load %arg2[%c789] : memref<832xf32, #tpu.memory_space<smem>>
    %3194 = vector.broadcast %3193 : f32 to vector<8x128xf32>
    %3195 = arith.addf %3192, %3194 : vector<8x128xf32>
    %c764 = arith.constant 764 : index
    %3196 = memref.load %arg2[%c764] : memref<832xf32, #tpu.memory_space<smem>>
    %3197 = vector.broadcast %3196 : f32 to vector<8x128xf32>
    %3198 = arith.mulf %3197, %3147 : vector<8x128xf32>
    %c765 = arith.constant 765 : index
    %3199 = memref.load %arg2[%c765] : memref<832xf32, #tpu.memory_space<smem>>
    %3200 = vector.broadcast %3199 : f32 to vector<8x128xf32>
    %3201 = arith.mulf %3200, %3151 : vector<8x128xf32>
    %3202 = arith.addf %3198, %3201 : vector<8x128xf32>
    %c766 = arith.constant 766 : index
    %3203 = memref.load %arg2[%c766] : memref<832xf32, #tpu.memory_space<smem>>
    %3204 = vector.broadcast %3203 : f32 to vector<8x128xf32>
    %3205 = arith.mulf %3204, %3155 : vector<8x128xf32>
    %3206 = arith.addf %3202, %3205 : vector<8x128xf32>
    %c767 = arith.constant 767 : index
    %3207 = memref.load %arg2[%c767] : memref<832xf32, #tpu.memory_space<smem>>
    %3208 = vector.broadcast %3207 : f32 to vector<8x128xf32>
    %3209 = arith.mulf %3208, %3159 : vector<8x128xf32>
    %3210 = arith.addf %3206, %3209 : vector<8x128xf32>
    %c790 = arith.constant 790 : index
    %3211 = memref.load %arg2[%c790] : memref<832xf32, #tpu.memory_space<smem>>
    %3212 = vector.broadcast %3211 : f32 to vector<8x128xf32>
    %3213 = arith.addf %3210, %3212 : vector<8x128xf32>
    %c768 = arith.constant 768 : index
    %3214 = memref.load %arg2[%c768] : memref<832xf32, #tpu.memory_space<smem>>
    %3215 = vector.broadcast %3214 : f32 to vector<8x128xf32>
    %3216 = arith.mulf %3215, %3147 : vector<8x128xf32>
    %c769 = arith.constant 769 : index
    %3217 = memref.load %arg2[%c769] : memref<832xf32, #tpu.memory_space<smem>>
    %3218 = vector.broadcast %3217 : f32 to vector<8x128xf32>
    %3219 = arith.mulf %3218, %3151 : vector<8x128xf32>
    %3220 = arith.addf %3216, %3219 : vector<8x128xf32>
    %c770 = arith.constant 770 : index
    %3221 = memref.load %arg2[%c770] : memref<832xf32, #tpu.memory_space<smem>>
    %3222 = vector.broadcast %3221 : f32 to vector<8x128xf32>
    %3223 = arith.mulf %3222, %3155 : vector<8x128xf32>
    %3224 = arith.addf %3220, %3223 : vector<8x128xf32>
    %c771 = arith.constant 771 : index
    %3225 = memref.load %arg2[%c771] : memref<832xf32, #tpu.memory_space<smem>>
    %3226 = vector.broadcast %3225 : f32 to vector<8x128xf32>
    %3227 = arith.mulf %3226, %3159 : vector<8x128xf32>
    %3228 = arith.addf %3224, %3227 : vector<8x128xf32>
    %c791 = arith.constant 791 : index
    %3229 = memref.load %arg2[%c791] : memref<832xf32, #tpu.memory_space<smem>>
    %3230 = vector.broadcast %3229 : f32 to vector<8x128xf32>
    %3231 = arith.addf %3228, %3230 : vector<8x128xf32>
    %c772 = arith.constant 772 : index
    %3232 = memref.load %arg2[%c772] : memref<832xf32, #tpu.memory_space<smem>>
    %3233 = vector.broadcast %3232 : f32 to vector<8x128xf32>
    %3234 = arith.mulf %3233, %3147 : vector<8x128xf32>
    %c773 = arith.constant 773 : index
    %3235 = memref.load %arg2[%c773] : memref<832xf32, #tpu.memory_space<smem>>
    %3236 = vector.broadcast %3235 : f32 to vector<8x128xf32>
    %3237 = arith.mulf %3236, %3151 : vector<8x128xf32>
    %3238 = arith.addf %3234, %3237 : vector<8x128xf32>
    %c774 = arith.constant 774 : index
    %3239 = memref.load %arg2[%c774] : memref<832xf32, #tpu.memory_space<smem>>
    %3240 = vector.broadcast %3239 : f32 to vector<8x128xf32>
    %3241 = arith.mulf %3240, %3155 : vector<8x128xf32>
    %3242 = arith.addf %3238, %3241 : vector<8x128xf32>
    %c775 = arith.constant 775 : index
    %3243 = memref.load %arg2[%c775] : memref<832xf32, #tpu.memory_space<smem>>
    %3244 = vector.broadcast %3243 : f32 to vector<8x128xf32>
    %3245 = arith.mulf %3244, %3159 : vector<8x128xf32>
    %3246 = arith.addf %3242, %3245 : vector<8x128xf32>
    %c792 = arith.constant 792 : index
    %3247 = memref.load %arg2[%c792] : memref<832xf32, #tpu.memory_space<smem>>
    %3248 = vector.broadcast %3247 : f32 to vector<8x128xf32>
    %3249 = arith.addf %3246, %3248 : vector<8x128xf32>
    %c776 = arith.constant 776 : index
    %3250 = memref.load %arg2[%c776] : memref<832xf32, #tpu.memory_space<smem>>
    %3251 = vector.broadcast %3250 : f32 to vector<8x128xf32>
    %3252 = arith.mulf %3251, %3147 : vector<8x128xf32>
    %c777 = arith.constant 777 : index
    %3253 = memref.load %arg2[%c777] : memref<832xf32, #tpu.memory_space<smem>>
    %3254 = vector.broadcast %3253 : f32 to vector<8x128xf32>
    %3255 = arith.mulf %3254, %3151 : vector<8x128xf32>
    %3256 = arith.addf %3252, %3255 : vector<8x128xf32>
    %c778 = arith.constant 778 : index
    %3257 = memref.load %arg2[%c778] : memref<832xf32, #tpu.memory_space<smem>>
    %3258 = vector.broadcast %3257 : f32 to vector<8x128xf32>
    %3259 = arith.mulf %3258, %3155 : vector<8x128xf32>
    %3260 = arith.addf %3256, %3259 : vector<8x128xf32>
    %c779 = arith.constant 779 : index
    %3261 = memref.load %arg2[%c779] : memref<832xf32, #tpu.memory_space<smem>>
    %3262 = vector.broadcast %3261 : f32 to vector<8x128xf32>
    %3263 = arith.mulf %3262, %3159 : vector<8x128xf32>
    %3264 = arith.addf %3260, %3263 : vector<8x128xf32>
    %c793 = arith.constant 793 : index
    %3265 = memref.load %arg2[%c793] : memref<832xf32, #tpu.memory_space<smem>>
    %3266 = vector.broadcast %3265 : f32 to vector<8x128xf32>
    %3267 = arith.addf %3264, %3266 : vector<8x128xf32>
    %c780 = arith.constant 780 : index
    %3268 = memref.load %arg2[%c780] : memref<832xf32, #tpu.memory_space<smem>>
    %3269 = vector.broadcast %3268 : f32 to vector<8x128xf32>
    %3270 = arith.mulf %3269, %3147 : vector<8x128xf32>
    %c781 = arith.constant 781 : index
    %3271 = memref.load %arg2[%c781] : memref<832xf32, #tpu.memory_space<smem>>
    %3272 = vector.broadcast %3271 : f32 to vector<8x128xf32>
    %3273 = arith.mulf %3272, %3151 : vector<8x128xf32>
    %3274 = arith.addf %3270, %3273 : vector<8x128xf32>
    %c782 = arith.constant 782 : index
    %3275 = memref.load %arg2[%c782] : memref<832xf32, #tpu.memory_space<smem>>
    %3276 = vector.broadcast %3275 : f32 to vector<8x128xf32>
    %3277 = arith.mulf %3276, %3155 : vector<8x128xf32>
    %3278 = arith.addf %3274, %3277 : vector<8x128xf32>
    %c783 = arith.constant 783 : index
    %3279 = memref.load %arg2[%c783] : memref<832xf32, #tpu.memory_space<smem>>
    %3280 = vector.broadcast %3279 : f32 to vector<8x128xf32>
    %3281 = arith.mulf %3280, %3159 : vector<8x128xf32>
    %3282 = arith.addf %3278, %3281 : vector<8x128xf32>
    %c794 = arith.constant 794 : index
    %3283 = memref.load %arg2[%c794] : memref<832xf32, #tpu.memory_space<smem>>
    %3284 = vector.broadcast %3283 : f32 to vector<8x128xf32>
    %3285 = arith.addf %3282, %3284 : vector<8x128xf32>
    %c784 = arith.constant 784 : index
    %3286 = memref.load %arg2[%c784] : memref<832xf32, #tpu.memory_space<smem>>
    %3287 = vector.broadcast %3286 : f32 to vector<8x128xf32>
    %3288 = arith.mulf %3287, %3147 : vector<8x128xf32>
    %c785 = arith.constant 785 : index
    %3289 = memref.load %arg2[%c785] : memref<832xf32, #tpu.memory_space<smem>>
    %3290 = vector.broadcast %3289 : f32 to vector<8x128xf32>
    %3291 = arith.mulf %3290, %3151 : vector<8x128xf32>
    %3292 = arith.addf %3288, %3291 : vector<8x128xf32>
    %c786 = arith.constant 786 : index
    %3293 = memref.load %arg2[%c786] : memref<832xf32, #tpu.memory_space<smem>>
    %3294 = vector.broadcast %3293 : f32 to vector<8x128xf32>
    %3295 = arith.mulf %3294, %3155 : vector<8x128xf32>
    %3296 = arith.addf %3292, %3295 : vector<8x128xf32>
    %c787 = arith.constant 787 : index
    %3297 = memref.load %arg2[%c787] : memref<832xf32, #tpu.memory_space<smem>>
    %3298 = vector.broadcast %3297 : f32 to vector<8x128xf32>
    %3299 = arith.mulf %3298, %3159 : vector<8x128xf32>
    %3300 = arith.addf %3296, %3299 : vector<8x128xf32>
    %c795 = arith.constant 795 : index
    %3301 = memref.load %arg2[%c795] : memref<832xf32, #tpu.memory_space<smem>>
    %3302 = vector.broadcast %3301 : f32 to vector<8x128xf32>
    %3303 = arith.addf %3300, %3302 : vector<8x128xf32>
    %c796 = arith.constant 796 : index
    %3304 = memref.load %arg2[%c796] : memref<832xf32, #tpu.memory_space<smem>>
    %3305 = vector.broadcast %3304 : f32 to vector<8x128xf32>
    %3306 = arith.mulf %3305, %3177 : vector<8x128xf32>
    %c797 = arith.constant 797 : index
    %3307 = memref.load %arg2[%c797] : memref<832xf32, #tpu.memory_space<smem>>
    %3308 = vector.broadcast %3307 : f32 to vector<8x128xf32>
    %3309 = arith.mulf %3308, %3195 : vector<8x128xf32>
    %3310 = arith.addf %3306, %3309 : vector<8x128xf32>
    %c798 = arith.constant 798 : index
    %3311 = memref.load %arg2[%c798] : memref<832xf32, #tpu.memory_space<smem>>
    %3312 = vector.broadcast %3311 : f32 to vector<8x128xf32>
    %3313 = arith.mulf %3312, %3213 : vector<8x128xf32>
    %3314 = arith.addf %3310, %3313 : vector<8x128xf32>
    %c799 = arith.constant 799 : index
    %3315 = memref.load %arg2[%c799] : memref<832xf32, #tpu.memory_space<smem>>
    %3316 = vector.broadcast %3315 : f32 to vector<8x128xf32>
    %3317 = arith.mulf %3316, %3231 : vector<8x128xf32>
    %3318 = arith.addf %3314, %3317 : vector<8x128xf32>
    %c800 = arith.constant 800 : index
    %3319 = memref.load %arg2[%c800] : memref<832xf32, #tpu.memory_space<smem>>
    %3320 = vector.broadcast %3319 : f32 to vector<8x128xf32>
    %3321 = arith.mulf %3320, %3249 : vector<8x128xf32>
    %3322 = arith.addf %3318, %3321 : vector<8x128xf32>
    %c801 = arith.constant 801 : index
    %3323 = memref.load %arg2[%c801] : memref<832xf32, #tpu.memory_space<smem>>
    %3324 = vector.broadcast %3323 : f32 to vector<8x128xf32>
    %3325 = arith.mulf %3324, %3267 : vector<8x128xf32>
    %3326 = arith.addf %3322, %3325 : vector<8x128xf32>
    %c802 = arith.constant 802 : index
    %3327 = memref.load %arg2[%c802] : memref<832xf32, #tpu.memory_space<smem>>
    %3328 = vector.broadcast %3327 : f32 to vector<8x128xf32>
    %3329 = arith.mulf %3328, %3285 : vector<8x128xf32>
    %3330 = arith.addf %3326, %3329 : vector<8x128xf32>
    %c803 = arith.constant 803 : index
    %3331 = memref.load %arg2[%c803] : memref<832xf32, #tpu.memory_space<smem>>
    %3332 = vector.broadcast %3331 : f32 to vector<8x128xf32>
    %3333 = arith.mulf %3332, %3303 : vector<8x128xf32>
    %3334 = arith.addf %3330, %3333 : vector<8x128xf32>
    %c828 = arith.constant 828 : index
    %3335 = memref.load %arg2[%c828] : memref<832xf32, #tpu.memory_space<smem>>
    %3336 = vector.broadcast %3335 : f32 to vector<8x128xf32>
    %3337 = arith.addf %3334, %3336 : vector<8x128xf32>
    %c804 = arith.constant 804 : index
    %3338 = memref.load %arg2[%c804] : memref<832xf32, #tpu.memory_space<smem>>
    %3339 = vector.broadcast %3338 : f32 to vector<8x128xf32>
    %3340 = arith.mulf %3339, %3177 : vector<8x128xf32>
    %c805 = arith.constant 805 : index
    %3341 = memref.load %arg2[%c805] : memref<832xf32, #tpu.memory_space<smem>>
    %3342 = vector.broadcast %3341 : f32 to vector<8x128xf32>
    %3343 = arith.mulf %3342, %3195 : vector<8x128xf32>
    %3344 = arith.addf %3340, %3343 : vector<8x128xf32>
    %c806 = arith.constant 806 : index
    %3345 = memref.load %arg2[%c806] : memref<832xf32, #tpu.memory_space<smem>>
    %3346 = vector.broadcast %3345 : f32 to vector<8x128xf32>
    %3347 = arith.mulf %3346, %3213 : vector<8x128xf32>
    %3348 = arith.addf %3344, %3347 : vector<8x128xf32>
    %c807 = arith.constant 807 : index
    %3349 = memref.load %arg2[%c807] : memref<832xf32, #tpu.memory_space<smem>>
    %3350 = vector.broadcast %3349 : f32 to vector<8x128xf32>
    %3351 = arith.mulf %3350, %3231 : vector<8x128xf32>
    %3352 = arith.addf %3348, %3351 : vector<8x128xf32>
    %c808 = arith.constant 808 : index
    %3353 = memref.load %arg2[%c808] : memref<832xf32, #tpu.memory_space<smem>>
    %3354 = vector.broadcast %3353 : f32 to vector<8x128xf32>
    %3355 = arith.mulf %3354, %3249 : vector<8x128xf32>
    %3356 = arith.addf %3352, %3355 : vector<8x128xf32>
    %c809 = arith.constant 809 : index
    %3357 = memref.load %arg2[%c809] : memref<832xf32, #tpu.memory_space<smem>>
    %3358 = vector.broadcast %3357 : f32 to vector<8x128xf32>
    %3359 = arith.mulf %3358, %3267 : vector<8x128xf32>
    %3360 = arith.addf %3356, %3359 : vector<8x128xf32>
    %c810 = arith.constant 810 : index
    %3361 = memref.load %arg2[%c810] : memref<832xf32, #tpu.memory_space<smem>>
    %3362 = vector.broadcast %3361 : f32 to vector<8x128xf32>
    %3363 = arith.mulf %3362, %3285 : vector<8x128xf32>
    %3364 = arith.addf %3360, %3363 : vector<8x128xf32>
    %c811 = arith.constant 811 : index
    %3365 = memref.load %arg2[%c811] : memref<832xf32, #tpu.memory_space<smem>>
    %3366 = vector.broadcast %3365 : f32 to vector<8x128xf32>
    %3367 = arith.mulf %3366, %3303 : vector<8x128xf32>
    %3368 = arith.addf %3364, %3367 : vector<8x128xf32>
    %c829 = arith.constant 829 : index
    %3369 = memref.load %arg2[%c829] : memref<832xf32, #tpu.memory_space<smem>>
    %3370 = vector.broadcast %3369 : f32 to vector<8x128xf32>
    %3371 = arith.addf %3368, %3370 : vector<8x128xf32>
    %c812 = arith.constant 812 : index
    %3372 = memref.load %arg2[%c812] : memref<832xf32, #tpu.memory_space<smem>>
    %3373 = vector.broadcast %3372 : f32 to vector<8x128xf32>
    %3374 = arith.mulf %3373, %3177 : vector<8x128xf32>
    %c813 = arith.constant 813 : index
    %3375 = memref.load %arg2[%c813] : memref<832xf32, #tpu.memory_space<smem>>
    %3376 = vector.broadcast %3375 : f32 to vector<8x128xf32>
    %3377 = arith.mulf %3376, %3195 : vector<8x128xf32>
    %3378 = arith.addf %3374, %3377 : vector<8x128xf32>
    %c814 = arith.constant 814 : index
    %3379 = memref.load %arg2[%c814] : memref<832xf32, #tpu.memory_space<smem>>
    %3380 = vector.broadcast %3379 : f32 to vector<8x128xf32>
    %3381 = arith.mulf %3380, %3213 : vector<8x128xf32>
    %3382 = arith.addf %3378, %3381 : vector<8x128xf32>
    %c815 = arith.constant 815 : index
    %3383 = memref.load %arg2[%c815] : memref<832xf32, #tpu.memory_space<smem>>
    %3384 = vector.broadcast %3383 : f32 to vector<8x128xf32>
    %3385 = arith.mulf %3384, %3231 : vector<8x128xf32>
    %3386 = arith.addf %3382, %3385 : vector<8x128xf32>
    %c816 = arith.constant 816 : index
    %3387 = memref.load %arg2[%c816] : memref<832xf32, #tpu.memory_space<smem>>
    %3388 = vector.broadcast %3387 : f32 to vector<8x128xf32>
    %3389 = arith.mulf %3388, %3249 : vector<8x128xf32>
    %3390 = arith.addf %3386, %3389 : vector<8x128xf32>
    %c817 = arith.constant 817 : index
    %3391 = memref.load %arg2[%c817] : memref<832xf32, #tpu.memory_space<smem>>
    %3392 = vector.broadcast %3391 : f32 to vector<8x128xf32>
    %3393 = arith.mulf %3392, %3267 : vector<8x128xf32>
    %3394 = arith.addf %3390, %3393 : vector<8x128xf32>
    %c818 = arith.constant 818 : index
    %3395 = memref.load %arg2[%c818] : memref<832xf32, #tpu.memory_space<smem>>
    %3396 = vector.broadcast %3395 : f32 to vector<8x128xf32>
    %3397 = arith.mulf %3396, %3285 : vector<8x128xf32>
    %3398 = arith.addf %3394, %3397 : vector<8x128xf32>
    %c819 = arith.constant 819 : index
    %3399 = memref.load %arg2[%c819] : memref<832xf32, #tpu.memory_space<smem>>
    %3400 = vector.broadcast %3399 : f32 to vector<8x128xf32>
    %3401 = arith.mulf %3400, %3303 : vector<8x128xf32>
    %3402 = arith.addf %3398, %3401 : vector<8x128xf32>
    %c830 = arith.constant 830 : index
    %3403 = memref.load %arg2[%c830] : memref<832xf32, #tpu.memory_space<smem>>
    %3404 = vector.broadcast %3403 : f32 to vector<8x128xf32>
    %3405 = arith.addf %3402, %3404 : vector<8x128xf32>
    %c820 = arith.constant 820 : index
    %3406 = memref.load %arg2[%c820] : memref<832xf32, #tpu.memory_space<smem>>
    %3407 = vector.broadcast %3406 : f32 to vector<8x128xf32>
    %3408 = arith.mulf %3407, %3177 : vector<8x128xf32>
    %c821 = arith.constant 821 : index
    %3409 = memref.load %arg2[%c821] : memref<832xf32, #tpu.memory_space<smem>>
    %3410 = vector.broadcast %3409 : f32 to vector<8x128xf32>
    %3411 = arith.mulf %3410, %3195 : vector<8x128xf32>
    %3412 = arith.addf %3408, %3411 : vector<8x128xf32>
    %c822 = arith.constant 822 : index
    %3413 = memref.load %arg2[%c822] : memref<832xf32, #tpu.memory_space<smem>>
    %3414 = vector.broadcast %3413 : f32 to vector<8x128xf32>
    %3415 = arith.mulf %3414, %3213 : vector<8x128xf32>
    %3416 = arith.addf %3412, %3415 : vector<8x128xf32>
    %c823 = arith.constant 823 : index
    %3417 = memref.load %arg2[%c823] : memref<832xf32, #tpu.memory_space<smem>>
    %3418 = vector.broadcast %3417 : f32 to vector<8x128xf32>
    %3419 = arith.mulf %3418, %3231 : vector<8x128xf32>
    %3420 = arith.addf %3416, %3419 : vector<8x128xf32>
    %c824 = arith.constant 824 : index
    %3421 = memref.load %arg2[%c824] : memref<832xf32, #tpu.memory_space<smem>>
    %3422 = vector.broadcast %3421 : f32 to vector<8x128xf32>
    %3423 = arith.mulf %3422, %3249 : vector<8x128xf32>
    %3424 = arith.addf %3420, %3423 : vector<8x128xf32>
    %c825 = arith.constant 825 : index
    %3425 = memref.load %arg2[%c825] : memref<832xf32, #tpu.memory_space<smem>>
    %3426 = vector.broadcast %3425 : f32 to vector<8x128xf32>
    %3427 = arith.mulf %3426, %3267 : vector<8x128xf32>
    %3428 = arith.addf %3424, %3427 : vector<8x128xf32>
    %c826 = arith.constant 826 : index
    %3429 = memref.load %arg2[%c826] : memref<832xf32, #tpu.memory_space<smem>>
    %3430 = vector.broadcast %3429 : f32 to vector<8x128xf32>
    %3431 = arith.mulf %3430, %3285 : vector<8x128xf32>
    %3432 = arith.addf %3428, %3431 : vector<8x128xf32>
    %c827 = arith.constant 827 : index
    %3433 = memref.load %arg2[%c827] : memref<832xf32, #tpu.memory_space<smem>>
    %3434 = vector.broadcast %3433 : f32 to vector<8x128xf32>
    %3435 = arith.mulf %3434, %3303 : vector<8x128xf32>
    %3436 = arith.addf %3432, %3435 : vector<8x128xf32>
    %c831 = arith.constant 831 : index
    %3437 = memref.load %arg2[%c831] : memref<832xf32, #tpu.memory_space<smem>>
    %3438 = vector.broadcast %3437 : f32 to vector<8x128xf32>
    %3439 = arith.addf %3436, %3438 : vector<8x128xf32>
    %3440 = arith.subf %3337, %3371 : vector<8x128xf32>
    %cst_137 = arith.constant 5.000000e-01 : f32
    %3441 = vector.broadcast %cst_137 : f32 to vector<8x128xf32>
    %3442 = arith.mulf %3441, %3440 : vector<8x128xf32>
    %3443 = math.tanh %3442 : vector<8x128xf32>
    %cst_138 = arith.constant 1.000000e+00 : f32
    %3444 = vector.broadcast %cst_138 : f32 to vector<8x128xf32>
    %3445 = arith.addf %3443, %3444 : vector<8x128xf32>
    %cst_139 = arith.constant 5.000000e-01 : f32
    %3446 = vector.broadcast %cst_139 : f32 to vector<8x128xf32>
    %3447 = arith.mulf %3446, %3445 : vector<8x128xf32>
    %c0_140 = arith.constant 0 : index
    %c0_141 = arith.constant 0 : index
    %c0_142 = arith.constant 0 : index
    %3448 = vector.load %arg3[%c0_140, %c0_141, %c0_142] : memref<4x8x128xf32, #tpu.memory_space<vmem>>, vector<1x8x128xf32>
    %3449 = vector.shape_cast %3448 : vector<1x8x128xf32> to vector<8x128xf32>
    %3450 = vector.shape_cast %3447 : vector<8x128xf32> to vector<1x8x128xf32>
    tpu.vector_store %arg3[%c0_140, %c0_141, %c0_142], %3450 {strides = array<i32>} : memref<4x8x128xf32, #tpu.memory_space<vmem>>, vector<1x8x128xf32>,
    %cst_143 = arith.constant 1.000000e+00 : f32
    %3451 = vector.broadcast %cst_143 : f32 to vector<8x128xf32>
    %3452 = arith.subf %3451, %3447 : vector<8x128xf32>
    %c1_144 = arith.constant 1 : index
    %c0_145 = arith.constant 0 : index
    %c0_146 = arith.constant 0 : index
    %3453 = vector.load %arg3[%c1_144, %c0_145, %c0_146] : memref<4x8x128xf32, #tpu.memory_space<vmem>>, vector<1x8x128xf32>
    %3454 = vector.shape_cast %3453 : vector<1x8x128xf32> to vector<8x128xf32>
    %3455 = vector.shape_cast %3452 : vector<8x128xf32> to vector<1x8x128xf32>
    tpu.vector_store %arg3[%c1_144, %c0_145, %c0_146], %3455 {strides = array<i32>} : memref<4x8x128xf32, #tpu.memory_space<vmem>>, vector<1x8x128xf32>,
    %cst_147 = arith.constant 5.000000e-01 : f32
    %3456 = vector.broadcast %cst_147 : f32 to vector<8x128xf32>
    %3457 = arith.mulf %3456, %3405 : vector<8x128xf32>
    %3458 = math.tanh %3457 : vector<8x128xf32>
    %cst_148 = arith.constant 2.000000e+00 : f32
    %3459 = vector.broadcast %cst_148 : f32 to vector<8x128xf32>
    %3460 = arith.mulf %3459, %3458 : vector<8x128xf32>
    %c2_149 = arith.constant 2 : index
    %c0_150 = arith.constant 0 : index
    %c0_151 = arith.constant 0 : index
    %3461 = vector.load %arg3[%c2_149, %c0_150, %c0_151] : memref<4x8x128xf32, #tpu.memory_space<vmem>>, vector<1x8x128xf32>
    %3462 = vector.shape_cast %3461 : vector<1x8x128xf32> to vector<8x128xf32>
    %3463 = vector.shape_cast %3460 : vector<8x128xf32> to vector<1x8x128xf32>
    tpu.vector_store %arg3[%c2_149, %c0_150, %c0_151], %3463 {strides = array<i32>} : memref<4x8x128xf32, #tpu.memory_space<vmem>>, vector<1x8x128xf32>,
    %cst_152 = arith.constant 0.000000e+00 : f32
    %3464 = vector.broadcast %cst_152 : f32 to vector<8x128xf32>
    %3465 = arith.maximumf %3439, %3464 : vector<8x128xf32>
    %3466 = math.absf %3439 : vector<8x128xf32>
    %cst_153 = arith.constant 0.000000e+00 : f32
    %3467 = vector.broadcast %cst_153 : f32 to vector<8x128xf32>
    %3468 = arith.subf %3467, %3466 : vector<8x128xf32>
    %3469 = math.exp %3468 : vector<8x128xf32>
    %cst_154 = arith.constant 1.000000e+00 : f32
    %3470 = vector.broadcast %cst_154 : f32 to vector<8x128xf32>
    %3471 = arith.addf %3470, %3469 : vector<8x128xf32>
    %3472 = math.log %3471 : vector<8x128xf32>
    %3473 = arith.addf %3465, %3472 : vector<8x128xf32>
    %c3_155 = arith.constant 3 : index
    %c0_156 = arith.constant 0 : index
    %c0_157 = arith.constant 0 : index
    %3474 = vector.load %arg3[%c3_155, %c0_156, %c0_157] : memref<4x8x128xf32, #tpu.memory_space<vmem>>, vector<1x8x128xf32>
    %3475 = vector.shape_cast %3474 : vector<1x8x128xf32> to vector<8x128xf32>
    %3476 = vector.shape_cast %3473 : vector<8x128xf32> to vector<1x8x128xf32>
    tpu.vector_store %arg3[%c3_155, %c0_156, %c0_157], %3476 {strides = array<i32>} : memref<4x8x128xf32, #tpu.memory_space<vmem>>, vector<1x8x128xf32>,
    return
  }
  func.func @transform_0(%arg0: i32) -> (i32, i32, i32) {
    %c0_i32 = arith.constant 0 : i32
    %c0_i32_0 = arith.constant 0 : i32
    %c0_i32_1 = arith.constant 0 : i32
    return %c0_i32, %arg0, %c0_i32_0 : i32, i32, i32
  }
  func.func @transform_1(%arg0: i32) -> i32 {
    %c0_i32 = arith.constant 0 : i32
    %c0_i32_0 = arith.constant 0 : i32
    return %c0_i32 : i32
  }
  func.func @transform_2(%arg0: i32) -> (i32, i32, i32) {
    %c0_i32 = arith.constant 0 : i32
    %c0_i32_0 = arith.constant 0 : i32
    %c0_i32_1 = arith.constant 0 : i32
    return %c0_i32, %arg0, %c0_i32_0 : i32, i32, i32
  }
}

</mosaic_0001>

<llo_original>
// kernel: mooncake_forward.1
$region0: #{mooncake_forward.1}
  #allocation0 [shape = 'u32[]', space=smem, size = 0x4, offset = 0x4, fixed_abs, tag = 'smem constant byte address 0x4 - core index']
  #allocation1 [shape = 'u32[72,128]{1,0:T(1,128)}', space=vmem, size = 0x9000, scoped, tag = 'internal scratch']
  %s0 = inlined_call_operand.vmem [shape: f32[1,8,128], index: 0, kind: input, shape index: {}]
  %s1 = inlined_call_operand.vmem [shape: f32[832], index: 1, kind: input, shape index: {}]
  %s2 = inlined_call_operand.vmem [shape: f32[4,8,128], index: 2, kind: output, shape index: {}]
  %s3 = sld [smem:[#allocation0]]
  $region22: #{mooncake_forward.1} parent=0
    _
  %s5 = ssub.s32 1, %s3
  %s6 = scalar_select 0, %s5, %s3
  $region1: #{mooncake_forward.1} parent=0
    #allocation2 [shape = 'u8[3584]{0}', space=smem, size = 0xe00, scoped, tag = 'input window, operand 1, single buffered']
    #allocation3 [shape = 's32[1]{0}', space=sflag, size = 0x4, scoped, tag = 'scoped memory for mooncake_forward.1']
    %7 = vsyncpa [#allocation3], 0
    // Predicated region
    $region2: #{mooncake_forward.1} parent=1 // pred_check
      _
    $region3: #{mooncake_forward.1} parent=1 // pred_check_branch
      %9 = sbr.rel (0) target = $region5
    $region4: #{mooncake_forward.1} parent=1 // pred_region
      _
    $region5: #{mooncake_forward.1} parent=1 // pred_fallthru
      _
    // Predicated region
    $region6: #{mooncake_forward.1} parent=1 // pred_check
      _
    $region7: #{mooncake_forward.1} parent=1 // pred_check_branch
      %11 = sbr.rel (0) target = $region9
    $region8: #{mooncake_forward.1} parent=1 // pred_region
      %13 = vsyncadd [#allocation3], 0
      %s15 = sshll.u32 %s1, 4
      %s16 = int_to_ptr.vmem [resolvable:$true] %s15
      %18 = dma.vmem_to_smem %s16, 112, [#allocation2], [#allocation3]
    $region9: #{mooncake_forward.1} parent=1 // pred_fallthru
      _
    // Predicated region
    $region10: #{mooncake_forward.1} parent=1 // pred_check
      _
    $region11: #{mooncake_forward.1} parent=1 // pred_check_branch
      %20 = sbr.rel (0) target = $region13
    $region12: #{mooncake_forward.1} parent=1 // pred_region
      %22 = dma.done [#allocation3], 112
    $region13: #{mooncake_forward.1} parent=1 // pred_fallthru
      _
    %23 = sfence
    %v24 = vlaneseq
    %v25 = vand.u32 %v24, 127
    %v26 = vcvt.s32.f32 %v25
    %v27 = vmul.f32 %v26, 0.0053333333
    %v28 = vld [vmem:[%s0] sm:$0xff]
    %30 = vrot.lane.b32.xlu0 %v28, 1
    %v31 = vpop.permute.xlu0 %30
    %vm33 = vcmask 7168
    %v34 = vsel %vm33, 0.0, %v31
    %36 = vrot.lane.b32.xlu0 %v27, 1
    %v37 = vpop.permute.xlu0 %36
    %v39 = vsel %vm33, 0.0, %v37
    %s40 = sld [smem:[#allocation2 + $0x1]]
    %v41 = vstv %s40
    %v42 = vmul.f32 %v41, %v28
    %s43 = sld [smem:[#allocation2]]
    %v44 = vstv %s43
    %v45 = vmul.f32 %v44, %v34
    %v46 = vadd.f32 %v42, %v45
    %s47 = sld [smem:[#allocation2 + $0x3]]
    %v48 = vstv %s47
    %v49 = vmul.f32 %v48, %v27
    %s50 = sld [smem:[#allocation2 + $0x2]]
    %v51 = vstv %s50
    %v52 = vmul.f32 %v51, %v39
    %v53 = vadd.f32 %v49, %v52
    %v54 = vadd.f32 %v46, %v53
    %s55 = sld [smem:[#allocation2 + $0x10]]
    %v56 = vstv %s55
    %v57 = vadd.f32 %v54, %v56
    %s58 = sld [smem:[#allocation2 + $0x5]]
    %v59 = vstv %s58
    %v60 = vmul.f32 %v59, %v28
    %s61 = sld [smem:[#allocation2 + $0x4]]
    %v62 = vstv %s61
    %v63 = vmul.f32 %v62, %v34
    %v64 = vadd.f32 %v60, %v63
    %s65 = sld [smem:[#allocation2 + $0x7]]
    %v66 = vstv %s65
    %v67 = vmul.f32 %v66, %v27
    %s68 = sld [smem:[#allocation2 + $0x6]]
    %v69 = vstv %s68
    %v70 = vmul.f32 %v69, %v39
    %v71 = vadd.f32 %v67, %v70
    %v72 = vadd.f32 %v64, %v71
    %s73 = sld [smem:[#allocation2 + $0x11]]
    %v74 = vstv %s73
    %v75 = vadd.f32 %v72, %v74
    %s76 = sld [smem:[#allocation2 + $0x9]]
    %v77 = vstv %s76
    %v78 = vmul.f32 %v77, %v28
    %s79 = sld [smem:[#allocation2 + $0x8]]
    %v80 = vstv %s79
    %v81 = vmul.f32 %v80, %v34
    %v82 = vadd.f32 %v78, %v81
    %s83 = sld [smem:[#allocation2 + $0xb]]
    %v84 = vstv %s83
    %v85 = vmul.f32 %v84, %v27
    %s86 = sld [smem:[#allocation2 + $0xa]]
    %v87 = vstv %s86
    %v88 = vmul.f32 %v87, %v39
    %v89 = vadd.f32 %v85, %v88
    %v90 = vadd.f32 %v82, %v89
    %s91 = sld [smem:[#allocation2 + $0x12]]
    %v92 = vstv %s91
    %v93 = vadd.f32 %v90, %v92
    %s94 = sld [smem:[#allocation2 + $0xd]]
    %v95 = vstv %s94
    %v96 = vmul.f32 %v95, %v28
    %s97 = sld [smem:[#allocation2 + $0xc]]
    %v98 = vstv %s97
    %v99 = vmul.f32 %v98, %v34
    %v100 = vadd.f32 %v96, %v99
    %s101 = sld [smem:[#allocation2 + $0xf]]
    %v102 = vstv %s101
    %v103 = vmul.f32 %v102, %v27
    %s104 = sld [smem:[#allocation2 + $0xe]]
    %v105 = vstv %s104
    %v106 = vmul.f32 %v105, %v39
    %v107 = vadd.f32 %v103, %v106
    %v108 = vadd.f32 %v100, %v107
    %s109 = sld [smem:[#allocation2 + $0x13]]
    %v110 = vstv %s109
    %v111 = vadd.f32 %v108, %v110
    %113 = vrot.lane.b32.xlu0 %v57, 1
    %v114 = vpop.permute.xlu0 %113
    %v116 = vsel %vm33, 0.0, %v114
    %118 = vrot.lane.b32.xlu0 %v75, 1
    %v119 = vpop.permute.xlu0 %118
    %v121 = vsel %vm33, 0.0, %v119
    %123 = vrot.lane.b32.xlu0 %v93, 1
    %v124 = vpop.permute.xlu0 %123
    %v126 = vsel %vm33, 0.0, %v124
    %128 = vrot.lane.b32.xlu0 %v111, 1
    %v129 = vpop.permute.xlu0 %128
    %v131 = vsel %vm33, 0.0, %v129
    %s132 = sld [smem:[#allocation2 + $0x15]]
    %v133 = vstv %s132
    %v134 = vmul.f32 %v133, %v57
    %s135 = sld [smem:[#allocation2 + $0x14]]
    %v136 = vstv %s135
    %v137 = vmul.f32 %v136, %v116
    %v138 = vadd.f32 %v134, %v137
    %s139 = sld [smem:[#allocation2 + $0x17]]
    %v140 = vstv %s139
    %v141 = vmul.f32 %v140, %v75
    %s142 = sld [smem:[#allocation2 + $0x16]]
    %v143 = vstv %s142
    %v144 = vmul.f32 %v143, %v121
    %v145 = vadd.f32 %v141, %v144
    %v146 = vadd.f32 %v138, %v145
    %s147 = sld [smem:[#allocation2 + $0x19]]
    %v148 = vstv %s147
    %v149 = vmul.f32 %v148, %v93
    %s150 = sld [smem:[#allocation2 + $0x18]]
    %v151 = vstv %s150
    %v152 = vmul.f32 %v151, %v126
    %v153 = vadd.f32 %v149, %v152
    %v154 = vadd.f32 %v146, %v153
    %s155 = sld [smem:[#allocation2 + $0x1b]]
    %v156 = vstv %s155
    %v157 = vmul.f32 %v156, %v111
    %s158 = sld [smem:[#allocation2 + $0x1a]]
    %v159 = vstv %s158
    %v160 = vmul.f32 %v159, %v131
    %v161 = vadd.f32 %v157, %v160
    %v162 = vadd.f32 %v154, %v161
    %s163 = sld [smem:[#allocation2 + $0x54]]
    %v164 = vstv %s163
    %v165 = vadd.f32 %v162, %v164
    %s166 = sld [smem:[#allocation2 + $0x1d]]
    %v167 = vstv %s166
    %v168 = vmul.f32 %v167, %v57
    %s169 = sld [smem:[#allocation2 + $0x1c]]
    %v170 = vstv %s169
    %v171 = vmul.f32 %v170, %v116
    %v172 = vadd.f32 %v168, %v171
    %s173 = sld [smem:[#allocation2 + $0x1f]]
    %v174 = vstv %s173
    %v175 = vmul.f32 %v174, %v75
    %s176 = sld [smem:[#allocation2 + $0x1e]]
    %v177 = vstv %s176
    %v178 = vmul.f32 %v177, %v121
    %v179 = vadd.f32 %v175, %v178
    %v180 = vadd.f32 %v172, %v179
    %s181 = sld [smem:[#allocation2 + $0x21]]
    %v182 = vstv %s181
    %v183 = vmul.f32 %v182, %v93
    %s184 = sld [smem:[#allocation2 + $0x20]]
    %v185 = vstv %s184
    %v186 = vmul.f32 %v185, %v126
    %v187 = vadd.f32 %v183, %v186
    %v188 = vadd.f32 %v180, %v187
    %s189 = sld [smem:[#allocation2 + $0x23]]
    %v190 = vstv %s189
    %v191 = vmul.f32 %v190, %v111
    %s192 = sld [smem:[#allocation2 + $0x22]]
    %v193 = vstv %s192
    %v194 = vmul.f32 %v193, %v131
    %v195 = vadd.f32 %v191, %v194
    %v196 = vadd.f32 %v188, %v195
    %s197 = sld [smem:[#allocation2 + $0x55]]
    %v198 = vstv %s197
    %v199 = vadd.f32 %v196, %v198
    %s200 = sld [smem:[#allocation2 + $0x25]]
    %v201 = vstv %s200
    %v202 = vmul.f32 %v201, %v57
    %s203 = sld [smem:[#allocation2 + $0x24]]
    %v204 = vstv %s203
    %v205 = vmul.f32 %v204, %v116
    %v206 = vadd.f32 %v202, %v205
    %s207 = sld [smem:[#allocation2 + $0x27]]
    %v208 = vstv %s207
    %v209 = vmul.f32 %v208, %v75
    %s210 = sld [smem:[#allocation2 + $0x26]]
    %v211 = vstv %s210
    %v212 = vmul.f32 %v211, %v121
    %v213 = vadd.f32 %v209, %v212
    %v214 = vadd.f32 %v206, %v213
    %s215 = sld [smem:[#allocation2 + $0x29]]
    %v216 = vstv %s215
    %v217 = vmul.f32 %v216, %v93
    %s218 = sld [smem:[#allocation2 + $0x28]]
    %v219 = vstv %s218
    %v220 = vmul.f32 %v219, %v126
    %v221 = vadd.f32 %v217, %v220
    %v222 = vadd.f32 %v214, %v221
    %s223 = sld [smem:[#allocation2 + $0x2b]]
    %v224 = vstv %s223
    %v225 = vmul.f32 %v224, %v111
    %s226 = sld [smem:[#allocation2 + $0x2a]]
    %v227 = vstv %s226
    %v228 = vmul.f32 %v227, %v131
    %v229 = vadd.f32 %v225, %v228
    %v230 = vadd.f32 %v222, %v229
    %s231 = sld [smem:[#allocation2 + $0x56]]
    %v232 = vstv %s231
    %v233 = vadd.f32 %v230, %v232
    %s234 = sld [smem:[#allocation2 + $0x2d]]
    %v235 = vstv %s234
    %v236 = vmul.f32 %v235, %v57
    %s237 = sld [smem:[#allocation2 + $0x2c]]
    %v238 = vstv %s237
    %v239 = vmul.f32 %v238, %v116
    %v240 = vadd.f32 %v236, %v239
    %s241 = sld [smem:[#allocation2 + $0x2f]]
    %v242 = vstv %s241
    %v243 = vmul.f32 %v242, %v75
    %s244 = sld [smem:[#allocation2 + $0x2e]]
    %v245 = vstv %s244
    %v246 = vmul.f32 %v245, %v121
    %v247 = vadd.f32 %v243, %v246
    %v248 = vadd.f32 %v240, %v247
    %s249 = sld [smem:[#allocation2 + $0x31]]
    %v250 = vstv %s249
    %v251 = vmul.f32 %v250, %v93
    %s252 = sld [smem:[#allocation2 + $0x30]]
    %v253 = vstv %s252
    %v254 = vmul.f32 %v253, %v126
    %v255 = vadd.f32 %v251, %v254
    %v256 = vadd.f32 %v248, %v255
    %s257 = sld [smem:[#allocation2 + $0x33]]
    %v258 = vstv %s257
    %v259 = vmul.f32 %v258, %v111
    %s260 = sld [smem:[#allocation2 + $0x32]]
    %v261 = vstv %s260
    %v262 = vmul.f32 %v261, %v131
    %v263 = vadd.f32 %v259, %v262
    %v264 = vadd.f32 %v256, %v263
    %s265 = sld [smem:[#allocation2 + $0x57]]
    %v266 = vstv %s265
    %v267 = vadd.f32 %v264, %v266
    %s268 = sld [smem:[#allocation2 + $0x35]]
    %v269 = vstv %s268
    %v270 = vmul.f32 %v269, %v57
    %s271 = sld [smem:[#allocation2 + $0x34]]
    %v272 = vstv %s271
    %v273 = vmul.f32 %v272, %v116
    %v274 = vadd.f32 %v270, %v273
    %s275 = sld [smem:[#allocation2 + $0x37]]
    %v276 = vstv %s275
    %v277 = vmul.f32 %v276, %v75
    %s278 = sld [smem:[#allocation2 + $0x36]]
    %v279 = vstv %s278
    %v280 = vmul.f32 %v279, %v121
    %v281 = vadd.f32 %v277, %v280
    %v282 = vadd.f32 %v274, %v281
    %s283 = sld [smem:[#allocation2 + $0x39]]
    %v284 = vstv %s283
    %v285 = vmul.f32 %v284, %v93
    %s286 = sld [smem:[#allocation2 + $0x38]]
    %v287 = vstv %s286
    %v288 = vmul.f32 %v287, %v126
    %v289 = vadd.f32 %v285, %v288
    %v290 = vadd.f32 %v282, %v289
    %s291 = sld [smem:[#allocation2 + $0x3b]]
    %v292 = vstv %s291
    %v293 = vmul.f32 %v292, %v111
    %s294 = sld [smem:[#allocation2 + $0x3a]]
    %v295 = vstv %s294
    %v296 = vmul.f32 %v295, %v131
    %v297 = vadd.f32 %v293, %v296
    %v298 = vadd.f32 %v290, %v297
    %s299 = sld [smem:[#allocation2 + $0x58]]
    %v300 = vstv %s299
    %v301 = vadd.f32 %v298, %v300
    %s302 = sld [smem:[#allocation2 + $0x3d]]
    %v303 = vstv %s302
    %v304 = vmul.f32 %v303, %v57
    %s305 = sld [smem:[#allocation2 + $0x3c]]
    %v306 = vstv %s305
    %v307 = vmul.f32 %v306, %v116
    %v308 = vadd.f32 %v304, %v307
    %s309 = sld [smem:[#allocation2 + $0x3f]]
    %v310 = vstv %s309
    %v311 = vmul.f32 %v310, %v75
    %s312 = sld [smem:[#allocation2 + $0x3e]]
    %v313 = vstv %s312
    %v314 = vmul.f32 %v313, %v121
    %v315 = vadd.f32 %v311, %v314
    %v316 = vadd.f32 %v308, %v315
    %s317 = sld [smem:[#allocation2 + $0x41]]
    %v318 = vstv %s317
    %v319 = vmul.f32 %v318, %v93
    %s320 = sld [smem:[#allocation2 + $0x40]]
    %v321 = vstv %s320
    %v322 = vmul.f32 %v321, %v126
    %v323 = vadd.f32 %v319, %v322
    %v324 = vadd.f32 %v316, %v323
    %s325 = sld [smem:[#allocation2 + $0x43]]
    %v326 = vstv %s325
    %v327 = vmul.f32 %v326, %v111
    %s328 = sld [smem:[#allocation2 + $0x42]]
    %v329 = vstv %s328
    %v330 = vmul.f32 %v329, %v131
    %v331 = vadd.f32 %v327, %v330
    %v332 = vadd.f32 %v324, %v331
    %s333 = sld [smem:[#allocation2 + $0x59]]
    %v334 = vstv %s333
    %v335 = vadd.f32 %v332, %v334
    %s336 = sld [smem:[#allocation2 + $0x45]]
    %v337 = vstv %s336
    %v338 = vmul.f32 %v337, %v57
    %s339 = sld [smem:[#allocation2 + $0x44]]
    %v340 = vstv %s339
    %v341 = vmul.f32 %v340, %v116
    %v342 = vadd.f32 %v338, %v341
    %s343 = sld [smem:[#allocation2 + $0x47]]
    %v344 = vstv %s343
    %v345 = vmul.f32 %v344, %v75
    %s346 = sld [smem:[#allocation2 + $0x46]]
    %v347 = vstv %s346
    %v348 = vmul.f32 %v347, %v121
    %v349 = vadd.f32 %v345, %v348
    %v350 = vadd.f32 %v342, %v349
    %s351 = sld [smem:[#allocation2 + $0x49]]
    %v352 = vstv %s351
    %v353 = vmul.f32 %v352, %v93
    %s354 = sld [smem:[#allocation2 + $0x48]]
    %v355 = vstv %s354
    %v356 = vmul.f32 %v355, %v126
    %v357 = vadd.f32 %v353, %v356
    %v358 = vadd.f32 %v350, %v357
    %s359 = sld [smem:[#allocation2 + $0x4b]]
    %v360 = vstv %s359
    %v361 = vmul.f32 %v360, %v111
    %s362 = sld [smem:[#allocation2 + $0x4a]]
    %v363 = vstv %s362
    %v364 = vmul.f32 %v363, %v131
    %v365 = vadd.f32 %v361, %v364
    %v366 = vadd.f32 %v358, %v365
    %s367 = sld [smem:[#allocation2 + $0x5a]]
    %v368 = vstv %s367
    %v369 = vadd.f32 %v366, %v368
    %s370 = sld [smem:[#allocation2 + $0x4d]]
    %v371 = vstv %s370
    %v372 = vmul.f32 %v371, %v57
    %s373 = sld [smem:[#allocation2 + $0x4c]]
    %v374 = vstv %s373
    %v375 = vmul.f32 %v374, %v116
    %v376 = vadd.f32 %v372, %v375
    %s377 = sld [smem:[#allocation2 + $0x4f]]
    %v378 = vstv %s377
    %v379 = vmul.f32 %v378, %v75
    %s380 = sld [smem:[#allocation2 + $0x4e]]
    %v381 = vstv %s380
    %v382 = vmul.f32 %v381, %v121
    %v383 = vadd.f32 %v379, %v382
    %v384 = vadd.f32 %v376, %v383
    %s385 = sld [smem:[#allocation2 + $0x51]]
    %v386 = vstv %s385
    %v387 = vmul.f32 %v386, %v93
    %s388 = sld [smem:[#allocation2 + $0x50]]
    %v389 = vstv %s388
    %v390 = vmul.f32 %v389, %v126
    %v391 = vadd.f32 %v387, %v390
    %v392 = vadd.f32 %v384, %v391
    %s393 = sld [smem:[#allocation2 + $0x53]]
    %v394 = vstv %s393
    %v395 = vmul.f32 %v394, %v111
    %s396 = sld [smem:[#allocation2 + $0x52]]
    %v397 = vstv %s396
    %v398 = vmul.f32 %v397, %v131
    %v399 = vadd.f32 %v395, %v398
    %v400 = vadd.f32 %v392, %v399
    %s401 = sld [smem:[#allocation2 + $0x5b]]
    %v402 = vstv %s401
    %v403 = vadd.f32 %v400, %v402
    %v404 = vtanh.pop %v165
    %v405 = vmul.f32 %v301, 0.5
    %v406 = vtanh.pop %v405
    %v407 = vadd.f32 %v406, 1.0
    %v408 = vmul.f32 %v407, 0.5
    %v409 = vmul.f32 %v404, %v408
    %v410 = vtanh.pop %v199
    %v411 = vmul.f32 %v335, 0.5
    %v412 = vtanh.pop %v411
    %v413 = vadd.f32 %v412, 1.0
    %v414 = vmul.f32 %v413, 0.5
    %v415 = vmul.f32 %v410, %v414
    %v416 = vtanh.pop %v233
    %v417 = vmul.f32 %v369, 0.5
    %v418 = vtanh.pop %v417
    %v419 = vadd.f32 %v418, 1.0
    %v420 = vmul.f32 %v419, 0.5
    %v421 = vmul.f32 %v416, %v420
    %v422 = vtanh.pop %v267
    %v423 = vmul.f32 %v403, 0.5
    %v424 = vtanh.pop %v423
    %v425 = vadd.f32 %v424, 1.0
    %v426 = vmul.f32 %v425, 0.5
    %v427 = vmul.f32 %v422, %v426
    %s428 = sld [smem:[#allocation2 + $0x5c]]
    %v429 = vstv %s428
    %v430 = vmul.f32 %v429, %v409
    %v431 = vadd.f32 %v57, %v430
    %s432 = sld [smem:[#allocation2 + $0x5d]]
    %v433 = vstv %s432
    %v434 = vmul.f32 %v433, %v415
    %v435 = vadd.f32 %v431, %v434
    %s436 = sld [smem:[#allocation2 + $0x5e]]
    %v437 = vstv %s436
    %v438 = vmul.f32 %v437, %v421
    %v439 = vadd.f32 %v435, %v438
    %s440 = sld [smem:[#allocation2 + $0x5f]]
    %v441 = vstv %s440
    %v442 = vmul.f32 %v441, %v427
    %v443 = vadd.f32 %v439, %v442
    %s444 = sld [smem:[#allocation2 + $0x6c]]
    %v445 = vstv %s444
    %v446 = vadd.f32 %v443, %v445
    %s447 = sld [smem:[#allocation2 + $0x60]]
    %v448 = vstv %s447
    %v449 = vmul.f32 %v448, %v409
    %v450 = vadd.f32 %v75, %v449
    %s451 = sld [smem:[#allocation2 + $0x61]]
    %v452 = vstv %s451
    %v453 = vmul.f32 %v452, %v415
    %v454 = vadd.f32 %v450, %v453
    %s455 = sld [smem:[#allocation2 + $0x62]]
    %v456 = vstv %s455
    %v457 = vmul.f32 %v456, %v421
    %v458 = vadd.f32 %v454, %v457
    %s459 = sld [smem:[#allocation2 + $0x63]]
    %v460 = vstv %s459
    %v461 = vmul.f32 %v460, %v427
    %v462 = vadd.f32 %v458, %v461
    %s463 = sld [smem:[#allocation2 + $0x6d]]
    %v464 = vstv %s463
    %v465 = vadd.f32 %v462, %v464
    %s466 = sld [smem:[#allocation2 + $0x64]]
    %v467 = vstv %s466
    %v468 = vmul.f32 %v467, %v409
    %v469 = vadd.f32 %v93, %v468
    %s470 = sld [smem:[#allocation2 + $0x65]]
    %v471 = vstv %s470
    %v472 = vmul.f32 %v471, %v415
    %v473 = vadd.f32 %v469, %v472
    %s474 = sld [smem:[#allocation2 + $0x66]]
    %v475 = vstv %s474
    %v476 = vmul.f32 %v475, %v421
    %v477 = vadd.f32 %v473, %v476
    %s478 = sld [smem:[#allocation2 + $0x67]]
    %v479 = vstv %s478
    %v480 = vmul.f32 %v479, %v427
    %v481 = vadd.f32 %v477, %v480
    %s482 = sld [smem:[#allocation2 + $0x6e]]
    %v483 = vstv %s482
    %v484 = vadd.f32 %v481, %v483
    %s485 = sld [smem:[#allocation2 + $0x68]]
    %v486 = vstv %s485
    %v487 = vmul.f32 %v486, %v409
    %v488 = vadd.f32 %v111, %v487
    %s489 = sld [smem:[#allocation2 + $0x69]]
    %v490 = vstv %s489
    %v491 = vmul.f32 %v490, %v415
    %v492 = vadd.f32 %v488, %v491
    %s493 = sld [smem:[#allocation2 + $0x6a]]
    %v494 = vstv %s493
    %v495 = vmul.f32 %v494, %v421
    %v496 = vadd.f32 %v492, %v495
    %s497 = sld [smem:[#allocation2 + $0x6b]]
    %v498 = vstv %s497
    %v499 = vmul.f32 %v498, %v427
    %v500 = vadd.f32 %v496, %v499
    %s501 = sld [smem:[#allocation2 + $0x6f]]
    %v502 = vstv %s501
    %v503 = vadd.f32 %v500, %v502
    %v504 = vadd.f32 %v57, %v446
    %v505 = vadd.f32 %v75, %v465
    %v506 = vadd.f32 %v93, %v484
    %v507 = vadd.f32 %v111, %v503
    %509 = vrot.lane.b32.xlu0 %v446, 2
    %v510 = vpop.permute.xlu0 %509
    %vm512 = vcmask 15360
    %v513 = vsel %vm512, 0.0, %v510
    %515 = vrot.lane.b32.xlu0 %v465, 2
    %v516 = vpop.permute.xlu0 %515
    %v518 = vsel %vm512, 0.0, %v516
    %520 = vrot.lane.b32.xlu0 %v484, 2
    %v521 = vpop.permute.xlu0 %520
    %v523 = vsel %vm512, 0.0, %v521
    %525 = vrot.lane.b32.xlu0 %v503, 2
    %v526 = vpop.permute.xlu0 %525
    %v528 = vsel %vm512, 0.0, %v526
    %s529 = sld [smem:[#allocation2 + $0x71]]
    %v530 = vstv %s529
    %v531 = vmul.f32 %v530, %v446
    %s532 = sld [smem:[#allocation2 + $0x70]]
    %v533 = vstv %s532
    %v534 = vmul.f32 %v533, %v513
    %v535 = vadd.f32 %v531, %v534
    %s536 = sld [smem:[#allocation2 + $0x73]]
    %v537 = vstv %s536
    %v538 = vmul.f32 %v537, %v465
    %s539 = sld [smem:[#allocation2 + $0x72]]
    %v540 = vstv %s539
    %v541 = vmul.f32 %v540, %v518
    %v542 = vadd.f32 %v538, %v541
    %v543 = vadd.f32 %v535, %v542
    %s544 = sld [smem:[#allocation2 + $0x75]]
    %v545 = vstv %s544
    %v546 = vmul.f32 %v545, %v484
    %s547 = sld [smem:[#allocation2 + $0x74]]
    %v548 = vstv %s547
    %v549 = vmul.f32 %v548, %v523
    %v550 = vadd.f32 %v546, %v549
    %v551 = vadd.f32 %v543, %v550
    %s552 = sld [smem:[#allocation2 + $0x77]]
    %v553 = vstv %s552
    %v554 = vmul.f32 %v553, %v503
    %s555 = sld [smem:[#allocation2 + $0x76]]
    %v556 = vstv %s555
    %v557 = vmul.f32 %v556, %v528
    %v558 = vadd.f32 %v554, %v557
    %v559 = vadd.f32 %v551, %v558
    %s560 = sld [smem:[#allocation2 + $0xb0]]
    %v561 = vstv %s560
    %v562 = vadd.f32 %v559, %v561
    %s563 = sld [smem:[#allocation2 + $0x79]]
    %v564 = vstv %s563
    %v565 = vmul.f32 %v564, %v446
    %s566 = sld [smem:[#allocation2 + $0x78]]
    %v567 = vstv %s566
    %v568 = vmul.f32 %v567, %v513
    %v569 = vadd.f32 %v565, %v568
    %s570 = sld [smem:[#allocation2 + $0x7b]]
    %v571 = vstv %s570
    %v572 = vmul.f32 %v571, %v465
    %s573 = sld [smem:[#allocation2 + $0x7a]]
    %v574 = vstv %s573
    %v575 = vmul.f32 %v574, %v518
    %v576 = vadd.f32 %v572, %v575
    %v577 = vadd.f32 %v569, %v576
    %s578 = sld [smem:[#allocation2 + $0x7d]]
    %v579 = vstv %s578
    %v580 = vmul.f32 %v579, %v484
    %s581 = sld [smem:[#allocation2 + $0x7c]]
    %v582 = vstv %s581
    %v583 = vmul.f32 %v582, %v523
    %v584 = vadd.f32 %v580, %v583
    %v585 = vadd.f32 %v577, %v584
    %s586 = sld [smem:[#allocation2 + $0x7f]]
    %v587 = vstv %s586
    %v588 = vmul.f32 %v587, %v503
    %s589 = sld [smem:[#allocation2 + $0x7e]]
    %v590 = vstv %s589
    %v591 = vmul.f32 %v590, %v528
    %v592 = vadd.f32 %v588, %v591
    %v593 = vadd.f32 %v585, %v592
    %s594 = sld [smem:[#allocation2 + $0xb1]]
    %v595 = vstv %s594
    %v596 = vadd.f32 %v593, %v595
    %s597 = sld [smem:[#allocation2 + $0x81]]
    %v598 = vstv %s597
    %v599 = vmul.f32 %v598, %v446
    %s600 = sld [smem:[#allocation2 + $0x80]]
    %v601 = vstv %s600
    %v602 = vmul.f32 %v601, %v513
    %v603 = vadd.f32 %v599, %v602
    %s604 = sld [smem:[#allocation2 + $0x83]]
    %v605 = vstv %s604
    %v606 = vmul.f32 %v605, %v465
    %s607 = sld [smem:[#allocation2 + $0x82]]
    %v608 = vstv %s607
    %v609 = vmul.f32 %v608, %v518
    %v610 = vadd.f32 %v606, %v609
    %v611 = vadd.f32 %v603, %v610
    %s612 = sld [smem:[#allocation2 + $0x85]]
    %v613 = vstv %s612
    %v614 = vmul.f32 %v613, %v484
    %s615 = sld [smem:[#allocation2 + $0x84]]
    %v616 = vstv %s615
    %v617 = vmul.f32 %v616, %v523
    %v618 = vadd.f32 %v614, %v617
    %v619 = vadd.f32 %v611, %v618
    %s620 = sld [smem:[#allocation2 + $0x87]]
    %v621 = vstv %s620
    %v622 = vmul.f32 %v621, %v503
    %s623 = sld [smem:[#allocation2 + $0x86]]
    %v624 = vstv %s623
    %v625 = vmul.f32 %v624, %v528
    %v626 = vadd.f32 %v622, %v625
    %v627 = vadd.f32 %v619, %v626
    %s628 = sld [smem:[#allocation2 + $0xb2]]
    %v629 = vstv %s628
    %v630 = vadd.f32 %v627, %v629
    %s631 = sld [smem:[#allocation2 + $0x89]]
    %v632 = vstv %s631
    %v633 = vmul.f32 %v632, %v446
    %s634 = sld [smem:[#allocation2 + $0x88]]
    %v635 = vstv %s634
    %v636 = vmul.f32 %v635, %v513
    %v637 = vadd.f32 %v633, %v636
    %s638 = sld [smem:[#allocation2 + $0x8b]]
    %v639 = vstv %s638
    %v640 = vmul.f32 %v639, %v465
    %s641 = sld [smem:[#allocation2 + $0x8a]]
    %v642 = vstv %s641
    %v643 = vmul.f32 %v642, %v518
    %v644 = vadd.f32 %v640, %v643
    %v645 = vadd.f32 %v637, %v644
    %s646 = sld [smem:[#allocation2 + $0x8d]]
    %v647 = vstv %s646
    %v648 = vmul.f32 %v647, %v484
    %s649 = sld [smem:[#allocation2 + $0x8c]]
    %v650 = vstv %s649
    %v651 = vmul.f32 %v650, %v523
    %v652 = vadd.f32 %v648, %v651
    %v653 = vadd.f32 %v645, %v652
    %s654 = sld [smem:[#allocation2 + $0x8f]]
    %v655 = vstv %s654
    %v656 = vmul.f32 %v655, %v503
    %s657 = sld [smem:[#allocation2 + $0x8e]]
    %v658 = vstv %s657
    %v659 = vmul.f32 %v658, %v528
    %v660 = vadd.f32 %v656, %v659
    %v661 = vadd.f32 %v653, %v660
    %s662 = sld [smem:[#allocation2 + $0xb3]]
    %v663 = vstv %s662
    %v664 = vadd.f32 %v661, %v663
    %s665 = sld [smem:[#allocation2 + $0x91]]
    %v666 = vstv %s665
    %v667 = vmul.f32 %v666, %v446
    %s668 = sld [smem:[#allocation2 + $0x90]]
    %v669 = vstv %s668
    %v670 = vmul.f32 %v669, %v513
    %v671 = vadd.f32 %v667, %v670
    %s672 = sld [smem:[#allocation2 + $0x93]]
    %v673 = vstv %s672
    %v674 = vmul.f32 %v673, %v465
    %s675 = sld [smem:[#allocation2 + $0x92]]
    %v676 = vstv %s675
    %v677 = vmul.f32 %v676, %v518
    %v678 = vadd.f32 %v674, %v677
    %v679 = vadd.f32 %v671, %v678
    %s680 = sld [smem:[#allocation2 + $0x95]]
    %v681 = vstv %s680
    %v682 = vmul.f32 %v681, %v484
    %s683 = sld [smem:[#allocation2 + $0x94]]
    %v684 = vstv %s683
    %v685 = vmul.f32 %v684, %v523
    %v686 = vadd.f32 %v682, %v685
    %v687 = vadd.f32 %v679, %v686
    %s688 = sld [smem:[#allocation2 + $0x97]]
    %v689 = vstv %s688
    %v690 = vmul.f32 %v689, %v503
    %s691 = sld [smem:[#allocation2 + $0x96]]
    %v692 = vstv %s691
    %v693 = vmul.f32 %v692, %v528
    %v694 = vadd.f32 %v690, %v693
    %v695 = vadd.f32 %v687, %v694
    %s696 = sld [smem:[#allocation2 + $0xb4]]
    %v697 = vstv %s696
    %v698 = vadd.f32 %v695, %v697
    %s699 = sld [smem:[#allocation2 + $0x99]]
    %v700 = vstv %s699
    %v701 = vmul.f32 %v700, %v446
    %s702 = sld [smem:[#allocation2 + $0x98]]
    %v703 = vstv %s702
    %v704 = vmul.f32 %v703, %v513
    %v705 = vadd.f32 %v701, %v704
    %s706 = sld [smem:[#allocation2 + $0x9b]]
    %v707 = vstv %s706
    %v708 = vmul.f32 %v707, %v465
    %s709 = sld [smem:[#allocation2 + $0x9a]]
    %v710 = vstv %s709
    %v711 = vmul.f32 %v710, %v518
    %v712 = vadd.f32 %v708, %v711
    %v713 = vadd.f32 %v705, %v712
    %s714 = sld [smem:[#allocation2 + $0x9d]]
    %v715 = vstv %s714
    %v716 = vmul.f32 %v715, %v484
    %s717 = sld [smem:[#allocation2 + $0x9c]]
    %v718 = vstv %s717
    %v719 = vmul.f32 %v718, %v523
    %v720 = vadd.f32 %v716, %v719
    %v721 = vadd.f32 %v713, %v720
    %s722 = sld [smem:[#allocation2 + $0x9f]]
    %v723 = vstv %s722
    %v724 = vmul.f32 %v723, %v503
    %s725 = sld [smem:[#allocation2 + $0x9e]]
    %v726 = vstv %s725
    %v727 = vmul.f32 %v726, %v528
    %v728 = vadd.f32 %v724, %v727
    %v729 = vadd.f32 %v721, %v728
    %s730 = sld [smem:[#allocation2 + $0xb5]]
    %v731 = vstv %s730
    %v732 = vadd.f32 %v729, %v731
    %s733 = sld [smem:[#allocation2 + $0xa1]]
    %v734 = vstv %s733
    %v735 = vmul.f32 %v734, %v446
    %s736 = sld [smem:[#allocation2 + $0xa0]]
    %v737 = vstv %s736
    %v738 = vmul.f32 %v737, %v513
    %v739 = vadd.f32 %v735, %v738
    %s740 = sld [smem:[#allocation2 + $0xa3]]
    %v741 = vstv %s740
    %v742 = vmul.f32 %v741, %v465
    %s743 = sld [smem:[#allocation2 + $0xa2]]
    %v744 = vstv %s743
    %v745 = vmul.f32 %v744, %v518
    %v746 = vadd.f32 %v742, %v745
    %v747 = vadd.f32 %v739, %v746
    %s748 = sld [smem:[#allocation2 + $0xa5]]
    %v749 = vstv %s748
    %v750 = vmul.f32 %v749, %v484
    %s751 = sld [smem:[#allocation2 + $0xa4]]
    %v752 = vstv %s751
    %v753 = vmul.f32 %v752, %v523
    %v754 = vadd.f32 %v750, %v753
    %v755 = vadd.f32 %v747, %v754
    %s756 = sld [smem:[#allocation2 + $0xa7]]
    %v757 = vstv %s756
    %v758 = vmul.f32 %v757, %v503
    %s759 = sld [smem:[#allocation2 + $0xa6]]
    %v760 = vstv %s759
    %v761 = vmul.f32 %v760, %v528
    %v762 = vadd.f32 %v758, %v761
    %v763 = vadd.f32 %v755, %v762
    %s764 = sld [smem:[#allocation2 + $0xb6]]
    %v765 = vstv %s764
    %v766 = vadd.f32 %v763, %v765
    %s767 = sld [smem:[#allocation2 + $0xa9]]
    %v768 = vstv %s767
    %v769 = vmul.f32 %v768, %v446
    %s770 = sld [smem:[#allocation2 + $0xa8]]
    %v771 = vstv %s770
    %v772 = vmul.f32 %v771, %v513
    %v773 = vadd.f32 %v769, %v772
    %s774 = sld [smem:[#allocation2 + $0xab]]
    %v775 = vstv %s774
    %v776 = vmul.f32 %v775, %v465
    %s777 = sld [smem:[#allocation2 + $0xaa]]
    %v778 = vstv %s777
    %v779 = vmul.f32 %v778, %v518
    %v780 = vadd.f32 %v776, %v779
    %v781 = vadd.f32 %v773, %v780
    %s782 = sld [smem:[#allocation2 + $0xad]]
    %v783 = vstv %s782
    %v784 = vmul.f32 %v783, %v484
    %s785 = sld [smem:[#allocation2 + $0xac]]
    %v786 = vstv %s785
    %v787 = vmul.f32 %v786, %v523
    %v788 = vadd.f32 %v784, %v787
    %v789 = vadd.f32 %v781, %v788
    %s790 = sld [smem:[#allocation2 + $0xaf]]
    %v791 = vstv %s790
    %v792 = vmul.f32 %v791, %v503
    %s793 = sld [smem:[#allocation2 + $0xae]]
    %v794 = vstv %s793
    %v795 = vmul.f32 %v794, %v528
    %v796 = vadd.f32 %v792, %v795
    %v797 = vadd.f32 %v789, %v796
    %s798 = sld [smem:[#allocation2 + $0xb7]]
    %v799 = vstv %s798
    %v800 = vadd.f32 %v797, %v799
    %v801 = vtanh.pop %v562
    %v802 = vmul.f32 %v698, 0.5
    %v803 = vtanh.pop %v802
    %v804 = vadd.f32 %v803, 1.0
    %v805 = vmul.f32 %v804, 0.5
    %v806 = vmul.f32 %v801, %v805
    %v807 = vtanh.pop %v596
    %v808 = vmul.f32 %v732, 0.5
    %v809 = vtanh.pop %v808
    %v810 = vadd.f32 %v809, 1.0
    %v811 = vmul.f32 %v810, 0.5
    %v812 = vmul.f32 %v807, %v811
    %v813 = vtanh.pop %v630
    %v814 = vmul.f32 %v766, 0.5
    %v815 = vtanh.pop %v814
    %v816 = vadd.f32 %v815, 1.0
    %v817 = vmul.f32 %v816, 0.5
    %v818 = vmul.f32 %v813, %v817
    %v819 = vtanh.pop %v664
    %v820 = vmul.f32 %v800, 0.5
    %v821 = vtanh.pop %v820
    %v822 = vadd.f32 %v821, 1.0
    %v823 = vmul.f32 %v822, 0.5
    %v824 = vmul.f32 %v819, %v823
    %s825 = sld [smem:[#allocation2 + $0xb8]]
    %v826 = vstv %s825
    %v827 = vmul.f32 %v826, %v806
    %v828 = vadd.f32 %v446, %v827
    %s829 = sld [smem:[#allocation2 + $0xb9]]
    %v830 = vstv %s829
    %v831 = vmul.f32 %v830, %v812
    %v832 = vadd.f32 %v828, %v831
    %s833 = sld [smem:[#allocation2 + $0xba]]
    %v834 = vstv %s833
    %v835 = vmul.f32 %v834, %v818
    %v836 = vadd.f32 %v832, %v835
    %s837 = sld [smem:[#allocation2 + $0xbb]]
    %v838 = vstv %s837
    %v839 = vmul.f32 %v838, %v824
    %v840 = vadd.f32 %v836, %v839
    %s841 = sld [smem:[#allocation2 + $0xc8]]
    %v842 = vstv %s841
    %v843 = vadd.f32 %v840, %v842
    %s844 = sld [smem:[#allocation2 + $0xbc]]
    %v845 = vstv %s844
    %v846 = vmul.f32 %v845, %v806
    %v847 = vadd.f32 %v465, %v846
    %s848 = sld [smem:[#allocation2 + $0xbd]]
    %v849 = vstv %s848
    %v850 = vmul.f32 %v849, %v812
    %v851 = vadd.f32 %v847, %v850
    %s852 = sld [smem:[#allocation2 + $0xbe]]
    %v853 = vstv %s852
    %v854 = vmul.f32 %v853, %v818
    %v855 = vadd.f32 %v851, %v854
    %s856 = sld [smem:[#allocation2 + $0xbf]]
    %v857 = vstv %s856
    %v858 = vmul.f32 %v857, %v824
    %v859 = vadd.f32 %v855, %v858
    %s860 = sld [smem:[#allocation2 + $0xc9]]
    %v861 = vstv %s860
    %v862 = vadd.f32 %v859, %v861
    %s863 = sld [smem:[#allocation2 + $0xc0]]
    %v864 = vstv %s863
    %v865 = vmul.f32 %v864, %v806
    %v866 = vadd.f32 %v484, %v865
    %s867 = sld [smem:[#allocation2 + $0xc1]]
    %v868 = vstv %s867
    %v869 = vmul.f32 %v868, %v812
    %v870 = vadd.f32 %v866, %v869
    %s871 = sld [smem:[#allocation2 + $0xc2]]
    %v872 = vstv %s871
    %v873 = vmul.f32 %v872, %v818
    %v874 = vadd.f32 %v870, %v873
    %s875 = sld [smem:[#allocation2 + $0xc3]]
    %v876 = vstv %s875
    %v877 = vmul.f32 %v876, %v824
    %v878 = vadd.f32 %v874, %v877
    %s879 = sld [smem:[#allocation2 + $0xca]]
    %v880 = vstv %s879
    %v881 = vadd.f32 %v878, %v880
    %s882 = sld [smem:[#allocation2 + $0xc4]]
    %v883 = vstv %s882
    %v884 = vmul.f32 %v883, %v806
    %v885 = vadd.f32 %v503, %v884
    %s886 = sld [smem:[#allocation2 + $0xc5]]
    %v887 = vstv %s886
    %v888 = vmul.f32 %v887, %v812
    %v889 = vadd.f32 %v885, %v888
    %s890 = sld [smem:[#allocation2 + $0xc6]]
    %v891 = vstv %s890
    %v892 = vmul.f32 %v891, %v818
    %v893 = vadd.f32 %v889, %v892
    %s894 = sld [smem:[#allocation2 + $0xc7]]
    %v895 = vstv %s894
    %v896 = vmul.f32 %v895, %v824
    %v897 = vadd.f32 %v893, %v896
    %s898 = sld [smem:[#allocation2 + $0xcb]]
    %v899 = vstv %s898
    %v900 = vadd.f32 %v897, %v899
    %v901 = vadd.f32 %v504, %v843
    %v902 = vadd.f32 %v505, %v862
    %v903 = vadd.f32 %v506, %v881
    %v904 = vadd.f32 %v507, %v900
    %906 = vrot.lane.b32.xlu0 %v843, 4
    %v907 = vpop.permute.xlu0 %906
    %vm909 = vcmask 31744
    %v910 = vsel %vm909, 0.0, %v907
    %912 = vrot.lane.b32.xlu0 %v862, 4
    %v913 = vpop.permute.xlu0 %912
    %v915 = vsel %vm909, 0.0, %v913
    %917 = vrot.lane.b32.xlu0 %v881, 4
    %v918 = vpop.permute.xlu0 %917
    %v920 = vsel %vm909, 0.0, %v918
    %922 = vrot.lane.b32.xlu0 %v900, 4
    %v923 = vpop.permute.xlu0 %922
    %v925 = vsel %vm909, 0.0, %v923
    %s926 = sld [smem:[#allocation2 + $0xcd]]
    %v927 = vstv %s926
    %v928 = vmul.f32 %v927, %v843
    %s929 = sld [smem:[#allocation2 + $0xcc]]
    %v930 = vstv %s929
    %v931 = vmul.f32 %v930, %v910
    %v932 = vadd.f32 %v928, %v931
    %s933 = sld [smem:[#allocation2 + $0xcf]]
    %v934 = vstv %s933
    %v935 = vmul.f32 %v934, %v862
    %s936 = sld [smem:[#allocation2 + $0xce]]
    %v937 = vstv %s936
    %v938 = vmul.f32 %v937, %v915
    %v939 = vadd.f32 %v935, %v938
    %v940 = vadd.f32 %v932, %v939
    %s941 = sld [smem:[#allocation2 + $0xd1]]
    %v942 = vstv %s941
    %v943 = vmul.f32 %v942, %v881
    %s944 = sld [smem:[#allocation2 + $0xd0]]
    %v945 = vstv %s944
    %v946 = vmul.f32 %v945, %v920
    %v947 = vadd.f32 %v943, %v946
    %v948 = vadd.f32 %v940, %v947
    %s949 = sld [smem:[#allocation2 + $0xd3]]
    %v950 = vstv %s949
    %v951 = vmul.f32 %v950, %v900
    %s952 = sld [smem:[#allocation2 + $0xd2]]
    %v953 = vstv %s952
    %v954 = vmul.f32 %v953, %v925
    %v955 = vadd.f32 %v951, %v954
    %v956 = vadd.f32 %v948, %v955
    %s957 = sld [smem:[#allocation2 + $0x10c]]
    %v958 = vstv %s957
    %v959 = vadd.f32 %v956, %v958
    %s960 = sld [smem:[#allocation2 + $0xd5]]
    %v961 = vstv %s960
    %v962 = vmul.f32 %v961, %v843
    %s963 = sld [smem:[#allocation2 + $0xd4]]
    %v964 = vstv %s963
    %v965 = vmul.f32 %v964, %v910
    %v966 = vadd.f32 %v962, %v965
    %s967 = sld [smem:[#allocation2 + $0xd7]]
    %v968 = vstv %s967
    %v969 = vmul.f32 %v968, %v862
    %s970 = sld [smem:[#allocation2 + $0xd6]]
    %v971 = vstv %s970
    %v972 = vmul.f32 %v971, %v915
    %v973 = vadd.f32 %v969, %v972
    %v974 = vadd.f32 %v966, %v973
    %s975 = sld [smem:[#allocation2 + $0xd9]]
    %v976 = vstv %s975
    %v977 = vmul.f32 %v976, %v881
    %s978 = sld [smem:[#allocation2 + $0xd8]]
    %v979 = vstv %s978
    %v980 = vmul.f32 %v979, %v920
    %v981 = vadd.f32 %v977, %v980
    %v982 = vadd.f32 %v974, %v981
    %s983 = sld [smem:[#allocation2 + $0xdb]]
    %v984 = vstv %s983
    %v985 = vmul.f32 %v984, %v900
    %s986 = sld [smem:[#allocation2 + $0xda]]
    %v987 = vstv %s986
    %v988 = vmul.f32 %v987, %v925
    %v989 = vadd.f32 %v985, %v988
    %v990 = vadd.f32 %v982, %v989
    %s991 = sld [smem:[#allocation2 + $0x10d]]
    %v992 = vstv %s991
    %v993 = vadd.f32 %v990, %v992
    %s994 = sld [smem:[#allocation2 + $0xdd]]
    %v995 = vstv %s994
    %v996 = vmul.f32 %v995, %v843
    %s997 = sld [smem:[#allocation2 + $0xdc]]
    %v998 = vstv %s997
    %v999 = vmul.f32 %v998, %v910
    %v1000 = vadd.f32 %v996, %v999
    %s1001 = sld [smem:[#allocation2 + $0xdf]]
    %v1002 = vstv %s1001
    %v1003 = vmul.f32 %v1002, %v862
    %s1004 = sld [smem:[#allocation2 + $0xde]]
    %v1005 = vstv %s1004
    %v1006 = vmul.f32 %v1005, %v915
    %v1007 = vadd.f32 %v1003, %v1006
    %v1008 = vadd.f32 %v1000, %v1007
    %s1009 = sld [smem:[#allocation2 + $0xe1]]
    %v1010 = vstv %s1009
    %v1011 = vmul.f32 %v1010, %v881
    %s1012 = sld [smem:[#allocation2 + $0xe0]]
    %v1013 = vstv %s1012
    %v1014 = vmul.f32 %v1013, %v920
    %v1015 = vadd.f32 %v1011, %v1014
    %v1016 = vadd.f32 %v1008, %v1015
    %s1017 = sld [smem:[#allocation2 + $0xe3]]
    %v1018 = vstv %s1017
    %v1019 = vmul.f32 %v1018, %v900
    %s1020 = sld [smem:[#allocation2 + $0xe2]]
    %v1021 = vstv %s1020
    %v1022 = vmul.f32 %v1021, %v925
    %v1023 = vadd.f32 %v1019, %v1022
    %v1024 = vadd.f32 %v1016, %v1023
    %s1025 = sld [smem:[#allocation2 + $0x10e]]
    %v1026 = vstv %s1025
    %v1027 = vadd.f32 %v1024, %v1026
    %s1028 = sld [smem:[#allocation2 + $0xe5]]
    %v1029 = vstv %s1028
    %v1030 = vmul.f32 %v1029, %v843
    %s1031 = sld [smem:[#allocation2 + $0xe4]]
    %v1032 = vstv %s1031
    %v1033 = vmul.f32 %v1032, %v910
    %v1034 = vadd.f32 %v1030, %v1033
    %s1035 = sld [smem:[#allocation2 + $0xe7]]
    %v1036 = vstv %s1035
    %v1037 = vmul.f32 %v1036, %v862
    %s1038 = sld [smem:[#allocation2 + $0xe6]]
    %v1039 = vstv %s1038
    %v1040 = vmul.f32 %v1039, %v915
    %v1041 = vadd.f32 %v1037, %v1040
    %v1042 = vadd.f32 %v1034, %v1041
    %s1043 = sld [smem:[#allocation2 + $0xe9]]
    %v1044 = vstv %s1043
    %v1045 = vmul.f32 %v1044, %v881
    %s1046 = sld [smem:[#allocation2 + $0xe8]]
    %v1047 = vstv %s1046
    %v1048 = vmul.f32 %v1047, %v920
    %v1049 = vadd.f32 %v1045, %v1048
    %v1050 = vadd.f32 %v1042, %v1049
    %s1051 = sld [smem:[#allocation2 + $0xeb]]
    %v1052 = vstv %s1051
    %v1053 = vmul.f32 %v1052, %v900
    %s1054 = sld [smem:[#allocation2 + $0xea]]
    %v1055 = vstv %s1054
    %v1056 = vmul.f32 %v1055, %v925
    %v1057 = vadd.f32 %v1053, %v1056
    %v1058 = vadd.f32 %v1050, %v1057
    %s1059 = sld [smem:[#allocation2 + $0x10f]]
    %v1060 = vstv %s1059
    %v1061 = vadd.f32 %v1058, %v1060
    %s1062 = sld [smem:[#allocation2 + $0xed]]
    %v1063 = vstv %s1062
    %v1064 = vmul.f32 %v1063, %v843
    %s1065 = sld [smem:[#allocation2 + $0xec]]
    %v1066 = vstv %s1065
    %v1067 = vmul.f32 %v1066, %v910
    %v1068 = vadd.f32 %v1064, %v1067
    %s1069 = sld [smem:[#allocation2 + $0xef]]
    %v1070 = vstv %s1069
    %v1071 = vmul.f32 %v1070, %v862
    %s1072 = sld [smem:[#allocation2 + $0xee]]
    %v1073 = vstv %s1072
    %v1074 = vmul.f32 %v1073, %v915
    %v1075 = vadd.f32 %v1071, %v1074
    %v1076 = vadd.f32 %v1068, %v1075
    %s1077 = sld [smem:[#allocation2 + $0xf1]]
    %v1078 = vstv %s1077
    %v1079 = vmul.f32 %v1078, %v881
    %s1080 = sld [smem:[#allocation2 + $0xf0]]
    %v1081 = vstv %s1080
    %v1082 = vmul.f32 %v1081, %v920
    %v1083 = vadd.f32 %v1079, %v1082
    %v1084 = vadd.f32 %v1076, %v1083
    %s1085 = sld [smem:[#allocation2 + $0xf3]]
    %v1086 = vstv %s1085
    %v1087 = vmul.f32 %v1086, %v900
    %s1088 = sld [smem:[#allocation2 + $0xf2]]
    %v1089 = vstv %s1088
    %v1090 = vmul.f32 %v1089, %v925
    %v1091 = vadd.f32 %v1087, %v1090
    %v1092 = vadd.f32 %v1084, %v1091
    %s1093 = sld [smem:[#allocation2 + $0x110]]
    %v1094 = vstv %s1093
    %v1095 = vadd.f32 %v1092, %v1094
    %s1096 = sld [smem:[#allocation2 + $0xf5]]
    %v1097 = vstv %s1096
    %v1098 = vmul.f32 %v1097, %v843
    %s1099 = sld [smem:[#allocation2 + $0xf4]]
    %v1100 = vstv %s1099
    %v1101 = vmul.f32 %v1100, %v910
    %v1102 = vadd.f32 %v1098, %v1101
    %s1103 = sld [smem:[#allocation2 + $0xf7]]
    %v1104 = vstv %s1103
    %v1105 = vmul.f32 %v1104, %v862
    %s1106 = sld [smem:[#allocation2 + $0xf6]]
    %v1107 = vstv %s1106
    %v1108 = vmul.f32 %v1107, %v915
    %v1109 = vadd.f32 %v1105, %v1108
    %v1110 = vadd.f32 %v1102, %v1109
    %s1111 = sld [smem:[#allocation2 + $0xf9]]
    %v1112 = vstv %s1111
    %v1113 = vmul.f32 %v1112, %v881
    %s1114 = sld [smem:[#allocation2 + $0xf8]]
    %v1115 = vstv %s1114
    %v1116 = vmul.f32 %v1115, %v920
    %v1117 = vadd.f32 %v1113, %v1116
    %v1118 = vadd.f32 %v1110, %v1117
    %s1119 = sld [smem:[#allocation2 + $0xfb]]
    %v1120 = vstv %s1119
    %v1121 = vmul.f32 %v1120, %v900
    %s1122 = sld [smem:[#allocation2 + $0xfa]]
    %v1123 = vstv %s1122
    %v1124 = vmul.f32 %v1123, %v925
    %v1125 = vadd.f32 %v1121, %v1124
    %v1126 = vadd.f32 %v1118, %v1125
    %s1127 = sld [smem:[#allocation2 + $0x111]]
    %v1128 = vstv %s1127
    %v1129 = vadd.f32 %v1126, %v1128
    %s1130 = sld [smem:[#allocation2 + $0xfd]]
    %v1131 = vstv %s1130
    %v1132 = vmul.f32 %v1131, %v843
    %s1133 = sld [smem:[#allocation2 + $0xfc]]
    %v1134 = vstv %s1133
    %v1135 = vmul.f32 %v1134, %v910
    %v1136 = vadd.f32 %v1132, %v1135
    %s1137 = sld [smem:[#allocation2 + $0xff]]
    %v1138 = vstv %s1137
    %v1139 = vmul.f32 %v1138, %v862
    %s1140 = sld [smem:[#allocation2 + $0xfe]]
    %v1141 = vstv %s1140
    %v1142 = vmul.f32 %v1141, %v915
    %v1143 = vadd.f32 %v1139, %v1142
    %v1144 = vadd.f32 %v1136, %v1143
    %s1145 = sld [smem:[#allocation2 + $0x101]]
    %v1146 = vstv %s1145
    %v1147 = vmul.f32 %v1146, %v881
    %s1148 = sld [smem:[#allocation2 + $0x100]]
    %v1149 = vstv %s1148
    %v1150 = vmul.f32 %v1149, %v920
    %v1151 = vadd.f32 %v1147, %v1150
    %v1152 = vadd.f32 %v1144, %v1151
    %s1153 = sld [smem:[#allocation2 + $0x103]]
    %v1154 = vstv %s1153
    %v1155 = vmul.f32 %v1154, %v900
    %s1156 = sld [smem:[#allocation2 + $0x102]]
    %v1157 = vstv %s1156
    %v1158 = vmul.f32 %v1157, %v925
    %v1159 = vadd.f32 %v1155, %v1158
    %v1160 = vadd.f32 %v1152, %v1159
    %s1161 = sld [smem:[#allocation2 + $0x112]]
    %v1162 = vstv %s1161
    %v1163 = vadd.f32 %v1160, %v1162
    %s1164 = sld [smem:[#allocation2 + $0x105]]
    %v1165 = vstv %s1164
    %v1166 = vmul.f32 %v1165, %v843
    %s1167 = sld [smem:[#allocation2 + $0x104]]
    %v1168 = vstv %s1167
    %v1169 = vmul.f32 %v1168, %v910
    %v1170 = vadd.f32 %v1166, %v1169
    %s1171 = sld [smem:[#allocation2 + $0x107]]
    %v1172 = vstv %s1171
    %v1173 = vmul.f32 %v1172, %v862
    %s1174 = sld [smem:[#allocation2 + $0x106]]
    %v1175 = vstv %s1174
    %v1176 = vmul.f32 %v1175, %v915
    %v1177 = vadd.f32 %v1173, %v1176
    %v1178 = vadd.f32 %v1170, %v1177
    %s1179 = sld [smem:[#allocation2 + $0x109]]
    %v1180 = vstv %s1179
    %v1181 = vmul.f32 %v1180, %v881
    %s1182 = sld [smem:[#allocation2 + $0x108]]
    %v1183 = vstv %s1182
    %v1184 = vmul.f32 %v1183, %v920
    %v1185 = vadd.f32 %v1181, %v1184
    %v1186 = vadd.f32 %v1178, %v1185
    %s1187 = sld [smem:[#allocation2 + $0x10b]]
    %v1188 = vstv %s1187
    %v1189 = vmul.f32 %v1188, %v900
    %s1190 = sld [smem:[#allocation2 + $0x10a]]
    %v1191 = vstv %s1190
    %v1192 = vmul.f32 %v1191, %v925
    %v1193 = vadd.f32 %v1189, %v1192
    %v1194 = vadd.f32 %v1186, %v1193
    %s1195 = sld [smem:[#allocation2 + $0x113]]
    %v1196 = vstv %s1195
    %v1197 = vadd.f32 %v1194, %v1196
    %v1198 = vtanh.pop %v959
    %v1199 = vmul.f32 %v1095, 0.5
    %v1200 = vtanh.pop %v1199
    %v1201 = vadd.f32 %v1200, 1.0
    %v1202 = vmul.f32 %v1201, 0.5
    %v1203 = vmul.f32 %v1198, %v1202
    %v1204 = vtanh.pop %v993
    %v1205 = vmul.f32 %v1129, 0.5
    %v1206 = vtanh.pop %v1205
    %v1207 = vadd.f32 %v1206, 1.0
    %v1208 = vmul.f32 %v1207, 0.5
    %v1209 = vmul.f32 %v1204, %v1208
    %v1210 = vtanh.pop %v1027
    %v1211 = vmul.f32 %v1163, 0.5
    %v1212 = vtanh.pop %v1211
    %v1213 = vadd.f32 %v1212, 1.0
    %v1214 = vmul.f32 %v1213, 0.5
    %v1215 = vmul.f32 %v1210, %v1214
    %v1216 = vtanh.pop %v1061
    %v1217 = vmul.f32 %v1197, 0.5
    %v1218 = vtanh.pop %v1217
    %v1219 = vadd.f32 %v1218, 1.0
    %v1220 = vmul.f32 %v1219, 0.5
    %v1221 = vmul.f32 %v1216, %v1220
    %s1222 = sld [smem:[#allocation2 + $0x114]]
    %v1223 = vstv %s1222
    %v1224 = vmul.f32 %v1223, %v1203
    %v1225 = vadd.f32 %v843, %v1224
    %s1226 = sld [smem:[#allocation2 + $0x115]]
    %v1227 = vstv %s1226
    %v1228 = vmul.f32 %v1227, %v1209
    %v1229 = vadd.f32 %v1225, %v1228
    %s1230 = sld [smem:[#allocation2 + $0x116]]
    %v1231 = vstv %s1230
    %v1232 = vmul.f32 %v1231, %v1215
    %v1233 = vadd.f32 %v1229, %v1232
    %s1234 = sld [smem:[#allocation2 + $0x117]]
    %v1235 = vstv %s1234
    %v1236 = vmul.f32 %v1235, %v1221
    %v1237 = vadd.f32 %v1233, %v1236
    %s1238 = sld [smem:[#allocation2 + $0x124]]
    %v1239 = vstv %s1238
    %v1240 = vadd.f32 %v1237, %v1239
    %s1241 = sld [smem:[#allocation2 + $0x118]]
    %v1242 = vstv %s1241
    %v1243 = vmul.f32 %v1242, %v1203
    %v1244 = vadd.f32 %v862, %v1243
    %s1245 = sld [smem:[#allocation2 + $0x119]]
    %v1246 = vstv %s1245
    %v1247 = vmul.f32 %v1246, %v1209
    %v1248 = vadd.f32 %v1244, %v1247
    %s1249 = sld [smem:[#allocation2 + $0x11a]]
    %v1250 = vstv %s1249
    %v1251 = vmul.f32 %v1250, %v1215
    %v1252 = vadd.f32 %v1248, %v1251
    %s1253 = sld [smem:[#allocation2 + $0x11b]]
    %v1254 = vstv %s1253
    %v1255 = vmul.f32 %v1254, %v1221
    %v1256 = vadd.f32 %v1252, %v1255
    %s1257 = sld [smem:[#allocation2 + $0x125]]
    %v1258 = vstv %s1257
    %v1259 = vadd.f32 %v1256, %v1258
    %s1260 = sld [smem:[#allocation2 + $0x11c]]
    %v1261 = vstv %s1260
    %v1262 = vmul.f32 %v1261, %v1203
    %v1263 = vadd.f32 %v881, %v1262
    %s1264 = sld [smem:[#allocation2 + $0x11d]]
    %v1265 = vstv %s1264
    %v1266 = vmul.f32 %v1265, %v1209
    %v1267 = vadd.f32 %v1263, %v1266
    %s1268 = sld [smem:[#allocation2 + $0x11e]]
    %v1269 = vstv %s1268
    %v1270 = vmul.f32 %v1269, %v1215
    %v1271 = vadd.f32 %v1267, %v1270
    %s1272 = sld [smem:[#allocation2 + $0x11f]]
    %v1273 = vstv %s1272
    %v1274 = vmul.f32 %v1273, %v1221
    %v1275 = vadd.f32 %v1271, %v1274
    %s1276 = sld [smem:[#allocation2 + $0x126]]
    %v1277 = vstv %s1276
    %v1278 = vadd.f32 %v1275, %v1277
    %s1279 = sld [smem:[#allocation2 + $0x120]]
    %v1280 = vstv %s1279
    %v1281 = vmul.f32 %v1280, %v1203
    %v1282 = vadd.f32 %v900, %v1281
    %s1283 = sld [smem:[#allocation2 + $0x121]]
    %v1284 = vstv %s1283
    %v1285 = vmul.f32 %v1284, %v1209
    %v1286 = vadd.f32 %v1282, %v1285
    %s1287 = sld [smem:[#allocation2 + $0x122]]
    %v1288 = vstv %s1287
    %v1289 = vmul.f32 %v1288, %v1215
    %v1290 = vadd.f32 %v1286, %v1289
    %s1291 = sld [smem:[#allocation2 + $0x123]]
    %v1292 = vstv %s1291
    %v1293 = vmul.f32 %v1292, %v1221
    %v1294 = vadd.f32 %v1290, %v1293
    %s1295 = sld [smem:[#allocation2 + $0x127]]
    %v1296 = vstv %s1295
    %v1297 = vadd.f32 %v1294, %v1296
    %v1298 = vadd.f32 %v901, %v1240
    %v1299 = vadd.f32 %v902, %v1259
    %v1300 = vadd.f32 %v903, %v1278
    %v1301 = vadd.f32 %v904, %v1297
    %1303 = vrot.lane.b32.xlu0 %v1240, 8
    %v1304 = vpop.permute.xlu0 %1303
    %vm1306 = vcmask 64512
    %v1307 = vsel %vm1306, 0.0, %v1304
    %1309 = vrot.lane.b32.xlu0 %v1259, 8
    %v1310 = vpop.permute.xlu0 %1309
    %v1312 = vsel %vm1306, 0.0, %v1310
    %1314 = vrot.lane.b32.xlu0 %v1278, 8
    %v1315 = vpop.permute.xlu0 %1314
    %v1317 = vsel %vm1306, 0.0, %v1315
    %1319 = vrot.lane.b32.xlu0 %v1297, 8
    %v1320 = vpop.permute.xlu0 %1319
    %v1322 = vsel %vm1306, 0.0, %v1320
    %s1323 = sld [smem:[#allocation2 + $0x129]]
    %v1324 = vstv %s1323
    %v1325 = vmul.f32 %v1324, %v1240
    %s1326 = sld [smem:[#allocation2 + $0x128]]
    %v1327 = vstv %s1326
    %v1328 = vmul.f32 %v1327, %v1307
    %v1329 = vadd.f32 %v1325, %v1328
    %s1330 = sld [smem:[#allocation2 + $0x12b]]
    %v1331 = vstv %s1330
    %v1332 = vmul.f32 %v1331, %v1259
    %s1333 = sld [smem:[#allocation2 + $0x12a]]
    %v1334 = vstv %s1333
    %v1335 = vmul.f32 %v1334, %v1312
    %v1336 = vadd.f32 %v1332, %v1335
    %v1337 = vadd.f32 %v1329, %v1336
    %s1338 = sld [smem:[#allocation2 + $0x12d]]
    %v1339 = vstv %s1338
    %v1340 = vmul.f32 %v1339, %v1278
    %s1341 = sld [smem:[#allocation2 + $0x12c]]
    %v1342 = vstv %s1341
    %v1343 = vmul.f32 %v1342, %v1317
    %v1344 = vadd.f32 %v1340, %v1343
    %v1345 = vadd.f32 %v1337, %v1344
    %s1346 = sld [smem:[#allocation2 + $0x12f]]
    %v1347 = vstv %s1346
    %v1348 = vmul.f32 %v1347, %v1297
    %s1349 = sld [smem:[#allocation2 + $0x12e]]
    %v1350 = vstv %s1349
    %v1351 = vmul.f32 %v1350, %v1322
    %v1352 = vadd.f32 %v1348, %v1351
    %v1353 = vadd.f32 %v1345, %v1352
    %s1354 = sld [smem:[#allocation2 + $0x168]]
    %v1355 = vstv %s1354
    %v1356 = vadd.f32 %v1353, %v1355
    %s1357 = sld [smem:[#allocation2 + $0x131]]
    %v1358 = vstv %s1357
    %v1359 = vmul.f32 %v1358, %v1240
    %s1360 = sld [smem:[#allocation2 + $0x130]]
    %v1361 = vstv %s1360
    %v1362 = vmul.f32 %v1361, %v1307
    %v1363 = vadd.f32 %v1359, %v1362
    %s1364 = sld [smem:[#allocation2 + $0x133]]
    %v1365 = vstv %s1364
    %v1366 = vmul.f32 %v1365, %v1259
    %s1367 = sld [smem:[#allocation2 + $0x132]]
    %v1368 = vstv %s1367
    %v1369 = vmul.f32 %v1368, %v1312
    %v1370 = vadd.f32 %v1366, %v1369
    %v1371 = vadd.f32 %v1363, %v1370
    %s1372 = sld [smem:[#allocation2 + $0x135]]
    %v1373 = vstv %s1372
    %v1374 = vmul.f32 %v1373, %v1278
    %s1375 = sld [smem:[#allocation2 + $0x134]]
    %v1376 = vstv %s1375
    %v1377 = vmul.f32 %v1376, %v1317
    %v1378 = vadd.f32 %v1374, %v1377
    %v1379 = vadd.f32 %v1371, %v1378
    %s1380 = sld [smem:[#allocation2 + $0x137]]
    %v1381 = vstv %s1380
    %v1382 = vmul.f32 %v1381, %v1297
    %s1383 = sld [smem:[#allocation2 + $0x136]]
    %v1384 = vstv %s1383
    %v1385 = vmul.f32 %v1384, %v1322
    %v1386 = vadd.f32 %v1382, %v1385
    %v1387 = vadd.f32 %v1379, %v1386
    %s1388 = sld [smem:[#allocation2 + $0x169]]
    %v1389 = vstv %s1388
    %v1390 = vadd.f32 %v1387, %v1389
    %s1391 = sld [smem:[#allocation2 + $0x139]]
    %v1392 = vstv %s1391
    %v1393 = vmul.f32 %v1392, %v1240
    %s1394 = sld [smem:[#allocation2 + $0x138]]
    %v1395 = vstv %s1394
    %v1396 = vmul.f32 %v1395, %v1307
    %v1397 = vadd.f32 %v1393, %v1396
    %s1398 = sld [smem:[#allocation2 + $0x13b]]
    %v1399 = vstv %s1398
    %v1400 = vmul.f32 %v1399, %v1259
    %s1401 = sld [smem:[#allocation2 + $0x13a]]
    %v1402 = vstv %s1401
    %v1403 = vmul.f32 %v1402, %v1312
    %v1404 = vadd.f32 %v1400, %v1403
    %v1405 = vadd.f32 %v1397, %v1404
    %s1406 = sld [smem:[#allocation2 + $0x13d]]
    %v1407 = vstv %s1406
    %v1408 = vmul.f32 %v1407, %v1278
    %s1409 = sld [smem:[#allocation2 + $0x13c]]
    %v1410 = vstv %s1409
    %v1411 = vmul.f32 %v1410, %v1317
    %v1412 = vadd.f32 %v1408, %v1411
    %v1413 = vadd.f32 %v1405, %v1412
    %s1414 = sld [smem:[#allocation2 + $0x13f]]
    %v1415 = vstv %s1414
    %v1416 = vmul.f32 %v1415, %v1297
    %s1417 = sld [smem:[#allocation2 + $0x13e]]
    %v1418 = vstv %s1417
    %v1419 = vmul.f32 %v1418, %v1322
    %v1420 = vadd.f32 %v1416, %v1419
    %v1421 = vadd.f32 %v1413, %v1420
    %s1422 = sld [smem:[#allocation2 + $0x16a]]
    %v1423 = vstv %s1422
    %v1424 = vadd.f32 %v1421, %v1423
    %s1425 = sld [smem:[#allocation2 + $0x141]]
    %v1426 = vstv %s1425
    %v1427 = vmul.f32 %v1426, %v1240
    %s1428 = sld [smem:[#allocation2 + $0x140]]
    %v1429 = vstv %s1428
    %v1430 = vmul.f32 %v1429, %v1307
    %v1431 = vadd.f32 %v1427, %v1430
    %s1432 = sld [smem:[#allocation2 + $0x143]]
    %v1433 = vstv %s1432
    %v1434 = vmul.f32 %v1433, %v1259
    %s1435 = sld [smem:[#allocation2 + $0x142]]
    %v1436 = vstv %s1435
    %v1437 = vmul.f32 %v1436, %v1312
    %v1438 = vadd.f32 %v1434, %v1437
    %v1439 = vadd.f32 %v1431, %v1438
    %s1440 = sld [smem:[#allocation2 + $0x145]]
    %v1441 = vstv %s1440
    %v1442 = vmul.f32 %v1441, %v1278
    %s1443 = sld [smem:[#allocation2 + $0x144]]
    %v1444 = vstv %s1443
    %v1445 = vmul.f32 %v1444, %v1317
    %v1446 = vadd.f32 %v1442, %v1445
    %v1447 = vadd.f32 %v1439, %v1446
    %s1448 = sld [smem:[#allocation2 + $0x147]]
    %v1449 = vstv %s1448
    %v1450 = vmul.f32 %v1449, %v1297
    %s1451 = sld [smem:[#allocation2 + $0x146]]
    %v1452 = vstv %s1451
    %v1453 = vmul.f32 %v1452, %v1322
    %v1454 = vadd.f32 %v1450, %v1453
    %v1455 = vadd.f32 %v1447, %v1454
    %s1456 = sld [smem:[#allocation2 + $0x16b]]
    %v1457 = vstv %s1456
    %v1458 = vadd.f32 %v1455, %v1457
    %s1459 = sld [smem:[#allocation2 + $0x149]]
    %v1460 = vstv %s1459
    %v1461 = vmul.f32 %v1460, %v1240
    %s1462 = sld [smem:[#allocation2 + $0x148]]
    %v1463 = vstv %s1462
    %v1464 = vmul.f32 %v1463, %v1307
    %v1465 = vadd.f32 %v1461, %v1464
    %s1466 = sld [smem:[#allocation2 + $0x14b]]
    %v1467 = vstv %s1466
    %v1468 = vmul.f32 %v1467, %v1259
    %s1469 = sld [smem:[#allocation2 + $0x14a]]
    %v1470 = vstv %s1469
    %v1471 = vmul.f32 %v1470, %v1312
    %v1472 = vadd.f32 %v1468, %v1471
    %v1473 = vadd.f32 %v1465, %v1472
    %s1474 = sld [smem:[#allocation2 + $0x14d]]
    %v1475 = vstv %s1474
    %v1476 = vmul.f32 %v1475, %v1278
    %s1477 = sld [smem:[#allocation2 + $0x14c]]
    %v1478 = vstv %s1477
    %v1479 = vmul.f32 %v1478, %v1317
    %v1480 = vadd.f32 %v1476, %v1479
    %v1481 = vadd.f32 %v1473, %v1480
    %s1482 = sld [smem:[#allocation2 + $0x14f]]
    %v1483 = vstv %s1482
    %v1484 = vmul.f32 %v1483, %v1297
    %s1485 = sld [smem:[#allocation2 + $0x14e]]
    %v1486 = vstv %s1485
    %v1487 = vmul.f32 %v1486, %v1322
    %v1488 = vadd.f32 %v1484, %v1487
    %v1489 = vadd.f32 %v1481, %v1488
    %s1490 = sld [smem:[#allocation2 + $0x16c]]
    %v1491 = vstv %s1490
    %v1492 = vadd.f32 %v1489, %v1491
    %s1493 = sld [smem:[#allocation2 + $0x151]]
    %v1494 = vstv %s1493
    %v1495 = vmul.f32 %v1494, %v1240
    %s1496 = sld [smem:[#allocation2 + $0x150]]
    %v1497 = vstv %s1496
    %v1498 = vmul.f32 %v1497, %v1307
    %v1499 = vadd.f32 %v1495, %v1498
    %s1500 = sld [smem:[#allocation2 + $0x153]]
    %v1501 = vstv %s1500
    %v1502 = vmul.f32 %v1501, %v1259
    %s1503 = sld [smem:[#allocation2 + $0x152]]
    %v1504 = vstv %s1503
    %v1505 = vmul.f32 %v1504, %v1312
    %v1506 = vadd.f32 %v1502, %v1505
    %v1507 = vadd.f32 %v1499, %v1506
    %s1508 = sld [smem:[#allocation2 + $0x155]]
    %v1509 = vstv %s1508
    %v1510 = vmul.f32 %v1509, %v1278
    %s1511 = sld [smem:[#allocation2 + $0x154]]
    %v1512 = vstv %s1511
    %v1513 = vmul.f32 %v1512, %v1317
    %v1514 = vadd.f32 %v1510, %v1513
    %v1515 = vadd.f32 %v1507, %v1514
    %s1516 = sld [smem:[#allocation2 + $0x157]]
    %v1517 = vstv %s1516
    %v1518 = vmul.f32 %v1517, %v1297
    %s1519 = sld [smem:[#allocation2 + $0x156]]
    %v1520 = vstv %s1519
    %v1521 = vmul.f32 %v1520, %v1322
    %v1522 = vadd.f32 %v1518, %v1521
    %v1523 = vadd.f32 %v1515, %v1522
    %s1524 = sld [smem:[#allocation2 + $0x16d]]
    %v1525 = vstv %s1524
    %v1526 = vadd.f32 %v1523, %v1525
    %s1527 = sld [smem:[#allocation2 + $0x159]]
    %v1528 = vstv %s1527
    %v1529 = vmul.f32 %v1528, %v1240
    %s1530 = sld [smem:[#allocation2 + $0x158]]
    %v1531 = vstv %s1530
    %v1532 = vmul.f32 %v1531, %v1307
    %v1533 = vadd.f32 %v1529, %v1532
    %s1534 = sld [smem:[#allocation2 + $0x15b]]
    %v1535 = vstv %s1534
    %v1536 = vmul.f32 %v1535, %v1259
    %s1537 = sld [smem:[#allocation2 + $0x15a]]
    %v1538 = vstv %s1537
    %v1539 = vmul.f32 %v1538, %v1312
    %v1540 = vadd.f32 %v1536, %v1539
    %v1541 = vadd.f32 %v1533, %v1540
    %s1542 = sld [smem:[#allocation2 + $0x15d]]
    %v1543 = vstv %s1542
    %v1544 = vmul.f32 %v1543, %v1278
    %s1545 = sld [smem:[#allocation2 + $0x15c]]
    %v1546 = vstv %s1545
    %v1547 = vmul.f32 %v1546, %v1317
    %v1548 = vadd.f32 %v1544, %v1547
    %v1549 = vadd.f32 %v1541, %v1548
    %s1550 = sld [smem:[#allocation2 + $0x15f]]
    %v1551 = vstv %s1550
    %v1552 = vmul.f32 %v1551, %v1297
    %s1553 = sld [smem:[#allocation2 + $0x15e]]
    %v1554 = vstv %s1553
    %v1555 = vmul.f32 %v1554, %v1322
    %v1556 = vadd.f32 %v1552, %v1555
    %v1557 = vadd.f32 %v1549, %v1556
    %s1558 = sld [smem:[#allocation2 + $0x16e]]
    %v1559 = vstv %s1558
    %v1560 = vadd.f32 %v1557, %v1559
    %s1561 = sld [smem:[#allocation2 + $0x161]]
    %v1562 = vstv %s1561
    %v1563 = vmul.f32 %v1562, %v1240
    %s1564 = sld [smem:[#allocation2 + $0x160]]
    %v1565 = vstv %s1564
    %v1566 = vmul.f32 %v1565, %v1307
    %v1567 = vadd.f32 %v1563, %v1566
    %s1568 = sld [smem:[#allocation2 + $0x163]]
    %v1569 = vstv %s1568
    %v1570 = vmul.f32 %v1569, %v1259
    %s1571 = sld [smem:[#allocation2 + $0x162]]
    %v1572 = vstv %s1571
    %v1573 = vmul.f32 %v1572, %v1312
    %v1574 = vadd.f32 %v1570, %v1573
    %v1575 = vadd.f32 %v1567, %v1574
    %s1576 = sld [smem:[#allocation2 + $0x165]]
    %v1577 = vstv %s1576
    %v1578 = vmul.f32 %v1577, %v1278
    %s1579 = sld [smem:[#allocation2 + $0x164]]
    %v1580 = vstv %s1579
    %v1581 = vmul.f32 %v1580, %v1317
    %v1582 = vadd.f32 %v1578, %v1581
    %v1583 = vadd.f32 %v1575, %v1582
    %s1584 = sld [smem:[#allocation2 + $0x167]]
    %v1585 = vstv %s1584
    %v1586 = vmul.f32 %v1585, %v1297
    %s1587 = sld [smem:[#allocation2 + $0x166]]
    %v1588 = vstv %s1587
    %v1589 = vmul.f32 %v1588, %v1322
    %v1590 = vadd.f32 %v1586, %v1589
    %v1591 = vadd.f32 %v1583, %v1590
    %s1592 = sld [smem:[#allocation2 + $0x16f]]
    %v1593 = vstv %s1592
    %v1594 = vadd.f32 %v1591, %v1593
    %v1595 = vtanh.pop %v1356
    %v1596 = vmul.f32 %v1492, 0.5
    %v1597 = vtanh.pop %v1596
    %v1598 = vadd.f32 %v1597, 1.0
    %v1599 = vmul.f32 %v1598, 0.5
    %v1600 = vmul.f32 %v1595, %v1599
    %v1601 = vtanh.pop %v1390
    %v1602 = vmul.f32 %v1526, 0.5
    %v1603 = vtanh.pop %v1602
    %v1604 = vadd.f32 %v1603, 1.0
    %v1605 = vmul.f32 %v1604, 0.5
    %v1606 = vmul.f32 %v1601, %v1605
    %v1607 = vtanh.pop %v1424
    %v1608 = vmul.f32 %v1560, 0.5
    %v1609 = vtanh.pop %v1608
    %v1610 = vadd.f32 %v1609, 1.0
    %v1611 = vmul.f32 %v1610, 0.5
    %v1612 = vmul.f32 %v1607, %v1611
    %v1613 = vtanh.pop %v1458
    %v1614 = vmul.f32 %v1594, 0.5
    %v1615 = vtanh.pop %v1614
    %v1616 = vadd.f32 %v1615, 1.0
    %v1617 = vmul.f32 %v1616, 0.5
    %v1618 = vmul.f32 %v1613, %v1617
    %s1619 = sld [smem:[#allocation2 + $0x170]]
    %v1620 = vstv %s1619
    %v1621 = vmul.f32 %v1620, %v1600
    %v1622 = vadd.f32 %v1240, %v1621
    %s1623 = sld [smem:[#allocation2 + $0x171]]
    %v1624 = vstv %s1623
    %v1625 = vmul.f32 %v1624, %v1606
    %v1626 = vadd.f32 %v1622, %v1625
    %s1627 = sld [smem:[#allocation2 + $0x172]]
    %v1628 = vstv %s1627
    %v1629 = vmul.f32 %v1628, %v1612
    %v1630 = vadd.f32 %v1626, %v1629
    %s1631 = sld [smem:[#allocation2 + $0x173]]
    %v1632 = vstv %s1631
    %v1633 = vmul.f32 %v1632, %v1618
    %v1634 = vadd.f32 %v1630, %v1633
    %s1635 = sld [smem:[#allocation2 + $0x180]]
    %v1636 = vstv %s1635
    %v1637 = vadd.f32 %v1634, %v1636
    %s1638 = sld [smem:[#allocation2 + $0x174]]
    %v1639 = vstv %s1638
    %v1640 = vmul.f32 %v1639, %v1600
    %v1641 = vadd.f32 %v1259, %v1640
    %s1642 = sld [smem:[#allocation2 + $0x175]]
    %v1643 = vstv %s1642
    %v1644 = vmul.f32 %v1643, %v1606
    %v1645 = vadd.f32 %v1641, %v1644
    %s1646 = sld [smem:[#allocation2 + $0x176]]
    %v1647 = vstv %s1646
    %v1648 = vmul.f32 %v1647, %v1612
    %v1649 = vadd.f32 %v1645, %v1648
    %s1650 = sld [smem:[#allocation2 + $0x177]]
    %v1651 = vstv %s1650
    %v1652 = vmul.f32 %v1651, %v1618
    %v1653 = vadd.f32 %v1649, %v1652
    %s1654 = sld [smem:[#allocation2 + $0x181]]
    %v1655 = vstv %s1654
    %v1656 = vadd.f32 %v1653, %v1655
    %s1657 = sld [smem:[#allocation2 + $0x178]]
    %v1658 = vstv %s1657
    %v1659 = vmul.f32 %v1658, %v1600
    %v1660 = vadd.f32 %v1278, %v1659
    %s1661 = sld [smem:[#allocation2 + $0x179]]
    %v1662 = vstv %s1661
    %v1663 = vmul.f32 %v1662, %v1606
    %v1664 = vadd.f32 %v1660, %v1663
    %s1665 = sld [smem:[#allocation2 + $0x17a]]
    %v1666 = vstv %s1665
    %v1667 = vmul.f32 %v1666, %v1612
    %v1668 = vadd.f32 %v1664, %v1667
    %s1669 = sld [smem:[#allocation2 + $0x17b]]
    %v1670 = vstv %s1669
    %v1671 = vmul.f32 %v1670, %v1618
    %v1672 = vadd.f32 %v1668, %v1671
    %s1673 = sld [smem:[#allocation2 + $0x182]]
    %v1674 = vstv %s1673
    %v1675 = vadd.f32 %v1672, %v1674
    %s1676 = sld [smem:[#allocation2 + $0x17c]]
    %v1677 = vstv %s1676
    %v1678 = vmul.f32 %v1677, %v1600
    %v1679 = vadd.f32 %v1297, %v1678
    %s1680 = sld [smem:[#allocation2 + $0x17d]]
    %v1681 = vstv %s1680
    %v1682 = vmul.f32 %v1681, %v1606
    %v1683 = vadd.f32 %v1679, %v1682
    %s1684 = sld [smem:[#allocation2 + $0x17e]]
    %v1685 = vstv %s1684
    %v1686 = vmul.f32 %v1685, %v1612
    %v1687 = vadd.f32 %v1683, %v1686
    %s1688 = sld [smem:[#allocation2 + $0x17f]]
    %v1689 = vstv %s1688
    %v1690 = vmul.f32 %v1689, %v1618
    %v1691 = vadd.f32 %v1687, %v1690
    %s1692 = sld [smem:[#allocation2 + $0x183]]
    %v1693 = vstv %s1692
    %v1694 = vadd.f32 %v1691, %v1693
    %v1695 = vadd.f32 %v1298, %v1637
    %v1696 = vadd.f32 %v1299, %v1656
    %v1697 = vadd.f32 %v1300, %v1675
    %v1698 = vadd.f32 %v1301, %v1694
    %1700 = vrot.lane.b32.xlu0 %v1637, 16
    %v1701 = vpop.permute.xlu0 %1700
    %vm1703 = vcmask 130048
    %v1704 = vsel %vm1703, 0.0, %v1701
    %1706 = vrot.lane.b32.xlu0 %v1656, 16
    %v1707 = vpop.permute.xlu0 %1706
    %v1709 = vsel %vm1703, 0.0, %v1707
    %1711 = vrot.lane.b32.xlu0 %v1675, 16
    %v1712 = vpop.permute.xlu0 %1711
    %v1714 = vsel %vm1703, 0.0, %v1712
    %1716 = vrot.lane.b32.xlu0 %v1694, 16
    %v1717 = vpop.permute.xlu0 %1716
    %v1719 = vsel %vm1703, 0.0, %v1717
    %s1720 = sld [smem:[#allocation2 + $0x185]]
    %v1721 = vstv %s1720
    %v1722 = vmul.f32 %v1721, %v1637
    %s1723 = sld [smem:[#allocation2 + $0x184]]
    %v1724 = vstv %s1723
    %v1725 = vmul.f32 %v1724, %v1704
    %v1726 = vadd.f32 %v1722, %v1725
    %s1727 = sld [smem:[#allocation2 + $0x187]]
    %v1728 = vstv %s1727
    %v1729 = vmul.f32 %v1728, %v1656
    %s1730 = sld [smem:[#allocation2 + $0x186]]
    %v1731 = vstv %s1730
    %v1732 = vmul.f32 %v1731, %v1709
    %v1733 = vadd.f32 %v1729, %v1732
    %v1734 = vadd.f32 %v1726, %v1733
    %s1735 = sld [smem:[#allocation2 + $0x189]]
    %v1736 = vstv %s1735
    %v1737 = vmul.f32 %v1736, %v1675
    %s1738 = sld [smem:[#allocation2 + $0x188]]
    %v1739 = vstv %s1738
    %v1740 = vmul.f32 %v1739, %v1714
    %v1741 = vadd.f32 %v1737, %v1740
    %v1742 = vadd.f32 %v1734, %v1741
    %s1743 = sld [smem:[#allocation2 + $0x18b]]
    %v1744 = vstv %s1743
    %v1745 = vmul.f32 %v1744, %v1694
    %s1746 = sld [smem:[#allocation2 + $0x18a]]
    %v1747 = vstv %s1746
    %v1748 = vmul.f32 %v1747, %v1719
    %v1749 = vadd.f32 %v1745, %v1748
    %v1750 = vadd.f32 %v1742, %v1749
    %s1751 = sld [smem:[#allocation2 + $0x1c4]]
    %v1752 = vstv %s1751
    %v1753 = vadd.f32 %v1750, %v1752
    %s1754 = sld [smem:[#allocation2 + $0x18d]]
    %v1755 = vstv %s1754
    %v1756 = vmul.f32 %v1755, %v1637
    %s1757 = sld [smem:[#allocation2 + $0x18c]]
    %v1758 = vstv %s1757
    %v1759 = vmul.f32 %v1758, %v1704
    %v1760 = vadd.f32 %v1756, %v1759
    %s1761 = sld [smem:[#allocation2 + $0x18f]]
    %v1762 = vstv %s1761
    %v1763 = vmul.f32 %v1762, %v1656
    %s1764 = sld [smem:[#allocation2 + $0x18e]]
    %v1765 = vstv %s1764
    %v1766 = vmul.f32 %v1765, %v1709
    %v1767 = vadd.f32 %v1763, %v1766
    %v1768 = vadd.f32 %v1760, %v1767
    %s1769 = sld [smem:[#allocation2 + $0x191]]
    %v1770 = vstv %s1769
    %v1771 = vmul.f32 %v1770, %v1675
    %s1772 = sld [smem:[#allocation2 + $0x190]]
    %v1773 = vstv %s1772
    %v1774 = vmul.f32 %v1773, %v1714
    %v1775 = vadd.f32 %v1771, %v1774
    %v1776 = vadd.f32 %v1768, %v1775
    %s1777 = sld [smem:[#allocation2 + $0x193]]
    %v1778 = vstv %s1777
    %v1779 = vmul.f32 %v1778, %v1694
    %s1780 = sld [smem:[#allocation2 + $0x192]]
    %v1781 = vstv %s1780
    %v1782 = vmul.f32 %v1781, %v1719
    %v1783 = vadd.f32 %v1779, %v1782
    %v1784 = vadd.f32 %v1776, %v1783
    %s1785 = sld [smem:[#allocation2 + $0x1c5]]
    %v1786 = vstv %s1785
    %v1787 = vadd.f32 %v1784, %v1786
    %s1788 = sld [smem:[#allocation2 + $0x195]]
    %v1789 = vstv %s1788
    %v1790 = vmul.f32 %v1789, %v1637
    %s1791 = sld [smem:[#allocation2 + $0x194]]
    %v1792 = vstv %s1791
    %v1793 = vmul.f32 %v1792, %v1704
    %v1794 = vadd.f32 %v1790, %v1793
    %s1795 = sld [smem:[#allocation2 + $0x197]]
    %v1796 = vstv %s1795
    %v1797 = vmul.f32 %v1796, %v1656
    %s1798 = sld [smem:[#allocation2 + $0x196]]
    %v1799 = vstv %s1798
    %v1800 = vmul.f32 %v1799, %v1709
    %v1801 = vadd.f32 %v1797, %v1800
    %v1802 = vadd.f32 %v1794, %v1801
    %s1803 = sld [smem:[#allocation2 + $0x199]]
    %v1804 = vstv %s1803
    %v1805 = vmul.f32 %v1804, %v1675
    %s1806 = sld [smem:[#allocation2 + $0x198]]
    %v1807 = vstv %s1806
    %v1808 = vmul.f32 %v1807, %v1714
    %v1809 = vadd.f32 %v1805, %v1808
    %v1810 = vadd.f32 %v1802, %v1809
    %s1811 = sld [smem:[#allocation2 + $0x19b]]
    %v1812 = vstv %s1811
    %v1813 = vmul.f32 %v1812, %v1694
    %s1814 = sld [smem:[#allocation2 + $0x19a]]
    %v1815 = vstv %s1814
    %v1816 = vmul.f32 %v1815, %v1719
    %v1817 = vadd.f32 %v1813, %v1816
    %v1818 = vadd.f32 %v1810, %v1817
    %s1819 = sld [smem:[#allocation2 + $0x1c6]]
    %v1820 = vstv %s1819
    %v1821 = vadd.f32 %v1818, %v1820
    %s1822 = sld [smem:[#allocation2 + $0x19d]]
    %v1823 = vstv %s1822
    %v1824 = vmul.f32 %v1823, %v1637
    %s1825 = sld [smem:[#allocation2 + $0x19c]]
    %v1826 = vstv %s1825
    %v1827 = vmul.f32 %v1826, %v1704
    %v1828 = vadd.f32 %v1824, %v1827
    %s1829 = sld [smem:[#allocation2 + $0x19f]]
    %v1830 = vstv %s1829
    %v1831 = vmul.f32 %v1830, %v1656
    %s1832 = sld [smem:[#allocation2 + $0x19e]]
    %v1833 = vstv %s1832
    %v1834 = vmul.f32 %v1833, %v1709
    %v1835 = vadd.f32 %v1831, %v1834
    %v1836 = vadd.f32 %v1828, %v1835
    %s1837 = sld [smem:[#allocation2 + $0x1a1]]
    %v1838 = vstv %s1837
    %v1839 = vmul.f32 %v1838, %v1675
    %s1840 = sld [smem:[#allocation2 + $0x1a0]]
    %v1841 = vstv %s1840
    %v1842 = vmul.f32 %v1841, %v1714
    %v1843 = vadd.f32 %v1839, %v1842
    %v1844 = vadd.f32 %v1836, %v1843
    %s1845 = sld [smem:[#allocation2 + $0x1a3]]
    %v1846 = vstv %s1845
    %v1847 = vmul.f32 %v1846, %v1694
    %s1848 = sld [smem:[#allocation2 + $0x1a2]]
    %v1849 = vstv %s1848
    %v1850 = vmul.f32 %v1849, %v1719
    %v1851 = vadd.f32 %v1847, %v1850
    %v1852 = vadd.f32 %v1844, %v1851
    %s1853 = sld [smem:[#allocation2 + $0x1c7]]
    %v1854 = vstv %s1853
    %v1855 = vadd.f32 %v1852, %v1854
    %s1856 = sld [smem:[#allocation2 + $0x1a5]]
    %v1857 = vstv %s1856
    %v1858 = vmul.f32 %v1857, %v1637
    %s1859 = sld [smem:[#allocation2 + $0x1a4]]
    %v1860 = vstv %s1859
    %v1861 = vmul.f32 %v1860, %v1704
    %v1862 = vadd.f32 %v1858, %v1861
    %s1863 = sld [smem:[#allocation2 + $0x1a7]]
    %v1864 = vstv %s1863
    %v1865 = vmul.f32 %v1864, %v1656
    %s1866 = sld [smem:[#allocation2 + $0x1a6]]
    %v1867 = vstv %s1866
    %v1868 = vmul.f32 %v1867, %v1709
    %v1869 = vadd.f32 %v1865, %v1868
    %v1870 = vadd.f32 %v1862, %v1869
    %s1871 = sld [smem:[#allocation2 + $0x1a9]]
    %v1872 = vstv %s1871
    %v1873 = vmul.f32 %v1872, %v1675
    %s1874 = sld [smem:[#allocation2 + $0x1a8]]
    %v1875 = vstv %s1874
    %v1876 = vmul.f32 %v1875, %v1714
    %v1877 = vadd.f32 %v1873, %v1876
    %v1878 = vadd.f32 %v1870, %v1877
    %s1879 = sld [smem:[#allocation2 + $0x1ab]]
    %v1880 = vstv %s1879
    %v1881 = vmul.f32 %v1880, %v1694
    %s1882 = sld [smem:[#allocation2 + $0x1aa]]
    %v1883 = vstv %s1882
    %v1884 = vmul.f32 %v1883, %v1719
    %v1885 = vadd.f32 %v1881, %v1884
    %v1886 = vadd.f32 %v1878, %v1885
    %s1887 = sld [smem:[#allocation2 + $0x1c8]]
    %v1888 = vstv %s1887
    %v1889 = vadd.f32 %v1886, %v1888
    %s1890 = sld [smem:[#allocation2 + $0x1ad]]
    %v1891 = vstv %s1890
    %v1892 = vmul.f32 %v1891, %v1637
    %s1893 = sld [smem:[#allocation2 + $0x1ac]]
    %v1894 = vstv %s1893
    %v1895 = vmul.f32 %v1894, %v1704
    %v1896 = vadd.f32 %v1892, %v1895
    %s1897 = sld [smem:[#allocation2 + $0x1af]]
    %v1898 = vstv %s1897
    %v1899 = vmul.f32 %v1898, %v1656
    %s1900 = sld [smem:[#allocation2 + $0x1ae]]
    %v1901 = vstv %s1900
    %v1902 = vmul.f32 %v1901, %v1709
    %v1903 = vadd.f32 %v1899, %v1902
    %v1904 = vadd.f32 %v1896, %v1903
    %s1905 = sld [smem:[#allocation2 + $0x1b1]]
    %v1906 = vstv %s1905
    %v1907 = vmul.f32 %v1906, %v1675
    %s1908 = sld [smem:[#allocation2 + $0x1b0]]
    %v1909 = vstv %s1908
    %v1910 = vmul.f32 %v1909, %v1714
    %v1911 = vadd.f32 %v1907, %v1910
    %v1912 = vadd.f32 %v1904, %v1911
    %s1913 = sld [smem:[#allocation2 + $0x1b3]]
    %v1914 = vstv %s1913
    %v1915 = vmul.f32 %v1914, %v1694
    %s1916 = sld [smem:[#allocation2 + $0x1b2]]
    %v1917 = vstv %s1916
    %v1918 = vmul.f32 %v1917, %v1719
    %v1919 = vadd.f32 %v1915, %v1918
    %v1920 = vadd.f32 %v1912, %v1919
    %s1921 = sld [smem:[#allocation2 + $0x1c9]]
    %v1922 = vstv %s1921
    %v1923 = vadd.f32 %v1920, %v1922
    %s1924 = sld [smem:[#allocation2 + $0x1b5]]
    %v1925 = vstv %s1924
    %v1926 = vmul.f32 %v1925, %v1637
    %s1927 = sld [smem:[#allocation2 + $0x1b4]]
    %v1928 = vstv %s1927
    %v1929 = vmul.f32 %v1928, %v1704
    %v1930 = vadd.f32 %v1926, %v1929
    %s1931 = sld [smem:[#allocation2 + $0x1b7]]
    %v1932 = vstv %s1931
    %v1933 = vmul.f32 %v1932, %v1656
    %s1934 = sld [smem:[#allocation2 + $0x1b6]]
    %v1935 = vstv %s1934
    %v1936 = vmul.f32 %v1935, %v1709
    %v1937 = vadd.f32 %v1933, %v1936
    %v1938 = vadd.f32 %v1930, %v1937
    %s1939 = sld [smem:[#allocation2 + $0x1b9]]
    %v1940 = vstv %s1939
    %v1941 = vmul.f32 %v1940, %v1675
    %s1942 = sld [smem:[#allocation2 + $0x1b8]]
    %v1943 = vstv %s1942
    %v1944 = vmul.f32 %v1943, %v1714
    %v1945 = vadd.f32 %v1941, %v1944
    %v1946 = vadd.f32 %v1938, %v1945
    %s1947 = sld [smem:[#allocation2 + $0x1bb]]
    %v1948 = vstv %s1947
    %v1949 = vmul.f32 %v1948, %v1694
    %s1950 = sld [smem:[#allocation2 + $0x1ba]]
    %v1951 = vstv %s1950
    %v1952 = vmul.f32 %v1951, %v1719
    %v1953 = vadd.f32 %v1949, %v1952
    %v1954 = vadd.f32 %v1946, %v1953
    %s1955 = sld [smem:[#allocation2 + $0x1ca]]
    %v1956 = vstv %s1955
    %v1957 = vadd.f32 %v1954, %v1956
    %s1958 = sld [smem:[#allocation2 + $0x1bd]]
    %v1959 = vstv %s1958
    %v1960 = vmul.f32 %v1959, %v1637
    %s1961 = sld [smem:[#allocation2 + $0x1bc]]
    %v1962 = vstv %s1961
    %v1963 = vmul.f32 %v1962, %v1704
    %v1964 = vadd.f32 %v1960, %v1963
    %s1965 = sld [smem:[#allocation2 + $0x1bf]]
    %v1966 = vstv %s1965
    %v1967 = vmul.f32 %v1966, %v1656
    %s1968 = sld [smem:[#allocation2 + $0x1be]]
    %v1969 = vstv %s1968
    %v1970 = vmul.f32 %v1969, %v1709
    %v1971 = vadd.f32 %v1967, %v1970
    %v1972 = vadd.f32 %v1964, %v1971
    %s1973 = sld [smem:[#allocation2 + $0x1c1]]
    %v1974 = vstv %s1973
    %v1975 = vmul.f32 %v1974, %v1675
    %s1976 = sld [smem:[#allocation2 + $0x1c0]]
    %v1977 = vstv %s1976
    %v1978 = vmul.f32 %v1977, %v1714
    %v1979 = vadd.f32 %v1975, %v1978
    %v1980 = vadd.f32 %v1972, %v1979
    %s1981 = sld [smem:[#allocation2 + $0x1c3]]
    %v1982 = vstv %s1981
    %v1983 = vmul.f32 %v1982, %v1694
    %s1984 = sld [smem:[#allocation2 + $0x1c2]]
    %v1985 = vstv %s1984
    %v1986 = vmul.f32 %v1985, %v1719
    %v1987 = vadd.f32 %v1983, %v1986
    %v1988 = vadd.f32 %v1980, %v1987
    %s1989 = sld [smem:[#allocation2 + $0x1cb]]
    %v1990 = vstv %s1989
    %v1991 = vadd.f32 %v1988, %v1990
    %v1992 = vtanh.pop %v1753
    %v1993 = vmul.f32 %v1889, 0.5
    %v1994 = vtanh.pop %v1993
    %v1995 = vadd.f32 %v1994, 1.0
    %v1996 = vmul.f32 %v1995, 0.5
    %v1997 = vmul.f32 %v1992, %v1996
    %v1998 = vtanh.pop %v1787
    %v1999 = vmul.f32 %v1923, 0.5
    %v2000 = vtanh.pop %v1999
    %v2001 = vadd.f32 %v2000, 1.0
    %v2002 = vmul.f32 %v2001, 0.5
    %v2003 = vmul.f32 %v1998, %v2002
    %v2004 = vtanh.pop %v1821
    %v2005 = vmul.f32 %v1957, 0.5
    %v2006 = vtanh.pop %v2005
    %v2007 = vadd.f32 %v2006, 1.0
    %v2008 = vmul.f32 %v2007, 0.5
    %v2009 = vmul.f32 %v2004, %v2008
    %v2010 = vtanh.pop %v1855
    %v2011 = vmul.f32 %v1991, 0.5
    %v2012 = vtanh.pop %v2011
    %v2013 = vadd.f32 %v2012, 1.0
    %v2014 = vmul.f32 %v2013, 0.5
    %v2015 = vmul.f32 %v2010, %v2014
    %s2016 = sld [smem:[#allocation2 + $0x1cc]]
    %v2017 = vstv %s2016
    %v2018 = vmul.f32 %v2017, %v1997
    %v2019 = vadd.f32 %v1637, %v2018
    %s2020 = sld [smem:[#allocation2 + $0x1cd]]
    %v2021 = vstv %s2020
    %v2022 = vmul.f32 %v2021, %v2003
    %v2023 = vadd.f32 %v2019, %v2022
    %s2024 = sld [smem:[#allocation2 + $0x1ce]]
    %v2025 = vstv %s2024
    %v2026 = vmul.f32 %v2025, %v2009
    %v2027 = vadd.f32 %v2023, %v2026
    %s2028 = sld [smem:[#allocation2 + $0x1cf]]
    %v2029 = vstv %s2028
    %v2030 = vmul.f32 %v2029, %v2015
    %v2031 = vadd.f32 %v2027, %v2030
    %s2032 = sld [smem:[#allocation2 + $0x1dc]]
    %v2033 = vstv %s2032
    %v2034 = vadd.f32 %v2031, %v2033
    %s2035 = sld [smem:[#allocation2 + $0x1d0]]
    %v2036 = vstv %s2035
    %v2037 = vmul.f32 %v2036, %v1997
    %v2038 = vadd.f32 %v1656, %v2037
    %s2039 = sld [smem:[#allocation2 + $0x1d1]]
    %v2040 = vstv %s2039
    %v2041 = vmul.f32 %v2040, %v2003
    %v2042 = vadd.f32 %v2038, %v2041
    %s2043 = sld [smem:[#allocation2 + $0x1d2]]
    %v2044 = vstv %s2043
    %v2045 = vmul.f32 %v2044, %v2009
    %v2046 = vadd.f32 %v2042, %v2045
    %s2047 = sld [smem:[#allocation2 + $0x1d3]]
    %v2048 = vstv %s2047
    %v2049 = vmul.f32 %v2048, %v2015
    %v2050 = vadd.f32 %v2046, %v2049
    %s2051 = sld [smem:[#allocation2 + $0x1dd]]
    %v2052 = vstv %s2051
    %v2053 = vadd.f32 %v2050, %v2052
    %s2054 = sld [smem:[#allocation2 + $0x1d4]]
    %v2055 = vstv %s2054
    %v2056 = vmul.f32 %v2055, %v1997
    %v2057 = vadd.f32 %v1675, %v2056
    %s2058 = sld [smem:[#allocation2 + $0x1d5]]
    %v2059 = vstv %s2058
    %v2060 = vmul.f32 %v2059, %v2003
    %v2061 = vadd.f32 %v2057, %v2060
    %s2062 = sld [smem:[#allocation2 + $0x1d6]]
    %v2063 = vstv %s2062
    %v2064 = vmul.f32 %v2063, %v2009
    %v2065 = vadd.f32 %v2061, %v2064
    %s2066 = sld [smem:[#allocation2 + $0x1d7]]
    %v2067 = vstv %s2066
    %v2068 = vmul.f32 %v2067, %v2015
    %v2069 = vadd.f32 %v2065, %v2068
    %s2070 = sld [smem:[#allocation2 + $0x1de]]
    %v2071 = vstv %s2070
    %v2072 = vadd.f32 %v2069, %v2071
    %s2073 = sld [smem:[#allocation2 + $0x1d8]]
    %v2074 = vstv %s2073
    %v2075 = vmul.f32 %v2074, %v1997
    %v2076 = vadd.f32 %v1694, %v2075
    %s2077 = sld [smem:[#allocation2 + $0x1d9]]
    %v2078 = vstv %s2077
    %v2079 = vmul.f32 %v2078, %v2003
    %v2080 = vadd.f32 %v2076, %v2079
    %s2081 = sld [smem:[#allocation2 + $0x1da]]
    %v2082 = vstv %s2081
    %v2083 = vmul.f32 %v2082, %v2009
    %v2084 = vadd.f32 %v2080, %v2083
    %s2085 = sld [smem:[#allocation2 + $0x1db]]
    %v2086 = vstv %s2085
    %v2087 = vmul.f32 %v2086, %v2015
    %v2088 = vadd.f32 %v2084, %v2087
    %s2089 = sld [smem:[#allocation2 + $0x1df]]
    %v2090 = vstv %s2089
    %v2091 = vadd.f32 %v2088, %v2090
    %v2092 = vadd.f32 %v1695, %v2034
    %v2093 = vadd.f32 %v1696, %v2053
    %v2094 = vadd.f32 %v1697, %v2072
    %v2095 = vadd.f32 %v1698, %v2091
    %2097 = vrot.lane.b32.xlu0 %v2034, 32
    %v2098 = vpop.permute.xlu0 %2097
    %vm2100 = vcmask 261120
    %v2101 = vsel %vm2100, 0.0, %v2098
    %2103 = vrot.lane.b32.xlu0 %v2053, 32
    %v2104 = vpop.permute.xlu0 %2103
    %v2106 = vsel %vm2100, 0.0, %v2104
    %2108 = vrot.lane.b32.xlu0 %v2072, 32
    %v2109 = vpop.permute.xlu0 %2108
    %v2111 = vsel %vm2100, 0.0, %v2109
    %2113 = vrot.lane.b32.xlu0 %v2091, 32
    %v2114 = vpop.permute.xlu0 %2113
    %v2116 = vsel %vm2100, 0.0, %v2114
    %s2117 = sld [smem:[#allocation2 + $0x1e1]]
    %v2118 = vstv %s2117
    %v2119 = vmul.f32 %v2118, %v2034
    %s2120 = sld [smem:[#allocation2 + $0x1e0]]
    %v2121 = vstv %s2120
    %v2122 = vmul.f32 %v2121, %v2101
    %v2123 = vadd.f32 %v2119, %v2122
    %s2124 = sld [smem:[#allocation2 + $0x1e3]]
    %v2125 = vstv %s2124
    %v2126 = vmul.f32 %v2125, %v2053
    %s2127 = sld [smem:[#allocation2 + $0x1e2]]
    %v2128 = vstv %s2127
    %v2129 = vmul.f32 %v2128, %v2106
    %v2130 = vadd.f32 %v2126, %v2129
    %v2131 = vadd.f32 %v2123, %v2130
    %s2132 = sld [smem:[#allocation2 + $0x1e5]]
    %v2133 = vstv %s2132
    %v2134 = vmul.f32 %v2133, %v2072
    %s2135 = sld [smem:[#allocation2 + $0x1e4]]
    %v2136 = vstv %s2135
    %v2137 = vmul.f32 %v2136, %v2111
    %v2138 = vadd.f32 %v2134, %v2137
    %v2139 = vadd.f32 %v2131, %v2138
    %s2140 = sld [smem:[#allocation2 + $0x1e7]]
    %v2141 = vstv %s2140
    %v2142 = vmul.f32 %v2141, %v2091
    %s2143 = sld [smem:[#allocation2 + $0x1e6]]
    %v2144 = vstv %s2143
    %v2145 = vmul.f32 %v2144, %v2116
    %v2146 = vadd.f32 %v2142, %v2145
    %v2147 = vadd.f32 %v2139, %v2146
    %s2148 = sld [smem:[#allocation2 + $0x220]]
    %v2149 = vstv %s2148
    %v2150 = vadd.f32 %v2147, %v2149
    %s2151 = sld [smem:[#allocation2 + $0x1e9]]
    %v2152 = vstv %s2151
    %v2153 = vmul.f32 %v2152, %v2034
    %s2154 = sld [smem:[#allocation2 + $0x1e8]]
    %v2155 = vstv %s2154
    %v2156 = vmul.f32 %v2155, %v2101
    %v2157 = vadd.f32 %v2153, %v2156
    %s2158 = sld [smem:[#allocation2 + $0x1eb]]
    %v2159 = vstv %s2158
    %v2160 = vmul.f32 %v2159, %v2053
    %s2161 = sld [smem:[#allocation2 + $0x1ea]]
    %v2162 = vstv %s2161
    %v2163 = vmul.f32 %v2162, %v2106
    %v2164 = vadd.f32 %v2160, %v2163
    %v2165 = vadd.f32 %v2157, %v2164
    %s2166 = sld [smem:[#allocation2 + $0x1ed]]
    %v2167 = vstv %s2166
    %v2168 = vmul.f32 %v2167, %v2072
    %s2169 = sld [smem:[#allocation2 + $0x1ec]]
    %v2170 = vstv %s2169
    %v2171 = vmul.f32 %v2170, %v2111
    %v2172 = vadd.f32 %v2168, %v2171
    %v2173 = vadd.f32 %v2165, %v2172
    %s2174 = sld [smem:[#allocation2 + $0x1ef]]
    %v2175 = vstv %s2174
    %v2176 = vmul.f32 %v2175, %v2091
    %s2177 = sld [smem:[#allocation2 + $0x1ee]]
    %v2178 = vstv %s2177
    %v2179 = vmul.f32 %v2178, %v2116
    %v2180 = vadd.f32 %v2176, %v2179
    %v2181 = vadd.f32 %v2173, %v2180
    %s2182 = sld [smem:[#allocation2 + $0x221]]
    %v2183 = vstv %s2182
    %v2184 = vadd.f32 %v2181, %v2183
    %s2185 = sld [smem:[#allocation2 + $0x1f1]]
    %v2186 = vstv %s2185
    %v2187 = vmul.f32 %v2186, %v2034
    %s2188 = sld [smem:[#allocation2 + $0x1f0]]
    %v2189 = vstv %s2188
    %v2190 = vmul.f32 %v2189, %v2101
    %v2191 = vadd.f32 %v2187, %v2190
    %s2192 = sld [smem:[#allocation2 + $0x1f3]]
    %v2193 = vstv %s2192
    %v2194 = vmul.f32 %v2193, %v2053
    %s2195 = sld [smem:[#allocation2 + $0x1f2]]
    %v2196 = vstv %s2195
    %v2197 = vmul.f32 %v2196, %v2106
    %v2198 = vadd.f32 %v2194, %v2197
    %v2199 = vadd.f32 %v2191, %v2198
    %s2200 = sld [smem:[#allocation2 + $0x1f5]]
    %v2201 = vstv %s2200
    %v2202 = vmul.f32 %v2201, %v2072
    %s2203 = sld [smem:[#allocation2 + $0x1f4]]
    %v2204 = vstv %s2203
    %v2205 = vmul.f32 %v2204, %v2111
    %v2206 = vadd.f32 %v2202, %v2205
    %v2207 = vadd.f32 %v2199, %v2206
    %s2208 = sld [smem:[#allocation2 + $0x1f7]]
    %v2209 = vstv %s2208
    %v2210 = vmul.f32 %v2209, %v2091
    %s2211 = sld [smem:[#allocation2 + $0x1f6]]
    %v2212 = vstv %s2211
    %v2213 = vmul.f32 %v2212, %v2116
    %v2214 = vadd.f32 %v2210, %v2213
    %v2215 = vadd.f32 %v2207, %v2214
    %s2216 = sld [smem:[#allocation2 + $0x222]]
    %v2217 = vstv %s2216
    %v2218 = vadd.f32 %v2215, %v2217
    %s2219 = sld [smem:[#allocation2 + $0x1f9]]
    %v2220 = vstv %s2219
    %v2221 = vmul.f32 %v2220, %v2034
    %s2222 = sld [smem:[#allocation2 + $0x1f8]]
    %v2223 = vstv %s2222
    %v2224 = vmul.f32 %v2223, %v2101
    %v2225 = vadd.f32 %v2221, %v2224
    %s2226 = sld [smem:[#allocation2 + $0x1fb]]
    %v2227 = vstv %s2226
    %v2228 = vmul.f32 %v2227, %v2053
    %s2229 = sld [smem:[#allocation2 + $0x1fa]]
    %v2230 = vstv %s2229
    %v2231 = vmul.f32 %v2230, %v2106
    %v2232 = vadd.f32 %v2228, %v2231
    %v2233 = vadd.f32 %v2225, %v2232
    %s2234 = sld [smem:[#allocation2 + $0x1fd]]
    %v2235 = vstv %s2234
    %v2236 = vmul.f32 %v2235, %v2072
    %s2237 = sld [smem:[#allocation2 + $0x1fc]]
    %v2238 = vstv %s2237
    %v2239 = vmul.f32 %v2238, %v2111
    %v2240 = vadd.f32 %v2236, %v2239
    %v2241 = vadd.f32 %v2233, %v2240
    %s2242 = sld [smem:[#allocation2 + $0x1ff]]
    %v2243 = vstv %s2242
    %v2244 = vmul.f32 %v2243, %v2091
    %s2245 = sld [smem:[#allocation2 + $0x1fe]]
    %v2246 = vstv %s2245
    %v2247 = vmul.f32 %v2246, %v2116
    %v2248 = vadd.f32 %v2244, %v2247
    %v2249 = vadd.f32 %v2241, %v2248
    %s2250 = sld [smem:[#allocation2 + $0x223]]
    %v2251 = vstv %s2250
    %v2252 = vadd.f32 %v2249, %v2251
    %s2253 = sld [smem:[#allocation2 + $0x201]]
    %v2254 = vstv %s2253
    %v2255 = vmul.f32 %v2254, %v2034
    %s2256 = sld [smem:[#allocation2 + $0x200]]
    %v2257 = vstv %s2256
    %v2258 = vmul.f32 %v2257, %v2101
    %v2259 = vadd.f32 %v2255, %v2258
    %s2260 = sld [smem:[#allocation2 + $0x203]]
    %v2261 = vstv %s2260
    %v2262 = vmul.f32 %v2261, %v2053
    %s2263 = sld [smem:[#allocation2 + $0x202]]
    %v2264 = vstv %s2263
    %v2265 = vmul.f32 %v2264, %v2106
    %v2266 = vadd.f32 %v2262, %v2265
    %v2267 = vadd.f32 %v2259, %v2266
    %s2268 = sld [smem:[#allocation2 + $0x205]]
    %v2269 = vstv %s2268
    %v2270 = vmul.f32 %v2269, %v2072
    %s2271 = sld [smem:[#allocation2 + $0x204]]
    %v2272 = vstv %s2271
    %v2273 = vmul.f32 %v2272, %v2111
    %v2274 = vadd.f32 %v2270, %v2273
    %v2275 = vadd.f32 %v2267, %v2274
    %s2276 = sld [smem:[#allocation2 + $0x207]]
    %v2277 = vstv %s2276
    %v2278 = vmul.f32 %v2277, %v2091
    %s2279 = sld [smem:[#allocation2 + $0x206]]
    %v2280 = vstv %s2279
    %v2281 = vmul.f32 %v2280, %v2116
    %v2282 = vadd.f32 %v2278, %v2281
    %v2283 = vadd.f32 %v2275, %v2282
    %s2284 = sld [smem:[#allocation2 + $0x224]]
    %v2285 = vstv %s2284
    %v2286 = vadd.f32 %v2283, %v2285
    %s2287 = sld [smem:[#allocation2 + $0x209]]
    %v2288 = vstv %s2287
    %v2289 = vmul.f32 %v2288, %v2034
    %s2290 = sld [smem:[#allocation2 + $0x208]]
    %v2291 = vstv %s2290
    %v2292 = vmul.f32 %v2291, %v2101
    %v2293 = vadd.f32 %v2289, %v2292
    %s2294 = sld [smem:[#allocation2 + $0x20b]]
    %v2295 = vstv %s2294
    %v2296 = vmul.f32 %v2295, %v2053
    %s2297 = sld [smem:[#allocation2 + $0x20a]]
    %v2298 = vstv %s2297
    %v2299 = vmul.f32 %v2298, %v2106
    %v2300 = vadd.f32 %v2296, %v2299
    %v2301 = vadd.f32 %v2293, %v2300
    %s2302 = sld [smem:[#allocation2 + $0x20d]]
    %v2303 = vstv %s2302
    %v2304 = vmul.f32 %v2303, %v2072
    %s2305 = sld [smem:[#allocation2 + $0x20c]]
    %v2306 = vstv %s2305
    %v2307 = vmul.f32 %v2306, %v2111
    %v2308 = vadd.f32 %v2304, %v2307
    %v2309 = vadd.f32 %v2301, %v2308
    %s2310 = sld [smem:[#allocation2 + $0x20f]]
    %v2311 = vstv %s2310
    %v2312 = vmul.f32 %v2311, %v2091
    %s2313 = sld [smem:[#allocation2 + $0x20e]]
    %v2314 = vstv %s2313
    %v2315 = vmul.f32 %v2314, %v2116
    %v2316 = vadd.f32 %v2312, %v2315
    %v2317 = vadd.f32 %v2309, %v2316
    %s2318 = sld [smem:[#allocation2 + $0x225]]
    %v2319 = vstv %s2318
    %v2320 = vadd.f32 %v2317, %v2319
    %s2321 = sld [smem:[#allocation2 + $0x211]]
    %v2322 = vstv %s2321
    %v2323 = vmul.f32 %v2322, %v2034
    %s2324 = sld [smem:[#allocation2 + $0x210]]
    %v2325 = vstv %s2324
    %v2326 = vmul.f32 %v2325, %v2101
    %v2327 = vadd.f32 %v2323, %v2326
    %s2328 = sld [smem:[#allocation2 + $0x213]]
    %v2329 = vstv %s2328
    %v2330 = vmul.f32 %v2329, %v2053
    %s2331 = sld [smem:[#allocation2 + $0x212]]
    %v2332 = vstv %s2331
    %v2333 = vmul.f32 %v2332, %v2106
    %v2334 = vadd.f32 %v2330, %v2333
    %v2335 = vadd.f32 %v2327, %v2334
    %s2336 = sld [smem:[#allocation2 + $0x215]]
    %v2337 = vstv %s2336
    %v2338 = vmul.f32 %v2337, %v2072
    %s2339 = sld [smem:[#allocation2 + $0x214]]
    %v2340 = vstv %s2339
    %v2341 = vmul.f32 %v2340, %v2111
    %v2342 = vadd.f32 %v2338, %v2341
    %v2343 = vadd.f32 %v2335, %v2342
    %s2344 = sld [smem:[#allocation2 + $0x217]]
    %v2345 = vstv %s2344
    %v2346 = vmul.f32 %v2345, %v2091
    %s2347 = sld [smem:[#allocation2 + $0x216]]
    %v2348 = vstv %s2347
    %v2349 = vmul.f32 %v2348, %v2116
    %v2350 = vadd.f32 %v2346, %v2349
    %v2351 = vadd.f32 %v2343, %v2350
    %s2352 = sld [smem:[#allocation2 + $0x226]]
    %v2353 = vstv %s2352
    %v2354 = vadd.f32 %v2351, %v2353
    %s2355 = sld [smem:[#allocation2 + $0x219]]
    %v2356 = vstv %s2355
    %v2357 = vmul.f32 %v2356, %v2034
    %s2358 = sld [smem:[#allocation2 + $0x218]]
    %v2359 = vstv %s2358
    %v2360 = vmul.f32 %v2359, %v2101
    %v2361 = vadd.f32 %v2357, %v2360
    %s2362 = sld [smem:[#allocation2 + $0x21b]]
    %v2363 = vstv %s2362
    %v2364 = vmul.f32 %v2363, %v2053
    %s2365 = sld [smem:[#allocation2 + $0x21a]]
    %v2366 = vstv %s2365
    %v2367 = vmul.f32 %v2366, %v2106
    %v2368 = vadd.f32 %v2364, %v2367
    %v2369 = vadd.f32 %v2361, %v2368
    %s2370 = sld [smem:[#allocation2 + $0x21d]]
    %v2371 = vstv %s2370
    %v2372 = vmul.f32 %v2371, %v2072
    %s2373 = sld [smem:[#allocation2 + $0x21c]]
    %v2374 = vstv %s2373
    %v2375 = vmul.f32 %v2374, %v2111
    %v2376 = vadd.f32 %v2372, %v2375
    %v2377 = vadd.f32 %v2369, %v2376
    %s2378 = sld [smem:[#allocation2 + $0x21f]]
    %v2379 = vstv %s2378
    %v2380 = vmul.f32 %v2379, %v2091
    %s2381 = sld [smem:[#allocation2 + $0x21e]]
    %v2382 = vstv %s2381
    %v2383 = vmul.f32 %v2382, %v2116
    %v2384 = vadd.f32 %v2380, %v2383
    %v2385 = vadd.f32 %v2377, %v2384
    %s2386 = sld [smem:[#allocation2 + $0x227]]
    %v2387 = vstv %s2386
    %v2388 = vadd.f32 %v2385, %v2387
    %v2389 = vtanh.pop %v2150
    %v2390 = vmul.f32 %v2286, 0.5
    %v2391 = vtanh.pop %v2390
    %v2392 = vadd.f32 %v2391, 1.0
    %v2393 = vmul.f32 %v2392, 0.5
    %v2394 = vmul.f32 %v2389, %v2393
    %v2395 = vtanh.pop %v2184
    %v2396 = vmul.f32 %v2320, 0.5
    %v2397 = vtanh.pop %v2396
    %v2398 = vadd.f32 %v2397, 1.0
    %v2399 = vmul.f32 %v2398, 0.5
    %v2400 = vmul.f32 %v2395, %v2399
    %v2401 = vtanh.pop %v2218
    %v2402 = vmul.f32 %v2354, 0.5
    %v2403 = vtanh.pop %v2402
    %v2404 = vadd.f32 %v2403, 1.0
    %v2405 = vmul.f32 %v2404, 0.5
    %v2406 = vmul.f32 %v2401, %v2405
    %v2407 = vtanh.pop %v2252
    %v2408 = vmul.f32 %v2388, 0.5
    %v2409 = vtanh.pop %v2408
    %v2410 = vadd.f32 %v2409, 1.0
    %v2411 = vmul.f32 %v2410, 0.5
    %v2412 = vmul.f32 %v2407, %v2411
    %s2413 = sld [smem:[#allocation2 + $0x228]]
    %v2414 = vstv %s2413
    %v2415 = vmul.f32 %v2414, %v2394
    %v2416 = vadd.f32 %v2034, %v2415
    %s2417 = sld [smem:[#allocation2 + $0x229]]
    %v2418 = vstv %s2417
    %v2419 = vmul.f32 %v2418, %v2400
    %v2420 = vadd.f32 %v2416, %v2419
    %s2421 = sld [smem:[#allocation2 + $0x22a]]
    %v2422 = vstv %s2421
    %v2423 = vmul.f32 %v2422, %v2406
    %v2424 = vadd.f32 %v2420, %v2423
    %s2425 = sld [smem:[#allocation2 + $0x22b]]
    %v2426 = vstv %s2425
    %v2427 = vmul.f32 %v2426, %v2412
    %v2428 = vadd.f32 %v2424, %v2427
    %s2429 = sld [smem:[#allocation2 + $0x238]]
    %v2430 = vstv %s2429
    %v2431 = vadd.f32 %v2428, %v2430
    %s2432 = sld [smem:[#allocation2 + $0x22c]]
    %v2433 = vstv %s2432
    %v2434 = vmul.f32 %v2433, %v2394
    %v2435 = vadd.f32 %v2053, %v2434
    %s2436 = sld [smem:[#allocation2 + $0x22d]]
    %v2437 = vstv %s2436
    %v2438 = vmul.f32 %v2437, %v2400
    %v2439 = vadd.f32 %v2435, %v2438
    %s2440 = sld [smem:[#allocation2 + $0x22e]]
    %v2441 = vstv %s2440
    %v2442 = vmul.f32 %v2441, %v2406
    %v2443 = vadd.f32 %v2439, %v2442
    %s2444 = sld [smem:[#allocation2 + $0x22f]]
    %v2445 = vstv %s2444
    %v2446 = vmul.f32 %v2445, %v2412
    %v2447 = vadd.f32 %v2443, %v2446
    %s2448 = sld [smem:[#allocation2 + $0x239]]
    %v2449 = vstv %s2448
    %v2450 = vadd.f32 %v2447, %v2449
    %s2451 = sld [smem:[#allocation2 + $0x230]]
    %v2452 = vstv %s2451
    %v2453 = vmul.f32 %v2452, %v2394
    %v2454 = vadd.f32 %v2072, %v2453
    %s2455 = sld [smem:[#allocation2 + $0x231]]
    %v2456 = vstv %s2455
    %v2457 = vmul.f32 %v2456, %v2400
    %v2458 = vadd.f32 %v2454, %v2457
    %s2459 = sld [smem:[#allocation2 + $0x232]]
    %v2460 = vstv %s2459
    %v2461 = vmul.f32 %v2460, %v2406
    %v2462 = vadd.f32 %v2458, %v2461
    %s2463 = sld [smem:[#allocation2 + $0x233]]
    %v2464 = vstv %s2463
    %v2465 = vmul.f32 %v2464, %v2412
    %v2466 = vadd.f32 %v2462, %v2465
    %s2467 = sld [smem:[#allocation2 + $0x23a]]
    %v2468 = vstv %s2467
    %v2469 = vadd.f32 %v2466, %v2468
    %s2470 = sld [smem:[#allocation2 + $0x234]]
    %v2471 = vstv %s2470
    %v2472 = vmul.f32 %v2471, %v2394
    %v2473 = vadd.f32 %v2091, %v2472
    %s2474 = sld [smem:[#allocation2 + $0x235]]
    %v2475 = vstv %s2474
    %v2476 = vmul.f32 %v2475, %v2400
    %v2477 = vadd.f32 %v2473, %v2476
    %s2478 = sld [smem:[#allocation2 + $0x236]]
    %v2479 = vstv %s2478
    %v2480 = vmul.f32 %v2479, %v2406
    %v2481 = vadd.f32 %v2477, %v2480
    %s2482 = sld [smem:[#allocation2 + $0x237]]
    %v2483 = vstv %s2482
    %v2484 = vmul.f32 %v2483, %v2412
    %v2485 = vadd.f32 %v2481, %v2484
    %s2486 = sld [smem:[#allocation2 + $0x23b]]
    %v2487 = vstv %s2486
    %v2488 = vadd.f32 %v2485, %v2487
    %v2489 = vadd.f32 %v2092, %v2431
    %v2490 = vadd.f32 %v2093, %v2450
    %v2491 = vadd.f32 %v2094, %v2469
    %v2492 = vadd.f32 %v2095, %v2488
    %2494 = vrot.lane.b32.xlu0 %v2431, 64
    %v2495 = vpop.permute.xlu0 %2494
    %vm2497 = vcmask 523264
    %v2498 = vsel %vm2497, 0.0, %v2495
    %2500 = vrot.lane.b32.xlu0 %v2450, 64
    %v2501 = vpop.permute.xlu0 %2500
    %v2503 = vsel %vm2497, 0.0, %v2501
    %2505 = vrot.lane.b32.xlu0 %v2469, 64
    %v2506 = vpop.permute.xlu0 %2505
    %v2508 = vsel %vm2497, 0.0, %v2506
    %2510 = vrot.lane.b32.xlu0 %v2488, 64
    %v2511 = vpop.permute.xlu0 %2510
    %v2513 = vsel %vm2497, 0.0, %v2511
    %s2514 = sld [smem:[#allocation2 + $0x23d]]
    %v2515 = vstv %s2514
    %v2516 = vmul.f32 %v2515, %v2431
    %s2517 = sld [smem:[#allocation2 + $0x23c]]
    %v2518 = vstv %s2517
    %v2519 = vmul.f32 %v2518, %v2498
    %v2520 = vadd.f32 %v2516, %v2519
    %s2521 = sld [smem:[#allocation2 + $0x23f]]
    %v2522 = vstv %s2521
    %v2523 = vmul.f32 %v2522, %v2450
    %s2524 = sld [smem:[#allocation2 + $0x23e]]
    %v2525 = vstv %s2524
    %v2526 = vmul.f32 %v2525, %v2503
    %v2527 = vadd.f32 %v2523, %v2526
    %v2528 = vadd.f32 %v2520, %v2527
    %s2529 = sld [smem:[#allocation2 + $0x241]]
    %v2530 = vstv %s2529
    %v2531 = vmul.f32 %v2530, %v2469
    %s2532 = sld [smem:[#allocation2 + $0x240]]
    %v2533 = vstv %s2532
    %v2534 = vmul.f32 %v2533, %v2508
    %v2535 = vadd.f32 %v2531, %v2534
    %v2536 = vadd.f32 %v2528, %v2535
    %s2537 = sld [smem:[#allocation2 + $0x243]]
    %v2538 = vstv %s2537
    %v2539 = vmul.f32 %v2538, %v2488
    %s2540 = sld [smem:[#allocation2 + $0x242]]
    %v2541 = vstv %s2540
    %v2542 = vmul.f32 %v2541, %v2513
    %v2543 = vadd.f32 %v2539, %v2542
    %v2544 = vadd.f32 %v2536, %v2543
    %s2545 = sld [smem:[#allocation2 + $0x27c]]
    %v2546 = vstv %s2545
    %v2547 = vadd.f32 %v2544, %v2546
    %s2548 = sld [smem:[#allocation2 + $0x245]]
    %v2549 = vstv %s2548
    %v2550 = vmul.f32 %v2549, %v2431
    %s2551 = sld [smem:[#allocation2 + $0x244]]
    %v2552 = vstv %s2551
    %v2553 = vmul.f32 %v2552, %v2498
    %v2554 = vadd.f32 %v2550, %v2553
    %s2555 = sld [smem:[#allocation2 + $0x247]]
    %v2556 = vstv %s2555
    %v2557 = vmul.f32 %v2556, %v2450
    %s2558 = sld [smem:[#allocation2 + $0x246]]
    %v2559 = vstv %s2558
    %v2560 = vmul.f32 %v2559, %v2503
    %v2561 = vadd.f32 %v2557, %v2560
    %v2562 = vadd.f32 %v2554, %v2561
    %s2563 = sld [smem:[#allocation2 + $0x249]]
    %v2564 = vstv %s2563
    %v2565 = vmul.f32 %v2564, %v2469
    %s2566 = sld [smem:[#allocation2 + $0x248]]
    %v2567 = vstv %s2566
    %v2568 = vmul.f32 %v2567, %v2508
    %v2569 = vadd.f32 %v2565, %v2568
    %v2570 = vadd.f32 %v2562, %v2569
    %s2571 = sld [smem:[#allocation2 + $0x24b]]
    %v2572 = vstv %s2571
    %v2573 = vmul.f32 %v2572, %v2488
    %s2574 = sld [smem:[#allocation2 + $0x24a]]
    %v2575 = vstv %s2574
    %v2576 = vmul.f32 %v2575, %v2513
    %v2577 = vadd.f32 %v2573, %v2576
    %v2578 = vadd.f32 %v2570, %v2577
    %s2579 = sld [smem:[#allocation2 + $0x27d]]
    %v2580 = vstv %s2579
    %v2581 = vadd.f32 %v2578, %v2580
    %s2582 = sld [smem:[#allocation2 + $0x24d]]
    %v2583 = vstv %s2582
    %v2584 = vmul.f32 %v2583, %v2431
    %s2585 = sld [smem:[#allocation2 + $0x24c]]
    %v2586 = vstv %s2585
    %v2587 = vmul.f32 %v2586, %v2498
    %v2588 = vadd.f32 %v2584, %v2587
    %s2589 = sld [smem:[#allocation2 + $0x24f]]
    %v2590 = vstv %s2589
    %v2591 = vmul.f32 %v2590, %v2450
    %s2592 = sld [smem:[#allocation2 + $0x24e]]
    %v2593 = vstv %s2592
    %v2594 = vmul.f32 %v2593, %v2503
    %v2595 = vadd.f32 %v2591, %v2594
    %v2596 = vadd.f32 %v2588, %v2595
    %s2597 = sld [smem:[#allocation2 + $0x251]]
    %v2598 = vstv %s2597
    %v2599 = vmul.f32 %v2598, %v2469
    %s2600 = sld [smem:[#allocation2 + $0x250]]
    %v2601 = vstv %s2600
    %v2602 = vmul.f32 %v2601, %v2508
    %v2603 = vadd.f32 %v2599, %v2602
    %v2604 = vadd.f32 %v2596, %v2603
    %s2605 = sld [smem:[#allocation2 + $0x253]]
    %v2606 = vstv %s2605
    %v2607 = vmul.f32 %v2606, %v2488
    %s2608 = sld [smem:[#allocation2 + $0x252]]
    %v2609 = vstv %s2608
    %v2610 = vmul.f32 %v2609, %v2513
    %v2611 = vadd.f32 %v2607, %v2610
    %v2612 = vadd.f32 %v2604, %v2611
    %s2613 = sld [smem:[#allocation2 + $0x27e]]
    %v2614 = vstv %s2613
    %v2615 = vadd.f32 %v2612, %v2614
    %s2616 = sld [smem:[#allocation2 + $0x255]]
    %v2617 = vstv %s2616
    %v2618 = vmul.f32 %v2617, %v2431
    %s2619 = sld [smem:[#allocation2 + $0x254]]
    %v2620 = vstv %s2619
    %v2621 = vmul.f32 %v2620, %v2498
    %v2622 = vadd.f32 %v2618, %v2621
    %s2623 = sld [smem:[#allocation2 + $0x257]]
    %v2624 = vstv %s2623
    %v2625 = vmul.f32 %v2624, %v2450
    %s2626 = sld [smem:[#allocation2 + $0x256]]
    %v2627 = vstv %s2626
    %v2628 = vmul.f32 %v2627, %v2503
    %v2629 = vadd.f32 %v2625, %v2628
    %v2630 = vadd.f32 %v2622, %v2629
    %s2631 = sld [smem:[#allocation2 + $0x259]]
    %v2632 = vstv %s2631
    %v2633 = vmul.f32 %v2632, %v2469
    %s2634 = sld [smem:[#allocation2 + $0x258]]
    %v2635 = vstv %s2634
    %v2636 = vmul.f32 %v2635, %v2508
    %v2637 = vadd.f32 %v2633, %v2636
    %v2638 = vadd.f32 %v2630, %v2637
    %s2639 = sld [smem:[#allocation2 + $0x25b]]
    %v2640 = vstv %s2639
    %v2641 = vmul.f32 %v2640, %v2488
    %s2642 = sld [smem:[#allocation2 + $0x25a]]
    %v2643 = vstv %s2642
    %v2644 = vmul.f32 %v2643, %v2513
    %v2645 = vadd.f32 %v2641, %v2644
    %v2646 = vadd.f32 %v2638, %v2645
    %s2647 = sld [smem:[#allocation2 + $0x27f]]
    %v2648 = vstv %s2647
    %v2649 = vadd.f32 %v2646, %v2648
    %s2650 = sld [smem:[#allocation2 + $0x25d]]
    %v2651 = vstv %s2650
    %v2652 = vmul.f32 %v2651, %v2431
    %s2653 = sld [smem:[#allocation2 + $0x25c]]
    %v2654 = vstv %s2653
    %v2655 = vmul.f32 %v2654, %v2498
    %v2656 = vadd.f32 %v2652, %v2655
    %s2657 = sld [smem:[#allocation2 + $0x25f]]
    %v2658 = vstv %s2657
    %v2659 = vmul.f32 %v2658, %v2450
    %s2660 = sld [smem:[#allocation2 + $0x25e]]
    %v2661 = vstv %s2660
    %v2662 = vmul.f32 %v2661, %v2503
    %v2663 = vadd.f32 %v2659, %v2662
    %v2664 = vadd.f32 %v2656, %v2663
    %s2665 = sld [smem:[#allocation2 + $0x261]]
    %v2666 = vstv %s2665
    %v2667 = vmul.f32 %v2666, %v2469
    %s2668 = sld [smem:[#allocation2 + $0x260]]
    %v2669 = vstv %s2668
    %v2670 = vmul.f32 %v2669, %v2508
    %v2671 = vadd.f32 %v2667, %v2670
    %v2672 = vadd.f32 %v2664, %v2671
    %s2673 = sld [smem:[#allocation2 + $0x263]]
    %v2674 = vstv %s2673
    %v2675 = vmul.f32 %v2674, %v2488
    %s2676 = sld [smem:[#allocation2 + $0x262]]
    %v2677 = vstv %s2676
    %v2678 = vmul.f32 %v2677, %v2513
    %v2679 = vadd.f32 %v2675, %v2678
    %v2680 = vadd.f32 %v2672, %v2679
    %s2681 = sld [smem:[#allocation2 + $0x280]]
    %v2682 = vstv %s2681
    %v2683 = vadd.f32 %v2680, %v2682
    %s2684 = sld [smem:[#allocation2 + $0x265]]
    %v2685 = vstv %s2684
    %v2686 = vmul.f32 %v2685, %v2431
    %s2687 = sld [smem:[#allocation2 + $0x264]]
    %v2688 = vstv %s2687
    %v2689 = vmul.f32 %v2688, %v2498
    %v2690 = vadd.f32 %v2686, %v2689
    %s2691 = sld [smem:[#allocation2 + $0x267]]
    %v2692 = vstv %s2691
    %v2693 = vmul.f32 %v2692, %v2450
    %s2694 = sld [smem:[#allocation2 + $0x266]]
    %v2695 = vstv %s2694
    %v2696 = vmul.f32 %v2695, %v2503
    %v2697 = vadd.f32 %v2693, %v2696
    %v2698 = vadd.f32 %v2690, %v2697
    %s2699 = sld [smem:[#allocation2 + $0x269]]
    %v2700 = vstv %s2699
    %v2701 = vmul.f32 %v2700, %v2469
    %s2702 = sld [smem:[#allocation2 + $0x268]]
    %v2703 = vstv %s2702
    %v2704 = vmul.f32 %v2703, %v2508
    %v2705 = vadd.f32 %v2701, %v2704
    %v2706 = vadd.f32 %v2698, %v2705
    %s2707 = sld [smem:[#allocation2 + $0x26b]]
    %v2708 = vstv %s2707
    %v2709 = vmul.f32 %v2708, %v2488
    %s2710 = sld [smem:[#allocation2 + $0x26a]]
    %v2711 = vstv %s2710
    %v2712 = vmul.f32 %v2711, %v2513
    %v2713 = vadd.f32 %v2709, %v2712
    %v2714 = vadd.f32 %v2706, %v2713
    %s2715 = sld [smem:[#allocation2 + $0x281]]
    %v2716 = vstv %s2715
    %v2717 = vadd.f32 %v2714, %v2716
    %s2718 = sld [smem:[#allocation2 + $0x26d]]
    %v2719 = vstv %s2718
    %v2720 = vmul.f32 %v2719, %v2431
    %s2721 = sld [smem:[#allocation2 + $0x26c]]
    %v2722 = vstv %s2721
    %v2723 = vmul.f32 %v2722, %v2498
    %v2724 = vadd.f32 %v2720, %v2723
    %s2725 = sld [smem:[#allocation2 + $0x26f]]
    %v2726 = vstv %s2725
    %v2727 = vmul.f32 %v2726, %v2450
    %s2728 = sld [smem:[#allocation2 + $0x26e]]
    %v2729 = vstv %s2728
    %v2730 = vmul.f32 %v2729, %v2503
    %v2731 = vadd.f32 %v2727, %v2730
    %v2732 = vadd.f32 %v2724, %v2731
    %s2733 = sld [smem:[#allocation2 + $0x271]]
    %v2734 = vstv %s2733
    %v2735 = vmul.f32 %v2734, %v2469
    %s2736 = sld [smem:[#allocation2 + $0x270]]
    %v2737 = vstv %s2736
    %v2738 = vmul.f32 %v2737, %v2508
    %v2739 = vadd.f32 %v2735, %v2738
    %v2740 = vadd.f32 %v2732, %v2739
    %s2741 = sld [smem:[#allocation2 + $0x273]]
    %v2742 = vstv %s2741
    %v2743 = vmul.f32 %v2742, %v2488
    %s2744 = sld [smem:[#allocation2 + $0x272]]
    %v2745 = vstv %s2744
    %v2746 = vmul.f32 %v2745, %v2513
    %v2747 = vadd.f32 %v2743, %v2746
    %v2748 = vadd.f32 %v2740, %v2747
    %s2749 = sld [smem:[#allocation2 + $0x282]]
    %v2750 = vstv %s2749
    %v2751 = vadd.f32 %v2748, %v2750
    %s2752 = sld [smem:[#allocation2 + $0x275]]
    %v2753 = vstv %s2752
    %v2754 = vmul.f32 %v2753, %v2431
    %s2755 = sld [smem:[#allocation2 + $0x274]]
    %v2756 = vstv %s2755
    %v2757 = vmul.f32 %v2756, %v2498
    %v2758 = vadd.f32 %v2754, %v2757
    %s2759 = sld [smem:[#allocation2 + $0x277]]
    %v2760 = vstv %s2759
    %v2761 = vmul.f32 %v2760, %v2450
    %s2762 = sld [smem:[#allocation2 + $0x276]]
    %v2763 = vstv %s2762
    %v2764 = vmul.f32 %v2763, %v2503
    %v2765 = vadd.f32 %v2761, %v2764
    %v2766 = vadd.f32 %v2758, %v2765
    %s2767 = sld [smem:[#allocation2 + $0x279]]
    %v2768 = vstv %s2767
    %v2769 = vmul.f32 %v2768, %v2469
    %s2770 = sld [smem:[#allocation2 + $0x278]]
    %v2771 = vstv %s2770
    %v2772 = vmul.f32 %v2771, %v2508
    %v2773 = vadd.f32 %v2769, %v2772
    %v2774 = vadd.f32 %v2766, %v2773
    %s2775 = sld [smem:[#allocation2 + $0x27b]]
    %v2776 = vstv %s2775
    %v2777 = vmul.f32 %v2776, %v2488
    %s2778 = sld [smem:[#allocation2 + $0x27a]]
    %v2779 = vstv %s2778
    %v2780 = vmul.f32 %v2779, %v2513
    %v2781 = vadd.f32 %v2777, %v2780
    %v2782 = vadd.f32 %v2774, %v2781
    %s2783 = sld [smem:[#allocation2 + $0x283]]
    %v2784 = vstv %s2783
    %v2785 = vadd.f32 %v2782, %v2784
    %v2786 = vtanh.pop %v2547
    %v2787 = vmul.f32 %v2683, 0.5
    %v2788 = vtanh.pop %v2787
    %v2789 = vadd.f32 %v2788, 1.0
    %v2790 = vmul.f32 %v2789, 0.5
    %v2791 = vmul.f32 %v2786, %v2790
    %v2792 = vtanh.pop %v2581
    %v2793 = vmul.f32 %v2717, 0.5
    %v2794 = vtanh.pop %v2793
    %v2795 = vadd.f32 %v2794, 1.0
    %v2796 = vmul.f32 %v2795, 0.5
    %v2797 = vmul.f32 %v2792, %v2796
    %v2798 = vtanh.pop %v2615
    %v2799 = vmul.f32 %v2751, 0.5
    %v2800 = vtanh.pop %v2799
    %v2801 = vadd.f32 %v2800, 1.0
    %v2802 = vmul.f32 %v2801, 0.5
    %v2803 = vmul.f32 %v2798, %v2802
    %v2804 = vtanh.pop %v2649
    %v2805 = vmul.f32 %v2785, 0.5
    %v2806 = vtanh.pop %v2805
    %v2807 = vadd.f32 %v2806, 1.0
    %v2808 = vmul.f32 %v2807, 0.5
    %v2809 = vmul.f32 %v2804, %v2808
    %s2810 = sld [smem:[#allocation2 + $0x284]]
    %v2811 = vstv %s2810
    %v2812 = vmul.f32 %v2811, %v2791
    %v2813 = vadd.f32 %v2431, %v2812
    %s2814 = sld [smem:[#allocation2 + $0x285]]
    %v2815 = vstv %s2814
    %v2816 = vmul.f32 %v2815, %v2797
    %v2817 = vadd.f32 %v2813, %v2816
    %s2818 = sld [smem:[#allocation2 + $0x286]]
    %v2819 = vstv %s2818
    %v2820 = vmul.f32 %v2819, %v2803
    %v2821 = vadd.f32 %v2817, %v2820
    %s2822 = sld [smem:[#allocation2 + $0x287]]
    %v2823 = vstv %s2822
    %v2824 = vmul.f32 %v2823, %v2809
    %v2825 = vadd.f32 %v2821, %v2824
    %s2826 = sld [smem:[#allocation2 + $0x294]]
    %v2827 = vstv %s2826
    %v2828 = vadd.f32 %v2825, %v2827
    %s2829 = sld [smem:[#allocation2 + $0x288]]
    %v2830 = vstv %s2829
    %v2831 = vmul.f32 %v2830, %v2791
    %v2832 = vadd.f32 %v2450, %v2831
    %s2833 = sld [smem:[#allocation2 + $0x289]]
    %v2834 = vstv %s2833
    %v2835 = vmul.f32 %v2834, %v2797
    %v2836 = vadd.f32 %v2832, %v2835
    %s2837 = sld [smem:[#allocation2 + $0x28a]]
    %v2838 = vstv %s2837
    %v2839 = vmul.f32 %v2838, %v2803
    %v2840 = vadd.f32 %v2836, %v2839
    %s2841 = sld [smem:[#allocation2 + $0x28b]]
    %v2842 = vstv %s2841
    %v2843 = vmul.f32 %v2842, %v2809
    %v2844 = vadd.f32 %v2840, %v2843
    %s2845 = sld [smem:[#allocation2 + $0x295]]
    %v2846 = vstv %s2845
    %v2847 = vadd.f32 %v2844, %v2846
    %s2848 = sld [smem:[#allocation2 + $0x28c]]
    %v2849 = vstv %s2848
    %v2850 = vmul.f32 %v2849, %v2791
    %v2851 = vadd.f32 %v2469, %v2850
    %s2852 = sld [smem:[#allocation2 + $0x28d]]
    %v2853 = vstv %s2852
    %v2854 = vmul.f32 %v2853, %v2797
    %v2855 = vadd.f32 %v2851, %v2854
    %s2856 = sld [smem:[#allocation2 + $0x28e]]
    %v2857 = vstv %s2856
    %v2858 = vmul.f32 %v2857, %v2803
    %v2859 = vadd.f32 %v2855, %v2858
    %s2860 = sld [smem:[#allocation2 + $0x28f]]
    %v2861 = vstv %s2860
    %v2862 = vmul.f32 %v2861, %v2809
    %v2863 = vadd.f32 %v2859, %v2862
    %s2864 = sld [smem:[#allocation2 + $0x296]]
    %v2865 = vstv %s2864
    %v2866 = vadd.f32 %v2863, %v2865
    %s2867 = sld [smem:[#allocation2 + $0x290]]
    %v2868 = vstv %s2867
    %v2869 = vmul.f32 %v2868, %v2791
    %v2870 = vadd.f32 %v2488, %v2869
    %s2871 = sld [smem:[#allocation2 + $0x291]]
    %v2872 = vstv %s2871
    %v2873 = vmul.f32 %v2872, %v2797
    %v2874 = vadd.f32 %v2870, %v2873
    %s2875 = sld [smem:[#allocation2 + $0x292]]
    %v2876 = vstv %s2875
    %v2877 = vmul.f32 %v2876, %v2803
    %v2878 = vadd.f32 %v2874, %v2877
    %s2879 = sld [smem:[#allocation2 + $0x293]]
    %v2880 = vstv %s2879
    %v2881 = vmul.f32 %v2880, %v2809
    %v2882 = vadd.f32 %v2878, %v2881
    %s2883 = sld [smem:[#allocation2 + $0x297]]
    %v2884 = vstv %s2883
    %v2885 = vadd.f32 %v2882, %v2884
    %v2886 = vadd.f32 %v2489, %v2828
    %v2887 = vadd.f32 %v2490, %v2847
    %v2888 = vadd.f32 %v2491, %v2866
    %v2889 = vadd.f32 %v2492, %v2885
    %s2890 = sld [smem:[#allocation2 + $0x299]]
    %v2891 = vstv %s2890
    %v2892 = vmul.f32 %v2891, %v2828
    %s2893 = sld [smem:[#allocation2 + $0x29b]]
    %v2894 = vstv %s2893
    %v2895 = vmul.f32 %v2894, %v2847
    %v2896 = vadd.f32 %v2892, %v2895
    %s2897 = sld [smem:[#allocation2 + $0x29d]]
    %v2898 = vstv %s2897
    %v2899 = vmul.f32 %v2898, %v2866
    %v2900 = vadd.f32 %v2896, %v2899
    %s2901 = sld [smem:[#allocation2 + $0x29f]]
    %v2902 = vstv %s2901
    %v2903 = vmul.f32 %v2902, %v2885
    %v2904 = vadd.f32 %v2900, %v2903
    %s2905 = sld [smem:[#allocation2 + $0x2d8]]
    %v2906 = vstv %s2905
    %v2907 = vadd.f32 %v2904, %v2906
    %s2908 = sld [smem:[#allocation2 + $0x2a1]]
    %v2909 = vstv %s2908
    %v2910 = vmul.f32 %v2909, %v2828
    %s2911 = sld [smem:[#allocation2 + $0x2a3]]
    %v2912 = vstv %s2911
    %v2913 = vmul.f32 %v2912, %v2847
    %v2914 = vadd.f32 %v2910, %v2913
    %s2915 = sld [smem:[#allocation2 + $0x2a5]]
    %v2916 = vstv %s2915
    %v2917 = vmul.f32 %v2916, %v2866
    %v2918 = vadd.f32 %v2914, %v2917
    %s2919 = sld [smem:[#allocation2 + $0x2a7]]
    %v2920 = vstv %s2919
    %v2921 = vmul.f32 %v2920, %v2885
    %v2922 = vadd.f32 %v2918, %v2921
    %s2923 = sld [smem:[#allocation2 + $0x2d9]]
    %v2924 = vstv %s2923
    %v2925 = vadd.f32 %v2922, %v2924
    %s2926 = sld [smem:[#allocation2 + $0x2a9]]
    %v2927 = vstv %s2926
    %v2928 = vmul.f32 %v2927, %v2828
    %s2929 = sld [smem:[#allocation2 + $0x2ab]]
    %v2930 = vstv %s2929
    %v2931 = vmul.f32 %v2930, %v2847
    %v2932 = vadd.f32 %v2928, %v2931
    %s2933 = sld [smem:[#allocation2 + $0x2ad]]
    %v2934 = vstv %s2933
    %v2935 = vmul.f32 %v2934, %v2866
    %v2936 = vadd.f32 %v2932, %v2935
    %s2937 = sld [smem:[#allocation2 + $0x2af]]
    %v2938 = vstv %s2937
    %v2939 = vmul.f32 %v2938, %v2885
    %v2940 = vadd.f32 %v2936, %v2939
    %s2941 = sld [smem:[#allocation2 + $0x2da]]
    %v2942 = vstv %s2941
    %v2943 = vadd.f32 %v2940, %v2942
    %s2944 = sld [smem:[#allocation2 + $0x2b1]]
    %v2945 = vstv %s2944
    %v2946 = vmul.f32 %v2945, %v2828
    %s2947 = sld [smem:[#allocation2 + $0x2b3]]
    %v2948 = vstv %s2947
    %v2949 = vmul.f32 %v2948, %v2847
    %v2950 = vadd.f32 %v2946, %v2949
    %s2951 = sld [smem:[#allocation2 + $0x2b5]]
    %v2952 = vstv %s2951
    %v2953 = vmul.f32 %v2952, %v2866
    %v2954 = vadd.f32 %v2950, %v2953
    %s2955 = sld [smem:[#allocation2 + $0x2b7]]
    %v2956 = vstv %s2955
    %v2957 = vmul.f32 %v2956, %v2885
    %v2958 = vadd.f32 %v2954, %v2957
    %s2959 = sld [smem:[#allocation2 + $0x2db]]
    %v2960 = vstv %s2959
    %v2961 = vadd.f32 %v2958, %v2960
    %s2962 = sld [smem:[#allocation2 + $0x2b9]]
    %v2963 = vstv %s2962
    %v2964 = vmul.f32 %v2963, %v2828
    %s2965 = sld [smem:[#allocation2 + $0x2bb]]
    %v2966 = vstv %s2965
    %v2967 = vmul.f32 %v2966, %v2847
    %v2968 = vadd.f32 %v2964, %v2967
    %s2969 = sld [smem:[#allocation2 + $0x2bd]]
    %v2970 = vstv %s2969
    %v2971 = vmul.f32 %v2970, %v2866
    %v2972 = vadd.f32 %v2968, %v2971
    %s2973 = sld [smem:[#allocation2 + $0x2bf]]
    %v2974 = vstv %s2973
    %v2975 = vmul.f32 %v2974, %v2885
    %v2976 = vadd.f32 %v2972, %v2975
    %s2977 = sld [smem:[#allocation2 + $0x2dc]]
    %v2978 = vstv %s2977
    %v2979 = vadd.f32 %v2976, %v2978
    %s2980 = sld [smem:[#allocation2 + $0x2c1]]
    %v2981 = vstv %s2980
    %v2982 = vmul.f32 %v2981, %v2828
    %s2983 = sld [smem:[#allocation2 + $0x2c3]]
    %v2984 = vstv %s2983
    %v2985 = vmul.f32 %v2984, %v2847
    %v2986 = vadd.f32 %v2982, %v2985
    %s2987 = sld [smem:[#allocation2 + $0x2c5]]
    %v2988 = vstv %s2987
    %v2989 = vmul.f32 %v2988, %v2866
    %v2990 = vadd.f32 %v2986, %v2989
    %s2991 = sld [smem:[#allocation2 + $0x2c7]]
    %v2992 = vstv %s2991
    %v2993 = vmul.f32 %v2992, %v2885
    %v2994 = vadd.f32 %v2990, %v2993
    %s2995 = sld [smem:[#allocation2 + $0x2dd]]
    %v2996 = vstv %s2995
    %v2997 = vadd.f32 %v2994, %v2996
    %s2998 = sld [smem:[#allocation2 + $0x2c9]]
    %v2999 = vstv %s2998
    %v3000 = vmul.f32 %v2999, %v2828
    %s3001 = sld [smem:[#allocation2 + $0x2cb]]
    %v3002 = vstv %s3001
    %v3003 = vmul.f32 %v3002, %v2847
    %v3004 = vadd.f32 %v3000, %v3003
    %s3005 = sld [smem:[#allocation2 + $0x2cd]]
    %v3006 = vstv %s3005
    %v3007 = vmul.f32 %v3006, %v2866
    %v3008 = vadd.f32 %v3004, %v3007
    %s3009 = sld [smem:[#allocation2 + $0x2cf]]
    %v3010 = vstv %s3009
    %v3011 = vmul.f32 %v3010, %v2885
    %v3012 = vadd.f32 %v3008, %v3011
    %s3013 = sld [smem:[#allocation2 + $0x2de]]
    %v3014 = vstv %s3013
    %v3015 = vadd.f32 %v3012, %v3014
    %s3016 = sld [smem:[#allocation2 + $0x2d1]]
    %v3017 = vstv %s3016
    %v3018 = vmul.f32 %v3017, %v2828
    %s3019 = sld [smem:[#allocation2 + $0x2d3]]
    %v3020 = vstv %s3019
    %v3021 = vmul.f32 %v3020, %v2847
    %v3022 = vadd.f32 %v3018, %v3021
    %s3023 = sld [smem:[#allocation2 + $0x2d5]]
    %v3024 = vstv %s3023
    %v3025 = vmul.f32 %v3024, %v2866
    %v3026 = vadd.f32 %v3022, %v3025
    %s3027 = sld [smem:[#allocation2 + $0x2d7]]
    %v3028 = vstv %s3027
    %v3029 = vmul.f32 %v3028, %v2885
    %v3030 = vadd.f32 %v3026, %v3029
    %s3031 = sld [smem:[#allocation2 + $0x2df]]
    %v3032 = vstv %s3031
    %v3033 = vadd.f32 %v3030, %v3032
    %v3034 = vtanh.pop %v2907
    %v3035 = vmul.f32 %v2979, 0.5
    %v3036 = vtanh.pop %v3035
    %v3037 = vadd.f32 %v3036, 1.0
    %v3038 = vmul.f32 %v3037, 0.5
    %v3039 = vmul.f32 %v3034, %v3038
    %v3040 = vtanh.pop %v2925
    %v3041 = vmul.f32 %v2997, 0.5
    %v3042 = vtanh.pop %v3041
    %v3043 = vadd.f32 %v3042, 1.0
    %v3044 = vmul.f32 %v3043, 0.5
    %v3045 = vmul.f32 %v3040, %v3044
    %v3046 = vtanh.pop %v2943
    %v3047 = vmul.f32 %v3015, 0.5
    %v3048 = vtanh.pop %v3047
    %v3049 = vadd.f32 %v3048, 1.0
    %v3050 = vmul.f32 %v3049, 0.5
    %v3051 = vmul.f32 %v3046, %v3050
    %v3052 = vtanh.pop %v2961
    %v3053 = vmul.f32 %v3033, 0.5
    %v3054 = vtanh.pop %v3053
    %v3055 = vadd.f32 %v3054, 1.0
    %v3056 = vmul.f32 %v3055, 0.5
    %v3057 = vmul.f32 %v3052, %v3056
    %s3058 = sld [smem:[#allocation2 + $0x2e0]]
    %v3059 = vstv %s3058
    %v3060 = vmul.f32 %v3059, %v3039
    %v3061 = vadd.f32 %v2828, %v3060
    %s3062 = sld [smem:[#allocation2 + $0x2e1]]
    %v3063 = vstv %s3062
    %v3064 = vmul.f32 %v3063, %v3045
    %v3065 = vadd.f32 %v3061, %v3064
    %s3066 = sld [smem:[#allocation2 + $0x2e2]]
    %v3067 = vstv %s3066
    %v3068 = vmul.f32 %v3067, %v3051
    %v3069 = vadd.f32 %v3065, %v3068
    %s3070 = sld [smem:[#allocation2 + $0x2e3]]
    %v3071 = vstv %s3070
    %v3072 = vmul.f32 %v3071, %v3057
    %v3073 = vadd.f32 %v3069, %v3072
    %s3074 = sld [smem:[#allocation2 + $0x2f0]]
    %v3075 = vstv %s3074
    %v3076 = vadd.f32 %v3073, %v3075
    %s3077 = sld [smem:[#allocation2 + $0x2e4]]
    %v3078 = vstv %s3077
    %v3079 = vmul.f32 %v3078, %v3039
    %v3080 = vadd.f32 %v2847, %v3079
    %s3081 = sld [smem:[#allocation2 + $0x2e5]]
    %v3082 = vstv %s3081
    %v3083 = vmul.f32 %v3082, %v3045
    %v3084 = vadd.f32 %v3080, %v3083
    %s3085 = sld [smem:[#allocation2 + $0x2e6]]
    %v3086 = vstv %s3085
    %v3087 = vmul.f32 %v3086, %v3051
    %v3088 = vadd.f32 %v3084, %v3087
    %s3089 = sld [smem:[#allocation2 + $0x2e7]]
    %v3090 = vstv %s3089
    %v3091 = vmul.f32 %v3090, %v3057
    %v3092 = vadd.f32 %v3088, %v3091
    %s3093 = sld [smem:[#allocation2 + $0x2f1]]
    %v3094 = vstv %s3093
    %v3095 = vadd.f32 %v3092, %v3094
    %s3096 = sld [smem:[#allocation2 + $0x2e8]]
    %v3097 = vstv %s3096
    %v3098 = vmul.f32 %v3097, %v3039
    %v3099 = vadd.f32 %v2866, %v3098
    %s3100 = sld [smem:[#allocation2 + $0x2e9]]
    %v3101 = vstv %s3100
    %v3102 = vmul.f32 %v3101, %v3045
    %v3103 = vadd.f32 %v3099, %v3102
    %s3104 = sld [smem:[#allocation2 + $0x2ea]]
    %v3105 = vstv %s3104
    %v3106 = vmul.f32 %v3105, %v3051
    %v3107 = vadd.f32 %v3103, %v3106
    %s3108 = sld [smem:[#allocation2 + $0x2eb]]
    %v3109 = vstv %s3108
    %v3110 = vmul.f32 %v3109, %v3057
    %v3111 = vadd.f32 %v3107, %v3110
    %s3112 = sld [smem:[#allocation2 + $0x2f2]]
    %v3113 = vstv %s3112
    %v3114 = vadd.f32 %v3111, %v3113
    %s3115 = sld [smem:[#allocation2 + $0x2ec]]
    %v3116 = vstv %s3115
    %v3117 = vmul.f32 %v3116, %v3039
    %v3118 = vadd.f32 %v2885, %v3117
    %s3119 = sld [smem:[#allocation2 + $0x2ed]]
    %v3120 = vstv %s3119
    %v3121 = vmul.f32 %v3120, %v3045
    %v3122 = vadd.f32 %v3118, %v3121
    %s3123 = sld [smem:[#allocation2 + $0x2ee]]
    %v3124 = vstv %s3123
    %v3125 = vmul.f32 %v3124, %v3051
    %v3126 = vadd.f32 %v3122, %v3125
    %s3127 = sld [smem:[#allocation2 + $0x2ef]]
    %v3128 = vstv %s3127
    %v3129 = vmul.f32 %v3128, %v3057
    %v3130 = vadd.f32 %v3126, %v3129
    %s3131 = sld [smem:[#allocation2 + $0x2f3]]
    %v3132 = vstv %s3131
    %v3133 = vadd.f32 %v3130, %v3132
    %v3134 = vadd.f32 %v2886, %v3076
    %v3135 = vadd.f32 %v2887, %v3095
    %v3136 = vadd.f32 %v2888, %v3114
    %v3137 = vadd.f32 %v2889, %v3133
    %v3138 = vmul.f32 %v3134, 0.11111111
    %v3139 = vmax.f32 %v3138, 0.0
    %v3140 = vmul.f32 %v3135, 0.11111111
    %v3141 = vmax.f32 %v3140, 0.0
    %v3142 = vmul.f32 %v3136, 0.11111111
    %v3143 = vmax.f32 %v3142, 0.0
    %v3144 = vmul.f32 %v3137, 0.11111111
    %v3145 = vmax.f32 %v3144, 0.0
    %s3146 = sld [smem:[#allocation2 + $0x2f4]]
    %v3147 = vstv %s3146
    %v3148 = vmul.f32 %v3147, %v3139
    %s3149 = sld [smem:[#allocation2 + $0x2f5]]
    %v3150 = vstv %s3149
    %v3151 = vmul.f32 %v3150, %v3141
    %v3152 = vadd.f32 %v3148, %v3151
    %s3153 = sld [smem:[#allocation2 + $0x2f6]]
    %v3154 = vstv %s3153
    %v3155 = vmul.f32 %v3154, %v3143
    %v3156 = vadd.f32 %v3152, %v3155
    %s3157 = sld [smem:[#allocation2 + $0x2f7]]
    %v3158 = vstv %s3157
    %v3159 = vmul.f32 %v3158, %v3145
    %v3160 = vadd.f32 %v3156, %v3159
    %s3161 = sld [smem:[#allocation2 + $0x314]]
    %v3162 = vstv %s3161
    %v3163 = vadd.f32 %v3160, %v3162
    %s3164 = sld [smem:[#allocation2 + $0x2f8]]
    %v3165 = vstv %s3164
    %v3166 = vmul.f32 %v3165, %v3139
    %s3167 = sld [smem:[#allocation2 + $0x2f9]]
    %v3168 = vstv %s3167
    %v3169 = vmul.f32 %v3168, %v3141
    %v3170 = vadd.f32 %v3166, %v3169
    %s3171 = sld [smem:[#allocation2 + $0x2fa]]
    %v3172 = vstv %s3171
    %v3173 = vmul.f32 %v3172, %v3143
    %v3174 = vadd.f32 %v3170, %v3173
    %s3175 = sld [smem:[#allocation2 + $0x2fb]]
    %v3176 = vstv %s3175
    %v3177 = vmul.f32 %v3176, %v3145
    %v3178 = vadd.f32 %v3174, %v3177
    %s3179 = sld [smem:[#allocation2 + $0x315]]
    %v3180 = vstv %s3179
    %v3181 = vadd.f32 %v3178, %v3180
    %s3182 = sld [smem:[#allocation2 + $0x2fc]]
    %v3183 = vstv %s3182
    %v3184 = vmul.f32 %v3183, %v3139
    %s3185 = sld [smem:[#allocation2 + $0x2fd]]
    %v3186 = vstv %s3185
    %v3187 = vmul.f32 %v3186, %v3141
    %v3188 = vadd.f32 %v3184, %v3187
    %s3189 = sld [smem:[#allocation2 + $0x2fe]]
    %v3190 = vstv %s3189
    %v3191 = vmul.f32 %v3190, %v3143
    %v3192 = vadd.f32 %v3188, %v3191
    %s3193 = sld [smem:[#allocation2 + $0x2ff]]
    %v3194 = vstv %s3193
    %v3195 = vmul.f32 %v3194, %v3145
    %v3196 = vadd.f32 %v3192, %v3195
    %s3197 = sld [smem:[#allocation2 + $0x316]]
    %v3198 = vstv %s3197
    %v3199 = vadd.f32 %v3196, %v3198
    %s3200 = sld [smem:[#allocation2 + $0x300]]
    %v3201 = vstv %s3200
    %v3202 = vmul.f32 %v3201, %v3139
    %s3203 = sld [smem:[#allocation2 + $0x301]]
    %v3204 = vstv %s3203
    %v3205 = vmul.f32 %v3204, %v3141
    %v3206 = vadd.f32 %v3202, %v3205
    %s3207 = sld [smem:[#allocation2 + $0x302]]
    %v3208 = vstv %s3207
    %v3209 = vmul.f32 %v3208, %v3143
    %v3210 = vadd.f32 %v3206, %v3209
    %s3211 = sld [smem:[#allocation2 + $0x303]]
    %v3212 = vstv %s3211
    %v3213 = vmul.f32 %v3212, %v3145
    %v3214 = vadd.f32 %v3210, %v3213
    %s3215 = sld [smem:[#allocation2 + $0x317]]
    %v3216 = vstv %s3215
    %v3217 = vadd.f32 %v3214, %v3216
    %s3218 = sld [smem:[#allocation2 + $0x304]]
    %v3219 = vstv %s3218
    %v3220 = vmul.f32 %v3219, %v3139
    %s3221 = sld [smem:[#allocation2 + $0x305]]
    %v3222 = vstv %s3221
    %v3223 = vmul.f32 %v3222, %v3141
    %v3224 = vadd.f32 %v3220, %v3223
    %s3225 = sld [smem:[#allocation2 + $0x306]]
    %v3226 = vstv %s3225
    %v3227 = vmul.f32 %v3226, %v3143
    %v3228 = vadd.f32 %v3224, %v3227
    %s3229 = sld [smem:[#allocation2 + $0x307]]
    %v3230 = vstv %s3229
    %v3231 = vmul.f32 %v3230, %v3145
    %v3232 = vadd.f32 %v3228, %v3231
    %s3233 = sld [smem:[#allocation2 + $0x318]]
    %v3234 = vstv %s3233
    %v3235 = vadd.f32 %v3232, %v3234
    %s3236 = sld [smem:[#allocation2 + $0x308]]
    %v3237 = vstv %s3236
    %v3238 = vmul.f32 %v3237, %v3139
    %s3239 = sld [smem:[#allocation2 + $0x309]]
    %v3240 = vstv %s3239
    %v3241 = vmul.f32 %v3240, %v3141
    %v3242 = vadd.f32 %v3238, %v3241
    %s3243 = sld [smem:[#allocation2 + $0x30a]]
    %v3244 = vstv %s3243
    %v3245 = vmul.f32 %v3244, %v3143
    %v3246 = vadd.f32 %v3242, %v3245
    %s3247 = sld [smem:[#allocation2 + $0x30b]]
    %v3248 = vstv %s3247
    %v3249 = vmul.f32 %v3248, %v3145
    %v3250 = vadd.f32 %v3246, %v3249
    %s3251 = sld [smem:[#allocation2 + $0x319]]
    %v3252 = vstv %s3251
    %v3253 = vadd.f32 %v3250, %v3252
    %s3254 = sld [smem:[#allocation2 + $0x30c]]
    %v3255 = vstv %s3254
    %v3256 = vmul.f32 %v3255, %v3139
    %s3257 = sld [smem:[#allocation2 + $0x30d]]
    %v3258 = vstv %s3257
    %v3259 = vmul.f32 %v3258, %v3141
    %v3260 = vadd.f32 %v3256, %v3259
    %s3261 = sld [smem:[#allocation2 + $0x30e]]
    %v3262 = vstv %s3261
    %v3263 = vmul.f32 %v3262, %v3143
    %v3264 = vadd.f32 %v3260, %v3263
    %s3265 = sld [smem:[#allocation2 + $0x30f]]
    %v3266 = vstv %s3265
    %v3267 = vmul.f32 %v3266, %v3145
    %v3268 = vadd.f32 %v3264, %v3267
    %s3269 = sld [smem:[#allocation2 + $0x31a]]
    %v3270 = vstv %s3269
    %v3271 = vadd.f32 %v3268, %v3270
    %s3272 = sld [smem:[#allocation2 + $0x310]]
    %v3273 = vstv %s3272
    %v3274 = vmul.f32 %v3273, %v3139
    %s3275 = sld [smem:[#allocation2 + $0x311]]
    %v3276 = vstv %s3275
    %v3277 = vmul.f32 %v3276, %v3141
    %v3278 = vadd.f32 %v3274, %v3277
    %s3279 = sld [smem:[#allocation2 + $0x312]]
    %v3280 = vstv %s3279
    %v3281 = vmul.f32 %v3280, %v3143
    %v3282 = vadd.f32 %v3278, %v3281
    %s3283 = sld [smem:[#allocation2 + $0x313]]
    %v3284 = vstv %s3283
    %v3285 = vmul.f32 %v3284, %v3145
    %v3286 = vadd.f32 %v3282, %v3285
    %s3287 = sld [smem:[#allocation2 + $0x31b]]
    %v3288 = vstv %s3287
    %v3289 = vadd.f32 %v3286, %v3288
    %s3290 = sld [smem:[#allocation2 + $0x31c]]
    %v3291 = vstv %s3290
    %v3292 = vmul.f32 %v3291, %v3163
    %s3293 = sld [smem:[#allocation2 + $0x31d]]
    %v3294 = vstv %s3293
    %v3295 = vmul.f32 %v3294, %v3181
    %v3296 = vadd.f32 %v3292, %v3295
    %s3297 = sld [smem:[#allocation2 + $0x31e]]
    %v3298 = vstv %s3297
    %v3299 = vmul.f32 %v3298, %v3199
    %v3300 = vadd.f32 %v3296, %v3299
    %s3301 = sld [smem:[#allocation2 + $0x31f]]
    %v3302 = vstv %s3301
    %v3303 = vmul.f32 %v3302, %v3217
    %v3304 = vadd.f32 %v3300, %v3303
    %s3305 = sld [smem:[#allocation2 + $0x320]]
    %v3306 = vstv %s3305
    %v3307 = vmul.f32 %v3306, %v3235
    %v3308 = vadd.f32 %v3304, %v3307
    %s3309 = sld [smem:[#allocation2 + $0x321]]
    %v3310 = vstv %s3309
    %v3311 = vmul.f32 %v3310, %v3253
    %v3312 = vadd.f32 %v3308, %v3311
    %s3313 = sld [smem:[#allocation2 + $0x322]]
    %v3314 = vstv %s3313
    %v3315 = vmul.f32 %v3314, %v3271
    %v3316 = vadd.f32 %v3312, %v3315
    %s3317 = sld [smem:[#allocation2 + $0x323]]
    %v3318 = vstv %s3317
    %v3319 = vmul.f32 %v3318, %v3289
    %v3320 = vadd.f32 %v3316, %v3319
    %s3321 = sld [smem:[#allocation2 + $0x33c]]
    %v3322 = vstv %s3321
    %v3323 = vadd.f32 %v3320, %v3322
    %s3324 = sld [smem:[#allocation2 + $0x324]]
    %v3325 = vstv %s3324
    %v3326 = vmul.f32 %v3325, %v3163
    %s3327 = sld [smem:[#allocation2 + $0x325]]
    %v3328 = vstv %s3327
    %v3329 = vmul.f32 %v3328, %v3181
    %v3330 = vadd.f32 %v3326, %v3329
    %s3331 = sld [smem:[#allocation2 + $0x326]]
    %v3332 = vstv %s3331
    %v3333 = vmul.f32 %v3332, %v3199
    %v3334 = vadd.f32 %v3330, %v3333
    %s3335 = sld [smem:[#allocation2 + $0x327]]
    %v3336 = vstv %s3335
    %v3337 = vmul.f32 %v3336, %v3217
    %v3338 = vadd.f32 %v3334, %v3337
    %s3339 = sld [smem:[#allocation2 + $0x328]]
    %v3340 = vstv %s3339
    %v3341 = vmul.f32 %v3340, %v3235
    %v3342 = vadd.f32 %v3338, %v3341
    %s3343 = sld [smem:[#allocation2 + $0x329]]
    %v3344 = vstv %s3343
    %v3345 = vmul.f32 %v3344, %v3253
    %v3346 = vadd.f32 %v3342, %v3345
    %s3347 = sld [smem:[#allocation2 + $0x32a]]
    %v3348 = vstv %s3347
    %v3349 = vmul.f32 %v3348, %v3271
    %v3350 = vadd.f32 %v3346, %v3349
    %s3351 = sld [smem:[#allocation2 + $0x32b]]
    %v3352 = vstv %s3351
    %v3353 = vmul.f32 %v3352, %v3289
    %v3354 = vadd.f32 %v3350, %v3353
    %s3355 = sld [smem:[#allocation2 + $0x33d]]
    %v3356 = vstv %s3355
    %v3357 = vadd.f32 %v3354, %v3356
    %s3358 = sld [smem:[#allocation2 + $0x32c]]
    %v3359 = vstv %s3358
    %v3360 = vmul.f32 %v3359, %v3163
    %s3361 = sld [smem:[#allocation2 + $0x32d]]
    %v3362 = vstv %s3361
    %v3363 = vmul.f32 %v3362, %v3181
    %v3364 = vadd.f32 %v3360, %v3363
    %s3365 = sld [smem:[#allocation2 + $0x32e]]
    %v3366 = vstv %s3365
    %v3367 = vmul.f32 %v3366, %v3199
    %v3368 = vadd.f32 %v3364, %v3367
    %s3369 = sld [smem:[#allocation2 + $0x32f]]
    %v3370 = vstv %s3369
    %v3371 = vmul.f32 %v3370, %v3217
    %v3372 = vadd.f32 %v3368, %v3371
    %s3373 = sld [smem:[#allocation2 + $0x330]]
    %v3374 = vstv %s3373
    %v3375 = vmul.f32 %v3374, %v3235
    %v3376 = vadd.f32 %v3372, %v3375
    %s3377 = sld [smem:[#allocation2 + $0x331]]
    %v3378 = vstv %s3377
    %v3379 = vmul.f32 %v3378, %v3253
    %v3380 = vadd.f32 %v3376, %v3379
    %s3381 = sld [smem:[#allocation2 + $0x332]]
    %v3382 = vstv %s3381
    %v3383 = vmul.f32 %v3382, %v3271
    %v3384 = vadd.f32 %v3380, %v3383
    %s3385 = sld [smem:[#allocation2 + $0x333]]
    %v3386 = vstv %s3385
    %v3387 = vmul.f32 %v3386, %v3289
    %v3388 = vadd.f32 %v3384, %v3387
    %s3389 = sld [smem:[#allocation2 + $0x33e]]
    %v3390 = vstv %s3389
    %v3391 = vadd.f32 %v3388, %v3390
    %s3392 = sld [smem:[#allocation2 + $0x334]]
    %v3393 = vstv %s3392
    %v3394 = vmul.f32 %v3393, %v3163
    %s3395 = sld [smem:[#allocation2 + $0x335]]
    %v3396 = vstv %s3395
    %v3397 = vmul.f32 %v3396, %v3181
    %v3398 = vadd.f32 %v3394, %v3397
    %s3399 = sld [smem:[#allocation2 + $0x336]]
    %v3400 = vstv %s3399
    %v3401 = vmul.f32 %v3400, %v3199
    %v3402 = vadd.f32 %v3398, %v3401
    %s3403 = sld [smem:[#allocation2 + $0x337]]
    %v3404 = vstv %s3403
    %v3405 = vmul.f32 %v3404, %v3217
    %v3406 = vadd.f32 %v3402, %v3405
    %s3407 = sld [smem:[#allocation2 + $0x338]]
    %v3408 = vstv %s3407
    %v3409 = vmul.f32 %v3408, %v3235
    %v3410 = vadd.f32 %v3406, %v3409
    %s3411 = sld [smem:[#allocation2 + $0x339]]
    %v3412 = vstv %s3411
    %v3413 = vmul.f32 %v3412, %v3253
    %v3414 = vadd.f32 %v3410, %v3413
    %s3415 = sld [smem:[#allocation2 + $0x33a]]
    %v3416 = vstv %s3415
    %v3417 = vmul.f32 %v3416, %v3271
    %v3418 = vadd.f32 %v3414, %v3417
    %s3419 = sld [smem:[#allocation2 + $0x33b]]
    %v3420 = vstv %s3419
    %v3421 = vmul.f32 %v3420, %v3289
    %v3422 = vadd.f32 %v3418, %v3421
    %s3423 = sld [smem:[#allocation2 + $0x33f]]
    %v3424 = vstv %s3423
    %v3425 = vadd.f32 %v3422, %v3424
    %v3426 = vsub.f32 %v3323, %v3357
    %v3427 = vmul.f32 %v3426, 0.5
    %v3428 = vtanh.pop %v3427
    %v3429 = vadd.f32 %v3428, 1.0
    %v3430 = vmul.f32 %v3429, 0.5
    %3431 = vst [vmem:[%s2] sm:$0xff] %v3430
    %v3432 = vsub.f32 1.0, %v3430
    %s3433 = scalar_lea.vmem %s2, 8
    %3434 = vst [vmem:[%s3433] sm:$0xff] %v3432
    %v3435 = vmul.f32 %v3391, 0.5
    %v3436 = vtanh.pop %v3435
    %v3437 = vmul.f32 %v3436, 2.0
    %s3438 = scalar_lea.vmem %s2, 16
    %3439 = vst [vmem:[%s3438] sm:$0xff] %v3437
    %v3440 = vmax.f32 %v3425, 0.0
    %v3441 = vand.u32 2147483647, %v3425
    %v3442 = vsub.f32 0.0, %v3441
    %v3443 = vmul.f32 %v3442, 1.442695
    %v3444 = vpow.pop %v3443
    %v3445 = vadd.f32 %v3444, 1.0
    %v3446 = vlog2.pop %v3445
    %v3447 = vmul.f32 %v3446, 0.6931472
    %v3448 = vadd.f32 %v3440, %v3447
    %s3449 = scalar_lea.vmem %s2, 24
    %3450 = vst [vmem:[%s3449] sm:$0xff] %v3448
    // Predicated region
    $region14: #{mooncake_forward.1} parent=1 // pred_check
      _
    $region15: #{mooncake_forward.1} parent=1 // pred_check_branch
      %3452 = sbr.rel (0) target = $region17
    $region16: #{mooncake_forward.1} parent=1 // pred_region
      _
    $region17: #{mooncake_forward.1} parent=1 // pred_fallthru
      _
    // Predicated region
    $region18: #{mooncake_forward.1} parent=1 // pred_check
      _
    $region19: #{mooncake_forward.1} parent=1 // pred_check_branch
      %3454 = sbr.rel (0) target = $region21
    $region20: #{mooncake_forward.1} parent=1 // pred_region
      _
    $region21: #{mooncake_forward.1} parent=1 // pred_fallthru
      _
    %3455 = vsyncpa [#allocation3], 1

</llo_original>
